<compile_context>
chip_gen: v6e
topology: v6e:2x2x1
jax: 0.10.0
libtpu: 0.0.40
codegen_flags: <defaults>
</compile_context>

<pallas_src>
import jax
import jax.numpy as jnp
import numpy as np
from jax import lax
from jax.experimental import pallas as pl
from jax.experimental.pallas import tpu as pltpu

LAYER_SIZE = 3200            # 64 ch * 5 * 10 spatial after three stride-2 convs
GH, GW = 5, 10               # final block grid = (H/8, W/8)
FLATROWS = GH * (GW + 1)     # 55: flat block-row positions (1 garbage slot/row)
PAD_TOP = GW + 2             # 12: top-pad rows of the flat padded layout
IN_ROWS = PAD_TOP + FLATROWS + 1   # 68 rows fed to the kernel per image
BUF_ROWS = 72                # scratch rows (>= PAD_TOP + FLATROWS)
TAP_OFFS = (0, 1, GW + 1, GW + 2)  # 4 block taps of a stride-2 3x3 conv
C0, C1, C2, C3 = 8 * 8 * 8, 4 * 4 * 16, 2 * 2 * 32, 64   # packed channel widths


# ----------------------------------------------------------------------------
# Fused kernel: convs (block-grid form) + MLP head, one grid step per image.
# ----------------------------------------------------------------------------
def _actor_kernel(x_ref, w1_ref, b1_ref, w2_ref, b2_ref, w3_ref, b3_ref,
                  wl1_ref, bl1_ref, lw2_ref, bl2_ref, lw3_ref, bl3_ref,
                  o_ref, buf1, buf2):
    f32 = jnp.float32
    bf16 = jnp.bfloat16

    # Mask that zeroes the garbage rows (flat index % (GW+1) == GW).  Needed so
    # the rows we store on top of the next layer's left-padding stay zero.
    ridx = lax.broadcasted_iota(jnp.int32, (FLATROWS, 1), 0)
    rmask = (ridx % (GW + 1) != GW).astype(f32)

    def conv_stage(read_tap, w_ref_, b_ref_, n_out):
        acc = jnp.zeros((FLATROWS, n_out), f32)
        for t, off in enumerate(TAP_OFFS):
            acc += jnp.dot(read_tap(off), w_ref_[t],
                           preferred_element_type=f32)
        return jnp.maximum(acc + b_ref_[...], 0.0) * rmask   # (FLATROWS, n_out) f32

    # ---- conv1: taps read (and cast) straight from the f32 input block ----
    y = conv_stage(
        lambda off: x_ref[0, pl.ds(off, FLATROWS), :].astype(bf16),
        w1_ref, b1_ref, C1)
    buf1[...] = jnp.zeros_like(buf1)
    buf1[pl.ds(PAD_TOP, FLATROWS), :] = y

    # ---- conv2 ----
    y = conv_stage(
        lambda off: buf1[pl.ds(off, FLATROWS), :].astype(bf16),
        w2_ref, b2_ref, C2)
    buf2[...] = jnp.zeros_like(buf2)
    buf2[pl.ds(PAD_TOP, FLATROWS), :] = y

    # ---- conv3 (feeds the MLP directly; stays in f32 / vregs) ----
    y3 = conv_stage(
        lambda off: buf2[pl.ds(off, FLATROWS), :].astype(bf16),
        w3_ref, b3_ref, C3)                                   # (55, 64) f32

    # ---- linear1: h[hd] = sum_{t,c} y3[t, c] * wl1[c, t, hd] ----
    # Short VPU loop over the 64 conv3 channels (static lane slices, no
    # relayout); garbage rows of wl1 are zero, so they drop out.
    hidden = wl1_ref.shape[2]
    acc1 = jnp.zeros((FLATROWS, hidden), f32)
    for c in range(C3):
        acc1 = acc1 + y3[:, c:c + 1] * wl1_ref[c]
    h = jnp.dot(jnp.ones((1, FLATROWS), f32), acc1,
                preferred_element_type=f32)                   # (1, hidden)
    h = jnp.maximum(h + bl1_ref[...], 0.0)
    h = jnp.maximum(jnp.dot(h, lw2_ref[...], preferred_element_type=f32)
                    + bl2_ref[...], 0.0)
    h = jnp.maximum(jnp.dot(h, lw3_ref[...], preferred_element_type=f32)
                    + bl3_ref[...], 0.0)
    o_ref[0] = jax.nn.sigmoid(h)


def _const_map(nd):
    if nd == 2:
        return lambda b: (0, 0)
    return lambda b: (0, 0, 0)


def _fused_call(x, q):
    """x: (B, IN_ROWS, C0) f32 (padded, space-to-depth packed input)."""
    B = x.shape[0]
    hidden = q["lw2"].shape[0]
    out_dim = q["lw3"].shape[1]
    operands = (x, q["w1e"], q["b1"], q["w2e"], q["b2"], q["w3e"], q["b3"],
                q["wl1"], q["bl1"], q["lw2"], q["bl2"], q["lw3"], q["bl3"])

    in_specs = [pl.BlockSpec((1, IN_ROWS, C0), lambda b: (b, 0, 0))]
    in_specs += [pl.BlockSpec(a.shape, _const_map(a.ndim)) for a in operands[1:]]

    flops = B * (2 * FLATROWS * (C0 * C1 + C1 * C2 + C2 * C3)
                 + 2 * FLATROWS * C3 * hidden
                 + 4 * hidden * hidden + 4 * hidden * out_dim)
    bytes_accessed = sum(int(a.size) * a.dtype.itemsize for a in operands)
    bytes_accessed += B * out_dim * 4
    cost = pl.CostEstimate(flops=flops, transcendentals=B * out_dim,
                           bytes_accessed=bytes_accessed)

    out = pl.pallas_call(
        _actor_kernel,
        out_shape=jax.ShapeDtypeStruct((B, 1, out_dim), jnp.float32),
        grid=(B,),
        in_specs=in_specs,
        out_specs=pl.BlockSpec((1, 1, out_dim), lambda b: (b, 0, 0)),
        scratch_shapes=[pltpu.VMEM((BUF_ROWS, C1), jnp.float32),
                        pltpu.VMEM((BUF_ROWS, C2), jnp.float32)],
        compiler_params=pltpu.CompilerParams(
            dimension_semantics=("parallel",)),
        cost_estimate=cost,
    )(*operands)
    return out.reshape(B, out_dim)


# ----------------------------------------------------------------------------
# Forward wrapper: space-to-depth-by-8 + pad into the flat layout, then kernel.
# ----------------------------------------------------------------------------
def actor_forward(state_nhwc, q):
    B, H, W, C = state_nhwc.shape
    assert (H // 8, W // 8, C) == (GH, GW, 8) and H % 8 == 0 and W % 8 == 0
    x = state_nhwc.reshape(B, GH, 8, GW, 8, C)
    x = jnp.transpose(x, (0, 1, 3, 2, 4, 5)).reshape(B, GH, GW, 8 * 8 * C)
    x = jnp.pad(x, ((0, 0), (0, 0), (1, 0), (0, 0)))      # left-pad column
    x = x.reshape(B, FLATROWS, C0)
    x = jnp.pad(x, ((0, 0), (PAD_TOP, 1), (0, 0)))         # top-pad rows
    return _fused_call(x, q)


# ----------------------------------------------------------------------------
# Parameters: PyTorch-layout init + one-time layout/dtype preparation
# ----------------------------------------------------------------------------
def init_params(key, hidden_size, output_size):
    ks = jax.random.split(key, 12)

    def u(k, shape, fan_in):
        bound = 1.0 / np.sqrt(float(fan_in))
        return jax.random.uniform(k, shape, jnp.float32, -bound, bound)

    p = {}
    p["c1_w"] = u(ks[0], (16, 8, 3, 3), 8 * 9)
    p["c1_b"] = u(ks[1], (16,), 8 * 9)
    p["c2_w"] = u(ks[2], (32, 16, 3, 3), 16 * 9)
    p["c2_b"] = u(ks[3], (32,), 16 * 9)
    p["c3_w"] = u(ks[4], (64, 32, 3, 3), 32 * 9)
    p["c3_b"] = u(ks[5], (64,), 32 * 9)
    p["l1_w"] = u(ks[6], (hidden_size, LAYER_SIZE), LAYER_SIZE)
    p["l1_b"] = u(ks[7], (hidden_size,), LAYER_SIZE)
    p["l2_w"] = u(ks[8], (hidden_size, hidden_size), hidden_size)
    p["l2_b"] = u(ks[9], (hidden_size,), hidden_size)
    p["l3_w"] = u(ks[10], (output_size, hidden_size), hidden_size)
    p["l3_b"] = u(ks[11], (output_size,), hidden_size)
    return p


def _expand_conv_weight(w_pt, phases_in, phases_out):
    """(Cout, Cin, 3, 3) torch weight -> (4, pi^2*Cin, po^2*Cout) tap matrices
    for the block-grid (space-to-depth) form of a 3x3/stride-2/pad-1 conv."""
    w = np.asarray(w_pt, np.float32)
    cout, cin = int(w.shape[0]), int(w.shape[1])
    pi, po = phases_in, phases_out
    big = np.zeros((2, 2, pi, pi, cin, po, po, cout), np.float32)
    for ao in range(po):
        for kh in range(3):
            rr = 2 * ao + kh - 1
            dq, ai = (0, pi - 1) if rr < 0 else (1, rr)
            for bo in range(po):
                for kw in range(3):
                    cc = 2 * bo + kw - 1
                    dr, bi = (0, pi - 1) if cc < 0 else (1, cc)
                    big[dq, dr, ai, bi, :, ao, bo, :] += w[:, :, kh, kw].T
    return big.reshape(4, pi * pi * cin, po * po * cout)


def prepare_params(p):
    """One-time transform into the layouts/dtypes the fused kernel consumes."""
    hidden = int(p["l1_w"].shape[0])
    bf = jnp.bfloat16
    q = {}
    q["w1e"] = jnp.asarray(_expand_conv_weight(p["c1_w"], 8, 4), bf)   # (4,512,256)
    q["w2e"] = jnp.asarray(_expand_conv_weight(p["c2_w"], 4, 2), bf)   # (4,256,128)
    q["w3e"] = jnp.asarray(_expand_conv_weight(p["c3_w"], 2, 1), bf)   # (4,128, 64)
    q["b1"] = jnp.asarray(np.tile(np.asarray(p["c1_b"], np.float32), 16)[None, :])
    q["b2"] = jnp.asarray(np.tile(np.asarray(p["c2_b"], np.float32), 4)[None, :])
    q["b3"] = jnp.asarray(np.asarray(p["c3_b"], np.float32)[None, :])

    # linear1: fold the PyTorch NCHW-flatten order into the weight; layout
    # (64 conv3 channels, 55 flat block rows, hidden); garbage rows stay zero.
    l1 = np.asarray(p["l1_w"], np.float32).reshape(hidden, C3, GH, GW)
    wl1 = np.zeros((C3, GH, GW + 1, hidden), np.float32)
    wl1[:, :, :GW, :] = np.transpose(l1, (1, 2, 3, 0))
    q["wl1"] = jnp.asarray(wl1.reshape(C3, FLATROWS, hidden))          # f32
    q["bl1"] = jnp.asarray(np.asarray(p["l1_b"], np.float32)[None, :])
    # tiny MLP tail stays f32 (no bf16 casts on the serial 1-row chain).
    q["lw2"] = jnp.asarray(np.asarray(p["l2_w"], np.float32).T)
    q["bl2"] = jnp.asarray(np.asarray(p["l2_b"], np.float32)[None, :])
    q["lw3"] = jnp.asarray(np.asarray(p["l3_w"], np.float32).T)
    q["bl3"] = jnp.asarray(np.asarray(p["l3_b"], np.float32)[None, :])
    return q


# ----------------------------------------------------------------------------
# Pure-JAX f32 reference (PyTorch-layout params) for sanity check
# ----------------------------------------------------------------------------
def actor_forward_ref(state_nhwc, p):
    def conv(x, w_pt, b):
        w = jnp.transpose(w_pt, (2, 3, 1, 0))  # HWIO
        y = lax.conv_general_dilated(
            x, w, window_strides=(2, 2), padding=((1, 1), (1, 1)),
            dimension_numbers=("NHWC", "HWIO", "NHWC"),
            precision=lax.Precision.HIGHEST)
        return jnp.maximum(y + b, 0.0)

    x = conv(state_nhwc, p["c1_w"], p["c1_b"])
    x = conv(x, p["c2_w"], p["c2_b"])
    x = conv(x, p["c3_w"], p["c3_b"])
    B = x.shape[0]
    x = jnp.transpose(x, (0, 3, 1, 2)).reshape(B, -1)   # NCHW flatten

    def dot(a, b):
        return jnp.dot(a, b, precision=lax.Precision.HIGHEST)

    x = jnp.maximum(dot(x, p["l1_w"].T) + p["l1_b"], 0.0)
    x = jnp.maximum(dot(x, p["l2_w"].T) + p["l2_b"], 0.0)
    x = jnp.maximum(dot(x, p["l3_w"].T) + p["l3_b"], 0.0)
    return jax.nn.sigmoid(x)


if __name__ == "__main__":
    # Shapes implied by the module: Cin=8, three stride-2 convs must leave
    # 64 * H' * W' = 3200  =>  H' * W' = 50  =>  H=40, W=80.
    B, H, W, C = 2, 40, 80, 8
    hidden_size, output_size = 32, 4

    key = jax.random.PRNGKey(0)
    k_state, k_params = jax.random.split(key)
    state = jax.random.normal(k_state, (B, H, W, C), dtype=jnp.float32)

    params = init_params(k_params, hidden_size, output_size)   # PyTorch layout
    fwd_params = prepare_params(params)                        # one-time prep

    out = jax.block_until_ready(jax.jit(actor_forward)(state, fwd_params))
    ref = jax.block_until_ready(jax.jit(actor_forward_ref)(state, params))

    assert out.shape == (B, output_size), out.shape
    assert bool(jnp.all(jnp.isfinite(out)))
    # bf16 conv operands (f32 accumulation) vs f32 HIGHEST reference
    assert bool(jnp.allclose(out, ref, rtol=2e-2, atol=2e-2)), (
        float(jnp.max(jnp.abs(out - ref))))

    print("KERNEL_OK")
</pallas_src>

<mosaic_0001>
module attributes {stable_mosaic.version = 11 : i64} {
  func.func @_actor_kernel(%arg0: i32, %arg1: memref<1x68x512xf32, #tpu.memory_space<vmem>>, %arg2: memref<4x512x256xbf16, #tpu.memory_space<vmem>>, %arg3: memref<1x256xf32, #tpu.memory_space<vmem>>, %arg4: memref<4x256x128xbf16, #tpu.memory_space<vmem>>, %arg5: memref<1x128xf32, #tpu.memory_space<vmem>>, %arg6: memref<4x128x64xbf16, #tpu.memory_space<vmem>>, %arg7: memref<1x64xf32, #tpu.memory_space<vmem>>, %arg8: memref<64x55x32xf32, #tpu.memory_space<vmem>>, %arg9: memref<1x32xf32, #tpu.memory_space<vmem>>, %arg10: memref<32x32xf32, #tpu.memory_space<vmem>>, %arg11: memref<1x32xf32, #tpu.memory_space<vmem>>, %arg12: memref<32x4xf32, #tpu.memory_space<vmem>>, %arg13: memref<1x4xf32, #tpu.memory_space<vmem>>, %arg14: memref<1x1x4xf32, #tpu.memory_space<vmem>>, %arg15: memref<72x256xf32, #tpu.memory_space<vmem>>, %arg16: memref<72x128xf32, #tpu.memory_space<vmem>>) attributes {dimension_semantics = [#tpu.dimension_semantics<parallel>], iteration_bounds = array<i64: 2>, scalar_prefetch = 0 : i64, scratch_operands = 2 : i64, tpu.core_type = #tpu.core_type<tc>, window_params = [{transform_indices = @transform_0, window_bounds = array<i64: 1, 68, 512>}, {pipeline_mode = #tpu.pipeline_mode<synchronous>, transform_indices = @transform_1, window_bounds = array<i64: 4, 512, 256>}, {pipeline_mode = #tpu.pipeline_mode<synchronous>, transform_indices = @transform_2, window_bounds = array<i64: 1, 256>}, {pipeline_mode = #tpu.pipeline_mode<synchronous>, transform_indices = @transform_3, window_bounds = array<i64: 4, 256, 128>}, {pipeline_mode = #tpu.pipeline_mode<synchronous>, transform_indices = @transform_4, window_bounds = array<i64: 1, 128>}, {pipeline_mode = #tpu.pipeline_mode<synchronous>, transform_indices = @transform_5, window_bounds = array<i64: 4, 128, 64>}, {pipeline_mode = #tpu.pipeline_mode<synchronous>, transform_indices = @transform_6, window_bounds = array<i64: 1, 64>}, {pipeline_mode = #tpu.pipeline_mode<synchronous>, transform_indices = @transform_7, window_bounds = array<i64: 64, 55, 32>}, {pipeline_mode = #tpu.pipeline_mode<synchronous>, transform_indices = @transform_8, window_bounds = array<i64: 1, 32>}, {pipeline_mode = #tpu.pipeline_mode<synchronous>, transform_indices = @transform_9, window_bounds = array<i64: 32, 32>}, {pipeline_mode = #tpu.pipeline_mode<synchronous>, transform_indices = @transform_10, window_bounds = array<i64: 1, 32>}, {pipeline_mode = #tpu.pipeline_mode<synchronous>, transform_indices = @transform_11, window_bounds = array<i64: 32, 4>}, {pipeline_mode = #tpu.pipeline_mode<synchronous>, transform_indices = @transform_12, window_bounds = array<i64: 1, 4>}, {transform_indices = @transform_13, window_bounds = array<i64: 1, 1, 4>}]} {
    %0 = tpu.iota {dimensions = array<i32: 0>} : vector<55x1xi32>
    %c11_i32 = arith.constant 11 : i32
    %c0_i32 = arith.constant 0 : i32
    %1 = arith.cmpi eq, %c11_i32, %c0_i32 : i32
    %c1_i32 = arith.constant 1 : i32
    %2 = arith.select %1, %c1_i32, %c11_i32 : i32
    %3 = vector.broadcast %2 : i32 to vector<55x1xi32>
    %4 = arith.remsi %0, %3 : vector<55x1xi32>
    %c0_i32_0 = arith.constant 0 : i32
    %5 = vector.broadcast %c0_i32_0 : i32 to vector<55x1xi32>
    %6 = arith.cmpi ne, %4, %5 : vector<55x1xi32>
    %c0_i32_1 = arith.constant 0 : i32
    %7 = vector.broadcast %c0_i32_1 : i32 to vector<55x1xi32>
    %8 = arith.cmpi slt, %4, %7 : vector<55x1xi32>
    %c0_i32_2 = arith.constant 0 : i32
    %9 = arith.cmpi slt, %2, %c0_i32_2 : i32
    %10 = vector.broadcast %9 : i1 to vector<55x1xi1>
    %11 = vector.broadcast %10 : vector<55x1xi1> to vector<55x1xi1>
    %12 = arith.xori %8, %11 : vector<55x1xi1>
    %13 = arith.andi %12, %6 : vector<55x1xi1>
    %14 = vector.broadcast %2 : i32 to vector<55x1xi32>
    %15 = arith.addi %4, %14 : vector<55x1xi32>
    %16 = arith.select %13, %15, %4 : vector<55x1xi1>, vector<55x1xi32>
    %c10_i32 = arith.constant 10 : i32
    %17 = vector.broadcast %c10_i32 : i32 to vector<55x1xi32>
    %18 = arith.cmpi ne, %16, %17 : vector<55x1xi32>
    %19 = arith.extui %18 : vector<55x1xi1> to vector<55x1xi32>
    %20 = arith.sitofp %19 : vector<55x1xi32> to vector<55x1xf32>
    %cst = arith.constant 0.000000e+00 : f32
    %21 = vector.broadcast %cst : f32 to vector<55x256xf32>
    %c0 = arith.constant 0 : index
    %c0_3 = arith.constant 0 : index
    %c0_4 = arith.constant 0 : index
    %22 = vector.load %arg1[%c0, %c0_3, %c0_4] : memref<1x68x512xf32, #tpu.memory_space<vmem>>, vector<1x55x512xf32>
    %23 = vector.shape_cast %22 : vector<1x55x512xf32> to vector<55x512xf32>
    %24 = arith.truncf %23 : vector<55x512xf32> to vector<55x512xbf16>
    %c0_5 = arith.constant 0 : index
    %c0_6 = arith.constant 0 : index
    %c0_7 = arith.constant 0 : index
    %25 = vector.load %arg2[%c0_5, %c0_6, %c0_7] : memref<4x512x256xbf16, #tpu.memory_space<vmem>>, vector<1x512x256xbf16>
    %26 = vector.shape_cast %25 : vector<1x512x256xbf16> to vector<512x256xbf16>
    %cst_8 = arith.constant dense<0.000000e+00> : vector<55x256xf32>
    %27 = tpu.matmul %24, %26, %cst_8 {dimension_numbers = #tpu.dot_dimension_numbers<[1], [0], [0], [1], [0, 0, 1, 1], [], []>} : vector<55x512xbf16>, vector<512x256xbf16>, vector<55x256xf32> -> vector<55x256xf32>
    %28 = arith.addf %21, %27 : vector<55x256xf32>
    %c0_9 = arith.constant 0 : index
    %c1 = arith.constant 1 : index
    %c0_10 = arith.constant 0 : index
    %29 = vector.load %arg1[%c0_9, %c1, %c0_10] : memref<1x68x512xf32, #tpu.memory_space<vmem>>, vector<1x55x512xf32>
    %30 = vector.shape_cast %29 : vector<1x55x512xf32> to vector<55x512xf32>
    %31 = arith.truncf %30 : vector<55x512xf32> to vector<55x512xbf16>
    %c1_11 = arith.constant 1 : index
    %c0_12 = arith.constant 0 : index
    %c0_13 = arith.constant 0 : index
    %32 = vector.load %arg2[%c1_11, %c0_12, %c0_13] : memref<4x512x256xbf16, #tpu.memory_space<vmem>>, vector<1x512x256xbf16>
    %33 = vector.shape_cast %32 : vector<1x512x256xbf16> to vector<512x256xbf16>
    %cst_14 = arith.constant dense<0.000000e+00> : vector<55x256xf32>
    %34 = tpu.matmul %31, %33, %cst_14 {dimension_numbers = #tpu.dot_dimension_numbers<[1], [0], [0], [1], [0, 0, 1, 1], [], []>} : vector<55x512xbf16>, vector<512x256xbf16>, vector<55x256xf32> -> vector<55x256xf32>
    %35 = arith.addf %28, %34 : vector<55x256xf32>
    %c0_15 = arith.constant 0 : index
    %c11 = arith.constant 11 : index
    %c0_16 = arith.constant 0 : index
    %36 = vector.load %arg1[%c0_15, %c11, %c0_16] : memref<1x68x512xf32, #tpu.memory_space<vmem>>, vector<1x55x512xf32>
    %37 = vector.shape_cast %36 : vector<1x55x512xf32> to vector<55x512xf32>
    %38 = arith.truncf %37 : vector<55x512xf32> to vector<55x512xbf16>
    %c2 = arith.constant 2 : index
    %c0_17 = arith.constant 0 : index
    %c0_18 = arith.constant 0 : index
    %39 = vector.load %arg2[%c2, %c0_17, %c0_18] : memref<4x512x256xbf16, #tpu.memory_space<vmem>>, vector<1x512x256xbf16>
    %40 = vector.shape_cast %39 : vector<1x512x256xbf16> to vector<512x256xbf16>
    %cst_19 = arith.constant dense<0.000000e+00> : vector<55x256xf32>
    %41 = tpu.matmul %38, %40, %cst_19 {dimension_numbers = #tpu.dot_dimension_numbers<[1], [0], [0], [1], [0, 0, 1, 1], [], []>} : vector<55x512xbf16>, vector<512x256xbf16>, vector<55x256xf32> -> vector<55x256xf32>
    %42 = arith.addf %35, %41 : vector<55x256xf32>
    %c0_20 = arith.constant 0 : index
    %c12 = arith.constant 12 : index
    %c0_21 = arith.constant 0 : index
    %43 = vector.load %arg1[%c0_20, %c12, %c0_21] : memref<1x68x512xf32, #tpu.memory_space<vmem>>, vector<1x55x512xf32>
    %44 = vector.shape_cast %43 : vector<1x55x512xf32> to vector<55x512xf32>
    %45 = arith.truncf %44 : vector<55x512xf32> to vector<55x512xbf16>
    %c3 = arith.constant 3 : index
    %c0_22 = arith.constant 0 : index
    %c0_23 = arith.constant 0 : index
    %46 = vector.load %arg2[%c3, %c0_22, %c0_23] : memref<4x512x256xbf16, #tpu.memory_space<vmem>>, vector<1x512x256xbf16>
    %47 = vector.shape_cast %46 : vector<1x512x256xbf16> to vector<512x256xbf16>
    %cst_24 = arith.constant dense<0.000000e+00> : vector<55x256xf32>
    %48 = tpu.matmul %45, %47, %cst_24 {dimension_numbers = #tpu.dot_dimension_numbers<[1], [0], [0], [1], [0, 0, 1, 1], [], []>} : vector<55x512xbf16>, vector<512x256xbf16>, vector<55x256xf32> -> vector<55x256xf32>
    %49 = arith.addf %42, %48 : vector<55x256xf32>
    %c0_25 = arith.constant 0 : index
    %c0_26 = arith.constant 0 : index
    %50 = vector.load %arg3[%c0_25, %c0_26] : memref<1x256xf32, #tpu.memory_space<vmem>>, vector<1x256xf32>
    %51 = vector.broadcast %50 : vector<1x256xf32> to vector<55x256xf32>
    %52 = arith.addf %49, %51 : vector<55x256xf32>
    %cst_27 = arith.constant 0.000000e+00 : f32
    %53 = vector.broadcast %cst_27 : f32 to vector<55x256xf32>
    %54 = arith.maximumf %52, %53 : vector<55x256xf32>
    %55 = vector.broadcast %20 : vector<55x1xf32> to vector<55x256xf32>
    %56 = arith.mulf %54, %55 : vector<55x256xf32>
    %cst_28 = arith.constant 0.000000e+00 : f32
    %57 = vector.broadcast %cst_28 : f32 to vector<72x256xf32>
    %c0_29 = arith.constant 0 : index
    %c0_30 = arith.constant 0 : index
    %58 = vector.load %arg15[%c0_29, %c0_30] : memref<72x256xf32, #tpu.memory_space<vmem>>, vector<72x256xf32>
    tpu.vector_store %arg15[%c0_29, %c0_30], %57 {strides = array<i32>} : memref<72x256xf32, #tpu.memory_space<vmem>>, vector<72x256xf32>,
    %c12_31 = arith.constant 12 : index
    %c0_32 = arith.constant 0 : index
    %59 = vector.load %arg15[%c12_31, %c0_32] : memref<72x256xf32, #tpu.memory_space<vmem>>, vector<55x256xf32>
    tpu.vector_store %arg15[%c12_31, %c0_32], %56 {strides = array<i32>} : memref<72x256xf32, #tpu.memory_space<vmem>>, vector<55x256xf32>,
    %cst_33 = arith.constant 0.000000e+00 : f32
    %60 = vector.broadcast %cst_33 : f32 to vector<55x128xf32>
    %c0_34 = arith.constant 0 : index
    %c0_35 = arith.constant 0 : index
    %61 = vector.load %arg15[%c0_34, %c0_35] : memref<72x256xf32, #tpu.memory_space<vmem>>, vector<55x256xf32>
    %62 = arith.truncf %61 : vector<55x256xf32> to vector<55x256xbf16>
    %c0_36 = arith.constant 0 : index
    %c0_37 = arith.constant 0 : index
    %c0_38 = arith.constant 0 : index
    %63 = vector.load %arg4[%c0_36, %c0_37, %c0_38] : memref<4x256x128xbf16, #tpu.memory_space<vmem>>, vector<1x256x128xbf16>
    %64 = vector.shape_cast %63 : vector<1x256x128xbf16> to vector<256x128xbf16>
    %cst_39 = arith.constant dense<0.000000e+00> : vector<55x128xf32>
    %65 = tpu.matmul %62, %64, %cst_39 {dimension_numbers = #tpu.dot_dimension_numbers<[1], [0], [0], [1], [0, 0, 1, 1], [], []>} : vector<55x256xbf16>, vector<256x128xbf16>, vector<55x128xf32> -> vector<55x128xf32>
    %66 = arith.addf %60, %65 : vector<55x128xf32>
    %c1_40 = arith.constant 1 : index
    %c0_41 = arith.constant 0 : index
    %67 = vector.load %arg15[%c1_40, %c0_41] : memref<72x256xf32, #tpu.memory_space<vmem>>, vector<55x256xf32>
    %68 = arith.truncf %67 : vector<55x256xf32> to vector<55x256xbf16>
    %c1_42 = arith.constant 1 : index
    %c0_43 = arith.constant 0 : index
    %c0_44 = arith.constant 0 : index
    %69 = vector.load %arg4[%c1_42, %c0_43, %c0_44] : memref<4x256x128xbf16, #tpu.memory_space<vmem>>, vector<1x256x128xbf16>
    %70 = vector.shape_cast %69 : vector<1x256x128xbf16> to vector<256x128xbf16>
    %cst_45 = arith.constant dense<0.000000e+00> : vector<55x128xf32>
    %71 = tpu.matmul %68, %70, %cst_45 {dimension_numbers = #tpu.dot_dimension_numbers<[1], [0], [0], [1], [0, 0, 1, 1], [], []>} : vector<55x256xbf16>, vector<256x128xbf16>, vector<55x128xf32> -> vector<55x128xf32>
    %72 = arith.addf %66, %71 : vector<55x128xf32>
    %c11_46 = arith.constant 11 : index
    %c0_47 = arith.constant 0 : index
    %73 = vector.load %arg15[%c11_46, %c0_47] : memref<72x256xf32, #tpu.memory_space<vmem>>, vector<55x256xf32>
    %74 = arith.truncf %73 : vector<55x256xf32> to vector<55x256xbf16>
    %c2_48 = arith.constant 2 : index
    %c0_49 = arith.constant 0 : index
    %c0_50 = arith.constant 0 : index
    %75 = vector.load %arg4[%c2_48, %c0_49, %c0_50] : memref<4x256x128xbf16, #tpu.memory_space<vmem>>, vector<1x256x128xbf16>
    %76 = vector.shape_cast %75 : vector<1x256x128xbf16> to vector<256x128xbf16>
    %cst_51 = arith.constant dense<0.000000e+00> : vector<55x128xf32>
    %77 = tpu.matmul %74, %76, %cst_51 {dimension_numbers = #tpu.dot_dimension_numbers<[1], [0], [0], [1], [0, 0, 1, 1], [], []>} : vector<55x256xbf16>, vector<256x128xbf16>, vector<55x128xf32> -> vector<55x128xf32>
    %78 = arith.addf %72, %77 : vector<55x128xf32>
    %c12_52 = arith.constant 12 : index
    %c0_53 = arith.constant 0 : index
    %79 = vector.load %arg15[%c12_52, %c0_53] : memref<72x256xf32, #tpu.memory_space<vmem>>, vector<55x256xf32>
    %80 = arith.truncf %79 : vector<55x256xf32> to vector<55x256xbf16>
    %c3_54 = arith.constant 3 : index
    %c0_55 = arith.constant 0 : index
    %c0_56 = arith.constant 0 : index
    %81 = vector.load %arg4[%c3_54, %c0_55, %c0_56] : memref<4x256x128xbf16, #tpu.memory_space<vmem>>, vector<1x256x128xbf16>
    %82 = vector.shape_cast %81 : vector<1x256x128xbf16> to vector<256x128xbf16>
    %cst_57 = arith.constant dense<0.000000e+00> : vector<55x128xf32>
    %83 = tpu.matmul %80, %82, %cst_57 {dimension_numbers = #tpu.dot_dimension_numbers<[1], [0], [0], [1], [0, 0, 1, 1], [], []>} : vector<55x256xbf16>, vector<256x128xbf16>, vector<55x128xf32> -> vector<55x128xf32>
    %84 = arith.addf %78, %83 : vector<55x128xf32>
    %c0_58 = arith.constant 0 : index
    %c0_59 = arith.constant 0 : index
    %85 = vector.load %arg5[%c0_58, %c0_59] : memref<1x128xf32, #tpu.memory_space<vmem>>, vector<1x128xf32>
    %86 = vector.broadcast %85 : vector<1x128xf32> to vector<55x128xf32>
    %87 = arith.addf %84, %86 : vector<55x128xf32>
    %cst_60 = arith.constant 0.000000e+00 : f32
    %88 = vector.broadcast %cst_60 : f32 to vector<55x128xf32>
    %89 = arith.maximumf %87, %88 : vector<55x128xf32>
    %90 = vector.broadcast %20 : vector<55x1xf32> to vector<55x128xf32>
    %91 = arith.mulf %89, %90 : vector<55x128xf32>
    %cst_61 = arith.constant 0.000000e+00 : f32
    %92 = vector.broadcast %cst_61 : f32 to vector<72x128xf32>
    %c0_62 = arith.constant 0 : index
    %c0_63 = arith.constant 0 : index
    %93 = vector.load %arg16[%c0_62, %c0_63] : memref<72x128xf32, #tpu.memory_space<vmem>>, vector<72x128xf32>
    tpu.vector_store %arg16[%c0_62, %c0_63], %92 {strides = array<i32>} : memref<72x128xf32, #tpu.memory_space<vmem>>, vector<72x128xf32>,
    %c12_64 = arith.constant 12 : index
    %c0_65 = arith.constant 0 : index
    %94 = vector.load %arg16[%c12_64, %c0_65] : memref<72x128xf32, #tpu.memory_space<vmem>>, vector<55x128xf32>
    tpu.vector_store %arg16[%c12_64, %c0_65], %91 {strides = array<i32>} : memref<72x128xf32, #tpu.memory_space<vmem>>, vector<55x128xf32>,
    %cst_66 = arith.constant 0.000000e+00 : f32
    %95 = vector.broadcast %cst_66 : f32 to vector<55x64xf32>
    %c0_67 = arith.constant 0 : index
    %c0_68 = arith.constant 0 : index
    %96 = vector.load %arg16[%c0_67, %c0_68] : memref<72x128xf32, #tpu.memory_space<vmem>>, vector<55x128xf32>
    %97 = arith.truncf %96 : vector<55x128xf32> to vector<55x128xbf16>
    %c0_69 = arith.constant 0 : index
    %c0_70 = arith.constant 0 : index
    %c0_71 = arith.constant 0 : index
    %98 = vector.load %arg6[%c0_69, %c0_70, %c0_71] : memref<4x128x64xbf16, #tpu.memory_space<vmem>>, vector<1x128x64xbf16>
    %99 = vector.shape_cast %98 : vector<1x128x64xbf16> to vector<128x64xbf16>
    %cst_72 = arith.constant dense<0.000000e+00> : vector<55x64xf32>
    %100 = tpu.matmul %97, %99, %cst_72 {dimension_numbers = #tpu.dot_dimension_numbers<[1], [0], [0], [1], [0, 0, 1, 1], [], []>} : vector<55x128xbf16>, vector<128x64xbf16>, vector<55x64xf32> -> vector<55x64xf32>
    %101 = arith.addf %95, %100 : vector<55x64xf32>
    %c1_73 = arith.constant 1 : index
    %c0_74 = arith.constant 0 : index
    %102 = vector.load %arg16[%c1_73, %c0_74] : memref<72x128xf32, #tpu.memory_space<vmem>>, vector<55x128xf32>
    %103 = arith.truncf %102 : vector<55x128xf32> to vector<55x128xbf16>
    %c1_75 = arith.constant 1 : index
    %c0_76 = arith.constant 0 : index
    %c0_77 = arith.constant 0 : index
    %104 = vector.load %arg6[%c1_75, %c0_76, %c0_77] : memref<4x128x64xbf16, #tpu.memory_space<vmem>>, vector<1x128x64xbf16>
    %105 = vector.shape_cast %104 : vector<1x128x64xbf16> to vector<128x64xbf16>
    %cst_78 = arith.constant dense<0.000000e+00> : vector<55x64xf32>
    %106 = tpu.matmul %103, %105, %cst_78 {dimension_numbers = #tpu.dot_dimension_numbers<[1], [0], [0], [1], [0, 0, 1, 1], [], []>} : vector<55x128xbf16>, vector<128x64xbf16>, vector<55x64xf32> -> vector<55x64xf32>
    %107 = arith.addf %101, %106 : vector<55x64xf32>
    %c11_79 = arith.constant 11 : index
    %c0_80 = arith.constant 0 : index
    %108 = vector.load %arg16[%c11_79, %c0_80] : memref<72x128xf32, #tpu.memory_space<vmem>>, vector<55x128xf32>
    %109 = arith.truncf %108 : vector<55x128xf32> to vector<55x128xbf16>
    %c2_81 = arith.constant 2 : index
    %c0_82 = arith.constant 0 : index
    %c0_83 = arith.constant 0 : index
    %110 = vector.load %arg6[%c2_81, %c0_82, %c0_83] : memref<4x128x64xbf16, #tpu.memory_space<vmem>>, vector<1x128x64xbf16>
    %111 = vector.shape_cast %110 : vector<1x128x64xbf16> to vector<128x64xbf16>
    %cst_84 = arith.constant dense<0.000000e+00> : vector<55x64xf32>
    %112 = tpu.matmul %109, %111, %cst_84 {dimension_numbers = #tpu.dot_dimension_numbers<[1], [0], [0], [1], [0, 0, 1, 1], [], []>} : vector<55x128xbf16>, vector<128x64xbf16>, vector<55x64xf32> -> vector<55x64xf32>
    %113 = arith.addf %107, %112 : vector<55x64xf32>
    %c12_85 = arith.constant 12 : index
    %c0_86 = arith.constant 0 : index
    %114 = vector.load %arg16[%c12_85, %c0_86] : memref<72x128xf32, #tpu.memory_space<vmem>>, vector<55x128xf32>
    %115 = arith.truncf %114 : vector<55x128xf32> to vector<55x128xbf16>
    %c3_87 = arith.constant 3 : index
    %c0_88 = arith.constant 0 : index
    %c0_89 = arith.constant 0 : index
    %116 = vector.load %arg6[%c3_87, %c0_88, %c0_89] : memref<4x128x64xbf16, #tpu.memory_space<vmem>>, vector<1x128x64xbf16>
    %117 = vector.shape_cast %116 : vector<1x128x64xbf16> to vector<128x64xbf16>
    %cst_90 = arith.constant dense<0.000000e+00> : vector<55x64xf32>
    %118 = tpu.matmul %115, %117, %cst_90 {dimension_numbers = #tpu.dot_dimension_numbers<[1], [0], [0], [1], [0, 0, 1, 1], [], []>} : vector<55x128xbf16>, vector<128x64xbf16>, vector<55x64xf32> -> vector<55x64xf32>
    %119 = arith.addf %113, %118 : vector<55x64xf32>
    %c0_91 = arith.constant 0 : index
    %c0_92 = arith.constant 0 : index
    %120 = vector.load %arg7[%c0_91, %c0_92] : memref<1x64xf32, #tpu.memory_space<vmem>>, vector<1x64xf32>
    %121 = vector.broadcast %120 : vector<1x64xf32> to vector<55x64xf32>
    %122 = arith.addf %119, %121 : vector<55x64xf32>
    %cst_93 = arith.constant 0.000000e+00 : f32
    %123 = vector.broadcast %cst_93 : f32 to vector<55x64xf32>
    %124 = arith.maximumf %122, %123 : vector<55x64xf32>
    %125 = vector.broadcast %20 : vector<55x1xf32> to vector<55x64xf32>
    %126 = arith.mulf %124, %125 : vector<55x64xf32>
    %cst_94 = arith.constant 0.000000e+00 : f32
    %127 = vector.broadcast %cst_94 : f32 to vector<55x32xf32>
    %128 = vector.extract_strided_slice %126 {offsets = [0, 0], sizes = [55, 1], strides = [1, 1]} : vector<55x64xf32> to vector<55x1xf32>
    %c0_95 = arith.constant 0 : index
    %c0_96 = arith.constant 0 : index
    %c0_97 = arith.constant 0 : index
    %129 = vector.load %arg8[%c0_95, %c0_96, %c0_97] : memref<64x55x32xf32, #tpu.memory_space<vmem>>, vector<1x55x32xf32>
    %130 = vector.shape_cast %129 : vector<1x55x32xf32> to vector<55x32xf32>
    %131 = vector.broadcast %128 : vector<55x1xf32> to vector<55x32xf32>
    %132 = arith.mulf %131, %130 : vector<55x32xf32>
    %133 = arith.addf %127, %132 : vector<55x32xf32>
    %134 = vector.extract_strided_slice %126 {offsets = [0, 1], sizes = [55, 1], strides = [1, 1]} : vector<55x64xf32> to vector<55x1xf32>
    %c1_98 = arith.constant 1 : index
    %c0_99 = arith.constant 0 : index
    %c0_100 = arith.constant 0 : index
    %135 = vector.load %arg8[%c1_98, %c0_99, %c0_100] : memref<64x55x32xf32, #tpu.memory_space<vmem>>, vector<1x55x32xf32>
    %136 = vector.shape_cast %135 : vector<1x55x32xf32> to vector<55x32xf32>
    %137 = vector.broadcast %134 : vector<55x1xf32> to vector<55x32xf32>
    %138 = arith.mulf %137, %136 : vector<55x32xf32>
    %139 = arith.addf %133, %138 : vector<55x32xf32>
    %140 = vector.extract_strided_slice %126 {offsets = [0, 2], sizes = [55, 1], strides = [1, 1]} : vector<55x64xf32> to vector<55x1xf32>
    %c2_101 = arith.constant 2 : index
    %c0_102 = arith.constant 0 : index
    %c0_103 = arith.constant 0 : index
    %141 = vector.load %arg8[%c2_101, %c0_102, %c0_103] : memref<64x55x32xf32, #tpu.memory_space<vmem>>, vector<1x55x32xf32>
    %142 = vector.shape_cast %141 : vector<1x55x32xf32> to vector<55x32xf32>
    %143 = vector.broadcast %140 : vector<55x1xf32> to vector<55x32xf32>
    %144 = arith.mulf %143, %142 : vector<55x32xf32>
    %145 = arith.addf %139, %144 : vector<55x32xf32>
    %146 = vector.extract_strided_slice %126 {offsets = [0, 3], sizes = [55, 1], strides = [1, 1]} : vector<55x64xf32> to vector<55x1xf32>
    %c3_104 = arith.constant 3 : index
    %c0_105 = arith.constant 0 : index
    %c0_106 = arith.constant 0 : index
    %147 = vector.load %arg8[%c3_104, %c0_105, %c0_106] : memref<64x55x32xf32, #tpu.memory_space<vmem>>, vector<1x55x32xf32>
    %148 = vector.shape_cast %147 : vector<1x55x32xf32> to vector<55x32xf32>
    %149 = vector.broadcast %146 : vector<55x1xf32> to vector<55x32xf32>
    %150 = arith.mulf %149, %148 : vector<55x32xf32>
    %151 = arith.addf %145, %150 : vector<55x32xf32>
    %152 = vector.extract_strided_slice %126 {offsets = [0, 4], sizes = [55, 1], strides = [1, 1]} : vector<55x64xf32> to vector<55x1xf32>
    %c4 = arith.constant 4 : index
    %c0_107 = arith.constant 0 : index
    %c0_108 = arith.constant 0 : index
    %153 = vector.load %arg8[%c4, %c0_107, %c0_108] : memref<64x55x32xf32, #tpu.memory_space<vmem>>, vector<1x55x32xf32>
    %154 = vector.shape_cast %153 : vector<1x55x32xf32> to vector<55x32xf32>
    %155 = vector.broadcast %152 : vector<55x1xf32> to vector<55x32xf32>
    %156 = arith.mulf %155, %154 : vector<55x32xf32>
    %157 = arith.addf %151, %156 : vector<55x32xf32>
    %158 = vector.extract_strided_slice %126 {offsets = [0, 5], sizes = [55, 1], strides = [1, 1]} : vector<55x64xf32> to vector<55x1xf32>
    %c5 = arith.constant 5 : index
    %c0_109 = arith.constant 0 : index
    %c0_110 = arith.constant 0 : index
    %159 = vector.load %arg8[%c5, %c0_109, %c0_110] : memref<64x55x32xf32, #tpu.memory_space<vmem>>, vector<1x55x32xf32>
    %160 = vector.shape_cast %159 : vector<1x55x32xf32> to vector<55x32xf32>
    %161 = vector.broadcast %158 : vector<55x1xf32> to vector<55x32xf32>
    %162 = arith.mulf %161, %160 : vector<55x32xf32>
    %163 = arith.addf %157, %162 : vector<55x32xf32>
    %164 = vector.extract_strided_slice %126 {offsets = [0, 6], sizes = [55, 1], strides = [1, 1]} : vector<55x64xf32> to vector<55x1xf32>
    %c6 = arith.constant 6 : index
    %c0_111 = arith.constant 0 : index
    %c0_112 = arith.constant 0 : index
    %165 = vector.load %arg8[%c6, %c0_111, %c0_112] : memref<64x55x32xf32, #tpu.memory_space<vmem>>, vector<1x55x32xf32>
    %166 = vector.shape_cast %165 : vector<1x55x32xf32> to vector<55x32xf32>
    %167 = vector.broadcast %164 : vector<55x1xf32> to vector<55x32xf32>
    %168 = arith.mulf %167, %166 : vector<55x32xf32>
    %169 = arith.addf %163, %168 : vector<55x32xf32>
    %170 = vector.extract_strided_slice %126 {offsets = [0, 7], sizes = [55, 1], strides = [1, 1]} : vector<55x64xf32> to vector<55x1xf32>
    %c7 = arith.constant 7 : index
    %c0_113 = arith.constant 0 : index
    %c0_114 = arith.constant 0 : index
    %171 = vector.load %arg8[%c7, %c0_113, %c0_114] : memref<64x55x32xf32, #tpu.memory_space<vmem>>, vector<1x55x32xf32>
    %172 = vector.shape_cast %171 : vector<1x55x32xf32> to vector<55x32xf32>
    %173 = vector.broadcast %170 : vector<55x1xf32> to vector<55x32xf32>
    %174 = arith.mulf %173, %172 : vector<55x32xf32>
    %175 = arith.addf %169, %174 : vector<55x32xf32>
    %176 = vector.extract_strided_slice %126 {offsets = [0, 8], sizes = [55, 1], strides = [1, 1]} : vector<55x64xf32> to vector<55x1xf32>
    %c8 = arith.constant 8 : index
    %c0_115 = arith.constant 0 : index
    %c0_116 = arith.constant 0 : index
    %177 = vector.load %arg8[%c8, %c0_115, %c0_116] : memref<64x55x32xf32, #tpu.memory_space<vmem>>, vector<1x55x32xf32>
    %178 = vector.shape_cast %177 : vector<1x55x32xf32> to vector<55x32xf32>
    %179 = vector.broadcast %176 : vector<55x1xf32> to vector<55x32xf32>
    %180 = arith.mulf %179, %178 : vector<55x32xf32>
    %181 = arith.addf %175, %180 : vector<55x32xf32>
    %182 = vector.extract_strided_slice %126 {offsets = [0, 9], sizes = [55, 1], strides = [1, 1]} : vector<55x64xf32> to vector<55x1xf32>
    %c9 = arith.constant 9 : index
    %c0_117 = arith.constant 0 : index
    %c0_118 = arith.constant 0 : index
    %183 = vector.load %arg8[%c9, %c0_117, %c0_118] : memref<64x55x32xf32, #tpu.memory_space<vmem>>, vector<1x55x32xf32>
    %184 = vector.shape_cast %183 : vector<1x55x32xf32> to vector<55x32xf32>
    %185 = vector.broadcast %182 : vector<55x1xf32> to vector<55x32xf32>
    %186 = arith.mulf %185, %184 : vector<55x32xf32>
    %187 = arith.addf %181, %186 : vector<55x32xf32>
    %188 = vector.extract_strided_slice %126 {offsets = [0, 10], sizes = [55, 1], strides = [1, 1]} : vector<55x64xf32> to vector<55x1xf32>
    %c10 = arith.constant 10 : index
    %c0_119 = arith.constant 0 : index
    %c0_120 = arith.constant 0 : index
    %189 = vector.load %arg8[%c10, %c0_119, %c0_120] : memref<64x55x32xf32, #tpu.memory_space<vmem>>, vector<1x55x32xf32>
    %190 = vector.shape_cast %189 : vector<1x55x32xf32> to vector<55x32xf32>
    %191 = vector.broadcast %188 : vector<55x1xf32> to vector<55x32xf32>
    %192 = arith.mulf %191, %190 : vector<55x32xf32>
    %193 = arith.addf %187, %192 : vector<55x32xf32>
    %194 = vector.extract_strided_slice %126 {offsets = [0, 11], sizes = [55, 1], strides = [1, 1]} : vector<55x64xf32> to vector<55x1xf32>
    %c11_121 = arith.constant 11 : index
    %c0_122 = arith.constant 0 : index
    %c0_123 = arith.constant 0 : index
    %195 = vector.load %arg8[%c11_121, %c0_122, %c0_123] : memref<64x55x32xf32, #tpu.memory_space<vmem>>, vector<1x55x32xf32>
    %196 = vector.shape_cast %195 : vector<1x55x32xf32> to vector<55x32xf32>
    %197 = vector.broadcast %194 : vector<55x1xf32> to vector<55x32xf32>
    %198 = arith.mulf %197, %196 : vector<55x32xf32>
    %199 = arith.addf %193, %198 : vector<55x32xf32>
    %200 = vector.extract_strided_slice %126 {offsets = [0, 12], sizes = [55, 1], strides = [1, 1]} : vector<55x64xf32> to vector<55x1xf32>
    %c12_124 = arith.constant 12 : index
    %c0_125 = arith.constant 0 : index
    %c0_126 = arith.constant 0 : index
    %201 = vector.load %arg8[%c12_124, %c0_125, %c0_126] : memref<64x55x32xf32, #tpu.memory_space<vmem>>, vector<1x55x32xf32>
    %202 = vector.shape_cast %201 : vector<1x55x32xf32> to vector<55x32xf32>
    %203 = vector.broadcast %200 : vector<55x1xf32> to vector<55x32xf32>
    %204 = arith.mulf %203, %202 : vector<55x32xf32>
    %205 = arith.addf %199, %204 : vector<55x32xf32>
    %206 = vector.extract_strided_slice %126 {offsets = [0, 13], sizes = [55, 1], strides = [1, 1]} : vector<55x64xf32> to vector<55x1xf32>
    %c13 = arith.constant 13 : index
    %c0_127 = arith.constant 0 : index
    %c0_128 = arith.constant 0 : index
    %207 = vector.load %arg8[%c13, %c0_127, %c0_128] : memref<64x55x32xf32, #tpu.memory_space<vmem>>, vector<1x55x32xf32>
    %208 = vector.shape_cast %207 : vector<1x55x32xf32> to vector<55x32xf32>
    %209 = vector.broadcast %206 : vector<55x1xf32> to vector<55x32xf32>
    %210 = arith.mulf %209, %208 : vector<55x32xf32>
    %211 = arith.addf %205, %210 : vector<55x32xf32>
    %212 = vector.extract_strided_slice %126 {offsets = [0, 14], sizes = [55, 1], strides = [1, 1]} : vector<55x64xf32> to vector<55x1xf32>
    %c14 = arith.constant 14 : index
    %c0_129 = arith.constant 0 : index
    %c0_130 = arith.constant 0 : index
    %213 = vector.load %arg8[%c14, %c0_129, %c0_130] : memref<64x55x32xf32, #tpu.memory_space<vmem>>, vector<1x55x32xf32>
    %214 = vector.shape_cast %213 : vector<1x55x32xf32> to vector<55x32xf32>
    %215 = vector.broadcast %212 : vector<55x1xf32> to vector<55x32xf32>
    %216 = arith.mulf %215, %214 : vector<55x32xf32>
    %217 = arith.addf %211, %216 : vector<55x32xf32>
    %218 = vector.extract_strided_slice %126 {offsets = [0, 15], sizes = [55, 1], strides = [1, 1]} : vector<55x64xf32> to vector<55x1xf32>
    %c15 = arith.constant 15 : index
    %c0_131 = arith.constant 0 : index
    %c0_132 = arith.constant 0 : index
    %219 = vector.load %arg8[%c15, %c0_131, %c0_132] : memref<64x55x32xf32, #tpu.memory_space<vmem>>, vector<1x55x32xf32>
    %220 = vector.shape_cast %219 : vector<1x55x32xf32> to vector<55x32xf32>
    %221 = vector.broadcast %218 : vector<55x1xf32> to vector<55x32xf32>
    %222 = arith.mulf %221, %220 : vector<55x32xf32>
    %223 = arith.addf %217, %222 : vector<55x32xf32>
    %224 = vector.extract_strided_slice %126 {offsets = [0, 16], sizes = [55, 1], strides = [1, 1]} : vector<55x64xf32> to vector<55x1xf32>
    %c16 = arith.constant 16 : index
    %c0_133 = arith.constant 0 : index
    %c0_134 = arith.constant 0 : index
    %225 = vector.load %arg8[%c16, %c0_133, %c0_134] : memref<64x55x32xf32, #tpu.memory_space<vmem>>, vector<1x55x32xf32>
    %226 = vector.shape_cast %225 : vector<1x55x32xf32> to vector<55x32xf32>
    %227 = vector.broadcast %224 : vector<55x1xf32> to vector<55x32xf32>
    %228 = arith.mulf %227, %226 : vector<55x32xf32>
    %229 = arith.addf %223, %228 : vector<55x32xf32>
    %230 = vector.extract_strided_slice %126 {offsets = [0, 17], sizes = [55, 1], strides = [1, 1]} : vector<55x64xf32> to vector<55x1xf32>
    %c17 = arith.constant 17 : index
    %c0_135 = arith.constant 0 : index
    %c0_136 = arith.constant 0 : index
    %231 = vector.load %arg8[%c17, %c0_135, %c0_136] : memref<64x55x32xf32, #tpu.memory_space<vmem>>, vector<1x55x32xf32>
    %232 = vector.shape_cast %231 : vector<1x55x32xf32> to vector<55x32xf32>
    %233 = vector.broadcast %230 : vector<55x1xf32> to vector<55x32xf32>
    %234 = arith.mulf %233, %232 : vector<55x32xf32>
    %235 = arith.addf %229, %234 : vector<55x32xf32>
    %236 = vector.extract_strided_slice %126 {offsets = [0, 18], sizes = [55, 1], strides = [1, 1]} : vector<55x64xf32> to vector<55x1xf32>
    %c18 = arith.constant 18 : index
    %c0_137 = arith.constant 0 : index
    %c0_138 = arith.constant 0 : index
    %237 = vector.load %arg8[%c18, %c0_137, %c0_138] : memref<64x55x32xf32, #tpu.memory_space<vmem>>, vector<1x55x32xf32>
    %238 = vector.shape_cast %237 : vector<1x55x32xf32> to vector<55x32xf32>
    %239 = vector.broadcast %236 : vector<55x1xf32> to vector<55x32xf32>
    %240 = arith.mulf %239, %238 : vector<55x32xf32>
    %241 = arith.addf %235, %240 : vector<55x32xf32>
    %242 = vector.extract_strided_slice %126 {offsets = [0, 19], sizes = [55, 1], strides = [1, 1]} : vector<55x64xf32> to vector<55x1xf32>
    %c19 = arith.constant 19 : index
    %c0_139 = arith.constant 0 : index
    %c0_140 = arith.constant 0 : index
    %243 = vector.load %arg8[%c19, %c0_139, %c0_140] : memref<64x55x32xf32, #tpu.memory_space<vmem>>, vector<1x55x32xf32>
    %244 = vector.shape_cast %243 : vector<1x55x32xf32> to vector<55x32xf32>
    %245 = vector.broadcast %242 : vector<55x1xf32> to vector<55x32xf32>
    %246 = arith.mulf %245, %244 : vector<55x32xf32>
    %247 = arith.addf %241, %246 : vector<55x32xf32>
    %248 = vector.extract_strided_slice %126 {offsets = [0, 20], sizes = [55, 1], strides = [1, 1]} : vector<55x64xf32> to vector<55x1xf32>
    %c20 = arith.constant 20 : index
    %c0_141 = arith.constant 0 : index
    %c0_142 = arith.constant 0 : index
    %249 = vector.load %arg8[%c20, %c0_141, %c0_142] : memref<64x55x32xf32, #tpu.memory_space<vmem>>, vector<1x55x32xf32>
    %250 = vector.shape_cast %249 : vector<1x55x32xf32> to vector<55x32xf32>
    %251 = vector.broadcast %248 : vector<55x1xf32> to vector<55x32xf32>
    %252 = arith.mulf %251, %250 : vector<55x32xf32>
    %253 = arith.addf %247, %252 : vector<55x32xf32>
    %254 = vector.extract_strided_slice %126 {offsets = [0, 21], sizes = [55, 1], strides = [1, 1]} : vector<55x64xf32> to vector<55x1xf32>
    %c21 = arith.constant 21 : index
    %c0_143 = arith.constant 0 : index
    %c0_144 = arith.constant 0 : index
    %255 = vector.load %arg8[%c21, %c0_143, %c0_144] : memref<64x55x32xf32, #tpu.memory_space<vmem>>, vector<1x55x32xf32>
    %256 = vector.shape_cast %255 : vector<1x55x32xf32> to vector<55x32xf32>
    %257 = vector.broadcast %254 : vector<55x1xf32> to vector<55x32xf32>
    %258 = arith.mulf %257, %256 : vector<55x32xf32>
    %259 = arith.addf %253, %258 : vector<55x32xf32>
    %260 = vector.extract_strided_slice %126 {offsets = [0, 22], sizes = [55, 1], strides = [1, 1]} : vector<55x64xf32> to vector<55x1xf32>
    %c22 = arith.constant 22 : index
    %c0_145 = arith.constant 0 : index
    %c0_146 = arith.constant 0 : index
    %261 = vector.load %arg8[%c22, %c0_145, %c0_146] : memref<64x55x32xf32, #tpu.memory_space<vmem>>, vector<1x55x32xf32>
    %262 = vector.shape_cast %261 : vector<1x55x32xf32> to vector<55x32xf32>
    %263 = vector.broadcast %260 : vector<55x1xf32> to vector<55x32xf32>
    %264 = arith.mulf %263, %262 : vector<55x32xf32>
    %265 = arith.addf %259, %264 : vector<55x32xf32>
    %266 = vector.extract_strided_slice %126 {offsets = [0, 23], sizes = [55, 1], strides = [1, 1]} : vector<55x64xf32> to vector<55x1xf32>
    %c23 = arith.constant 23 : index
    %c0_147 = arith.constant 0 : index
    %c0_148 = arith.constant 0 : index
    %267 = vector.load %arg8[%c23, %c0_147, %c0_148] : memref<64x55x32xf32, #tpu.memory_space<vmem>>, vector<1x55x32xf32>
    %268 = vector.shape_cast %267 : vector<1x55x32xf32> to vector<55x32xf32>
    %269 = vector.broadcast %266 : vector<55x1xf32> to vector<55x32xf32>
    %270 = arith.mulf %269, %268 : vector<55x32xf32>
    %271 = arith.addf %265, %270 : vector<55x32xf32>
    %272 = vector.extract_strided_slice %126 {offsets = [0, 24], sizes = [55, 1], strides = [1, 1]} : vector<55x64xf32> to vector<55x1xf32>
    %c24 = arith.constant 24 : index
    %c0_149 = arith.constant 0 : index
    %c0_150 = arith.constant 0 : index
    %273 = vector.load %arg8[%c24, %c0_149, %c0_150] : memref<64x55x32xf32, #tpu.memory_space<vmem>>, vector<1x55x32xf32>
    %274 = vector.shape_cast %273 : vector<1x55x32xf32> to vector<55x32xf32>
    %275 = vector.broadcast %272 : vector<55x1xf32> to vector<55x32xf32>
    %276 = arith.mulf %275, %274 : vector<55x32xf32>
    %277 = arith.addf %271, %276 : vector<55x32xf32>
    %278 = vector.extract_strided_slice %126 {offsets = [0, 25], sizes = [55, 1], strides = [1, 1]} : vector<55x64xf32> to vector<55x1xf32>
    %c25 = arith.constant 25 : index
    %c0_151 = arith.constant 0 : index
    %c0_152 = arith.constant 0 : index
    %279 = vector.load %arg8[%c25, %c0_151, %c0_152] : memref<64x55x32xf32, #tpu.memory_space<vmem>>, vector<1x55x32xf32>
    %280 = vector.shape_cast %279 : vector<1x55x32xf32> to vector<55x32xf32>
    %281 = vector.broadcast %278 : vector<55x1xf32> to vector<55x32xf32>
    %282 = arith.mulf %281, %280 : vector<55x32xf32>
    %283 = arith.addf %277, %282 : vector<55x32xf32>
    %284 = vector.extract_strided_slice %126 {offsets = [0, 26], sizes = [55, 1], strides = [1, 1]} : vector<55x64xf32> to vector<55x1xf32>
    %c26 = arith.constant 26 : index
    %c0_153 = arith.constant 0 : index
    %c0_154 = arith.constant 0 : index
    %285 = vector.load %arg8[%c26, %c0_153, %c0_154] : memref<64x55x32xf32, #tpu.memory_space<vmem>>, vector<1x55x32xf32>
    %286 = vector.shape_cast %285 : vector<1x55x32xf32> to vector<55x32xf32>
    %287 = vector.broadcast %284 : vector<55x1xf32> to vector<55x32xf32>
    %288 = arith.mulf %287, %286 : vector<55x32xf32>
    %289 = arith.addf %283, %288 : vector<55x32xf32>
    %290 = vector.extract_strided_slice %126 {offsets = [0, 27], sizes = [55, 1], strides = [1, 1]} : vector<55x64xf32> to vector<55x1xf32>
    %c27 = arith.constant 27 : index
    %c0_155 = arith.constant 0 : index
    %c0_156 = arith.constant 0 : index
    %291 = vector.load %arg8[%c27, %c0_155, %c0_156] : memref<64x55x32xf32, #tpu.memory_space<vmem>>, vector<1x55x32xf32>
    %292 = vector.shape_cast %291 : vector<1x55x32xf32> to vector<55x32xf32>
    %293 = vector.broadcast %290 : vector<55x1xf32> to vector<55x32xf32>
    %294 = arith.mulf %293, %292 : vector<55x32xf32>
    %295 = arith.addf %289, %294 : vector<55x32xf32>
    %296 = vector.extract_strided_slice %126 {offsets = [0, 28], sizes = [55, 1], strides = [1, 1]} : vector<55x64xf32> to vector<55x1xf32>
    %c28 = arith.constant 28 : index
    %c0_157 = arith.constant 0 : index
    %c0_158 = arith.constant 0 : index
    %297 = vector.load %arg8[%c28, %c0_157, %c0_158] : memref<64x55x32xf32, #tpu.memory_space<vmem>>, vector<1x55x32xf32>
    %298 = vector.shape_cast %297 : vector<1x55x32xf32> to vector<55x32xf32>
    %299 = vector.broadcast %296 : vector<55x1xf32> to vector<55x32xf32>
    %300 = arith.mulf %299, %298 : vector<55x32xf32>
    %301 = arith.addf %295, %300 : vector<55x32xf32>
    %302 = vector.extract_strided_slice %126 {offsets = [0, 29], sizes = [55, 1], strides = [1, 1]} : vector<55x64xf32> to vector<55x1xf32>
    %c29 = arith.constant 29 : index
    %c0_159 = arith.constant 0 : index
    %c0_160 = arith.constant 0 : index
    %303 = vector.load %arg8[%c29, %c0_159, %c0_160] : memref<64x55x32xf32, #tpu.memory_space<vmem>>, vector<1x55x32xf32>
    %304 = vector.shape_cast %303 : vector<1x55x32xf32> to vector<55x32xf32>
    %305 = vector.broadcast %302 : vector<55x1xf32> to vector<55x32xf32>
    %306 = arith.mulf %305, %304 : vector<55x32xf32>
    %307 = arith.addf %301, %306 : vector<55x32xf32>
    %308 = vector.extract_strided_slice %126 {offsets = [0, 30], sizes = [55, 1], strides = [1, 1]} : vector<55x64xf32> to vector<55x1xf32>
    %c30 = arith.constant 30 : index
    %c0_161 = arith.constant 0 : index
    %c0_162 = arith.constant 0 : index
    %309 = vector.load %arg8[%c30, %c0_161, %c0_162] : memref<64x55x32xf32, #tpu.memory_space<vmem>>, vector<1x55x32xf32>
    %310 = vector.shape_cast %309 : vector<1x55x32xf32> to vector<55x32xf32>
    %311 = vector.broadcast %308 : vector<55x1xf32> to vector<55x32xf32>
    %312 = arith.mulf %311, %310 : vector<55x32xf32>
    %313 = arith.addf %307, %312 : vector<55x32xf32>
    %314 = vector.extract_strided_slice %126 {offsets = [0, 31], sizes = [55, 1], strides = [1, 1]} : vector<55x64xf32> to vector<55x1xf32>
    %c31 = arith.constant 31 : index
    %c0_163 = arith.constant 0 : index
    %c0_164 = arith.constant 0 : index
    %315 = vector.load %arg8[%c31, %c0_163, %c0_164] : memref<64x55x32xf32, #tpu.memory_space<vmem>>, vector<1x55x32xf32>
    %316 = vector.shape_cast %315 : vector<1x55x32xf32> to vector<55x32xf32>
    %317 = vector.broadcast %314 : vector<55x1xf32> to vector<55x32xf32>
    %318 = arith.mulf %317, %316 : vector<55x32xf32>
    %319 = arith.addf %313, %318 : vector<55x32xf32>
    %320 = vector.extract_strided_slice %126 {offsets = [0, 32], sizes = [55, 1], strides = [1, 1]} : vector<55x64xf32> to vector<55x1xf32>
    %c32 = arith.constant 32 : index
    %c0_165 = arith.constant 0 : index
    %c0_166 = arith.constant 0 : index
    %321 = vector.load %arg8[%c32, %c0_165, %c0_166] : memref<64x55x32xf32, #tpu.memory_space<vmem>>, vector<1x55x32xf32>
    %322 = vector.shape_cast %321 : vector<1x55x32xf32> to vector<55x32xf32>
    %323 = vector.broadcast %320 : vector<55x1xf32> to vector<55x32xf32>
    %324 = arith.mulf %323, %322 : vector<55x32xf32>
    %325 = arith.addf %319, %324 : vector<55x32xf32>
    %326 = vector.extract_strided_slice %126 {offsets = [0, 33], sizes = [55, 1], strides = [1, 1]} : vector<55x64xf32> to vector<55x1xf32>
    %c33 = arith.constant 33 : index
    %c0_167 = arith.constant 0 : index
    %c0_168 = arith.constant 0 : index
    %327 = vector.load %arg8[%c33, %c0_167, %c0_168] : memref<64x55x32xf32, #tpu.memory_space<vmem>>, vector<1x55x32xf32>
    %328 = vector.shape_cast %327 : vector<1x55x32xf32> to vector<55x32xf32>
    %329 = vector.broadcast %326 : vector<55x1xf32> to vector<55x32xf32>
    %330 = arith.mulf %329, %328 : vector<55x32xf32>
    %331 = arith.addf %325, %330 : vector<55x32xf32>
    %332 = vector.extract_strided_slice %126 {offsets = [0, 34], sizes = [55, 1], strides = [1, 1]} : vector<55x64xf32> to vector<55x1xf32>
    %c34 = arith.constant 34 : index
    %c0_169 = arith.constant 0 : index
    %c0_170 = arith.constant 0 : index
    %333 = vector.load %arg8[%c34, %c0_169, %c0_170] : memref<64x55x32xf32, #tpu.memory_space<vmem>>, vector<1x55x32xf32>
    %334 = vector.shape_cast %333 : vector<1x55x32xf32> to vector<55x32xf32>
    %335 = vector.broadcast %332 : vector<55x1xf32> to vector<55x32xf32>
    %336 = arith.mulf %335, %334 : vector<55x32xf32>
    %337 = arith.addf %331, %336 : vector<55x32xf32>
    %338 = vector.extract_strided_slice %126 {offsets = [0, 35], sizes = [55, 1], strides = [1, 1]} : vector<55x64xf32> to vector<55x1xf32>
    %c35 = arith.constant 35 : index
    %c0_171 = arith.constant 0 : index
    %c0_172 = arith.constant 0 : index
    %339 = vector.load %arg8[%c35, %c0_171, %c0_172] : memref<64x55x32xf32, #tpu.memory_space<vmem>>, vector<1x55x32xf32>
    %340 = vector.shape_cast %339 : vector<1x55x32xf32> to vector<55x32xf32>
    %341 = vector.broadcast %338 : vector<55x1xf32> to vector<55x32xf32>
    %342 = arith.mulf %341, %340 : vector<55x32xf32>
    %343 = arith.addf %337, %342 : vector<55x32xf32>
    %344 = vector.extract_strided_slice %126 {offsets = [0, 36], sizes = [55, 1], strides = [1, 1]} : vector<55x64xf32> to vector<55x1xf32>
    %c36 = arith.constant 36 : index
    %c0_173 = arith.constant 0 : index
    %c0_174 = arith.constant 0 : index
    %345 = vector.load %arg8[%c36, %c0_173, %c0_174] : memref<64x55x32xf32, #tpu.memory_space<vmem>>, vector<1x55x32xf32>
    %346 = vector.shape_cast %345 : vector<1x55x32xf32> to vector<55x32xf32>
    %347 = vector.broadcast %344 : vector<55x1xf32> to vector<55x32xf32>
    %348 = arith.mulf %347, %346 : vector<55x32xf32>
    %349 = arith.addf %343, %348 : vector<55x32xf32>
    %350 = vector.extract_strided_slice %126 {offsets = [0, 37], sizes = [55, 1], strides = [1, 1]} : vector<55x64xf32> to vector<55x1xf32>
    %c37 = arith.constant 37 : index
    %c0_175 = arith.constant 0 : index
    %c0_176 = arith.constant 0 : index
    %351 = vector.load %arg8[%c37, %c0_175, %c0_176] : memref<64x55x32xf32, #tpu.memory_space<vmem>>, vector<1x55x32xf32>
    %352 = vector.shape_cast %351 : vector<1x55x32xf32> to vector<55x32xf32>
    %353 = vector.broadcast %350 : vector<55x1xf32> to vector<55x32xf32>
    %354 = arith.mulf %353, %352 : vector<55x32xf32>
    %355 = arith.addf %349, %354 : vector<55x32xf32>
    %356 = vector.extract_strided_slice %126 {offsets = [0, 38], sizes = [55, 1], strides = [1, 1]} : vector<55x64xf32> to vector<55x1xf32>
    %c38 = arith.constant 38 : index
    %c0_177 = arith.constant 0 : index
    %c0_178 = arith.constant 0 : index
    %357 = vector.load %arg8[%c38, %c0_177, %c0_178] : memref<64x55x32xf32, #tpu.memory_space<vmem>>, vector<1x55x32xf32>
    %358 = vector.shape_cast %357 : vector<1x55x32xf32> to vector<55x32xf32>
    %359 = vector.broadcast %356 : vector<55x1xf32> to vector<55x32xf32>
    %360 = arith.mulf %359, %358 : vector<55x32xf32>
    %361 = arith.addf %355, %360 : vector<55x32xf32>
    %362 = vector.extract_strided_slice %126 {offsets = [0, 39], sizes = [55, 1], strides = [1, 1]} : vector<55x64xf32> to vector<55x1xf32>
    %c39 = arith.constant 39 : index
    %c0_179 = arith.constant 0 : index
    %c0_180 = arith.constant 0 : index
    %363 = vector.load %arg8[%c39, %c0_179, %c0_180] : memref<64x55x32xf32, #tpu.memory_space<vmem>>, vector<1x55x32xf32>
    %364 = vector.shape_cast %363 : vector<1x55x32xf32> to vector<55x32xf32>
    %365 = vector.broadcast %362 : vector<55x1xf32> to vector<55x32xf32>
    %366 = arith.mulf %365, %364 : vector<55x32xf32>
    %367 = arith.addf %361, %366 : vector<55x32xf32>
    %368 = vector.extract_strided_slice %126 {offsets = [0, 40], sizes = [55, 1], strides = [1, 1]} : vector<55x64xf32> to vector<55x1xf32>
    %c40 = arith.constant 40 : index
    %c0_181 = arith.constant 0 : index
    %c0_182 = arith.constant 0 : index
    %369 = vector.load %arg8[%c40, %c0_181, %c0_182] : memref<64x55x32xf32, #tpu.memory_space<vmem>>, vector<1x55x32xf32>
    %370 = vector.shape_cast %369 : vector<1x55x32xf32> to vector<55x32xf32>
    %371 = vector.broadcast %368 : vector<55x1xf32> to vector<55x32xf32>
    %372 = arith.mulf %371, %370 : vector<55x32xf32>
    %373 = arith.addf %367, %372 : vector<55x32xf32>
    %374 = vector.extract_strided_slice %126 {offsets = [0, 41], sizes = [55, 1], strides = [1, 1]} : vector<55x64xf32> to vector<55x1xf32>
    %c41 = arith.constant 41 : index
    %c0_183 = arith.constant 0 : index
    %c0_184 = arith.constant 0 : index
    %375 = vector.load %arg8[%c41, %c0_183, %c0_184] : memref<64x55x32xf32, #tpu.memory_space<vmem>>, vector<1x55x32xf32>
    %376 = vector.shape_cast %375 : vector<1x55x32xf32> to vector<55x32xf32>
    %377 = vector.broadcast %374 : vector<55x1xf32> to vector<55x32xf32>
    %378 = arith.mulf %377, %376 : vector<55x32xf32>
    %379 = arith.addf %373, %378 : vector<55x32xf32>
    %380 = vector.extract_strided_slice %126 {offsets = [0, 42], sizes = [55, 1], strides = [1, 1]} : vector<55x64xf32> to vector<55x1xf32>
    %c42 = arith.constant 42 : index
    %c0_185 = arith.constant 0 : index
    %c0_186 = arith.constant 0 : index
    %381 = vector.load %arg8[%c42, %c0_185, %c0_186] : memref<64x55x32xf32, #tpu.memory_space<vmem>>, vector<1x55x32xf32>
    %382 = vector.shape_cast %381 : vector<1x55x32xf32> to vector<55x32xf32>
    %383 = vector.broadcast %380 : vector<55x1xf32> to vector<55x32xf32>
    %384 = arith.mulf %383, %382 : vector<55x32xf32>
    %385 = arith.addf %379, %384 : vector<55x32xf32>
    %386 = vector.extract_strided_slice %126 {offsets = [0, 43], sizes = [55, 1], strides = [1, 1]} : vector<55x64xf32> to vector<55x1xf32>
    %c43 = arith.constant 43 : index
    %c0_187 = arith.constant 0 : index
    %c0_188 = arith.constant 0 : index
    %387 = vector.load %arg8[%c43, %c0_187, %c0_188] : memref<64x55x32xf32, #tpu.memory_space<vmem>>, vector<1x55x32xf32>
    %388 = vector.shape_cast %387 : vector<1x55x32xf32> to vector<55x32xf32>
    %389 = vector.broadcast %386 : vector<55x1xf32> to vector<55x32xf32>
    %390 = arith.mulf %389, %388 : vector<55x32xf32>
    %391 = arith.addf %385, %390 : vector<55x32xf32>
    %392 = vector.extract_strided_slice %126 {offsets = [0, 44], sizes = [55, 1], strides = [1, 1]} : vector<55x64xf32> to vector<55x1xf32>
    %c44 = arith.constant 44 : index
    %c0_189 = arith.constant 0 : index
    %c0_190 = arith.constant 0 : index
    %393 = vector.load %arg8[%c44, %c0_189, %c0_190] : memref<64x55x32xf32, #tpu.memory_space<vmem>>, vector<1x55x32xf32>
    %394 = vector.shape_cast %393 : vector<1x55x32xf32> to vector<55x32xf32>
    %395 = vector.broadcast %392 : vector<55x1xf32> to vector<55x32xf32>
    %396 = arith.mulf %395, %394 : vector<55x32xf32>
    %397 = arith.addf %391, %396 : vector<55x32xf32>
    %398 = vector.extract_strided_slice %126 {offsets = [0, 45], sizes = [55, 1], strides = [1, 1]} : vector<55x64xf32> to vector<55x1xf32>
    %c45 = arith.constant 45 : index
    %c0_191 = arith.constant 0 : index
    %c0_192 = arith.constant 0 : index
    %399 = vector.load %arg8[%c45, %c0_191, %c0_192] : memref<64x55x32xf32, #tpu.memory_space<vmem>>, vector<1x55x32xf32>
    %400 = vector.shape_cast %399 : vector<1x55x32xf32> to vector<55x32xf32>
    %401 = vector.broadcast %398 : vector<55x1xf32> to vector<55x32xf32>
    %402 = arith.mulf %401, %400 : vector<55x32xf32>
    %403 = arith.addf %397, %402 : vector<55x32xf32>
    %404 = vector.extract_strided_slice %126 {offsets = [0, 46], sizes = [55, 1], strides = [1, 1]} : vector<55x64xf32> to vector<55x1xf32>
    %c46 = arith.constant 46 : index
    %c0_193 = arith.constant 0 : index
    %c0_194 = arith.constant 0 : index
    %405 = vector.load %arg8[%c46, %c0_193, %c0_194] : memref<64x55x32xf32, #tpu.memory_space<vmem>>, vector<1x55x32xf32>
    %406 = vector.shape_cast %405 : vector<1x55x32xf32> to vector<55x32xf32>
    %407 = vector.broadcast %404 : vector<55x1xf32> to vector<55x32xf32>
    %408 = arith.mulf %407, %406 : vector<55x32xf32>
    %409 = arith.addf %403, %408 : vector<55x32xf32>
    %410 = vector.extract_strided_slice %126 {offsets = [0, 47], sizes = [55, 1], strides = [1, 1]} : vector<55x64xf32> to vector<55x1xf32>
    %c47 = arith.constant 47 : index
    %c0_195 = arith.constant 0 : index
    %c0_196 = arith.constant 0 : index
    %411 = vector.load %arg8[%c47, %c0_195, %c0_196] : memref<64x55x32xf32, #tpu.memory_space<vmem>>, vector<1x55x32xf32>
    %412 = vector.shape_cast %411 : vector<1x55x32xf32> to vector<55x32xf32>
    %413 = vector.broadcast %410 : vector<55x1xf32> to vector<55x32xf32>
    %414 = arith.mulf %413, %412 : vector<55x32xf32>
    %415 = arith.addf %409, %414 : vector<55x32xf32>
    %416 = vector.extract_strided_slice %126 {offsets = [0, 48], sizes = [55, 1], strides = [1, 1]} : vector<55x64xf32> to vector<55x1xf32>
    %c48 = arith.constant 48 : index
    %c0_197 = arith.constant 0 : index
    %c0_198 = arith.constant 0 : index
    %417 = vector.load %arg8[%c48, %c0_197, %c0_198] : memref<64x55x32xf32, #tpu.memory_space<vmem>>, vector<1x55x32xf32>
    %418 = vector.shape_cast %417 : vector<1x55x32xf32> to vector<55x32xf32>
    %419 = vector.broadcast %416 : vector<55x1xf32> to vector<55x32xf32>
    %420 = arith.mulf %419, %418 : vector<55x32xf32>
    %421 = arith.addf %415, %420 : vector<55x32xf32>
    %422 = vector.extract_strided_slice %126 {offsets = [0, 49], sizes = [55, 1], strides = [1, 1]} : vector<55x64xf32> to vector<55x1xf32>
    %c49 = arith.constant 49 : index
    %c0_199 = arith.constant 0 : index
    %c0_200 = arith.constant 0 : index
    %423 = vector.load %arg8[%c49, %c0_199, %c0_200] : memref<64x55x32xf32, #tpu.memory_space<vmem>>, vector<1x55x32xf32>
    %424 = vector.shape_cast %423 : vector<1x55x32xf32> to vector<55x32xf32>
    %425 = vector.broadcast %422 : vector<55x1xf32> to vector<55x32xf32>
    %426 = arith.mulf %425, %424 : vector<55x32xf32>
    %427 = arith.addf %421, %426 : vector<55x32xf32>
    %428 = vector.extract_strided_slice %126 {offsets = [0, 50], sizes = [55, 1], strides = [1, 1]} : vector<55x64xf32> to vector<55x1xf32>
    %c50 = arith.constant 50 : index
    %c0_201 = arith.constant 0 : index
    %c0_202 = arith.constant 0 : index
    %429 = vector.load %arg8[%c50, %c0_201, %c0_202] : memref<64x55x32xf32, #tpu.memory_space<vmem>>, vector<1x55x32xf32>
    %430 = vector.shape_cast %429 : vector<1x55x32xf32> to vector<55x32xf32>
    %431 = vector.broadcast %428 : vector<55x1xf32> to vector<55x32xf32>
    %432 = arith.mulf %431, %430 : vector<55x32xf32>
    %433 = arith.addf %427, %432 : vector<55x32xf32>
    %434 = vector.extract_strided_slice %126 {offsets = [0, 51], sizes = [55, 1], strides = [1, 1]} : vector<55x64xf32> to vector<55x1xf32>
    %c51 = arith.constant 51 : index
    %c0_203 = arith.constant 0 : index
    %c0_204 = arith.constant 0 : index
    %435 = vector.load %arg8[%c51, %c0_203, %c0_204] : memref<64x55x32xf32, #tpu.memory_space<vmem>>, vector<1x55x32xf32>
    %436 = vector.shape_cast %435 : vector<1x55x32xf32> to vector<55x32xf32>
    %437 = vector.broadcast %434 : vector<55x1xf32> to vector<55x32xf32>
    %438 = arith.mulf %437, %436 : vector<55x32xf32>
    %439 = arith.addf %433, %438 : vector<55x32xf32>
    %440 = vector.extract_strided_slice %126 {offsets = [0, 52], sizes = [55, 1], strides = [1, 1]} : vector<55x64xf32> to vector<55x1xf32>
    %c52 = arith.constant 52 : index
    %c0_205 = arith.constant 0 : index
    %c0_206 = arith.constant 0 : index
    %441 = vector.load %arg8[%c52, %c0_205, %c0_206] : memref<64x55x32xf32, #tpu.memory_space<vmem>>, vector<1x55x32xf32>
    %442 = vector.shape_cast %441 : vector<1x55x32xf32> to vector<55x32xf32>
    %443 = vector.broadcast %440 : vector<55x1xf32> to vector<55x32xf32>
    %444 = arith.mulf %443, %442 : vector<55x32xf32>
    %445 = arith.addf %439, %444 : vector<55x32xf32>
    %446 = vector.extract_strided_slice %126 {offsets = [0, 53], sizes = [55, 1], strides = [1, 1]} : vector<55x64xf32> to vector<55x1xf32>
    %c53 = arith.constant 53 : index
    %c0_207 = arith.constant 0 : index
    %c0_208 = arith.constant 0 : index
    %447 = vector.load %arg8[%c53, %c0_207, %c0_208] : memref<64x55x32xf32, #tpu.memory_space<vmem>>, vector<1x55x32xf32>
    %448 = vector.shape_cast %447 : vector<1x55x32xf32> to vector<55x32xf32>
    %449 = vector.broadcast %446 : vector<55x1xf32> to vector<55x32xf32>
    %450 = arith.mulf %449, %448 : vector<55x32xf32>
    %451 = arith.addf %445, %450 : vector<55x32xf32>
    %452 = vector.extract_strided_slice %126 {offsets = [0, 54], sizes = [55, 1], strides = [1, 1]} : vector<55x64xf32> to vector<55x1xf32>
    %c54 = arith.constant 54 : index
    %c0_209 = arith.constant 0 : index
    %c0_210 = arith.constant 0 : index
    %453 = vector.load %arg8[%c54, %c0_209, %c0_210] : memref<64x55x32xf32, #tpu.memory_space<vmem>>, vector<1x55x32xf32>
    %454 = vector.shape_cast %453 : vector<1x55x32xf32> to vector<55x32xf32>
    %455 = vector.broadcast %452 : vector<55x1xf32> to vector<55x32xf32>
    %456 = arith.mulf %455, %454 : vector<55x32xf32>
    %457 = arith.addf %451, %456 : vector<55x32xf32>
    %458 = vector.extract_strided_slice %126 {offsets = [0, 55], sizes = [55, 1], strides = [1, 1]} : vector<55x64xf32> to vector<55x1xf32>
    %c55 = arith.constant 55 : index
    %c0_211 = arith.constant 0 : index
    %c0_212 = arith.constant 0 : index
    %459 = vector.load %arg8[%c55, %c0_211, %c0_212] : memref<64x55x32xf32, #tpu.memory_space<vmem>>, vector<1x55x32xf32>
    %460 = vector.shape_cast %459 : vector<1x55x32xf32> to vector<55x32xf32>
    %461 = vector.broadcast %458 : vector<55x1xf32> to vector<55x32xf32>
    %462 = arith.mulf %461, %460 : vector<55x32xf32>
    %463 = arith.addf %457, %462 : vector<55x32xf32>
    %464 = vector.extract_strided_slice %126 {offsets = [0, 56], sizes = [55, 1], strides = [1, 1]} : vector<55x64xf32> to vector<55x1xf32>
    %c56 = arith.constant 56 : index
    %c0_213 = arith.constant 0 : index
    %c0_214 = arith.constant 0 : index
    %465 = vector.load %arg8[%c56, %c0_213, %c0_214] : memref<64x55x32xf32, #tpu.memory_space<vmem>>, vector<1x55x32xf32>
    %466 = vector.shape_cast %465 : vector<1x55x32xf32> to vector<55x32xf32>
    %467 = vector.broadcast %464 : vector<55x1xf32> to vector<55x32xf32>
    %468 = arith.mulf %467, %466 : vector<55x32xf32>
    %469 = arith.addf %463, %468 : vector<55x32xf32>
    %470 = vector.extract_strided_slice %126 {offsets = [0, 57], sizes = [55, 1], strides = [1, 1]} : vector<55x64xf32> to vector<55x1xf32>
    %c57 = arith.constant 57 : index
    %c0_215 = arith.constant 0 : index
    %c0_216 = arith.constant 0 : index
    %471 = vector.load %arg8[%c57, %c0_215, %c0_216] : memref<64x55x32xf32, #tpu.memory_space<vmem>>, vector<1x55x32xf32>
    %472 = vector.shape_cast %471 : vector<1x55x32xf32> to vector<55x32xf32>
    %473 = vector.broadcast %470 : vector<55x1xf32> to vector<55x32xf32>
    %474 = arith.mulf %473, %472 : vector<55x32xf32>
    %475 = arith.addf %469, %474 : vector<55x32xf32>
    %476 = vector.extract_strided_slice %126 {offsets = [0, 58], sizes = [55, 1], strides = [1, 1]} : vector<55x64xf32> to vector<55x1xf32>
    %c58 = arith.constant 58 : index
    %c0_217 = arith.constant 0 : index
    %c0_218 = arith.constant 0 : index
    %477 = vector.load %arg8[%c58, %c0_217, %c0_218] : memref<64x55x32xf32, #tpu.memory_space<vmem>>, vector<1x55x32xf32>
    %478 = vector.shape_cast %477 : vector<1x55x32xf32> to vector<55x32xf32>
    %479 = vector.broadcast %476 : vector<55x1xf32> to vector<55x32xf32>
    %480 = arith.mulf %479, %478 : vector<55x32xf32>
    %481 = arith.addf %475, %480 : vector<55x32xf32>
    %482 = vector.extract_strided_slice %126 {offsets = [0, 59], sizes = [55, 1], strides = [1, 1]} : vector<55x64xf32> to vector<55x1xf32>
    %c59 = arith.constant 59 : index
    %c0_219 = arith.constant 0 : index
    %c0_220 = arith.constant 0 : index
    %483 = vector.load %arg8[%c59, %c0_219, %c0_220] : memref<64x55x32xf32, #tpu.memory_space<vmem>>, vector<1x55x32xf32>
    %484 = vector.shape_cast %483 : vector<1x55x32xf32> to vector<55x32xf32>
    %485 = vector.broadcast %482 : vector<55x1xf32> to vector<55x32xf32>
    %486 = arith.mulf %485, %484 : vector<55x32xf32>
    %487 = arith.addf %481, %486 : vector<55x32xf32>
    %488 = vector.extract_strided_slice %126 {offsets = [0, 60], sizes = [55, 1], strides = [1, 1]} : vector<55x64xf32> to vector<55x1xf32>
    %c60 = arith.constant 60 : index
    %c0_221 = arith.constant 0 : index
    %c0_222 = arith.constant 0 : index
    %489 = vector.load %arg8[%c60, %c0_221, %c0_222] : memref<64x55x32xf32, #tpu.memory_space<vmem>>, vector<1x55x32xf32>
    %490 = vector.shape_cast %489 : vector<1x55x32xf32> to vector<55x32xf32>
    %491 = vector.broadcast %488 : vector<55x1xf32> to vector<55x32xf32>
    %492 = arith.mulf %491, %490 : vector<55x32xf32>
    %493 = arith.addf %487, %492 : vector<55x32xf32>
    %494 = vector.extract_strided_slice %126 {offsets = [0, 61], sizes = [55, 1], strides = [1, 1]} : vector<55x64xf32> to vector<55x1xf32>
    %c61 = arith.constant 61 : index
    %c0_223 = arith.constant 0 : index
    %c0_224 = arith.constant 0 : index
    %495 = vector.load %arg8[%c61, %c0_223, %c0_224] : memref<64x55x32xf32, #tpu.memory_space<vmem>>, vector<1x55x32xf32>
    %496 = vector.shape_cast %495 : vector<1x55x32xf32> to vector<55x32xf32>
    %497 = vector.broadcast %494 : vector<55x1xf32> to vector<55x32xf32>
    %498 = arith.mulf %497, %496 : vector<55x32xf32>
    %499 = arith.addf %493, %498 : vector<55x32xf32>
    %500 = vector.extract_strided_slice %126 {offsets = [0, 62], sizes = [55, 1], strides = [1, 1]} : vector<55x64xf32> to vector<55x1xf32>
    %c62 = arith.constant 62 : index
    %c0_225 = arith.constant 0 : index
    %c0_226 = arith.constant 0 : index
    %501 = vector.load %arg8[%c62, %c0_225, %c0_226] : memref<64x55x32xf32, #tpu.memory_space<vmem>>, vector<1x55x32xf32>
    %502 = vector.shape_cast %501 : vector<1x55x32xf32> to vector<55x32xf32>
    %503 = vector.broadcast %500 : vector<55x1xf32> to vector<55x32xf32>
    %504 = arith.mulf %503, %502 : vector<55x32xf32>
    %505 = arith.addf %499, %504 : vector<55x32xf32>
    %506 = vector.extract_strided_slice %126 {offsets = [0, 63], sizes = [55, 1], strides = [1, 1]} : vector<55x64xf32> to vector<55x1xf32>
    %c63 = arith.constant 63 : index
    %c0_227 = arith.constant 0 : index
    %c0_228 = arith.constant 0 : index
    %507 = vector.load %arg8[%c63, %c0_227, %c0_228] : memref<64x55x32xf32, #tpu.memory_space<vmem>>, vector<1x55x32xf32>
    %508 = vector.shape_cast %507 : vector<1x55x32xf32> to vector<55x32xf32>
    %509 = vector.broadcast %506 : vector<55x1xf32> to vector<55x32xf32>
    %510 = arith.mulf %509, %508 : vector<55x32xf32>
    %511 = arith.addf %505, %510 : vector<55x32xf32>
    %cst_229 = arith.constant 1.000000e+00 : f32
    %512 = vector.broadcast %cst_229 : f32 to vector<1x55xf32>
    %cst_230 = arith.constant dense<0.000000e+00> : vector<1x32xf32>
    %513 = tpu.matmul %512, %511, %cst_230 {dimension_numbers = #tpu.dot_dimension_numbers<[1], [0], [0], [1], [0, 0, 1, 1], [], []>} : vector<1x55xf32>, vector<55x32xf32>, vector<1x32xf32> -> vector<1x32xf32>
    %c0_231 = arith.constant 0 : index
    %c0_232 = arith.constant 0 : index
    %514 = vector.load %arg9[%c0_231, %c0_232] : memref<1x32xf32, #tpu.memory_space<vmem>>, vector<1x32xf32>
    %515 = arith.addf %513, %514 : vector<1x32xf32>
    %cst_233 = arith.constant 0.000000e+00 : f32
    %516 = vector.broadcast %cst_233 : f32 to vector<1x32xf32>
    %517 = arith.maximumf %515, %516 : vector<1x32xf32>
    %c0_234 = arith.constant 0 : index
    %c0_235 = arith.constant 0 : index
    %518 = vector.load %arg10[%c0_234, %c0_235] : memref<32x32xf32, #tpu.memory_space<vmem>>, vector<32x32xf32>
    %cst_236 = arith.constant dense<0.000000e+00> : vector<1x32xf32>
    %519 = tpu.matmul %517, %518, %cst_236 {dimension_numbers = #tpu.dot_dimension_numbers<[1], [0], [0], [1], [0, 0, 1, 1], [], []>} : vector<1x32xf32>, vector<32x32xf32>, vector<1x32xf32> -> vector<1x32xf32>
    %c0_237 = arith.constant 0 : index
    %c0_238 = arith.constant 0 : index
    %520 = vector.load %arg11[%c0_237, %c0_238] : memref<1x32xf32, #tpu.memory_space<vmem>>, vector<1x32xf32>
    %521 = arith.addf %519, %520 : vector<1x32xf32>
    %cst_239 = arith.constant 0.000000e+00 : f32
    %522 = vector.broadcast %cst_239 : f32 to vector<1x32xf32>
    %523 = arith.maximumf %521, %522 : vector<1x32xf32>
    %c0_240 = arith.constant 0 : index
    %c0_241 = arith.constant 0 : index
    %524 = vector.load %arg12[%c0_240, %c0_241] : memref<32x4xf32, #tpu.memory_space<vmem>>, vector<32x4xf32>
    %cst_242 = arith.constant dense<0.000000e+00> : vector<1x4xf32>
    %525 = tpu.matmul %523, %524, %cst_242 {dimension_numbers = #tpu.dot_dimension_numbers<[1], [0], [0], [1], [0, 0, 1, 1], [], []>} : vector<1x32xf32>, vector<32x4xf32>, vector<1x4xf32> -> vector<1x4xf32>
    %c0_243 = arith.constant 0 : index
    %c0_244 = arith.constant 0 : index
    %526 = vector.load %arg13[%c0_243, %c0_244] : memref<1x4xf32, #tpu.memory_space<vmem>>, vector<1x4xf32>
    %527 = arith.addf %525, %526 : vector<1x4xf32>
    %cst_245 = arith.constant 0.000000e+00 : f32
    %528 = vector.broadcast %cst_245 : f32 to vector<1x4xf32>
    %529 = arith.maximumf %527, %528 : vector<1x4xf32>
    %530 = arith.negf %529 : vector<1x4xf32>
    %531 = math.exp %530 : vector<1x4xf32>
    %cst_246 = arith.constant 1.000000e+00 : f32
    %532 = vector.broadcast %cst_246 : f32 to vector<1x4xf32>
    %533 = arith.addf %532, %531 : vector<1x4xf32>
    %534 = arith.divf %532, %533 : vector<1x4xf32>
    %c0_247 = arith.constant 0 : index
    %c0_248 = arith.constant 0 : index
    %c0_249 = arith.constant 0 : index
    %535 = vector.load %arg14[%c0_247, %c0_248, %c0_249] : memref<1x1x4xf32, #tpu.memory_space<vmem>>, vector<1x1x4xf32>
    %536 = vector.shape_cast %535 : vector<1x1x4xf32> to vector<1x4xf32>
    %537 = vector.shape_cast %534 : vector<1x4xf32> to vector<1x1x4xf32>
    tpu.vector_store %arg14[%c0_247, %c0_248, %c0_249], %537 {strides = array<i32>} : memref<1x1x4xf32, #tpu.memory_space<vmem>>, vector<1x1x4xf32>,
    return
  }
  func.func @transform_0(%arg0: i32) -> (i32, i32, i32) {
    %c0_i32 = arith.constant 0 : i32
    %c0_i32_0 = arith.constant 0 : i32
    %c0_i32_1 = arith.constant 0 : i32
    return %arg0, %c0_i32, %c0_i32_0 : i32, i32, i32
  }
  func.func @transform_1(%arg0: i32) -> (i32, i32, i32) {
    %c0_i32 = arith.constant 0 : i32
    %c0_i32_0 = arith.constant 0 : i32
    %c0_i32_1 = arith.constant 0 : i32
    %c0_i32_2 = arith.constant 0 : i32
    return %c0_i32, %c0_i32_0, %c0_i32_1 : i32, i32, i32
  }
  func.func @transform_2(%arg0: i32) -> (i32, i32) {
    %c0_i32 = arith.constant 0 : i32
    %c0_i32_0 = arith.constant 0 : i32
    %c0_i32_1 = arith.constant 0 : i32
    return %c0_i32, %c0_i32_0 : i32, i32
  }
  func.func @transform_3(%arg0: i32) -> (i32, i32, i32) {
    %c0_i32 = arith.constant 0 : i32
    %c0_i32_0 = arith.constant 0 : i32
    %c0_i32_1 = arith.constant 0 : i32
    %c0_i32_2 = arith.constant 0 : i32
    return %c0_i32, %c0_i32_0, %c0_i32_1 : i32, i32, i32
  }
  func.func @transform_4(%arg0: i32) -> (i32, i32) {
    %c0_i32 = arith.constant 0 : i32
    %c0_i32_0 = arith.constant 0 : i32
    %c0_i32_1 = arith.constant 0 : i32
    return %c0_i32, %c0_i32_0 : i32, i32
  }
  func.func @transform_5(%arg0: i32) -> (i32, i32, i32) {
    %c0_i32 = arith.constant 0 : i32
    %c0_i32_0 = arith.constant 0 : i32
    %c0_i32_1 = arith.constant 0 : i32
    %c0_i32_2 = arith.constant 0 : i32
    return %c0_i32, %c0_i32_0, %c0_i32_1 : i32, i32, i32
  }
  func.func @transform_6(%arg0: i32) -> (i32, i32) {
    %c0_i32 = arith.constant 0 : i32
    %c0_i32_0 = arith.constant 0 : i32
    %c0_i32_1 = arith.constant 0 : i32
    return %c0_i32, %c0_i32_0 : i32, i32
  }
  func.func @transform_7(%arg0: i32) -> (i32, i32, i32) {
    %c0_i32 = arith.constant 0 : i32
    %c0_i32_0 = arith.constant 0 : i32
    %c0_i32_1 = arith.constant 0 : i32
    %c0_i32_2 = arith.constant 0 : i32
    return %c0_i32, %c0_i32_0, %c0_i32_1 : i32, i32, i32
  }
  func.func @transform_8(%arg0: i32) -> (i32, i32) {
    %c0_i32 = arith.constant 0 : i32
    %c0_i32_0 = arith.constant 0 : i32
    %c0_i32_1 = arith.constant 0 : i32
    return %c0_i32, %c0_i32_0 : i32, i32
  }
  func.func @transform_9(%arg0: i32) -> (i32, i32) {
    %c0_i32 = arith.constant 0 : i32
    %c0_i32_0 = arith.constant 0 : i32
    %c0_i32_1 = arith.constant 0 : i32
    return %c0_i32, %c0_i32_0 : i32, i32
  }
  func.func @transform_10(%arg0: i32) -> (i32, i32) {
    %c0_i32 = arith.constant 0 : i32
    %c0_i32_0 = arith.constant 0 : i32
    %c0_i32_1 = arith.constant 0 : i32
    return %c0_i32, %c0_i32_0 : i32, i32
  }
  func.func @transform_11(%arg0: i32) -> (i32, i32) {
    %c0_i32 = arith.constant 0 : i32
    %c0_i32_0 = arith.constant 0 : i32
    %c0_i32_1 = arith.constant 0 : i32
    return %c0_i32, %c0_i32_0 : i32, i32
  }
  func.func @transform_12(%arg0: i32) -> (i32, i32) {
    %c0_i32 = arith.constant 0 : i32
    %c0_i32_0 = arith.constant 0 : i32
    %c0_i32_1 = arith.constant 0 : i32
    return %c0_i32, %c0_i32_0 : i32, i32
  }
  func.func @transform_13(%arg0: i32) -> (i32, i32, i32) {
    %c0_i32 = arith.constant 0 : i32
    %c0_i32_0 = arith.constant 0 : i32
    %c0_i32_1 = arith.constant 0 : i32
    return %arg0, %c0_i32, %c0_i32_0 : i32, i32, i32
  }
}

</mosaic_0001>

<llo_original>
// kernel: actor_forward.1
$region0: #{actor_forward.1}
  #allocation0 [shape = 'u32[]', space=smem, size = 0x4, offset = 0x4, fixed_abs, tag = 'smem constant byte address 0x4 - core index']
  #allocation1 [shape = 'u32[144,128]{1,0:T(1,128)}', space=vmem, size = 0x12000, scoped, tag = 'internal scratch']
  #allocation2 [shape = 'f32[72,256]{1,0:T(8,128)}', space=vmem, size = 0x12000, scoped, tag = 'scratch operand']
  #allocation3 [shape = 'f32[72,128]{1,0:T(8,128)}', space=vmem, size = 0x9000, scoped, tag = 'scratch operand']
  %s0 = inlined_call_operand.vmem [shape: f32[2,68,512], index: 0, kind: input, shape index: {}]
  %s1 = inlined_call_operand.vmem [shape: bf16[4,512,256], index: 1, kind: input, shape index: {}]
  %s2 = inlined_call_operand.vmem [shape: f32[1,256], index: 2, kind: input, shape index: {}]
  %s3 = inlined_call_operand.vmem [shape: bf16[4,256,128], index: 3, kind: input, shape index: {}]
  %s4 = inlined_call_operand.vmem [shape: f32[1,128], index: 4, kind: input, shape index: {}]
  %s5 = inlined_call_operand.vmem [shape: bf16[4,128,64], index: 5, kind: input, shape index: {}]
  %s6 = inlined_call_operand.vmem [shape: f32[1,64], index: 6, kind: input, shape index: {}]
  %s7 = inlined_call_operand.vmem [shape: f32[64,55,32], index: 7, kind: input, shape index: {}]
  %s8 = inlined_call_operand.vmem [shape: f32[1,32], index: 8, kind: input, shape index: {}]
  %s9 = inlined_call_operand.vmem [shape: f32[32,32], index: 9, kind: input, shape index: {}]
  %s10 = inlined_call_operand.vmem [shape: f32[1,32], index: 10, kind: input, shape index: {}]
  %s11 = inlined_call_operand.vmem [shape: f32[32,4], index: 11, kind: input, shape index: {}]
  %s12 = inlined_call_operand.vmem [shape: f32[1,4], index: 12, kind: input, shape index: {}]
  %s13 = inlined_call_operand.hbm [shape: f32[2,1,4], index: 13, kind: output, shape index: {}]
  %s14 = sld [smem:[#allocation0]]
  $region85: #{actor_forward.1} parent=0
    _
  %s16 = ssub.s32 1, %s14
  %s17 = scalar_select 0, %s16, %s14
  $region1: #{actor_forward.1} parent=0
    #allocation4 [shape = 'u8[1024]{0}', space=vmem, size = 0x400, scoped, tag = 'output window, operand 0']
    #allocation5 [shape = 's32[2]{0}', space=sflag, size = 0x8, scoped, tag = 'scoped memory for actor_forward.1']
    %18 = vsyncpa [#allocation5], 0
    %s19 = scalar_lea.sflag [#allocation5], 1
    %20 = vsyncpa %s19, 0
    loop: start=0, step=1, limit=4
    $region2: #{actor_forward.1} parent=1 // loop_pre_header
      _
    $region3: #{actor_forward.1} parent=1 // loop_header
      %s22 = sphi 0, %s26
      %p23 = scmp.ge.s32.totalorder %s22, 4
      %s32 = sphi 0, %s34
      %s35 = sphi 0, %s32
      %s36 = sphi 0, %s35
      %s52 = sphi 0, %s36
      %s56 = sphi 0, %s56
      %s58 = sphi 0, %s56
      %s59 = sphi 0, %s58
      %s73 = sphi 0, %s59
      %s77 = sphi 0, %s77
      %s79 = sphi 0, %s77
      %s80 = sphi 0, %s79
      %s94 = sphi 0, %s80
      %s98 = sphi 0, %s98
      %s100 = sphi 0, %s98
      %s101 = sphi 0, %s100
      %s115 = sphi 0, %s101
      %s119 = sphi 0, %s119
      %s121 = sphi 0, %s119
      %s122 = sphi 0, %s121
      %s136 = sphi 0, %s122
      %s140 = sphi 0, %s140
      %s142 = sphi 0, %s140
      %s143 = sphi 0, %s142
      %s157 = sphi 0, %s143
      %s161 = sphi 0, %s161
      %s163 = sphi 0, %s161
      %s164 = sphi 0, %s163
      %s178 = sphi 0, %s164
      %s182 = sphi 0, %s182
      %s184 = sphi 0, %s182
      %s185 = sphi 0, %s184
      %s199 = sphi 0, %s185
      %s203 = sphi 0, %s203
      %s205 = sphi 0, %s203
      %s206 = sphi 0, %s205
      %s220 = sphi 0, %s206
      %s224 = sphi 0, %s224
      %s226 = sphi 0, %s224
      %s227 = sphi 0, %s226
      %s241 = sphi 0, %s227
      %s245 = sphi 0, %s245
      %s247 = sphi 0, %s245
      %s248 = sphi 0, %s247
      %s262 = sphi 0, %s248
      %s266 = sphi 0, %s266
      %s268 = sphi 0, %s266
      %s269 = sphi 0, %s268
      %s283 = sphi 0, %s269
      %s287 = sphi 0, %s287
      %s289 = sphi 0, %s287
      %s290 = sphi 0, %s289
      %s304 = sphi 0, %s290
      %s310 = sphi 0, %s312
      %s313 = sphi 0, %s310
      %s314 = sphi 0, %s313
      %s330 = sphi 0, %s314
    $region4: #{actor_forward.1} parent=1 // loop_header_branch
      %25 = sbr.rel (%p23) target = $region8
    $region5: #{actor_forward.1} parent=1 // loop_body
      %s27 = ssub.s32 %s22, 1
      %s28 = ssub.s32 %s22, 2
      %s29 = sadd.s32 %s22, 1
      %s30 = ssub.s32 %s22, %s29
      %p31 = scmp.eq.s32.totalorder %s30, 0
      %s33 = sadd.s32 %s32, 1
      %s34 = scalar_select %p31, %s32, %s33
      %p37 = pneg %p31
      %p38 = scmp.eq.s32.totalorder %s22, 1
      %p39 = por %p37, %p38
      %p40 = scmp.ne.s32.totalorder %s32, %s35
      %p41 = scmp.eq.s32.totalorder %s22, 0
      %p42 = por %p40, %p41
      %p43 = scmp.ne.s32.totalorder %s32, %s35
      %p44 = scmp.eq.s32.totalorder %s27, 1
      %p45 = por %p43, %p44
      %p46 = scmp.ne.s32.totalorder %s35, %s36
      %p47 = scmp.eq.s32.totalorder %s27, 0
      %p48 = por %p46, %p47
      %p49 = scmp.ne.s32.totalorder %s35, %s36
      %p50 = scmp.eq.s32.totalorder %s28, 1
      %p51 = por %p49, %p50
      %p53 = scmp.ne.s32.totalorder %s36, %s52
      %p54 = scmp.eq.s32.totalorder %s28, 0
      %p55 = por %p53, %p54
      %s57 = sadd.s32 %s56, 1
      %p60 = scmp.eq.s32.totalorder %s22, 1
      %p61 = scmp.ne.s32.totalorder %s56, %s58
      %p62 = scmp.eq.s32.totalorder %s22, 0
      %p63 = por %p61, %p62
      %p64 = scmp.ne.s32.totalorder %s56, %s58
      %p65 = scmp.eq.s32.totalorder %s27, 1
      %p66 = por %p64, %p65
      %p67 = scmp.ne.s32.totalorder %s58, %s59
      %p68 = scmp.eq.s32.totalorder %s27, 0
      %p69 = por %p67, %p68
      %p70 = scmp.ne.s32.totalorder %s58, %s59
      %p71 = scmp.eq.s32.totalorder %s28, 1
      %p72 = por %p70, %p71
      %p74 = scmp.ne.s32.totalorder %s59, %s73
      %p75 = scmp.eq.s32.totalorder %s28, 0
      %p76 = por %p74, %p75
      %s78 = sadd.s32 %s77, 1
      %p81 = scmp.eq.s32.totalorder %s22, 1
      %p82 = scmp.ne.s32.totalorder %s77, %s79
      %p83 = scmp.eq.s32.totalorder %s22, 0
      %p84 = por %p82, %p83
      %p85 = scmp.ne.s32.totalorder %s77, %s79
      %p86 = scmp.eq.s32.totalorder %s27, 1
      %p87 = por %p85, %p86
      %p88 = scmp.ne.s32.totalorder %s79, %s80
      %p89 = scmp.eq.s32.totalorder %s27, 0
      %p90 = por %p88, %p89
      %p91 = scmp.ne.s32.totalorder %s79, %s80
      %p92 = scmp.eq.s32.totalorder %s28, 1
      %p93 = por %p91, %p92
      %p95 = scmp.ne.s32.totalorder %s80, %s94
      %p96 = scmp.eq.s32.totalorder %s28, 0
      %p97 = por %p95, %p96
      %s99 = sadd.s32 %s98, 1
      %p102 = scmp.eq.s32.totalorder %s22, 1
      %p103 = scmp.ne.s32.totalorder %s98, %s100
      %p104 = scmp.eq.s32.totalorder %s22, 0
      %p105 = por %p103, %p104
      %p106 = scmp.ne.s32.totalorder %s98, %s100
      %p107 = scmp.eq.s32.totalorder %s27, 1
      %p108 = por %p106, %p107
      %p109 = scmp.ne.s32.totalorder %s100, %s101
      %p110 = scmp.eq.s32.totalorder %s27, 0
      %p111 = por %p109, %p110
      %p112 = scmp.ne.s32.totalorder %s100, %s101
      %p113 = scmp.eq.s32.totalorder %s28, 1
      %p114 = por %p112, %p113
      %p116 = scmp.ne.s32.totalorder %s101, %s115
      %p117 = scmp.eq.s32.totalorder %s28, 0
      %p118 = por %p116, %p117
      %s120 = sadd.s32 %s119, 1
      %p123 = scmp.eq.s32.totalorder %s22, 1
      %p124 = scmp.ne.s32.totalorder %s119, %s121
      %p125 = scmp.eq.s32.totalorder %s22, 0
      %p126 = por %p124, %p125
      %p127 = scmp.ne.s32.totalorder %s119, %s121
      %p128 = scmp.eq.s32.totalorder %s27, 1
      %p129 = por %p127, %p128
      %p130 = scmp.ne.s32.totalorder %s121, %s122
      %p131 = scmp.eq.s32.totalorder %s27, 0
      %p132 = por %p130, %p131
      %p133 = scmp.ne.s32.totalorder %s121, %s122
      %p134 = scmp.eq.s32.totalorder %s28, 1
      %p135 = por %p133, %p134
      %p137 = scmp.ne.s32.totalorder %s122, %s136
      %p138 = scmp.eq.s32.totalorder %s28, 0
      %p139 = por %p137, %p138
      %s141 = sadd.s32 %s140, 1
      %p144 = scmp.eq.s32.totalorder %s22, 1
      %p145 = scmp.ne.s32.totalorder %s140, %s142
      %p146 = scmp.eq.s32.totalorder %s22, 0
      %p147 = por %p145, %p146
      %p148 = scmp.ne.s32.totalorder %s140, %s142
      %p149 = scmp.eq.s32.totalorder %s27, 1
      %p150 = por %p148, %p149
      %p151 = scmp.ne.s32.totalorder %s142, %s143
      %p152 = scmp.eq.s32.totalorder %s27, 0
      %p153 = por %p151, %p152
      %p154 = scmp.ne.s32.totalorder %s142, %s143
      %p155 = scmp.eq.s32.totalorder %s28, 1
      %p156 = por %p154, %p155
      %p158 = scmp.ne.s32.totalorder %s143, %s157
      %p159 = scmp.eq.s32.totalorder %s28, 0
      %p160 = por %p158, %p159
      %s162 = sadd.s32 %s161, 1
      %p165 = scmp.eq.s32.totalorder %s22, 1
      %p166 = scmp.ne.s32.totalorder %s161, %s163
      %p167 = scmp.eq.s32.totalorder %s22, 0
      %p168 = por %p166, %p167
      %p169 = scmp.ne.s32.totalorder %s161, %s163
      %p170 = scmp.eq.s32.totalorder %s27, 1
      %p171 = por %p169, %p170
      %p172 = scmp.ne.s32.totalorder %s163, %s164
      %p173 = scmp.eq.s32.totalorder %s27, 0
      %p174 = por %p172, %p173
      %p175 = scmp.ne.s32.totalorder %s163, %s164
      %p176 = scmp.eq.s32.totalorder %s28, 1
      %p177 = por %p175, %p176
      %p179 = scmp.ne.s32.totalorder %s164, %s178
      %p180 = scmp.eq.s32.totalorder %s28, 0
      %p181 = por %p179, %p180
      %s183 = sadd.s32 %s182, 1
      %p186 = scmp.eq.s32.totalorder %s22, 1
      %p187 = scmp.ne.s32.totalorder %s182, %s184
      %p188 = scmp.eq.s32.totalorder %s22, 0
      %p189 = por %p187, %p188
      %p190 = scmp.ne.s32.totalorder %s182, %s184
      %p191 = scmp.eq.s32.totalorder %s27, 1
      %p192 = por %p190, %p191
      %p193 = scmp.ne.s32.totalorder %s184, %s185
      %p194 = scmp.eq.s32.totalorder %s27, 0
      %p195 = por %p193, %p194
      %p196 = scmp.ne.s32.totalorder %s184, %s185
      %p197 = scmp.eq.s32.totalorder %s28, 1
      %p198 = por %p196, %p197
      %p200 = scmp.ne.s32.totalorder %s185, %s199
      %p201 = scmp.eq.s32.totalorder %s28, 0
      %p202 = por %p200, %p201
      %s204 = sadd.s32 %s203, 1
      %p207 = scmp.eq.s32.totalorder %s22, 1
      %p208 = scmp.ne.s32.totalorder %s203, %s205
      %p209 = scmp.eq.s32.totalorder %s22, 0
      %p210 = por %p208, %p209
      %p211 = scmp.ne.s32.totalorder %s203, %s205
      %p212 = scmp.eq.s32.totalorder %s27, 1
      %p213 = por %p211, %p212
      %p214 = scmp.ne.s32.totalorder %s205, %s206
      %p215 = scmp.eq.s32.totalorder %s27, 0
      %p216 = por %p214, %p215
      %p217 = scmp.ne.s32.totalorder %s205, %s206
      %p218 = scmp.eq.s32.totalorder %s28, 1
      %p219 = por %p217, %p218
      %p221 = scmp.ne.s32.totalorder %s206, %s220
      %p222 = scmp.eq.s32.totalorder %s28, 0
      %p223 = por %p221, %p222
      %s225 = sadd.s32 %s224, 1
      %p228 = scmp.eq.s32.totalorder %s22, 1
      %p229 = scmp.ne.s32.totalorder %s224, %s226
      %p230 = scmp.eq.s32.totalorder %s22, 0
      %p231 = por %p229, %p230
      %p232 = scmp.ne.s32.totalorder %s224, %s226
      %p233 = scmp.eq.s32.totalorder %s27, 1
      %p234 = por %p232, %p233
      %p235 = scmp.ne.s32.totalorder %s226, %s227
      %p236 = scmp.eq.s32.totalorder %s27, 0
      %p237 = por %p235, %p236
      %p238 = scmp.ne.s32.totalorder %s226, %s227
      %p239 = scmp.eq.s32.totalorder %s28, 1
      %p240 = por %p238, %p239
      %p242 = scmp.ne.s32.totalorder %s227, %s241
      %p243 = scmp.eq.s32.totalorder %s28, 0
      %p244 = por %p242, %p243
      %s246 = sadd.s32 %s245, 1
      %p249 = scmp.eq.s32.totalorder %s22, 1
      %p250 = scmp.ne.s32.totalorder %s245, %s247
      %p251 = scmp.eq.s32.totalorder %s22, 0
      %p252 = por %p250, %p251
      %p253 = scmp.ne.s32.totalorder %s245, %s247
      %p254 = scmp.eq.s32.totalorder %s27, 1
      %p255 = por %p253, %p254
      %p256 = scmp.ne.s32.totalorder %s247, %s248
      %p257 = scmp.eq.s32.totalorder %s27, 0
      %p258 = por %p256, %p257
      %p259 = scmp.ne.s32.totalorder %s247, %s248
      %p260 = scmp.eq.s32.totalorder %s28, 1
      %p261 = por %p259, %p260
      %p263 = scmp.ne.s32.totalorder %s248, %s262
      %p264 = scmp.eq.s32.totalorder %s28, 0
      %p265 = por %p263, %p264
      %s267 = sadd.s32 %s266, 1
      %p270 = scmp.eq.s32.totalorder %s22, 1
      %p271 = scmp.ne.s32.totalorder %s266, %s268
      %p272 = scmp.eq.s32.totalorder %s22, 0
      %p273 = por %p271, %p272
      %p274 = scmp.ne.s32.totalorder %s266, %s268
      %p275 = scmp.eq.s32.totalorder %s27, 1
      %p276 = por %p274, %p275
      %p277 = scmp.ne.s32.totalorder %s268, %s269
      %p278 = scmp.eq.s32.totalorder %s27, 0
      %p279 = por %p277, %p278
      %p280 = scmp.ne.s32.totalorder %s268, %s269
      %p281 = scmp.eq.s32.totalorder %s28, 1
      %p282 = por %p280, %p281
      %p284 = scmp.ne.s32.totalorder %s269, %s283
      %p285 = scmp.eq.s32.totalorder %s28, 0
      %p286 = por %p284, %p285
      %s288 = sadd.s32 %s287, 1
      %p291 = scmp.eq.s32.totalorder %s22, 1
      %p292 = scmp.ne.s32.totalorder %s287, %s289
      %p293 = scmp.eq.s32.totalorder %s22, 0
      %p294 = por %p292, %p293
      %p295 = scmp.ne.s32.totalorder %s287, %s289
      %p296 = scmp.eq.s32.totalorder %s27, 1
      %p297 = por %p295, %p296
      %p298 = scmp.ne.s32.totalorder %s289, %s290
      %p299 = scmp.eq.s32.totalorder %s27, 0
      %p300 = por %p298, %p299
      %p301 = scmp.ne.s32.totalorder %s289, %s290
      %p302 = scmp.eq.s32.totalorder %s28, 1
      %p303 = por %p301, %p302
      %p305 = scmp.ne.s32.totalorder %s290, %s304
      %p306 = scmp.eq.s32.totalorder %s28, 0
      %p307 = por %p305, %p306
      %s308 = ssub.s32 %s22, %s29
      %p309 = scmp.eq.s32.totalorder %s308, 0
      %s311 = sadd.s32 %s310, 1
      %s312 = scalar_select %p309, %s310, %s311
      %p315 = pneg %p309
      %p316 = scmp.eq.s32.totalorder %s22, 1
      %p317 = por %p315, %p316
      %p318 = scmp.ne.s32.totalorder %s310, %s313
      %p319 = scmp.eq.s32.totalorder %s22, 0
      %p320 = por %p318, %p319
      %p321 = scmp.ne.s32.totalorder %s310, %s313
      %p322 = scmp.eq.s32.totalorder %s27, 1
      %p323 = por %p321, %p322
      %p324 = scmp.ne.s32.totalorder %s313, %s314
      %p325 = scmp.eq.s32.totalorder %s27, 0
      %p326 = por %p324, %p325
      %p327 = scmp.ne.s32.totalorder %s313, %s314
      %p328 = scmp.eq.s32.totalorder %s28, 1
      %p329 = por %p327, %p328
      %p331 = scmp.ne.s32.totalorder %s314, %s330
      %p332 = scmp.eq.s32.totalorder %s28, 0
      %p333 = por %p331, %p332
      %p334 = scmp.le.s32.totalorder 1, %s22
      %p335 = scmp.lt.s32.totalorder %s22, 3
      %p336 = pnand %p334, %p335
      %p337 = pneg %p336
      // Predicated region
      $region9: #{actor_forward.1} parent=5 // pred_check
        _
      $region10: #{actor_forward.1} parent=5 // pred_check_branch
        %339 = sbr.rel (%p336) target = $region12
      $region11: #{actor_forward.1} parent=5 // pred_region
        %s340 = ssub.s32 %s22, 1
        // Predicated region
        $region13: #{actor_forward.1} parent=11 // pred_check
          %p341 = pneg %p69
        $region14: #{actor_forward.1} parent=11 // pred_check_branch
          %343 = sbr.rel (%p341) target = $region16
        $region15: #{actor_forward.1} parent=11 // pred_region
          _
        $region16: #{actor_forward.1} parent=11 // pred_fallthru
          _
        // Predicated region
        $region17: #{actor_forward.1} parent=11 // pred_check
          %p344 = pneg %p90
        $region18: #{actor_forward.1} parent=11 // pred_check_branch
          %346 = sbr.rel (%p344) target = $region20
        $region19: #{actor_forward.1} parent=11 // pred_region
          _
        $region20: #{actor_forward.1} parent=11 // pred_fallthru
          _
        // Predicated region
        $region21: #{actor_forward.1} parent=11 // pred_check
          %p347 = pneg %p111
        $region22: #{actor_forward.1} parent=11 // pred_check_branch
          %349 = sbr.rel (%p347) target = $region24
        $region23: #{actor_forward.1} parent=11 // pred_region
          _
        $region24: #{actor_forward.1} parent=11 // pred_fallthru
          _
        // Predicated region
        $region25: #{actor_forward.1} parent=11 // pred_check
          %p350 = pneg %p132
        $region26: #{actor_forward.1} parent=11 // pred_check_branch
          %352 = sbr.rel (%p350) target = $region28
        $region27: #{actor_forward.1} parent=11 // pred_region
          _
        $region28: #{actor_forward.1} parent=11 // pred_fallthru
          _
        // Predicated region
        $region29: #{actor_forward.1} parent=11 // pred_check
          %p353 = pneg %p153
        $region30: #{actor_forward.1} parent=11 // pred_check_branch
          %355 = sbr.rel (%p353) target = $region32
        $region31: #{actor_forward.1} parent=11 // pred_region
          _
        $region32: #{actor_forward.1} parent=11 // pred_fallthru
          _
        // Predicated region
        $region33: #{actor_forward.1} parent=11 // pred_check
          %p356 = pneg %p174
        $region34: #{actor_forward.1} parent=11 // pred_check_branch
          %358 = sbr.rel (%p356) target = $region36
        $region35: #{actor_forward.1} parent=11 // pred_region
          _
        $region36: #{actor_forward.1} parent=11 // pred_fallthru
          _
        // Predicated region
        $region37: #{actor_forward.1} parent=11 // pred_check
          %p359 = pneg %p195
        $region38: #{actor_forward.1} parent=11 // pred_check_branch
          %361 = sbr.rel (%p359) target = $region40
        $region39: #{actor_forward.1} parent=11 // pred_region
          _
        $region40: #{actor_forward.1} parent=11 // pred_fallthru
          _
        // Predicated region
        $region41: #{actor_forward.1} parent=11 // pred_check
          %p362 = pneg %p216
        $region42: #{actor_forward.1} parent=11 // pred_check_branch
          %364 = sbr.rel (%p362) target = $region44
        $region43: #{actor_forward.1} parent=11 // pred_region
          _
        $region44: #{actor_forward.1} parent=11 // pred_fallthru
          _
        // Predicated region
        $region45: #{actor_forward.1} parent=11 // pred_check
          %p365 = pneg %p237
        $region46: #{actor_forward.1} parent=11 // pred_check_branch
          %367 = sbr.rel (%p365) target = $region48
        $region47: #{actor_forward.1} parent=11 // pred_region
          _
        $region48: #{actor_forward.1} parent=11 // pred_fallthru
          _
        // Predicated region
        $region49: #{actor_forward.1} parent=11 // pred_check
          %p368 = pneg %p258
        $region50: #{actor_forward.1} parent=11 // pred_check_branch
          %370 = sbr.rel (%p368) target = $region52
        $region51: #{actor_forward.1} parent=11 // pred_region
          _
        $region52: #{actor_forward.1} parent=11 // pred_fallthru
          _
        // Predicated region
        $region53: #{actor_forward.1} parent=11 // pred_check
          %p371 = pneg %p279
        $region54: #{actor_forward.1} parent=11 // pred_check_branch
          %373 = sbr.rel (%p371) target = $region56
        $region55: #{actor_forward.1} parent=11 // pred_region
          _
        $region56: #{actor_forward.1} parent=11 // pred_fallthru
          _
        // Predicated region
        $region57: #{actor_forward.1} parent=11 // pred_check
          %p374 = pneg %p300
        $region58: #{actor_forward.1} parent=11 // pred_check_branch
          %376 = sbr.rel (%p374) target = $region60
        $region59: #{actor_forward.1} parent=11 // pred_region
          _
        $region60: #{actor_forward.1} parent=11 // pred_fallthru
          _
      $region12: #{actor_forward.1} parent=5 // pred_fallthru
        _
      %p377 = scmp.lt.s32.totalorder %s22, 2
      // Predicated region
      $region61: #{actor_forward.1} parent=5 // pred_check
        %p378 = pneg %p377
      $region62: #{actor_forward.1} parent=5 // pred_check_branch
        %380 = sbr.rel (%p378) target = $region64
      $region63: #{actor_forward.1} parent=5 // pred_region
        // Predicated region
        $region65: #{actor_forward.1} parent=63 // pred_check
          %p381 = pneg %p42
        $region66: #{actor_forward.1} parent=63 // pred_check_branch
          %383 = sbr.rel (%p381) target = $region68
        $region67: #{actor_forward.1} parent=63 // pred_region
          %p384 = scmp.lt.s32.totalorder %s22, 1
          %s385 = scalar_select %p384, %s22, 1
          %s386 = smul.addr %s385, 36
          %s387 = smul.addr %s386, 8
          %s388 = scalar_lea.vmem %s0, %s387
        $region68: #{actor_forward.1} parent=63 // pred_fallthru
          _
      $region64: #{actor_forward.1} parent=5 // pred_fallthru
        _
      %p389 = scmp.le.s32.totalorder 1, %s22
      %p390 = scmp.lt.s32.totalorder %s22, 3
      %p391 = pnand %p389, %p390
      %p392 = pneg %p391
      // Predicated region
      $region69: #{actor_forward.1} parent=5 // pred_check
        _
      $region70: #{actor_forward.1} parent=5 // pred_check_branch
        %394 = sbr.rel (%p391) target = $region72
      $region71: #{actor_forward.1} parent=5 // pred_region
        %s395 = ssub.s32 %s22, 1
        %p396 = scmp.lt.s32.totalorder %s27, 1
        %s397 = scalar_select %p396, %s27, 1
        %s398 = smul.addr %s397, 36
        %s399 = smul.addr %s398, 8
        %s400 = scalar_lea.vmem %s0, %s399
        %p401 = pneg %p48
        %p402 = pneg %p45
        %p403 = pneg %p69
        %p404 = pneg %p66
        %p405 = pneg %p90
        %p406 = pneg %p87
        %p407 = pneg %p111
        %p408 = pneg %p108
        %p409 = pneg %p132
        %p410 = pneg %p129
        %p411 = pneg %p153
        %p412 = pneg %p150
        %p413 = pneg %p174
        %p414 = pneg %p171
        %p415 = pneg %p195
        %p416 = pneg %p192
        %p417 = pneg %p216
        %p418 = pneg %p213
        %p419 = pneg %p237
        %p420 = pneg %p234
        %p421 = pneg %p258
        %p422 = pneg %p255
        %p423 = pneg %p279
        %p424 = pneg %p276
        %p425 = pneg %p300
        %p426 = pneg %p297
        %p427 = pneg %p326
        %p428 = pneg %p323
        %s429 = sand.u32 %s313, 1
        %s430 = scalar_lea.sflag [#allocation5], %s429
        %s431 = sand.u32 %s313, 1
        %s432 = scalar_lea.vmem [#allocation4], %s431
        %p433 = scmp.lt.s32.totalorder %s27, 1
        %s434 = scalar_select %p433, %s27, 1
        %s435 = smul.addr %s434, 36
        %s436 = smul.addr %s435, 8
        %s437 = scalar_lea.vmem %s0, %s436
        %v439 = vlaneseq
        %v440 = vshrl.u32 %v439, 7
        %v441 = vadd.s32 %v440, 8
        %v442 = vadd.s32 %v440, 16
        %v443 = vadd.s32 %v440, 24
        %v444 = vadd.s32 %v440, 32
        %v445 = vadd.s32 %v440, 40
        %v446 = vadd.s32 %v440, 48
        %vm447 = vcmp.lt.s32.totalorder %v440, 0
        %v448 = vsub.s32 0, %v440
        %v449 = vsel %vm447, %v448, %v440
        %v450 = vmul.u32.u64.compose %v449, 3123612579
        %v451 = vextract.low.u32 %v450
        %v452 = vextract.high.u32 %v450
        %v453 = vshrl.u32 %v452, 3
        %v454 = vmul.u32 %v453, 11
        %v455 = vsub.s32 %v449, %v454
        %v456 = vsub.s32 0, %v455
        %v457 = vsel %vm447, %v456, %v455
        %vm458 = vcmp.lt.s32.totalorder %v441, 0
        %v459 = vsub.s32 0, %v441
        %v460 = vsel %vm458, %v459, %v441
        %v461 = vmul.u32.u64.compose %v460, 3123612579
        %v462 = vextract.low.u32 %v461
        %v463 = vextract.high.u32 %v461
        %v464 = vshrl.u32 %v463, 3
        %v465 = vmul.u32 %v464, 11
        %v466 = vsub.s32 %v460, %v465
        %v467 = vsub.s32 0, %v466
        %v468 = vsel %vm458, %v467, %v466
        %vm469 = vcmp.lt.s32.totalorder %v442, 0
        %v470 = vsub.s32 0, %v442
        %v471 = vsel %vm469, %v470, %v442
        %v472 = vmul.u32.u64.compose %v471, 3123612579
        %v473 = vextract.low.u32 %v472
        %v474 = vextract.high.u32 %v472
        %v475 = vshrl.u32 %v474, 3
        %v476 = vmul.u32 %v475, 11
        %v477 = vsub.s32 %v471, %v476
        %v478 = vsub.s32 0, %v477
        %v479 = vsel %vm469, %v478, %v477
        %vm480 = vcmp.lt.s32.totalorder %v443, 0
        %v481 = vsub.s32 0, %v443
        %v482 = vsel %vm480, %v481, %v443
        %v483 = vmul.u32.u64.compose %v482, 3123612579
        %v484 = vextract.low.u32 %v483
        %v485 = vextract.high.u32 %v483
        %v486 = vshrl.u32 %v485, 3
        %v487 = vmul.u32 %v486, 11
        %v488 = vsub.s32 %v482, %v487
        %v489 = vsub.s32 0, %v488
        %v490 = vsel %vm480, %v489, %v488
        %vm491 = vcmp.lt.s32.totalorder %v444, 0
        %v492 = vsub.s32 0, %v444
        %v493 = vsel %vm491, %v492, %v444
        %v494 = vmul.u32.u64.compose %v493, 3123612579
        %v495 = vextract.low.u32 %v494
        %v496 = vextract.high.u32 %v494
        %v497 = vshrl.u32 %v496, 3
        %v498 = vmul.u32 %v497, 11
        %v499 = vsub.s32 %v493, %v498
        %v500 = vsub.s32 0, %v499
        %v501 = vsel %vm491, %v500, %v499
        %vm502 = vcmp.lt.s32.totalorder %v445, 0
        %v503 = vsub.s32 0, %v445
        %v504 = vsel %vm502, %v503, %v445
        %v505 = vmul.u32.u64.compose %v504, 3123612579
        %v506 = vextract.low.u32 %v505
        %v507 = vextract.high.u32 %v505
        %v508 = vshrl.u32 %v507, 3
        %v509 = vmul.u32 %v508, 11
        %v510 = vsub.s32 %v504, %v509
        %v511 = vsub.s32 0, %v510
        %v512 = vsel %vm502, %v511, %v510
        %vm513 = vcmp.lt.s32.totalorder %v446, 0
        %v514 = vsub.s32 0, %v446
        %v515 = vsel %vm513, %v514, %v446
        %v516 = vmul.u32.u64.compose %v515, 3123612579
        %v517 = vextract.low.u32 %v516
        %v518 = vextract.high.u32 %v516
        %v519 = vshrl.u32 %v518, 3
        %v520 = vmul.u32 %v519, 11
        %v521 = vsub.s32 %v515, %v520
        %v522 = vsub.s32 0, %v521
        %v523 = vsel %vm513, %v522, %v521
        %vm524 = vcmp.ne.s32.totalorder %v457, 0
        %vm525 = vcmp.ne.s32.totalorder %v468, 0
        %vm526 = vcmp.ne.s32.totalorder %v479, 0
        %vm527 = vcmp.ne.s32.totalorder %v490, 0
        %vm528 = vcmp.ne.s32.totalorder %v501, 0
        %vm529 = vcmp.ne.s32.totalorder %v512, 0
        %vm530 = vcmp.ne.s32.totalorder %v523, 0
        %vm531 = vcmp.lt.s32.totalorder %v457, 0
        %vm532 = vcmp.lt.s32.totalorder %v468, 0
        %vm533 = vcmp.lt.s32.totalorder %v479, 0
        %vm534 = vcmp.lt.s32.totalorder %v490, 0
        %vm535 = vcmp.lt.s32.totalorder %v501, 0
        %vm536 = vcmp.lt.s32.totalorder %v512, 0
        %vm537 = vcmp.lt.s32.totalorder %v523, 0
        %vm538 = vmand %vm531, %vm524
        %vm539 = vmand %vm532, %vm525
        %vm540 = vmand %vm533, %vm526
        %vm541 = vmand %vm534, %vm527
        %vm542 = vmand %vm535, %vm528
        %vm543 = vmand %vm536, %vm529
        %vm544 = vmand %vm537, %vm530
        %v545 = vadd.s32 %v457, 11
        %v546 = vadd.s32 %v468, 11
        %v547 = vadd.s32 %v479, 11
        %v548 = vadd.s32 %v490, 11
        %v549 = vadd.s32 %v501, 11
        %v550 = vadd.s32 %v512, 11
        %v551 = vadd.s32 %v523, 11
        %v552 = vsel %vm538, %v545, %v457
        %v553 = vsel %vm539, %v546, %v468
        %v554 = vsel %vm540, %v547, %v479
        %v555 = vsel %vm541, %v548, %v490
        %v556 = vsel %vm542, %v549, %v501
        %v557 = vsel %vm543, %v550, %v512
        %v558 = vsel %vm544, %v551, %v523
        %vm559 = vcmp.ne.s32.totalorder %v552, 10
        %vm560 = vcmp.ne.s32.totalorder %v553, 10
        %vm561 = vcmp.ne.s32.totalorder %v554, 10
        %vm562 = vcmp.ne.s32.totalorder %v555, 10
        %vm563 = vcmp.ne.s32.totalorder %v556, 10
        %vm564 = vcmp.ne.s32.totalorder %v557, 10
        %vm565 = vcmp.ne.s32.totalorder %v558, 10
        %v566 = vsel %vm559, 1, 0
        %v567 = vsel %vm560, 1, 0
        %v568 = vsel %vm561, 1, 0
        %v569 = vsel %vm562, 1, 0
        %v570 = vsel %vm563, 1, 0
        %v571 = vsel %vm564, 1, 0
        %v572 = vsel %vm565, 1, 0
        %v573 = vcvt.s32.f32 %v566
        %v574 = vcvt.s32.f32 %v567
        %v575 = vcvt.s32.f32 %v568
        %v576 = vcvt.s32.f32 %v569
        %v577 = vcvt.s32.f32 %v570
        %v578 = vcvt.s32.f32 %v571
        %v579 = vcvt.s32.f32 %v572
        %v580 = vld [vmem:[%s437] sm:$0xff]
        %v581 = vld [vmem:[%s437 + $0x8] sm:$0xff]
        %v582 = vld [vmem:[%s437 + $0x10] sm:$0xff]
        %v583 = vld [vmem:[%s437 + $0x18] sm:$0xff]
        %v584 = vld [vmem:[%s437 + $0x20] sm:$0xff]
        %v585 = vld [vmem:[%s437 + $0x28] sm:$0xff]
        %v586 = vld [vmem:[%s437 + $0x30] sm:$0xff]
        %v587 = vld [vmem:[%s437 + $0x38] sm:$0xff]
        %v588 = vld [vmem:[%s437 + $0x40] sm:$0xff]
        %v589 = vld [vmem:[%s437 + $0x48] sm:$0xff]
        %v590 = vld [vmem:[%s437 + $0x50] sm:$0xff]
        %v591 = vld [vmem:[%s437 + $0x58] sm:$0xff]
        %v592 = vld [vmem:[%s437 + $0x60] sm:$0xff]
        %v593 = vld [vmem:[%s437 + $0x68] sm:$0xff]
        %v594 = vld [vmem:[%s437 + $0x70] sm:$0xff]
        %v595 = vld [vmem:[%s437 + $0x78] sm:$0xff]
        %v596 = vld [vmem:[%s437 + $0x80] sm:$0xff]
        %v597 = vld [vmem:[%s437 + $0x88] sm:$0xff]
        %v598 = vld [vmem:[%s437 + $0x90] sm:$0xff]
        %v599 = vld [vmem:[%s437 + $0x98] sm:$0xff]
        %v600 = vld [vmem:[%s437 + $0xa0] sm:$0xff]
        %v601 = vld [vmem:[%s437 + $0xa8] sm:$0xff]
        %v602 = vld [vmem:[%s437 + $0xb0] sm:$0xff]
        %v603 = vld [vmem:[%s437 + $0xb8] sm:$0xff]
        %v604 = vld [vmem:[%s437 + $0xc0] sm:$0x7f]
        %v605 = vld [vmem:[%s437 + $0xc8] sm:$0x7f]
        %v606 = vld [vmem:[%s437 + $0xd0] sm:$0x7f]
        %v607 = vld [vmem:[%s437 + $0xd8] sm:$0x7f]
        %v608 = vpack.c.bf16 %v584, %v580
        %v609 = vpack.c.bf16 %v585, %v581
        %v610 = vpack.c.bf16 %v586, %v582
        %v611 = vpack.c.bf16 %v587, %v583
        %v612 = vpack.c.bf16 %v592, %v588
        %v613 = vpack.c.bf16 %v593, %v589
        %v614 = vpack.c.bf16 %v594, %v590
        %v615 = vpack.c.bf16 %v595, %v591
        %v616 = vpack.c.bf16 %v600, %v596
        %v617 = vpack.c.bf16 %v601, %v597
        %v618 = vpack.c.bf16 %v602, %v598
        %v619 = vpack.c.bf16 %v603, %v599
        %v620 = vpack.c.bf16 %v604, %v604
        %v621 = vpack.c.bf16 %v605, %v605
        %v622 = vpack.c.bf16 %v606, %v606
        %v623 = vpack.c.bf16 %v607, %v607
        %v624 = vld [vmem:[%s1] sm:$0xff]
        %v625 = vld [vmem:[%s1 + $0x8] sm:$0xff]
        %v626 = vld [vmem:[%s1 + $0x10] sm:$0xff]
        %v627 = vld [vmem:[%s1 + $0x18] sm:$0xff]
        %v628 = vld [vmem:[%s1 + $0x20] sm:$0xff]
        %v629 = vld [vmem:[%s1 + $0x28] sm:$0xff]
        %v630 = vld [vmem:[%s1 + $0x30] sm:$0xff]
        %v631 = vld [vmem:[%s1 + $0x38] sm:$0xff]
        %v632 = vld [vmem:[%s1 + $0x40] sm:$0xff]
        %v633 = vld [vmem:[%s1 + $0x48] sm:$0xff]
        %v634 = vld [vmem:[%s1 + $0x50] sm:$0xff]
        %v635 = vld [vmem:[%s1 + $0x58] sm:$0xff]
        %v636 = vld [vmem:[%s1 + $0x60] sm:$0xff]
        %v637 = vld [vmem:[%s1 + $0x68] sm:$0xff]
        %v638 = vld [vmem:[%s1 + $0x70] sm:$0xff]
        %v639 = vld [vmem:[%s1 + $0x78] sm:$0xff]
        %v640 = vld [vmem:[%s1 + $0x80] sm:$0xff]
        %v641 = vld [vmem:[%s1 + $0x88] sm:$0xff]
        %v642 = vld [vmem:[%s1 + $0x90] sm:$0xff]
        %v643 = vld [vmem:[%s1 + $0x98] sm:$0xff]
        %v644 = vld [vmem:[%s1 + $0xa0] sm:$0xff]
        %v645 = vld [vmem:[%s1 + $0xa8] sm:$0xff]
        %v646 = vld [vmem:[%s1 + $0xb0] sm:$0xff]
        %v647 = vld [vmem:[%s1 + $0xb8] sm:$0xff]
        %v648 = vld [vmem:[%s1 + $0xc0] sm:$0xff]
        %v649 = vld [vmem:[%s1 + $0xc8] sm:$0xff]
        %v650 = vld [vmem:[%s1 + $0xd0] sm:$0xff]
        %v651 = vld [vmem:[%s1 + $0xd8] sm:$0xff]
        %v652 = vld [vmem:[%s1 + $0xe0] sm:$0xff]
        %v653 = vld [vmem:[%s1 + $0xe8] sm:$0xff]
        %v654 = vld [vmem:[%s1 + $0xf0] sm:$0xff]
        %v655 = vld [vmem:[%s1 + $0xf8] sm:$0xff]
        %v656 = vld [vmem:[%s1 + $0x100] sm:$0xff]
        %v657 = vld [vmem:[%s1 + $0x108] sm:$0xff]
        %v658 = vld [vmem:[%s1 + $0x110] sm:$0xff]
        %v659 = vld [vmem:[%s1 + $0x118] sm:$0xff]
        %v660 = vld [vmem:[%s1 + $0x120] sm:$0xff]
        %v661 = vld [vmem:[%s1 + $0x128] sm:$0xff]
        %v662 = vld [vmem:[%s1 + $0x130] sm:$0xff]
        %v663 = vld [vmem:[%s1 + $0x138] sm:$0xff]
        %v664 = vld [vmem:[%s1 + $0x140] sm:$0xff]
        %v665 = vld [vmem:[%s1 + $0x148] sm:$0xff]
        %v666 = vld [vmem:[%s1 + $0x150] sm:$0xff]
        %v667 = vld [vmem:[%s1 + $0x158] sm:$0xff]
        %v668 = vld [vmem:[%s1 + $0x160] sm:$0xff]
        %v669 = vld [vmem:[%s1 + $0x168] sm:$0xff]
        %v670 = vld [vmem:[%s1 + $0x170] sm:$0xff]
        %v671 = vld [vmem:[%s1 + $0x178] sm:$0xff]
        %v672 = vld [vmem:[%s1 + $0x180] sm:$0xff]
        %v673 = vld [vmem:[%s1 + $0x188] sm:$0xff]
        %v674 = vld [vmem:[%s1 + $0x190] sm:$0xff]
        %v675 = vld [vmem:[%s1 + $0x198] sm:$0xff]
        %v676 = vld [vmem:[%s1 + $0x1a0] sm:$0xff]
        %v677 = vld [vmem:[%s1 + $0x1a8] sm:$0xff]
        %v678 = vld [vmem:[%s1 + $0x1b0] sm:$0xff]
        %v679 = vld [vmem:[%s1 + $0x1b8] sm:$0xff]
        %v680 = vld [vmem:[%s1 + $0x1c0] sm:$0xff]
        %v681 = vld [vmem:[%s1 + $0x1c8] sm:$0xff]
        %v682 = vld [vmem:[%s1 + $0x1d0] sm:$0xff]
        %v683 = vld [vmem:[%s1 + $0x1d8] sm:$0xff]
        %v684 = vld [vmem:[%s1 + $0x1e0] sm:$0xff]
        %v685 = vld [vmem:[%s1 + $0x1e8] sm:$0xff]
        %v686 = vld [vmem:[%s1 + $0x1f0] sm:$0xff]
        %v687 = vld [vmem:[%s1 + $0x1f8] sm:$0xff]
        %v688 = vld [vmem:[%s437] sm:$0xfe]
        %v689 = vld [vmem:[%s437 + $0x8] sm:$0xfe]
        %v690 = vld [vmem:[%s437 + $0x10] sm:$0xfe]
        %v691 = vld [vmem:[%s437 + $0x18] sm:$0xfe]
        %v692 = vld [vmem:[%s437 + $0xc0] sm:$0xff]
        %v693 = vld [vmem:[%s437 + $0xc8] sm:$0xff]
        %v694 = vld [vmem:[%s437 + $0xd0] sm:$0xff]
        %v695 = vld [vmem:[%s437 + $0xd8] sm:$0xff]
        %v696 = vpack.c.bf16 %v584, %v688
        %v697 = vpack.c.bf16 %v585, %v689
        %v698 = vpack.c.bf16 %v586, %v690
        %v699 = vpack.c.bf16 %v587, %v691
        %v700 = vpack.c.bf16 %v692, %v692
        %v701 = vpack.c.bf16 %v693, %v693
        %v702 = vpack.c.bf16 %v694, %v694
        %v703 = vpack.c.bf16 %v695, %v695
        %s704 = scalar_lea.vmem %s1, 512
        %v705 = vld [vmem:[%s704] sm:$0xff]
        %v706 = vld [vmem:[%s704 + $0x8] sm:$0xff]
        %v707 = vld [vmem:[%s704 + $0x10] sm:$0xff]
        %v708 = vld [vmem:[%s704 + $0x18] sm:$0xff]
        %v709 = vld [vmem:[%s704 + $0x20] sm:$0xff]
        %v710 = vld [vmem:[%s704 + $0x28] sm:$0xff]
        %v711 = vld [vmem:[%s704 + $0x30] sm:$0xff]
        %v712 = vld [vmem:[%s704 + $0x38] sm:$0xff]
        %v713 = vld [vmem:[%s704 + $0x40] sm:$0xff]
        %v714 = vld [vmem:[%s704 + $0x48] sm:$0xff]
        %v715 = vld [vmem:[%s704 + $0x50] sm:$0xff]
        %v716 = vld [vmem:[%s704 + $0x58] sm:$0xff]
        %v717 = vld [vmem:[%s704 + $0x60] sm:$0xff]
        %v718 = vld [vmem:[%s704 + $0x68] sm:$0xff]
        %v719 = vld [vmem:[%s704 + $0x70] sm:$0xff]
        %v720 = vld [vmem:[%s704 + $0x78] sm:$0xff]
        %v721 = vld [vmem:[%s704 + $0x80] sm:$0xff]
        %v722 = vld [vmem:[%s704 + $0x88] sm:$0xff]
        %v723 = vld [vmem:[%s704 + $0x90] sm:$0xff]
        %v724 = vld [vmem:[%s704 + $0x98] sm:$0xff]
        %v725 = vld [vmem:[%s704 + $0xa0] sm:$0xff]
        %v726 = vld [vmem:[%s704 + $0xa8] sm:$0xff]
        %v727 = vld [vmem:[%s704 + $0xb0] sm:$0xff]
        %v728 = vld [vmem:[%s704 + $0xb8] sm:$0xff]
        %v729 = vld [vmem:[%s704 + $0xc0] sm:$0xff]
        %v730 = vld [vmem:[%s704 + $0xc8] sm:$0xff]
        %v731 = vld [vmem:[%s704 + $0xd0] sm:$0xff]
        %v732 = vld [vmem:[%s704 + $0xd8] sm:$0xff]
        %v733 = vld [vmem:[%s704 + $0xe0] sm:$0xff]
        %v734 = vld [vmem:[%s704 + $0xe8] sm:$0xff]
        %v735 = vld [vmem:[%s704 + $0xf0] sm:$0xff]
        %v736 = vld [vmem:[%s704 + $0xf8] sm:$0xff]
        %v737 = vld [vmem:[%s704 + $0x100] sm:$0xff]
        %v738 = vld [vmem:[%s704 + $0x108] sm:$0xff]
        %v739 = vld [vmem:[%s704 + $0x110] sm:$0xff]
        %v740 = vld [vmem:[%s704 + $0x118] sm:$0xff]
        %v741 = vld [vmem:[%s704 + $0x120] sm:$0xff]
        %v742 = vld [vmem:[%s704 + $0x128] sm:$0xff]
        %v743 = vld [vmem:[%s704 + $0x130] sm:$0xff]
        %v744 = vld [vmem:[%s704 + $0x138] sm:$0xff]
        %v745 = vld [vmem:[%s704 + $0x140] sm:$0xff]
        %v746 = vld [vmem:[%s704 + $0x148] sm:$0xff]
        %v747 = vld [vmem:[%s704 + $0x150] sm:$0xff]
        %v748 = vld [vmem:[%s704 + $0x158] sm:$0xff]
        %v749 = vld [vmem:[%s704 + $0x160] sm:$0xff]
        %v750 = vld [vmem:[%s704 + $0x168] sm:$0xff]
        %v751 = vld [vmem:[%s704 + $0x170] sm:$0xff]
        %v752 = vld [vmem:[%s704 + $0x178] sm:$0xff]
        %v753 = vld [vmem:[%s704 + $0x180] sm:$0xff]
        %v754 = vld [vmem:[%s704 + $0x188] sm:$0xff]
        %v755 = vld [vmem:[%s704 + $0x190] sm:$0xff]
        %v756 = vld [vmem:[%s704 + $0x198] sm:$0xff]
        %v757 = vld [vmem:[%s704 + $0x1a0] sm:$0xff]
        %v758 = vld [vmem:[%s704 + $0x1a8] sm:$0xff]
        %v759 = vld [vmem:[%s704 + $0x1b0] sm:$0xff]
        %v760 = vld [vmem:[%s704 + $0x1b8] sm:$0xff]
        %v761 = vld [vmem:[%s704 + $0x1c0] sm:$0xff]
        %v762 = vld [vmem:[%s704 + $0x1c8] sm:$0xff]
        %v763 = vld [vmem:[%s704 + $0x1d0] sm:$0xff]
        %v764 = vld [vmem:[%s704 + $0x1d8] sm:$0xff]
        %v765 = vld [vmem:[%s704 + $0x1e0] sm:$0xff]
        %v766 = vld [vmem:[%s704 + $0x1e8] sm:$0xff]
        %v767 = vld [vmem:[%s704 + $0x1f0] sm:$0xff]
        %v768 = vld [vmem:[%s704 + $0x1f8] sm:$0xff]
        %vm769 = vsmask.f32 7424
        %v771 = vshrl.u32 %v696, 16
        %v773 = vshll.u32 %v696, 16
        %v775 = vrot.slane %v773, 1
        %v776 = vor.u32 %v771, %v775
        %v778 = vshll.u32 %v612, 16
        %v780 = vrot.slane %v778, 1
        %v781 = vsel %vm769, %v776, %v780
        %v783 = vshrl.u32 %v697, 16
        %v785 = vshll.u32 %v697, 16
        %v787 = vrot.slane %v785, 1
        %v788 = vor.u32 %v783, %v787
        %v790 = vshll.u32 %v613, 16
        %v792 = vrot.slane %v790, 1
        %v793 = vsel %vm769, %v788, %v792
        %v795 = vshrl.u32 %v698, 16
        %v797 = vshll.u32 %v698, 16
        %v799 = vrot.slane %v797, 1
        %v800 = vor.u32 %v795, %v799
        %v802 = vshll.u32 %v614, 16
        %v804 = vrot.slane %v802, 1
        %v805 = vsel %vm769, %v800, %v804
        %v807 = vshrl.u32 %v699, 16
        %v809 = vshll.u32 %v699, 16
        %v811 = vrot.slane %v809, 1
        %v812 = vor.u32 %v807, %v811
        %v814 = vshll.u32 %v615, 16
        %v816 = vrot.slane %v814, 1
        %v817 = vsel %vm769, %v812, %v816
        %v818 = vshrl.u32 %v612, 16
        %v820 = vor.u32 %v818, %v780
        %v822 = vshll.u32 %v616, 16
        %v824 = vrot.slane %v822, 1
        %v825 = vsel %vm769, %v820, %v824
        %v826 = vshrl.u32 %v613, 16
        %v828 = vor.u32 %v826, %v792
        %v830 = vshll.u32 %v617, 16
        %v832 = vrot.slane %v830, 1
        %v833 = vsel %vm769, %v828, %v832
        %v834 = vshrl.u32 %v614, 16
        %v836 = vor.u32 %v834, %v804
        %v838 = vshll.u32 %v618, 16
        %v840 = vrot.slane %v838, 1
        %v841 = vsel %vm769, %v836, %v840
        %v842 = vshrl.u32 %v615, 16
        %v844 = vor.u32 %v842, %v816
        %v846 = vshll.u32 %v619, 16
        %v848 = vrot.slane %v846, 1
        %v849 = vsel %vm769, %v844, %v848
        %v850 = vshrl.u32 %v616, 16
        %v852 = vor.u32 %v850, %v824
        %v854 = vshll.u32 %v700, 16
        %v856 = vrot.slane %v854, 1
        %v857 = vsel %vm769, %v852, %v856
        %v858 = vshrl.u32 %v617, 16
        %v860 = vor.u32 %v858, %v832
        %v862 = vshll.u32 %v701, 16
        %v864 = vrot.slane %v862, 1
        %v865 = vsel %vm769, %v860, %v864
        %v866 = vshrl.u32 %v618, 16
        %v868 = vor.u32 %v866, %v840
        %v870 = vshll.u32 %v702, 16
        %v872 = vrot.slane %v870, 1
        %v873 = vsel %vm769, %v868, %v872
        %v874 = vshrl.u32 %v619, 16
        %v876 = vor.u32 %v874, %v848
        %v878 = vshll.u32 %v703, 16
        %v880 = vrot.slane %v878, 1
        %v881 = vsel %vm769, %v876, %v880
        %v882 = vshrl.u32 %v700, 16
        %v884 = vor.u32 %v882, %v856
        %v885 = vshrl.u32 %v701, 16
        %v887 = vor.u32 %v885, %v864
        %v888 = vshrl.u32 %v702, 16
        %v890 = vor.u32 %v888, %v872
        %v891 = vshrl.u32 %v703, 16
        %v893 = vor.u32 %v891, %v880
        %v974 = vunpack.c.l.b16 %v705
        %v975 = vunpack.c.h.b16 %v705
        %v976 = vunpack.c.l.b16 %v706
        %v977 = vunpack.c.h.b16 %v706
        %v978 = vunpack.c.l.b16 %v707
        %v979 = vunpack.c.h.b16 %v707
        %v980 = vunpack.c.l.b16 %v708
        %v981 = vunpack.c.h.b16 %v708
        %v982 = vunpack.c.l.b16 %v709
        %v983 = vunpack.c.h.b16 %v709
        %v984 = vunpack.c.l.b16 %v710
        %v985 = vunpack.c.h.b16 %v710
        %v986 = vunpack.c.l.b16 %v711
        %v987 = vunpack.c.h.b16 %v711
        %v988 = vunpack.c.l.b16 %v712
        %v989 = vunpack.c.h.b16 %v712
        %v990 = vunpack.c.l.b16 %v713
        %v991 = vunpack.c.h.b16 %v713
        %v992 = vunpack.c.l.b16 %v714
        %v993 = vunpack.c.h.b16 %v714
        %v994 = vunpack.c.l.b16 %v715
        %v995 = vunpack.c.h.b16 %v715
        %v996 = vunpack.c.l.b16 %v716
        %v997 = vunpack.c.h.b16 %v716
        %v998 = vunpack.c.l.b16 %v717
        %v999 = vunpack.c.h.b16 %v717
        %v1000 = vunpack.c.l.b16 %v718
        %v1001 = vunpack.c.h.b16 %v718
        %v1002 = vunpack.c.l.b16 %v719
        %v1003 = vunpack.c.h.b16 %v719
        %v1004 = vunpack.c.l.b16 %v720
        %v1005 = vunpack.c.h.b16 %v720
        %v1006 = vunpack.c.l.b16 %v721
        %v1007 = vunpack.c.h.b16 %v721
        %v1008 = vunpack.c.l.b16 %v722
        %v1009 = vunpack.c.h.b16 %v722
        %v1010 = vunpack.c.l.b16 %v723
        %v1011 = vunpack.c.h.b16 %v723
        %v1012 = vunpack.c.l.b16 %v724
        %v1013 = vunpack.c.h.b16 %v724
        %v1014 = vunpack.c.l.b16 %v725
        %v1015 = vunpack.c.h.b16 %v725
        %v1016 = vunpack.c.l.b16 %v726
        %v1017 = vunpack.c.h.b16 %v726
        %v1018 = vunpack.c.l.b16 %v727
        %v1019 = vunpack.c.h.b16 %v727
        %v1020 = vunpack.c.l.b16 %v728
        %v1021 = vunpack.c.h.b16 %v728
        %v1022 = vunpack.c.l.b16 %v729
        %v1023 = vunpack.c.h.b16 %v729
        %v1024 = vunpack.c.l.b16 %v730
        %v1025 = vunpack.c.h.b16 %v730
        %v1026 = vunpack.c.l.b16 %v731
        %v1027 = vunpack.c.h.b16 %v731
        %v1028 = vunpack.c.l.b16 %v732
        %v1029 = vunpack.c.h.b16 %v732
        %v1030 = vunpack.c.l.b16 %v733
        %v1031 = vunpack.c.h.b16 %v733
        %v1032 = vunpack.c.l.b16 %v734
        %v1033 = vunpack.c.h.b16 %v734
        %v1034 = vunpack.c.l.b16 %v735
        %v1035 = vunpack.c.h.b16 %v735
        %v1036 = vunpack.c.l.b16 %v736
        %v1037 = vunpack.c.h.b16 %v736
        %v1038 = vunpack.c.l.b16 %v737
        %v1039 = vunpack.c.h.b16 %v737
        %v1040 = vunpack.c.l.b16 %v738
        %v1041 = vunpack.c.h.b16 %v738
        %v1042 = vunpack.c.l.b16 %v739
        %v1043 = vunpack.c.h.b16 %v739
        %v1044 = vunpack.c.l.b16 %v740
        %v1045 = vunpack.c.h.b16 %v740
        %v1046 = vunpack.c.l.b16 %v741
        %v1047 = vunpack.c.h.b16 %v741
        %v1048 = vunpack.c.l.b16 %v742
        %v1049 = vunpack.c.h.b16 %v742
        %v1050 = vunpack.c.l.b16 %v743
        %v1051 = vunpack.c.h.b16 %v743
        %v1052 = vunpack.c.l.b16 %v744
        %v1053 = vunpack.c.h.b16 %v744
        %v1054 = vunpack.c.l.b16 %v745
        %v1055 = vunpack.c.h.b16 %v745
        %v1056 = vunpack.c.l.b16 %v746
        %v1057 = vunpack.c.h.b16 %v746
        %v1058 = vunpack.c.l.b16 %v747
        %v1059 = vunpack.c.h.b16 %v747
        %v1060 = vunpack.c.l.b16 %v748
        %v1061 = vunpack.c.h.b16 %v748
        %v1062 = vunpack.c.l.b16 %v749
        %v1063 = vunpack.c.h.b16 %v749
        %v1064 = vunpack.c.l.b16 %v750
        %v1065 = vunpack.c.h.b16 %v750
        %v1066 = vunpack.c.l.b16 %v751
        %v1067 = vunpack.c.h.b16 %v751
        %v1068 = vunpack.c.l.b16 %v752
        %v1069 = vunpack.c.h.b16 %v752
        %v1070 = vunpack.c.l.b16 %v753
        %v1071 = vunpack.c.h.b16 %v753
        %v1072 = vunpack.c.l.b16 %v754
        %v1073 = vunpack.c.h.b16 %v754
        %v1074 = vunpack.c.l.b16 %v755
        %v1075 = vunpack.c.h.b16 %v755
        %v1076 = vunpack.c.l.b16 %v756
        %v1077 = vunpack.c.h.b16 %v756
        %v1078 = vunpack.c.l.b16 %v757
        %v1079 = vunpack.c.h.b16 %v757
        %v1080 = vunpack.c.l.b16 %v758
        %v1081 = vunpack.c.h.b16 %v758
        %v1082 = vunpack.c.l.b16 %v759
        %v1083 = vunpack.c.h.b16 %v759
        %v1084 = vunpack.c.l.b16 %v760
        %v1085 = vunpack.c.h.b16 %v760
        %v1086 = vunpack.c.l.b16 %v761
        %v1087 = vunpack.c.h.b16 %v761
        %v1088 = vunpack.c.l.b16 %v762
        %v1089 = vunpack.c.h.b16 %v762
        %v1090 = vunpack.c.l.b16 %v763
        %v1091 = vunpack.c.h.b16 %v763
        %v1092 = vunpack.c.l.b16 %v764
        %v1093 = vunpack.c.h.b16 %v764
        %v1094 = vunpack.c.l.b16 %v765
        %v1095 = vunpack.c.h.b16 %v765
        %v1096 = vunpack.c.l.b16 %v766
        %v1097 = vunpack.c.h.b16 %v766
        %v1098 = vunpack.c.l.b16 %v767
        %v1099 = vunpack.c.h.b16 %v767
        %v1100 = vunpack.c.l.b16 %v768
        %v1101 = vunpack.c.h.b16 %v768
        %v1102 = vpack.c.b16 %v976, %v974
        %v1103 = vpack.c.b16 %v977, %v975
        %v1104 = vpack.c.b16 %v980, %v978
        %v1105 = vpack.c.b16 %v981, %v979
        %v1106 = vpack.c.b16 %v984, %v982
        %v1107 = vpack.c.b16 %v985, %v983
        %v1108 = vpack.c.b16 %v988, %v986
        %v1109 = vpack.c.b16 %v989, %v987
        %v1110 = vpack.c.b16 %v992, %v990
        %v1111 = vpack.c.b16 %v993, %v991
        %v1112 = vpack.c.b16 %v996, %v994
        %v1113 = vpack.c.b16 %v997, %v995
        %v1114 = vpack.c.b16 %v1000, %v998
        %v1115 = vpack.c.b16 %v1001, %v999
        %v1116 = vpack.c.b16 %v1004, %v1002
        %v1117 = vpack.c.b16 %v1005, %v1003
        %v1118 = vpack.c.b16 %v1008, %v1006
        %v1119 = vpack.c.b16 %v1009, %v1007
        %v1120 = vpack.c.b16 %v1012, %v1010
        %v1121 = vpack.c.b16 %v1013, %v1011
        %v1122 = vpack.c.b16 %v1016, %v1014
        %v1123 = vpack.c.b16 %v1017, %v1015
        %v1124 = vpack.c.b16 %v1020, %v1018
        %v1125 = vpack.c.b16 %v1021, %v1019
        %v1126 = vpack.c.b16 %v1024, %v1022
        %v1127 = vpack.c.b16 %v1025, %v1023
        %v1128 = vpack.c.b16 %v1028, %v1026
        %v1129 = vpack.c.b16 %v1029, %v1027
        %v1130 = vpack.c.b16 %v1032, %v1030
        %v1131 = vpack.c.b16 %v1033, %v1031
        %v1132 = vpack.c.b16 %v1036, %v1034
        %v1133 = vpack.c.b16 %v1037, %v1035
        %v1134 = vpack.c.b16 %v1040, %v1038
        %v1135 = vpack.c.b16 %v1041, %v1039
        %v1136 = vpack.c.b16 %v1044, %v1042
        %v1137 = vpack.c.b16 %v1045, %v1043
        %v1138 = vpack.c.b16 %v1048, %v1046
        %v1139 = vpack.c.b16 %v1049, %v1047
        %v1140 = vpack.c.b16 %v1052, %v1050
        %v1141 = vpack.c.b16 %v1053, %v1051
        %v1142 = vpack.c.b16 %v1056, %v1054
        %v1143 = vpack.c.b16 %v1057, %v1055
        %v1144 = vpack.c.b16 %v1060, %v1058
        %v1145 = vpack.c.b16 %v1061, %v1059
        %v1146 = vpack.c.b16 %v1064, %v1062
        %v1147 = vpack.c.b16 %v1065, %v1063
        %v1148 = vpack.c.b16 %v1068, %v1066
        %v1149 = vpack.c.b16 %v1069, %v1067
        %v1150 = vpack.c.b16 %v1072, %v1070
        %v1151 = vpack.c.b16 %v1073, %v1071
        %v1152 = vpack.c.b16 %v1076, %v1074
        %v1153 = vpack.c.b16 %v1077, %v1075
        %v1154 = vpack.c.b16 %v1080, %v1078
        %v1155 = vpack.c.b16 %v1081, %v1079
        %v1156 = vpack.c.b16 %v1084, %v1082
        %v1157 = vpack.c.b16 %v1085, %v1083
        %v1158 = vpack.c.b16 %v1088, %v1086
        %v1159 = vpack.c.b16 %v1089, %v1087
        %v1160 = vpack.c.b16 %v1092, %v1090
        %v1161 = vpack.c.b16 %v1093, %v1091
        %v1162 = vpack.c.b16 %v1096, %v1094
        %v1163 = vpack.c.b16 %v1097, %v1095
        %v1164 = vpack.c.b16 %v1100, %v1098
        %v1165 = vpack.c.b16 %v1101, %v1099
        %1230 = vmatprep.subr.bf16.mxu0 %v1117
        %1231 = vmatpush1.bf16.msra.mxu0 %v1116
        %1232 = vmatprep.subr.bf16.mxu0 %v1115
        %1233 = vmatpush1.bf16.msra.mxu0 %v1114
        %1234 = vmatprep.subr.bf16.mxu0 %v1113
        %1235 = vmatpush1.bf16.msra.mxu0 %v1112
        %1236 = vmatprep.subr.bf16.mxu0 %v1111
        %1237 = vmatpush1.bf16.msra.mxu0 %v1110
        %1238 = vmatprep.subr.bf16.mxu0 %v1109
        %1239 = vmatpush1.bf16.msra.mxu0 %v1108
        %1240 = vmatprep.subr.bf16.mxu0 %v1107
        %1241 = vmatpush1.bf16.msra.mxu0 %v1106
        %1242 = vmatprep.subr.bf16.mxu0 %v1105
        %1243 = vmatpush1.bf16.msra.mxu0 %v1104
        %1244 = vmatprep.subr.bf16.mxu0 %v1103
        %1245 = vmatpush1.bf16.msra.mxu0 %v1102
        %1246 = vmatprep.subr.bf16.mxu0 %v1133
        %1247 = vmatpush2.bf16.msra.mxu0 %v1132
        %1248 = vmatprep.subr.bf16.mxu0 %v1131
        %1249 = vmatpush2.bf16.msra.mxu0 %v1130
        %1250 = vmatprep.subr.bf16.mxu0 %v1129
        %1251 = vmatpush2.bf16.msra.mxu0 %v1128
        %1252 = vmatprep.subr.bf16.mxu0 %v1127
        %1253 = vmatpush2.bf16.msra.mxu0 %v1126
        %1254 = vmatprep.subr.bf16.mxu0 %v1125
        %1255 = vmatpush2.bf16.msra.mxu0 %v1124
        %1256 = vmatprep.subr.bf16.mxu0 %v1123
        %1257 = vmatpush2.bf16.msra.mxu0 %v1122
        %1258 = vmatprep.subr.bf16.mxu0 %v1121
        %1259 = vmatpush2.bf16.msra.mxu0 %v1120
        %1260 = vmatprep.subr.bf16.mxu0 %v1119
        %1261 = vmatpush2.bf16.msra.mxu0 %v1118
        %1262 = vmatprep.mubr.bf16.mxu0 %v793
        %1263 = vmatmul.mubr.bf16.gmra.mxu0 %v781
        %v1264 = vpop.f32.mrf.mxu0
        %v1265 = vadd.f32 0.0, %v1264
        %v1266 = vpop.f32.mrf.mxu0
        %v1267 = vadd.f32 0.0, %v1266
        %v1268 = vpop.f32.mrf.mxu0
        %v1269 = vadd.f32 0.0, %v1268
        %v1270 = vpop.f32.mrf.mxu0
        %v1271 = vadd.f32 0.0, %v1270
        %1272 = vmatprep.mubr.bf16.mxu0 %v833
        %1273 = vmatmul.mubr.bf16.gmra.mxu0 %v825
        %v1274 = vpop.f32.mrf.mxu0
        %v1275 = vadd.f32 0.0, %v1274
        %v1276 = vpop.f32.mrf.mxu0
        %v1277 = vadd.f32 0.0, %v1276
        %v1278 = vpop.f32.mrf.mxu0
        %v1279 = vadd.f32 0.0, %v1278
        %v1280 = vpop.f32.mrf.mxu0
        %v1281 = vadd.f32 0.0, %v1280
        %1282 = vmatprep.mubr.bf16.mxu0 %v865
        %1283 = vmatmul.mubr.bf16.gmra.mxu0 %v857
        %v1284 = vpop.f32.mrf.mxu0
        %v1285 = vadd.f32 0.0, %v1284
        %v1286 = vpop.f32.mrf.mxu0
        %v1287 = vadd.f32 0.0, %v1286
        %v1288 = vpop.f32.mrf.mxu0
        %v1289 = vadd.f32 0.0, %v1288
        %v1290 = vpop.f32.mrf.mxu0
        %v1291 = vadd.f32 0.0, %v1290
        %1292 = vmatprep.mubr.bf16.mxu0 %v887
        %1293 = vmatmul.mubr.bf16.gmra.mxu0 %v884
        %v1294 = vpop.f32.mrf.mxu0
        %v1295 = vadd.f32 0.0, %v1294
        %v1296 = vpop.f32.mrf.mxu0
        %v1297 = vadd.f32 0.0, %v1296
        %v1298 = vpop.f32.mrf.mxu0
        %v1299 = vpop.f32.mrf.mxu0
        %1300 = vdwg.mxu0
        %1301 = vmatprep.subr.bf16.mxu0 %v1149
        %1302 = vmatpush1.bf16.msra.mxu0 %v1148
        %1303 = vmatprep.subr.bf16.mxu0 %v1147
        %1304 = vmatpush1.bf16.msra.mxu0 %v1146
        %1305 = vmatprep.subr.bf16.mxu0 %v1145
        %1306 = vmatpush1.bf16.msra.mxu0 %v1144
        %1307 = vmatprep.subr.bf16.mxu0 %v1143
        %1308 = vmatpush1.bf16.msra.mxu0 %v1142
        %1309 = vmatprep.subr.bf16.mxu0 %v1141
        %1310 = vmatpush1.bf16.msra.mxu0 %v1140
        %1311 = vmatprep.subr.bf16.mxu0 %v1139
        %1312 = vmatpush1.bf16.msra.mxu0 %v1138
        %1313 = vmatprep.subr.bf16.mxu0 %v1137
        %1314 = vmatpush1.bf16.msra.mxu0 %v1136
        %1315 = vmatprep.subr.bf16.mxu0 %v1135
        %1316 = vmatpush1.bf16.msra.mxu0 %v1134
        %1317 = vmatprep.subr.bf16.mxu0 %v1165
        %1318 = vmatpush2.bf16.msra.mxu0 %v1164
        %1319 = vmatprep.subr.bf16.mxu0 %v1163
        %1320 = vmatpush2.bf16.msra.mxu0 %v1162
        %1321 = vmatprep.subr.bf16.mxu0 %v1161
        %1322 = vmatpush2.bf16.msra.mxu0 %v1160
        %1323 = vmatprep.subr.bf16.mxu0 %v1159
        %1324 = vmatpush2.bf16.msra.mxu0 %v1158
        %1325 = vmatprep.subr.bf16.mxu0 %v1157
        %1326 = vmatpush2.bf16.msra.mxu0 %v1156
        %1327 = vmatprep.subr.bf16.mxu0 %v1155
        %1328 = vmatpush2.bf16.msra.mxu0 %v1154
        %1329 = vmatprep.subr.bf16.mxu0 %v1153
        %1330 = vmatpush2.bf16.msra.mxu0 %v1152
        %1331 = vmatprep.subr.bf16.mxu0 %v1151
        %1332 = vmatpush2.bf16.msra.mxu0 %v1150
        %1333 = vmatprep.mubr.bf16.mxu0 %v817
        %1334 = vmatmul.mubr.bf16.gmra.mxu0 %v805
        %v1335 = vpop.f32.mrf.mxu0
        %v1336 = vadd.f32 %v1265, %v1335
        %v1337 = vpop.f32.mrf.mxu0
        %v1338 = vadd.f32 %v1267, %v1337
        %v1339 = vpop.f32.mrf.mxu0
        %v1340 = vadd.f32 %v1269, %v1339
        %v1341 = vpop.f32.mrf.mxu0
        %v1342 = vadd.f32 %v1271, %v1341
        %1343 = vmatprep.mubr.bf16.mxu0 %v849
        %1344 = vmatmul.mubr.bf16.gmra.mxu0 %v841
        %v1345 = vpop.f32.mrf.mxu0
        %v1346 = vadd.f32 %v1275, %v1345
        %v1347 = vpop.f32.mrf.mxu0
        %v1348 = vadd.f32 %v1277, %v1347
        %v1349 = vpop.f32.mrf.mxu0
        %v1350 = vadd.f32 %v1279, %v1349
        %v1351 = vpop.f32.mrf.mxu0
        %v1352 = vadd.f32 %v1281, %v1351
        %1353 = vmatprep.mubr.bf16.mxu0 %v881
        %1354 = vmatmul.mubr.bf16.gmra.mxu0 %v873
        %v1355 = vpop.f32.mrf.mxu0
        %v1356 = vadd.f32 %v1285, %v1355
        %v1357 = vpop.f32.mrf.mxu0
        %v1358 = vadd.f32 %v1287, %v1357
        %v1359 = vpop.f32.mrf.mxu0
        %v1360 = vadd.f32 %v1289, %v1359
        %v1361 = vpop.f32.mrf.mxu0
        %v1362 = vadd.f32 %v1291, %v1361
        %1363 = vmatprep.mubr.bf16.mxu0 %v893
        %1364 = vmatmul.mubr.bf16.gmra.mxu0 %v890
        %v1365 = vpop.f32.mrf.mxu0
        %v1366 = vadd.f32 %v1295, %v1365
        %v1367 = vpop.f32.mrf.mxu0
        %v1368 = vadd.f32 %v1297, %v1367
        %v1369 = vpop.f32.mrf.mxu0
        %v1370 = vpop.f32.mrf.mxu0
        %1371 = vdwg.mxu0
        %v1436 = vunpack.c.l.b16 %v624
        %v1437 = vunpack.c.h.b16 %v624
        %v1438 = vunpack.c.l.b16 %v625
        %v1439 = vunpack.c.h.b16 %v625
        %v1440 = vunpack.c.l.b16 %v626
        %v1441 = vunpack.c.h.b16 %v626
        %v1442 = vunpack.c.l.b16 %v627
        %v1443 = vunpack.c.h.b16 %v627
        %v1444 = vunpack.c.l.b16 %v628
        %v1445 = vunpack.c.h.b16 %v628
        %v1446 = vunpack.c.l.b16 %v629
        %v1447 = vunpack.c.h.b16 %v629
        %v1448 = vunpack.c.l.b16 %v630
        %v1449 = vunpack.c.h.b16 %v630
        %v1450 = vunpack.c.l.b16 %v631
        %v1451 = vunpack.c.h.b16 %v631
        %v1452 = vunpack.c.l.b16 %v632
        %v1453 = vunpack.c.h.b16 %v632
        %v1454 = vunpack.c.l.b16 %v633
        %v1455 = vunpack.c.h.b16 %v633
        %v1456 = vunpack.c.l.b16 %v634
        %v1457 = vunpack.c.h.b16 %v634
        %v1458 = vunpack.c.l.b16 %v635
        %v1459 = vunpack.c.h.b16 %v635
        %v1460 = vunpack.c.l.b16 %v636
        %v1461 = vunpack.c.h.b16 %v636
        %v1462 = vunpack.c.l.b16 %v637
        %v1463 = vunpack.c.h.b16 %v637
        %v1464 = vunpack.c.l.b16 %v638
        %v1465 = vunpack.c.h.b16 %v638
        %v1466 = vunpack.c.l.b16 %v639
        %v1467 = vunpack.c.h.b16 %v639
        %v1468 = vunpack.c.l.b16 %v640
        %v1469 = vunpack.c.h.b16 %v640
        %v1470 = vunpack.c.l.b16 %v641
        %v1471 = vunpack.c.h.b16 %v641
        %v1472 = vunpack.c.l.b16 %v642
        %v1473 = vunpack.c.h.b16 %v642
        %v1474 = vunpack.c.l.b16 %v643
        %v1475 = vunpack.c.h.b16 %v643
        %v1476 = vunpack.c.l.b16 %v644
        %v1477 = vunpack.c.h.b16 %v644
        %v1478 = vunpack.c.l.b16 %v645
        %v1479 = vunpack.c.h.b16 %v645
        %v1480 = vunpack.c.l.b16 %v646
        %v1481 = vunpack.c.h.b16 %v646
        %v1482 = vunpack.c.l.b16 %v647
        %v1483 = vunpack.c.h.b16 %v647
        %v1484 = vunpack.c.l.b16 %v648
        %v1485 = vunpack.c.h.b16 %v648
        %v1486 = vunpack.c.l.b16 %v649
        %v1487 = vunpack.c.h.b16 %v649
        %v1488 = vunpack.c.l.b16 %v650
        %v1489 = vunpack.c.h.b16 %v650
        %v1490 = vunpack.c.l.b16 %v651
        %v1491 = vunpack.c.h.b16 %v651
        %v1492 = vunpack.c.l.b16 %v652
        %v1493 = vunpack.c.h.b16 %v652
        %v1494 = vunpack.c.l.b16 %v653
        %v1495 = vunpack.c.h.b16 %v653
        %v1496 = vunpack.c.l.b16 %v654
        %v1497 = vunpack.c.h.b16 %v654
        %v1498 = vunpack.c.l.b16 %v655
        %v1499 = vunpack.c.h.b16 %v655
        %v1500 = vunpack.c.l.b16 %v656
        %v1501 = vunpack.c.h.b16 %v656
        %v1502 = vunpack.c.l.b16 %v657
        %v1503 = vunpack.c.h.b16 %v657
        %v1504 = vunpack.c.l.b16 %v658
        %v1505 = vunpack.c.h.b16 %v658
        %v1506 = vunpack.c.l.b16 %v659
        %v1507 = vunpack.c.h.b16 %v659
        %v1508 = vunpack.c.l.b16 %v660
        %v1509 = vunpack.c.h.b16 %v660
        %v1510 = vunpack.c.l.b16 %v661
        %v1511 = vunpack.c.h.b16 %v661
        %v1512 = vunpack.c.l.b16 %v662
        %v1513 = vunpack.c.h.b16 %v662
        %v1514 = vunpack.c.l.b16 %v663
        %v1515 = vunpack.c.h.b16 %v663
        %v1516 = vunpack.c.l.b16 %v664
        %v1517 = vunpack.c.h.b16 %v664
        %v1518 = vunpack.c.l.b16 %v665
        %v1519 = vunpack.c.h.b16 %v665
        %v1520 = vunpack.c.l.b16 %v666
        %v1521 = vunpack.c.h.b16 %v666
        %v1522 = vunpack.c.l.b16 %v667
        %v1523 = vunpack.c.h.b16 %v667
        %v1524 = vunpack.c.l.b16 %v668
        %v1525 = vunpack.c.h.b16 %v668
        %v1526 = vunpack.c.l.b16 %v669
        %v1527 = vunpack.c.h.b16 %v669
        %v1528 = vunpack.c.l.b16 %v670
        %v1529 = vunpack.c.h.b16 %v670
        %v1530 = vunpack.c.l.b16 %v671
        %v1531 = vunpack.c.h.b16 %v671
        %v1532 = vunpack.c.l.b16 %v672
        %v1533 = vunpack.c.h.b16 %v672
        %v1534 = vunpack.c.l.b16 %v673
        %v1535 = vunpack.c.h.b16 %v673
        %v1536 = vunpack.c.l.b16 %v674
        %v1537 = vunpack.c.h.b16 %v674
        %v1538 = vunpack.c.l.b16 %v675
        %v1539 = vunpack.c.h.b16 %v675
        %v1540 = vunpack.c.l.b16 %v676
        %v1541 = vunpack.c.h.b16 %v676
        %v1542 = vunpack.c.l.b16 %v677
        %v1543 = vunpack.c.h.b16 %v677
        %v1544 = vunpack.c.l.b16 %v678
        %v1545 = vunpack.c.h.b16 %v678
        %v1546 = vunpack.c.l.b16 %v679
        %v1547 = vunpack.c.h.b16 %v679
        %v1548 = vunpack.c.l.b16 %v680
        %v1549 = vunpack.c.h.b16 %v680
        %v1550 = vunpack.c.l.b16 %v681
        %v1551 = vunpack.c.h.b16 %v681
        %v1552 = vunpack.c.l.b16 %v682
        %v1553 = vunpack.c.h.b16 %v682
        %v1554 = vunpack.c.l.b16 %v683
        %v1555 = vunpack.c.h.b16 %v683
        %v1556 = vunpack.c.l.b16 %v684
        %v1557 = vunpack.c.h.b16 %v684
        %v1558 = vunpack.c.l.b16 %v685
        %v1559 = vunpack.c.h.b16 %v685
        %v1560 = vunpack.c.l.b16 %v686
        %v1561 = vunpack.c.h.b16 %v686
        %v1562 = vunpack.c.l.b16 %v687
        %v1563 = vunpack.c.h.b16 %v687
        %v1564 = vpack.c.b16 %v1438, %v1436
        %v1565 = vpack.c.b16 %v1439, %v1437
        %v1566 = vpack.c.b16 %v1442, %v1440
        %v1567 = vpack.c.b16 %v1443, %v1441
        %v1568 = vpack.c.b16 %v1446, %v1444
        %v1569 = vpack.c.b16 %v1447, %v1445
        %v1570 = vpack.c.b16 %v1450, %v1448
        %v1571 = vpack.c.b16 %v1451, %v1449
        %v1572 = vpack.c.b16 %v1454, %v1452
        %v1573 = vpack.c.b16 %v1455, %v1453
        %v1574 = vpack.c.b16 %v1458, %v1456
        %v1575 = vpack.c.b16 %v1459, %v1457
        %v1576 = vpack.c.b16 %v1462, %v1460
        %v1577 = vpack.c.b16 %v1463, %v1461
        %v1578 = vpack.c.b16 %v1466, %v1464
        %v1579 = vpack.c.b16 %v1467, %v1465
        %v1580 = vpack.c.b16 %v1470, %v1468
        %v1581 = vpack.c.b16 %v1471, %v1469
        %v1582 = vpack.c.b16 %v1474, %v1472
        %v1583 = vpack.c.b16 %v1475, %v1473
        %v1584 = vpack.c.b16 %v1478, %v1476
        %v1585 = vpack.c.b16 %v1479, %v1477
        %v1586 = vpack.c.b16 %v1482, %v1480
        %v1587 = vpack.c.b16 %v1483, %v1481
        %v1588 = vpack.c.b16 %v1486, %v1484
        %v1589 = vpack.c.b16 %v1487, %v1485
        %v1590 = vpack.c.b16 %v1490, %v1488
        %v1591 = vpack.c.b16 %v1491, %v1489
        %v1592 = vpack.c.b16 %v1494, %v1492
        %v1593 = vpack.c.b16 %v1495, %v1493
        %v1594 = vpack.c.b16 %v1498, %v1496
        %v1595 = vpack.c.b16 %v1499, %v1497
        %v1596 = vpack.c.b16 %v1502, %v1500
        %v1597 = vpack.c.b16 %v1503, %v1501
        %v1598 = vpack.c.b16 %v1506, %v1504
        %v1599 = vpack.c.b16 %v1507, %v1505
        %v1600 = vpack.c.b16 %v1510, %v1508
        %v1601 = vpack.c.b16 %v1511, %v1509
        %v1602 = vpack.c.b16 %v1514, %v1512
        %v1603 = vpack.c.b16 %v1515, %v1513
        %v1604 = vpack.c.b16 %v1518, %v1516
        %v1605 = vpack.c.b16 %v1519, %v1517
        %v1606 = vpack.c.b16 %v1522, %v1520
        %v1607 = vpack.c.b16 %v1523, %v1521
        %v1608 = vpack.c.b16 %v1526, %v1524
        %v1609 = vpack.c.b16 %v1527, %v1525
        %v1610 = vpack.c.b16 %v1530, %v1528
        %v1611 = vpack.c.b16 %v1531, %v1529
        %v1612 = vpack.c.b16 %v1534, %v1532
        %v1613 = vpack.c.b16 %v1535, %v1533
        %v1614 = vpack.c.b16 %v1538, %v1536
        %v1615 = vpack.c.b16 %v1539, %v1537
        %v1616 = vpack.c.b16 %v1542, %v1540
        %v1617 = vpack.c.b16 %v1543, %v1541
        %v1618 = vpack.c.b16 %v1546, %v1544
        %v1619 = vpack.c.b16 %v1547, %v1545
        %v1620 = vpack.c.b16 %v1550, %v1548
        %v1621 = vpack.c.b16 %v1551, %v1549
        %v1622 = vpack.c.b16 %v1554, %v1552
        %v1623 = vpack.c.b16 %v1555, %v1553
        %v1624 = vpack.c.b16 %v1558, %v1556
        %v1625 = vpack.c.b16 %v1559, %v1557
        %v1626 = vpack.c.b16 %v1562, %v1560
        %v1627 = vpack.c.b16 %v1563, %v1561
        %1692 = vmatprep.subr.bf16.mxu0 %v1579
        %1693 = vmatpush1.bf16.msra.mxu0 %v1578
        %1694 = vmatprep.subr.bf16.mxu0 %v1577
        %1695 = vmatpush1.bf16.msra.mxu0 %v1576
        %1696 = vmatprep.subr.bf16.mxu0 %v1575
        %1697 = vmatpush1.bf16.msra.mxu0 %v1574
        %1698 = vmatprep.subr.bf16.mxu0 %v1573
        %1699 = vmatpush1.bf16.msra.mxu0 %v1572
        %1700 = vmatprep.subr.bf16.mxu0 %v1571
        %1701 = vmatpush1.bf16.msra.mxu0 %v1570
        %1702 = vmatprep.subr.bf16.mxu0 %v1569
        %1703 = vmatpush1.bf16.msra.mxu0 %v1568
        %1704 = vmatprep.subr.bf16.mxu0 %v1567
        %1705 = vmatpush1.bf16.msra.mxu0 %v1566
        %1706 = vmatprep.subr.bf16.mxu0 %v1565
        %1707 = vmatpush1.bf16.msra.mxu0 %v1564
        %1708 = vmatprep.subr.bf16.mxu0 %v1595
        %1709 = vmatpush2.bf16.msra.mxu0 %v1594
        %1710 = vmatprep.subr.bf16.mxu0 %v1593
        %1711 = vmatpush2.bf16.msra.mxu0 %v1592
        %1712 = vmatprep.subr.bf16.mxu0 %v1591
        %1713 = vmatpush2.bf16.msra.mxu0 %v1590
        %1714 = vmatprep.subr.bf16.mxu0 %v1589
        %1715 = vmatpush2.bf16.msra.mxu0 %v1588
        %1716 = vmatprep.subr.bf16.mxu0 %v1587
        %1717 = vmatpush2.bf16.msra.mxu0 %v1586
        %1718 = vmatprep.subr.bf16.mxu0 %v1585
        %1719 = vmatpush2.bf16.msra.mxu0 %v1584
        %1720 = vmatprep.subr.bf16.mxu0 %v1583
        %1721 = vmatpush2.bf16.msra.mxu0 %v1582
        %1722 = vmatprep.subr.bf16.mxu0 %v1581
        %1723 = vmatpush2.bf16.msra.mxu0 %v1580
        %1724 = vmatprep.mubr.bf16.mxu0 %v609
        %1725 = vmatmul.mubr.bf16.gmra.mxu0 %v608
        %v1726 = vpop.f32.mrf.mxu0
        %v1727 = vadd.f32 %v1336, %v1726
        %v1728 = vpop.f32.mrf.mxu0
        %v1729 = vadd.f32 %v1338, %v1728
        %v1730 = vpop.f32.mrf.mxu0
        %v1731 = vadd.f32 %v1340, %v1730
        %v1732 = vpop.f32.mrf.mxu0
        %v1733 = vadd.f32 %v1342, %v1732
        %1734 = vmatprep.mubr.bf16.mxu0 %v613
        %1735 = vmatmul.mubr.bf16.gmra.mxu0 %v612
        %v1736 = vpop.f32.mrf.mxu0
        %v1737 = vadd.f32 %v1346, %v1736
        %v1738 = vpop.f32.mrf.mxu0
        %v1739 = vadd.f32 %v1348, %v1738
        %v1740 = vpop.f32.mrf.mxu0
        %v1741 = vadd.f32 %v1350, %v1740
        %v1742 = vpop.f32.mrf.mxu0
        %v1743 = vadd.f32 %v1352, %v1742
        %1744 = vmatprep.mubr.bf16.mxu0 %v617
        %1745 = vmatmul.mubr.bf16.gmra.mxu0 %v616
        %v1746 = vpop.f32.mrf.mxu0
        %v1747 = vadd.f32 %v1356, %v1746
        %v1748 = vpop.f32.mrf.mxu0
        %v1749 = vadd.f32 %v1358, %v1748
        %v1750 = vpop.f32.mrf.mxu0
        %v1751 = vadd.f32 %v1360, %v1750
        %v1752 = vpop.f32.mrf.mxu0
        %v1753 = vadd.f32 %v1362, %v1752
        %1754 = vmatprep.mubr.bf16.mxu0 %v621
        %1755 = vmatmul.mubr.bf16.gmra.mxu0 %v620
        %v1756 = vpop.f32.mrf.mxu0
        %v1757 = vadd.f32 %v1366, %v1756
        %v1758 = vpop.f32.mrf.mxu0
        %v1759 = vadd.f32 %v1368, %v1758
        %v1760 = vpop.f32.mrf.mxu0
        %v1761 = vpop.f32.mrf.mxu0
        %1762 = vdwg.mxu0
        %1763 = vmatprep.subr.bf16.mxu0 %v1611
        %1764 = vmatpush1.bf16.msra.mxu0 %v1610
        %1765 = vmatprep.subr.bf16.mxu0 %v1609
        %1766 = vmatpush1.bf16.msra.mxu0 %v1608
        %1767 = vmatprep.subr.bf16.mxu0 %v1607
        %1768 = vmatpush1.bf16.msra.mxu0 %v1606
        %1769 = vmatprep.subr.bf16.mxu0 %v1605
        %1770 = vmatpush1.bf16.msra.mxu0 %v1604
        %1771 = vmatprep.subr.bf16.mxu0 %v1603
        %1772 = vmatpush1.bf16.msra.mxu0 %v1602
        %1773 = vmatprep.subr.bf16.mxu0 %v1601
        %1774 = vmatpush1.bf16.msra.mxu0 %v1600
        %1775 = vmatprep.subr.bf16.mxu0 %v1599
        %1776 = vmatpush1.bf16.msra.mxu0 %v1598
        %1777 = vmatprep.subr.bf16.mxu0 %v1597
        %1778 = vmatpush1.bf16.msra.mxu0 %v1596
        %1779 = vmatprep.subr.bf16.mxu0 %v1627
        %1780 = vmatpush2.bf16.msra.mxu0 %v1626
        %1781 = vmatprep.subr.bf16.mxu0 %v1625
        %1782 = vmatpush2.bf16.msra.mxu0 %v1624
        %1783 = vmatprep.subr.bf16.mxu0 %v1623
        %1784 = vmatpush2.bf16.msra.mxu0 %v1622
        %1785 = vmatprep.subr.bf16.mxu0 %v1621
        %1786 = vmatpush2.bf16.msra.mxu0 %v1620
        %1787 = vmatprep.subr.bf16.mxu0 %v1619
        %1788 = vmatpush2.bf16.msra.mxu0 %v1618
        %1789 = vmatprep.subr.bf16.mxu0 %v1617
        %1790 = vmatpush2.bf16.msra.mxu0 %v1616
        %1791 = vmatprep.subr.bf16.mxu0 %v1615
        %1792 = vmatpush2.bf16.msra.mxu0 %v1614
        %1793 = vmatprep.subr.bf16.mxu0 %v1613
        %1794 = vmatpush2.bf16.msra.mxu0 %v1612
        %1795 = vmatprep.mubr.bf16.mxu0 %v611
        %1796 = vmatmul.mubr.bf16.gmra.mxu0 %v610
        %v1797 = vpop.f32.mrf.mxu0
        %v1798 = vadd.f32 %v1727, %v1797
        %v1799 = vpop.f32.mrf.mxu0
        %v1800 = vadd.f32 %v1729, %v1799
        %v1801 = vpop.f32.mrf.mxu0
        %v1802 = vadd.f32 %v1731, %v1801
        %v1803 = vpop.f32.mrf.mxu0
        %v1804 = vadd.f32 %v1733, %v1803
        %1805 = vmatprep.mubr.bf16.mxu0 %v615
        %1806 = vmatmul.mubr.bf16.gmra.mxu0 %v614
        %v1807 = vpop.f32.mrf.mxu0
        %v1808 = vadd.f32 %v1737, %v1807
        %v1809 = vpop.f32.mrf.mxu0
        %v1810 = vadd.f32 %v1739, %v1809
        %v1811 = vpop.f32.mrf.mxu0
        %v1812 = vadd.f32 %v1741, %v1811
        %v1813 = vpop.f32.mrf.mxu0
        %v1814 = vadd.f32 %v1743, %v1813
        %1815 = vmatprep.mubr.bf16.mxu0 %v619
        %1816 = vmatmul.mubr.bf16.gmra.mxu0 %v618
        %v1817 = vpop.f32.mrf.mxu0
        %v1818 = vadd.f32 %v1747, %v1817
        %v1819 = vpop.f32.mrf.mxu0
        %v1820 = vadd.f32 %v1749, %v1819
        %v1821 = vpop.f32.mrf.mxu0
        %v1822 = vadd.f32 %v1751, %v1821
        %v1823 = vpop.f32.mrf.mxu0
        %v1824 = vadd.f32 %v1753, %v1823
        %1825 = vmatprep.mubr.bf16.mxu0 %v623
        %1826 = vmatmul.mubr.bf16.gmra.mxu0 %v622
        %v1827 = vpop.f32.mrf.mxu0
        %v1828 = vadd.f32 %v1757, %v1827
        %v1829 = vpop.f32.mrf.mxu0
        %v1830 = vadd.f32 %v1759, %v1829
        %v1831 = vpop.f32.mrf.mxu0
        %v1832 = vpop.f32.mrf.mxu0
        %1833 = vdwg.mxu0
        %v1834 = vld [vmem:[%s437 + $0x20] sm:$0xf8]
        %v1835 = vld [vmem:[%s437 + $0x28] sm:$0xf8]
        %v1836 = vld [vmem:[%s437 + $0x30] sm:$0xf8]
        %v1837 = vld [vmem:[%s437 + $0x38] sm:$0xf8]
        %v1838 = vld [vmem:[%s437 + $0x40] sm:$0xff]
        %v1839 = vld [vmem:[%s437 + $0x48] sm:$0xff]
        %v1840 = vld [vmem:[%s437 + $0x50] sm:$0xff]
        %v1841 = vld [vmem:[%s437 + $0x58] sm:$0xff]
        %v1842 = vld [vmem:[%s437 + $0x60] sm:$0xff]
        %v1843 = vld [vmem:[%s437 + $0x68] sm:$0xff]
        %v1844 = vld [vmem:[%s437 + $0x70] sm:$0xff]
        %v1845 = vld [vmem:[%s437 + $0x78] sm:$0xff]
        %v1846 = vld [vmem:[%s437 + $0x80] sm:$0xff]
        %v1847 = vld [vmem:[%s437 + $0x88] sm:$0xff]
        %v1848 = vld [vmem:[%s437 + $0x90] sm:$0xff]
        %v1849 = vld [vmem:[%s437 + $0x98] sm:$0xff]
        %v1850 = vld [vmem:[%s437 + $0xa0] sm:$0xff]
        %v1851 = vld [vmem:[%s437 + $0xa8] sm:$0xff]
        %v1852 = vld [vmem:[%s437 + $0xb0] sm:$0xff]
        %v1853 = vld [vmem:[%s437 + $0xb8] sm:$0xff]
        %v1854 = vld [vmem:[%s437 + $0xc0] sm:$0xff]
        %v1855 = vld [vmem:[%s437 + $0xc8] sm:$0xff]
        %v1856 = vld [vmem:[%s437 + $0xd0] sm:$0xff]
        %v1857 = vld [vmem:[%s437 + $0xd8] sm:$0xff]
        %v1858 = vld [vmem:[%s437 + $0xe0] sm:$0xff]
        %v1859 = vld [vmem:[%s437 + $0xe8] sm:$0xff]
        %v1860 = vld [vmem:[%s437 + $0xf0] sm:$0xff]
        %v1861 = vld [vmem:[%s437 + $0xf8] sm:$0xff]
        %v1862 = vld [vmem:[%s437 + $0x100] sm:$0x3]
        %v1863 = vld [vmem:[%s437 + $0x108] sm:$0x3]
        %v1864 = vld [vmem:[%s437 + $0x110] sm:$0x3]
        %v1865 = vld [vmem:[%s437 + $0x118] sm:$0x3]
        %v1866 = vpack.c.bf16 %v1838, %v1834
        %v1867 = vpack.c.bf16 %v1839, %v1835
        %v1868 = vpack.c.bf16 %v1840, %v1836
        %v1869 = vpack.c.bf16 %v1841, %v1837
        %v1870 = vpack.c.bf16 %v1846, %v1842
        %v1871 = vpack.c.bf16 %v1847, %v1843
        %v1872 = vpack.c.bf16 %v1848, %v1844
        %v1873 = vpack.c.bf16 %v1849, %v1845
        %v1874 = vpack.c.bf16 %v1854, %v1850
        %v1875 = vpack.c.bf16 %v1855, %v1851
        %v1876 = vpack.c.bf16 %v1856, %v1852
        %v1877 = vpack.c.bf16 %v1857, %v1853
        %v1878 = vpack.c.bf16 %v1862, %v1858
        %v1879 = vpack.c.bf16 %v1863, %v1859
        %v1880 = vpack.c.bf16 %v1864, %v1860
        %v1881 = vpack.c.bf16 %v1865, %v1861
        %s1882 = scalar_lea.vmem %s1, 1024
        %v1883 = vld [vmem:[%s1882] sm:$0xff]
        %v1884 = vld [vmem:[%s1882 + $0x8] sm:$0xff]
        %v1885 = vld [vmem:[%s1882 + $0x10] sm:$0xff]
        %v1886 = vld [vmem:[%s1882 + $0x18] sm:$0xff]
        %v1887 = vld [vmem:[%s1882 + $0x20] sm:$0xff]
        %v1888 = vld [vmem:[%s1882 + $0x28] sm:$0xff]
        %v1889 = vld [vmem:[%s1882 + $0x30] sm:$0xff]
        %v1890 = vld [vmem:[%s1882 + $0x38] sm:$0xff]
        %v1891 = vld [vmem:[%s1882 + $0x40] sm:$0xff]
        %v1892 = vld [vmem:[%s1882 + $0x48] sm:$0xff]
        %v1893 = vld [vmem:[%s1882 + $0x50] sm:$0xff]
        %v1894 = vld [vmem:[%s1882 + $0x58] sm:$0xff]
        %v1895 = vld [vmem:[%s1882 + $0x60] sm:$0xff]
        %v1896 = vld [vmem:[%s1882 + $0x68] sm:$0xff]
        %v1897 = vld [vmem:[%s1882 + $0x70] sm:$0xff]
        %v1898 = vld [vmem:[%s1882 + $0x78] sm:$0xff]
        %v1899 = vld [vmem:[%s1882 + $0x80] sm:$0xff]
        %v1900 = vld [vmem:[%s1882 + $0x88] sm:$0xff]
        %v1901 = vld [vmem:[%s1882 + $0x90] sm:$0xff]
        %v1902 = vld [vmem:[%s1882 + $0x98] sm:$0xff]
        %v1903 = vld [vmem:[%s1882 + $0xa0] sm:$0xff]
        %v1904 = vld [vmem:[%s1882 + $0xa8] sm:$0xff]
        %v1905 = vld [vmem:[%s1882 + $0xb0] sm:$0xff]
        %v1906 = vld [vmem:[%s1882 + $0xb8] sm:$0xff]
        %v1907 = vld [vmem:[%s1882 + $0xc0] sm:$0xff]
        %v1908 = vld [vmem:[%s1882 + $0xc8] sm:$0xff]
        %v1909 = vld [vmem:[%s1882 + $0xd0] sm:$0xff]
        %v1910 = vld [vmem:[%s1882 + $0xd8] sm:$0xff]
        %v1911 = vld [vmem:[%s1882 + $0xe0] sm:$0xff]
        %v1912 = vld [vmem:[%s1882 + $0xe8] sm:$0xff]
        %v1913 = vld [vmem:[%s1882 + $0xf0] sm:$0xff]
        %v1914 = vld [vmem:[%s1882 + $0xf8] sm:$0xff]
        %v1915 = vld [vmem:[%s1882 + $0x100] sm:$0xff]
        %v1916 = vld [vmem:[%s1882 + $0x108] sm:$0xff]
        %v1917 = vld [vmem:[%s1882 + $0x110] sm:$0xff]
        %v1918 = vld [vmem:[%s1882 + $0x118] sm:$0xff]
        %v1919 = vld [vmem:[%s1882 + $0x120] sm:$0xff]
        %v1920 = vld [vmem:[%s1882 + $0x128] sm:$0xff]
        %v1921 = vld [vmem:[%s1882 + $0x130] sm:$0xff]
        %v1922 = vld [vmem:[%s1882 + $0x138] sm:$0xff]
        %v1923 = vld [vmem:[%s1882 + $0x140] sm:$0xff]
        %v1924 = vld [vmem:[%s1882 + $0x148] sm:$0xff]
        %v1925 = vld [vmem:[%s1882 + $0x150] sm:$0xff]
        %v1926 = vld [vmem:[%s1882 + $0x158] sm:$0xff]
        %v1927 = vld [vmem:[%s1882 + $0x160] sm:$0xff]
        %v1928 = vld [vmem:[%s1882 + $0x168] sm:$0xff]
        %v1929 = vld [vmem:[%s1882 + $0x170] sm:$0xff]
        %v1930 = vld [vmem:[%s1882 + $0x178] sm:$0xff]
        %v1931 = vld [vmem:[%s1882 + $0x180] sm:$0xff]
        %v1932 = vld [vmem:[%s1882 + $0x188] sm:$0xff]
        %v1933 = vld [vmem:[%s1882 + $0x190] sm:$0xff]
        %v1934 = vld [vmem:[%s1882 + $0x198] sm:$0xff]
        %v1935 = vld [vmem:[%s1882 + $0x1a0] sm:$0xff]
        %v1936 = vld [vmem:[%s1882 + $0x1a8] sm:$0xff]
        %v1937 = vld [vmem:[%s1882 + $0x1b0] sm:$0xff]
        %v1938 = vld [vmem:[%s1882 + $0x1b8] sm:$0xff]
        %v1939 = vld [vmem:[%s1882 + $0x1c0] sm:$0xff]
        %v1940 = vld [vmem:[%s1882 + $0x1c8] sm:$0xff]
        %v1941 = vld [vmem:[%s1882 + $0x1d0] sm:$0xff]
        %v1942 = vld [vmem:[%s1882 + $0x1d8] sm:$0xff]
        %v1943 = vld [vmem:[%s1882 + $0x1e0] sm:$0xff]
        %v1944 = vld [vmem:[%s1882 + $0x1e8] sm:$0xff]
        %v1945 = vld [vmem:[%s1882 + $0x1f0] sm:$0xff]
        %v1946 = vld [vmem:[%s1882 + $0x1f8] sm:$0xff]
        %vm1947 = vsmask.f32 6400
        %v1949 = vshrl.u32 %v1866, 16
        %v1951 = vrot.slane %v1949, 1
        %v1952 = vshll.u32 %v1866, 16
        %v1954 = vrot.slane %v1952, 2
        %v1955 = vor.u32 %v1951, %v1954
        %v1957 = vshrl.u32 %v1870, 16
        %v1959 = vrot.slane %v1957, 1
        %v1960 = vshll.u32 %v1870, 16
        %v1962 = vrot.slane %v1960, 2
        %v1963 = vor.u32 %v1959, %v1962
        %v1964 = vsel %vm1947, %v1955, %v1963
        %v1966 = vshrl.u32 %v1867, 16
        %v1968 = vrot.slane %v1966, 1
        %v1969 = vshll.u32 %v1867, 16
        %v1971 = vrot.slane %v1969, 2
        %v1972 = vor.u32 %v1968, %v1971
        %v1974 = vshrl.u32 %v1871, 16
        %v1976 = vrot.slane %v1974, 1
        %v1977 = vshll.u32 %v1871, 16
        %v1979 = vrot.slane %v1977, 2
        %v1980 = vor.u32 %v1976, %v1979
        %v1981 = vsel %vm1947, %v1972, %v1980
        %v1983 = vshrl.u32 %v1868, 16
        %v1985 = vrot.slane %v1983, 1
        %v1986 = vshll.u32 %v1868, 16
        %v1988 = vrot.slane %v1986, 2
        %v1989 = vor.u32 %v1985, %v1988
        %v1991 = vshrl.u32 %v1872, 16
        %v1993 = vrot.slane %v1991, 1
        %v1994 = vshll.u32 %v1872, 16
        %v1996 = vrot.slane %v1994, 2
        %v1997 = vor.u32 %v1993, %v1996
        %v1998 = vsel %vm1947, %v1989, %v1997
        %v2000 = vshrl.u32 %v1869, 16
        %v2002 = vrot.slane %v2000, 1
        %v2003 = vshll.u32 %v1869, 16
        %v2005 = vrot.slane %v2003, 2
        %v2006 = vor.u32 %v2002, %v2005
        %v2008 = vshrl.u32 %v1873, 16
        %v2010 = vrot.slane %v2008, 1
        %v2011 = vshll.u32 %v1873, 16
        %v2013 = vrot.slane %v2011, 2
        %v2014 = vor.u32 %v2010, %v2013
        %v2015 = vsel %vm1947, %v2006, %v2014
        %v2017 = vshrl.u32 %v1874, 16
        %v2019 = vrot.slane %v2017, 1
        %v2020 = vshll.u32 %v1874, 16
        %v2022 = vrot.slane %v2020, 2
        %v2023 = vor.u32 %v2019, %v2022
        %v2024 = vsel %vm1947, %v1963, %v2023
        %v2026 = vshrl.u32 %v1875, 16
        %v2028 = vrot.slane %v2026, 1
        %v2029 = vshll.u32 %v1875, 16
        %v2031 = vrot.slane %v2029, 2
        %v2032 = vor.u32 %v2028, %v2031
        %v2033 = vsel %vm1947, %v1980, %v2032
        %v2035 = vshrl.u32 %v1876, 16
        %v2037 = vrot.slane %v2035, 1
        %v2038 = vshll.u32 %v1876, 16
        %v2040 = vrot.slane %v2038, 2
        %v2041 = vor.u32 %v2037, %v2040
        %v2042 = vsel %vm1947, %v1997, %v2041
        %v2044 = vshrl.u32 %v1877, 16
        %v2046 = vrot.slane %v2044, 1
        %v2047 = vshll.u32 %v1877, 16
        %v2049 = vrot.slane %v2047, 2
        %v2050 = vor.u32 %v2046, %v2049
        %v2051 = vsel %vm1947, %v2014, %v2050
        %v2053 = vshrl.u32 %v1878, 16
        %v2055 = vrot.slane %v2053, 1
        %v2056 = vshll.u32 %v1878, 16
        %v2058 = vrot.slane %v2056, 2
        %v2059 = vor.u32 %v2055, %v2058
        %v2060 = vsel %vm1947, %v2023, %v2059
        %v2062 = vshrl.u32 %v1879, 16
        %v2064 = vrot.slane %v2062, 1
        %v2065 = vshll.u32 %v1879, 16
        %v2067 = vrot.slane %v2065, 2
        %v2068 = vor.u32 %v2064, %v2067
        %v2069 = vsel %vm1947, %v2032, %v2068
        %v2071 = vshrl.u32 %v1880, 16
        %v2073 = vrot.slane %v2071, 1
        %v2074 = vshll.u32 %v1880, 16
        %v2076 = vrot.slane %v2074, 2
        %v2077 = vor.u32 %v2073, %v2076
        %v2078 = vsel %vm1947, %v2041, %v2077
        %v2080 = vshrl.u32 %v1881, 16
        %v2082 = vrot.slane %v2080, 1
        %v2083 = vshll.u32 %v1881, 16
        %v2085 = vrot.slane %v2083, 2
        %v2086 = vor.u32 %v2082, %v2085
        %v2087 = vsel %vm1947, %v2050, %v2086
        %v2168 = vunpack.c.l.b16 %v1883
        %v2169 = vunpack.c.h.b16 %v1883
        %v2170 = vunpack.c.l.b16 %v1884
        %v2171 = vunpack.c.h.b16 %v1884
        %v2172 = vunpack.c.l.b16 %v1885
        %v2173 = vunpack.c.h.b16 %v1885
        %v2174 = vunpack.c.l.b16 %v1886
        %v2175 = vunpack.c.h.b16 %v1886
        %v2176 = vunpack.c.l.b16 %v1887
        %v2177 = vunpack.c.h.b16 %v1887
        %v2178 = vunpack.c.l.b16 %v1888
        %v2179 = vunpack.c.h.b16 %v1888
        %v2180 = vunpack.c.l.b16 %v1889
        %v2181 = vunpack.c.h.b16 %v1889
        %v2182 = vunpack.c.l.b16 %v1890
        %v2183 = vunpack.c.h.b16 %v1890
        %v2184 = vunpack.c.l.b16 %v1891
        %v2185 = vunpack.c.h.b16 %v1891
        %v2186 = vunpack.c.l.b16 %v1892
        %v2187 = vunpack.c.h.b16 %v1892
        %v2188 = vunpack.c.l.b16 %v1893
        %v2189 = vunpack.c.h.b16 %v1893
        %v2190 = vunpack.c.l.b16 %v1894
        %v2191 = vunpack.c.h.b16 %v1894
        %v2192 = vunpack.c.l.b16 %v1895
        %v2193 = vunpack.c.h.b16 %v1895
        %v2194 = vunpack.c.l.b16 %v1896
        %v2195 = vunpack.c.h.b16 %v1896
        %v2196 = vunpack.c.l.b16 %v1897
        %v2197 = vunpack.c.h.b16 %v1897
        %v2198 = vunpack.c.l.b16 %v1898
        %v2199 = vunpack.c.h.b16 %v1898
        %v2200 = vunpack.c.l.b16 %v1899
        %v2201 = vunpack.c.h.b16 %v1899
        %v2202 = vunpack.c.l.b16 %v1900
        %v2203 = vunpack.c.h.b16 %v1900
        %v2204 = vunpack.c.l.b16 %v1901
        %v2205 = vunpack.c.h.b16 %v1901
        %v2206 = vunpack.c.l.b16 %v1902
        %v2207 = vunpack.c.h.b16 %v1902
        %v2208 = vunpack.c.l.b16 %v1903
        %v2209 = vunpack.c.h.b16 %v1903
        %v2210 = vunpack.c.l.b16 %v1904
        %v2211 = vunpack.c.h.b16 %v1904
        %v2212 = vunpack.c.l.b16 %v1905
        %v2213 = vunpack.c.h.b16 %v1905
        %v2214 = vunpack.c.l.b16 %v1906
        %v2215 = vunpack.c.h.b16 %v1906
        %v2216 = vunpack.c.l.b16 %v1907
        %v2217 = vunpack.c.h.b16 %v1907
        %v2218 = vunpack.c.l.b16 %v1908
        %v2219 = vunpack.c.h.b16 %v1908
        %v2220 = vunpack.c.l.b16 %v1909
        %v2221 = vunpack.c.h.b16 %v1909
        %v2222 = vunpack.c.l.b16 %v1910
        %v2223 = vunpack.c.h.b16 %v1910
        %v2224 = vunpack.c.l.b16 %v1911
        %v2225 = vunpack.c.h.b16 %v1911
        %v2226 = vunpack.c.l.b16 %v1912
        %v2227 = vunpack.c.h.b16 %v1912
        %v2228 = vunpack.c.l.b16 %v1913
        %v2229 = vunpack.c.h.b16 %v1913
        %v2230 = vunpack.c.l.b16 %v1914
        %v2231 = vunpack.c.h.b16 %v1914
        %v2232 = vunpack.c.l.b16 %v1915
        %v2233 = vunpack.c.h.b16 %v1915
        %v2234 = vunpack.c.l.b16 %v1916
        %v2235 = vunpack.c.h.b16 %v1916
        %v2236 = vunpack.c.l.b16 %v1917
        %v2237 = vunpack.c.h.b16 %v1917
        %v2238 = vunpack.c.l.b16 %v1918
        %v2239 = vunpack.c.h.b16 %v1918
        %v2240 = vunpack.c.l.b16 %v1919
        %v2241 = vunpack.c.h.b16 %v1919
        %v2242 = vunpack.c.l.b16 %v1920
        %v2243 = vunpack.c.h.b16 %v1920
        %v2244 = vunpack.c.l.b16 %v1921
        %v2245 = vunpack.c.h.b16 %v1921
        %v2246 = vunpack.c.l.b16 %v1922
        %v2247 = vunpack.c.h.b16 %v1922
        %v2248 = vunpack.c.l.b16 %v1923
        %v2249 = vunpack.c.h.b16 %v1923
        %v2250 = vunpack.c.l.b16 %v1924
        %v2251 = vunpack.c.h.b16 %v1924
        %v2252 = vunpack.c.l.b16 %v1925
        %v2253 = vunpack.c.h.b16 %v1925
        %v2254 = vunpack.c.l.b16 %v1926
        %v2255 = vunpack.c.h.b16 %v1926
        %v2256 = vunpack.c.l.b16 %v1927
        %v2257 = vunpack.c.h.b16 %v1927
        %v2258 = vunpack.c.l.b16 %v1928
        %v2259 = vunpack.c.h.b16 %v1928
        %v2260 = vunpack.c.l.b16 %v1929
        %v2261 = vunpack.c.h.b16 %v1929
        %v2262 = vunpack.c.l.b16 %v1930
        %v2263 = vunpack.c.h.b16 %v1930
        %v2264 = vunpack.c.l.b16 %v1931
        %v2265 = vunpack.c.h.b16 %v1931
        %v2266 = vunpack.c.l.b16 %v1932
        %v2267 = vunpack.c.h.b16 %v1932
        %v2268 = vunpack.c.l.b16 %v1933
        %v2269 = vunpack.c.h.b16 %v1933
        %v2270 = vunpack.c.l.b16 %v1934
        %v2271 = vunpack.c.h.b16 %v1934
        %v2272 = vunpack.c.l.b16 %v1935
        %v2273 = vunpack.c.h.b16 %v1935
        %v2274 = vunpack.c.l.b16 %v1936
        %v2275 = vunpack.c.h.b16 %v1936
        %v2276 = vunpack.c.l.b16 %v1937
        %v2277 = vunpack.c.h.b16 %v1937
        %v2278 = vunpack.c.l.b16 %v1938
        %v2279 = vunpack.c.h.b16 %v1938
        %v2280 = vunpack.c.l.b16 %v1939
        %v2281 = vunpack.c.h.b16 %v1939
        %v2282 = vunpack.c.l.b16 %v1940
        %v2283 = vunpack.c.h.b16 %v1940
        %v2284 = vunpack.c.l.b16 %v1941
        %v2285 = vunpack.c.h.b16 %v1941
        %v2286 = vunpack.c.l.b16 %v1942
        %v2287 = vunpack.c.h.b16 %v1942
        %v2288 = vunpack.c.l.b16 %v1943
        %v2289 = vunpack.c.h.b16 %v1943
        %v2290 = vunpack.c.l.b16 %v1944
        %v2291 = vunpack.c.h.b16 %v1944
        %v2292 = vunpack.c.l.b16 %v1945
        %v2293 = vunpack.c.h.b16 %v1945
        %v2294 = vunpack.c.l.b16 %v1946
        %v2295 = vunpack.c.h.b16 %v1946
        %v2296 = vpack.c.b16 %v2170, %v2168
        %v2297 = vpack.c.b16 %v2171, %v2169
        %v2298 = vpack.c.b16 %v2174, %v2172
        %v2299 = vpack.c.b16 %v2175, %v2173
        %v2300 = vpack.c.b16 %v2178, %v2176
        %v2301 = vpack.c.b16 %v2179, %v2177
        %v2302 = vpack.c.b16 %v2182, %v2180
        %v2303 = vpack.c.b16 %v2183, %v2181
        %v2304 = vpack.c.b16 %v2186, %v2184
        %v2305 = vpack.c.b16 %v2187, %v2185
        %v2306 = vpack.c.b16 %v2190, %v2188
        %v2307 = vpack.c.b16 %v2191, %v2189
        %v2308 = vpack.c.b16 %v2194, %v2192
        %v2309 = vpack.c.b16 %v2195, %v2193
        %v2310 = vpack.c.b16 %v2198, %v2196
        %v2311 = vpack.c.b16 %v2199, %v2197
        %v2312 = vpack.c.b16 %v2202, %v2200
        %v2313 = vpack.c.b16 %v2203, %v2201
        %v2314 = vpack.c.b16 %v2206, %v2204
        %v2315 = vpack.c.b16 %v2207, %v2205
        %v2316 = vpack.c.b16 %v2210, %v2208
        %v2317 = vpack.c.b16 %v2211, %v2209
        %v2318 = vpack.c.b16 %v2214, %v2212
        %v2319 = vpack.c.b16 %v2215, %v2213
        %v2320 = vpack.c.b16 %v2218, %v2216
        %v2321 = vpack.c.b16 %v2219, %v2217
        %v2322 = vpack.c.b16 %v2222, %v2220
        %v2323 = vpack.c.b16 %v2223, %v2221
        %v2324 = vpack.c.b16 %v2226, %v2224
        %v2325 = vpack.c.b16 %v2227, %v2225
        %v2326 = vpack.c.b16 %v2230, %v2228
        %v2327 = vpack.c.b16 %v2231, %v2229
        %v2328 = vpack.c.b16 %v2234, %v2232
        %v2329 = vpack.c.b16 %v2235, %v2233
        %v2330 = vpack.c.b16 %v2238, %v2236
        %v2331 = vpack.c.b16 %v2239, %v2237
        %v2332 = vpack.c.b16 %v2242, %v2240
        %v2333 = vpack.c.b16 %v2243, %v2241
        %v2334 = vpack.c.b16 %v2246, %v2244
        %v2335 = vpack.c.b16 %v2247, %v2245
        %v2336 = vpack.c.b16 %v2250, %v2248
        %v2337 = vpack.c.b16 %v2251, %v2249
        %v2338 = vpack.c.b16 %v2254, %v2252
        %v2339 = vpack.c.b16 %v2255, %v2253
        %v2340 = vpack.c.b16 %v2258, %v2256
        %v2341 = vpack.c.b16 %v2259, %v2257
        %v2342 = vpack.c.b16 %v2262, %v2260
        %v2343 = vpack.c.b16 %v2263, %v2261
        %v2344 = vpack.c.b16 %v2266, %v2264
        %v2345 = vpack.c.b16 %v2267, %v2265
        %v2346 = vpack.c.b16 %v2270, %v2268
        %v2347 = vpack.c.b16 %v2271, %v2269
        %v2348 = vpack.c.b16 %v2274, %v2272
        %v2349 = vpack.c.b16 %v2275, %v2273
        %v2350 = vpack.c.b16 %v2278, %v2276
        %v2351 = vpack.c.b16 %v2279, %v2277
        %v2352 = vpack.c.b16 %v2282, %v2280
        %v2353 = vpack.c.b16 %v2283, %v2281
        %v2354 = vpack.c.b16 %v2286, %v2284
        %v2355 = vpack.c.b16 %v2287, %v2285
        %v2356 = vpack.c.b16 %v2290, %v2288
        %v2357 = vpack.c.b16 %v2291, %v2289
        %v2358 = vpack.c.b16 %v2294, %v2292
        %v2359 = vpack.c.b16 %v2295, %v2293
        %2424 = vmatprep.subr.bf16.mxu0 %v2311
        %2425 = vmatpush1.bf16.msra.mxu0 %v2310
        %2426 = vmatprep.subr.bf16.mxu0 %v2309
        %2427 = vmatpush1.bf16.msra.mxu0 %v2308
        %2428 = vmatprep.subr.bf16.mxu0 %v2307
        %2429 = vmatpush1.bf16.msra.mxu0 %v2306
        %2430 = vmatprep.subr.bf16.mxu0 %v2305
        %2431 = vmatpush1.bf16.msra.mxu0 %v2304
        %2432 = vmatprep.subr.bf16.mxu0 %v2303
        %2433 = vmatpush1.bf16.msra.mxu0 %v2302
        %2434 = vmatprep.subr.bf16.mxu0 %v2301
        %2435 = vmatpush1.bf16.msra.mxu0 %v2300
        %2436 = vmatprep.subr.bf16.mxu0 %v2299
        %2437 = vmatpush1.bf16.msra.mxu0 %v2298
        %2438 = vmatprep.subr.bf16.mxu0 %v2297
        %2439 = vmatpush1.bf16.msra.mxu0 %v2296
        %2440 = vmatprep.subr.bf16.mxu0 %v2327
        %2441 = vmatpush2.bf16.msra.mxu0 %v2326
        %2442 = vmatprep.subr.bf16.mxu0 %v2325
        %2443 = vmatpush2.bf16.msra.mxu0 %v2324
        %2444 = vmatprep.subr.bf16.mxu0 %v2323
        %2445 = vmatpush2.bf16.msra.mxu0 %v2322
        %2446 = vmatprep.subr.bf16.mxu0 %v2321
        %2447 = vmatpush2.bf16.msra.mxu0 %v2320
        %2448 = vmatprep.subr.bf16.mxu0 %v2319
        %2449 = vmatpush2.bf16.msra.mxu0 %v2318
        %2450 = vmatprep.subr.bf16.mxu0 %v2317
        %2451 = vmatpush2.bf16.msra.mxu0 %v2316
        %2452 = vmatprep.subr.bf16.mxu0 %v2315
        %2453 = vmatpush2.bf16.msra.mxu0 %v2314
        %2454 = vmatprep.subr.bf16.mxu0 %v2313
        %2455 = vmatpush2.bf16.msra.mxu0 %v2312
        %2456 = vmatprep.mubr.bf16.mxu0 %v1981
        %2457 = vmatmul.mubr.bf16.gmra.mxu0 %v1964
        %v2458 = vpop.f32.mrf.mxu0
        %v2459 = vadd.f32 0.0, %v2458
        %v2460 = vpop.f32.mrf.mxu0
        %v2461 = vadd.f32 0.0, %v2460
        %v2462 = vpop.f32.mrf.mxu0
        %v2463 = vadd.f32 0.0, %v2462
        %v2464 = vpop.f32.mrf.mxu0
        %v2465 = vadd.f32 0.0, %v2464
        %2466 = vmatprep.mubr.bf16.mxu0 %v2033
        %2467 = vmatmul.mubr.bf16.gmra.mxu0 %v2024
        %v2468 = vpop.f32.mrf.mxu0
        %v2469 = vadd.f32 0.0, %v2468
        %v2470 = vpop.f32.mrf.mxu0
        %v2471 = vadd.f32 0.0, %v2470
        %v2472 = vpop.f32.mrf.mxu0
        %v2473 = vadd.f32 0.0, %v2472
        %v2474 = vpop.f32.mrf.mxu0
        %v2475 = vadd.f32 0.0, %v2474
        %2476 = vmatprep.mubr.bf16.mxu0 %v2069
        %2477 = vmatmul.mubr.bf16.gmra.mxu0 %v2060
        %v2478 = vpop.f32.mrf.mxu0
        %v2479 = vadd.f32 0.0, %v2478
        %v2480 = vpop.f32.mrf.mxu0
        %v2481 = vadd.f32 0.0, %v2480
        %v2482 = vpop.f32.mrf.mxu0
        %v2483 = vadd.f32 0.0, %v2482
        %v2484 = vpop.f32.mrf.mxu0
        %v2485 = vadd.f32 0.0, %v2484
        %2486 = vmatprep.mubr.bf16.mxu0 %v2068
        %2487 = vmatmul.mubr.bf16.gmra.mxu0 %v2059
        %v2488 = vpop.f32.mrf.mxu0
        %v2489 = vadd.f32 0.0, %v2488
        %v2490 = vpop.f32.mrf.mxu0
        %v2491 = vadd.f32 0.0, %v2490
        %v2492 = vpop.f32.mrf.mxu0
        %v2493 = vpop.f32.mrf.mxu0
        %2494 = vdwg.mxu0
        %2495 = vmatprep.subr.bf16.mxu0 %v2343
        %2496 = vmatpush1.bf16.msra.mxu0 %v2342
        %2497 = vmatprep.subr.bf16.mxu0 %v2341
        %2498 = vmatpush1.bf16.msra.mxu0 %v2340
        %2499 = vmatprep.subr.bf16.mxu0 %v2339
        %2500 = vmatpush1.bf16.msra.mxu0 %v2338
        %2501 = vmatprep.subr.bf16.mxu0 %v2337
        %2502 = vmatpush1.bf16.msra.mxu0 %v2336
        %2503 = vmatprep.subr.bf16.mxu0 %v2335
        %2504 = vmatpush1.bf16.msra.mxu0 %v2334
        %2505 = vmatprep.subr.bf16.mxu0 %v2333
        %2506 = vmatpush1.bf16.msra.mxu0 %v2332
        %2507 = vmatprep.subr.bf16.mxu0 %v2331
        %2508 = vmatpush1.bf16.msra.mxu0 %v2330
        %2509 = vmatprep.subr.bf16.mxu0 %v2329
        %2510 = vmatpush1.bf16.msra.mxu0 %v2328
        %2511 = vmatprep.subr.bf16.mxu0 %v2359
        %2512 = vmatpush2.bf16.msra.mxu0 %v2358
        %2513 = vmatprep.subr.bf16.mxu0 %v2357
        %2514 = vmatpush2.bf16.msra.mxu0 %v2356
        %2515 = vmatprep.subr.bf16.mxu0 %v2355
        %2516 = vmatpush2.bf16.msra.mxu0 %v2354
        %2517 = vmatprep.subr.bf16.mxu0 %v2353
        %2518 = vmatpush2.bf16.msra.mxu0 %v2352
        %2519 = vmatprep.subr.bf16.mxu0 %v2351
        %2520 = vmatpush2.bf16.msra.mxu0 %v2350
        %2521 = vmatprep.subr.bf16.mxu0 %v2349
        %2522 = vmatpush2.bf16.msra.mxu0 %v2348
        %2523 = vmatprep.subr.bf16.mxu0 %v2347
        %2524 = vmatpush2.bf16.msra.mxu0 %v2346
        %2525 = vmatprep.subr.bf16.mxu0 %v2345
        %2526 = vmatpush2.bf16.msra.mxu0 %v2344
        %2527 = vmatprep.mubr.bf16.mxu0 %v2015
        %2528 = vmatmul.mubr.bf16.gmra.mxu0 %v1998
        %v2529 = vpop.f32.mrf.mxu0
        %v2530 = vadd.f32 %v2459, %v2529
        %v2531 = vpop.f32.mrf.mxu0
        %v2532 = vadd.f32 %v2461, %v2531
        %v2533 = vpop.f32.mrf.mxu0
        %v2534 = vadd.f32 %v2463, %v2533
        %v2535 = vpop.f32.mrf.mxu0
        %v2536 = vadd.f32 %v2465, %v2535
        %2537 = vmatprep.mubr.bf16.mxu0 %v2051
        %2538 = vmatmul.mubr.bf16.gmra.mxu0 %v2042
        %v2539 = vpop.f32.mrf.mxu0
        %v2540 = vadd.f32 %v2469, %v2539
        %v2541 = vpop.f32.mrf.mxu0
        %v2542 = vadd.f32 %v2471, %v2541
        %v2543 = vpop.f32.mrf.mxu0
        %v2544 = vadd.f32 %v2473, %v2543
        %v2545 = vpop.f32.mrf.mxu0
        %v2546 = vadd.f32 %v2475, %v2545
        %2547 = vmatprep.mubr.bf16.mxu0 %v2087
        %2548 = vmatmul.mubr.bf16.gmra.mxu0 %v2078
        %v2549 = vpop.f32.mrf.mxu0
        %v2550 = vadd.f32 %v2479, %v2549
        %v2551 = vpop.f32.mrf.mxu0
        %v2552 = vadd.f32 %v2481, %v2551
        %v2553 = vpop.f32.mrf.mxu0
        %v2554 = vadd.f32 %v2483, %v2553
        %v2555 = vpop.f32.mrf.mxu0
        %v2556 = vadd.f32 %v2485, %v2555
        %2557 = vmatprep.mubr.bf16.mxu0 %v2086
        %2558 = vmatmul.mubr.bf16.gmra.mxu0 %v2077
        %v2559 = vpop.f32.mrf.mxu0
        %v2560 = vadd.f32 %v2489, %v2559
        %v2561 = vpop.f32.mrf.mxu0
        %v2562 = vadd.f32 %v2491, %v2561
        %v2563 = vpop.f32.mrf.mxu0
        %v2564 = vpop.f32.mrf.mxu0
        %2565 = vdwg.mxu0
        %v2566 = vadd.f32 %v1798, %v2530
        %v2567 = vadd.f32 %v1800, %v2532
        %v2568 = vadd.f32 %v1802, %v2534
        %v2569 = vadd.f32 %v1804, %v2536
        %v2570 = vadd.f32 %v1808, %v2540
        %v2571 = vadd.f32 %v1810, %v2542
        %v2572 = vadd.f32 %v1812, %v2544
        %v2573 = vadd.f32 %v1814, %v2546
        %v2574 = vadd.f32 %v1818, %v2550
        %v2575 = vadd.f32 %v1820, %v2552
        %v2576 = vadd.f32 %v1822, %v2554
        %v2577 = vadd.f32 %v1824, %v2556
        %v2578 = vadd.f32 %v1828, %v2560
        %v2579 = vadd.f32 %v1830, %v2562
        %v2580 = vld [vmem:[%s437 + $0x20] sm:$0xf0]
        %v2581 = vld [vmem:[%s437 + $0x28] sm:$0xf0]
        %v2582 = vld [vmem:[%s437 + $0x30] sm:$0xf0]
        %v2583 = vld [vmem:[%s437 + $0x38] sm:$0xf0]
        %v2584 = vld [vmem:[%s437 + $0x100] sm:$0x7]
        %v2585 = vld [vmem:[%s437 + $0x108] sm:$0x7]
        %v2586 = vld [vmem:[%s437 + $0x110] sm:$0x7]
        %v2587 = vld [vmem:[%s437 + $0x118] sm:$0x7]
        %v2588 = vpack.c.bf16 %v1838, %v2580
        %v2589 = vpack.c.bf16 %v1839, %v2581
        %v2590 = vpack.c.bf16 %v1840, %v2582
        %v2591 = vpack.c.bf16 %v1841, %v2583
        %v2592 = vpack.c.bf16 %v2584, %v1858
        %v2593 = vpack.c.bf16 %v2585, %v1859
        %v2594 = vpack.c.bf16 %v2586, %v1860
        %v2595 = vpack.c.bf16 %v2587, %v1861
        %s2596 = scalar_lea.vmem %s1, 1536
        %v2597 = vld [vmem:[%s2596] sm:$0xff]
        %v2598 = vld [vmem:[%s2596 + $0x8] sm:$0xff]
        %v2599 = vld [vmem:[%s2596 + $0x10] sm:$0xff]
        %v2600 = vld [vmem:[%s2596 + $0x18] sm:$0xff]
        %v2601 = vld [vmem:[%s2596 + $0x20] sm:$0xff]
        %v2602 = vld [vmem:[%s2596 + $0x28] sm:$0xff]
        %v2603 = vld [vmem:[%s2596 + $0x30] sm:$0xff]
        %v2604 = vld [vmem:[%s2596 + $0x38] sm:$0xff]
        %v2605 = vld [vmem:[%s2596 + $0x40] sm:$0xff]
        %v2606 = vld [vmem:[%s2596 + $0x48] sm:$0xff]
        %v2607 = vld [vmem:[%s2596 + $0x50] sm:$0xff]
        %v2608 = vld [vmem:[%s2596 + $0x58] sm:$0xff]
        %v2609 = vld [vmem:[%s2596 + $0x60] sm:$0xff]
        %v2610 = vld [vmem:[%s2596 + $0x68] sm:$0xff]
        %v2611 = vld [vmem:[%s2596 + $0x70] sm:$0xff]
        %v2612 = vld [vmem:[%s2596 + $0x78] sm:$0xff]
        %v2613 = vld [vmem:[%s2596 + $0x80] sm:$0xff]
        %v2614 = vld [vmem:[%s2596 + $0x88] sm:$0xff]
        %v2615 = vld [vmem:[%s2596 + $0x90] sm:$0xff]
        %v2616 = vld [vmem:[%s2596 + $0x98] sm:$0xff]
        %v2617 = vld [vmem:[%s2596 + $0xa0] sm:$0xff]
        %v2618 = vld [vmem:[%s2596 + $0xa8] sm:$0xff]
        %v2619 = vld [vmem:[%s2596 + $0xb0] sm:$0xff]
        %v2620 = vld [vmem:[%s2596 + $0xb8] sm:$0xff]
        %v2621 = vld [vmem:[%s2596 + $0xc0] sm:$0xff]
        %v2622 = vld [vmem:[%s2596 + $0xc8] sm:$0xff]
        %v2623 = vld [vmem:[%s2596 + $0xd0] sm:$0xff]
        %v2624 = vld [vmem:[%s2596 + $0xd8] sm:$0xff]
        %v2625 = vld [vmem:[%s2596 + $0xe0] sm:$0xff]
        %v2626 = vld [vmem:[%s2596 + $0xe8] sm:$0xff]
        %v2627 = vld [vmem:[%s2596 + $0xf0] sm:$0xff]
        %v2628 = vld [vmem:[%s2596 + $0xf8] sm:$0xff]
        %v2629 = vld [vmem:[%s2596 + $0x100] sm:$0xff]
        %v2630 = vld [vmem:[%s2596 + $0x108] sm:$0xff]
        %v2631 = vld [vmem:[%s2596 + $0x110] sm:$0xff]
        %v2632 = vld [vmem:[%s2596 + $0x118] sm:$0xff]
        %v2633 = vld [vmem:[%s2596 + $0x120] sm:$0xff]
        %v2634 = vld [vmem:[%s2596 + $0x128] sm:$0xff]
        %v2635 = vld [vmem:[%s2596 + $0x130] sm:$0xff]
        %v2636 = vld [vmem:[%s2596 + $0x138] sm:$0xff]
        %v2637 = vld [vmem:[%s2596 + $0x140] sm:$0xff]
        %v2638 = vld [vmem:[%s2596 + $0x148] sm:$0xff]
        %v2639 = vld [vmem:[%s2596 + $0x150] sm:$0xff]
        %v2640 = vld [vmem:[%s2596 + $0x158] sm:$0xff]
        %v2641 = vld [vmem:[%s2596 + $0x160] sm:$0xff]
        %v2642 = vld [vmem:[%s2596 + $0x168] sm:$0xff]
        %v2643 = vld [vmem:[%s2596 + $0x170] sm:$0xff]
        %v2644 = vld [vmem:[%s2596 + $0x178] sm:$0xff]
        %v2645 = vld [vmem:[%s2596 + $0x180] sm:$0xff]
        %v2646 = vld [vmem:[%s2596 + $0x188] sm:$0xff]
        %v2647 = vld [vmem:[%s2596 + $0x190] sm:$0xff]
        %v2648 = vld [vmem:[%s2596 + $0x198] sm:$0xff]
        %v2649 = vld [vmem:[%s2596 + $0x1a0] sm:$0xff]
        %v2650 = vld [vmem:[%s2596 + $0x1a8] sm:$0xff]
        %v2651 = vld [vmem:[%s2596 + $0x1b0] sm:$0xff]
        %v2652 = vld [vmem:[%s2596 + $0x1b8] sm:$0xff]
        %v2653 = vld [vmem:[%s2596 + $0x1c0] sm:$0xff]
        %v2654 = vld [vmem:[%s2596 + $0x1c8] sm:$0xff]
        %v2655 = vld [vmem:[%s2596 + $0x1d0] sm:$0xff]
        %v2656 = vld [vmem:[%s2596 + $0x1d8] sm:$0xff]
        %v2657 = vld [vmem:[%s2596 + $0x1e0] sm:$0xff]
        %v2658 = vld [vmem:[%s2596 + $0x1e8] sm:$0xff]
        %v2659 = vld [vmem:[%s2596 + $0x1f0] sm:$0xff]
        %v2660 = vld [vmem:[%s2596 + $0x1f8] sm:$0xff]
        %vm2677 = vcmask 1045504
        %v2678 = vrot.slane %v2588, 2
        %v2679 = vrot.slane %v1870, 2
        %v2680 = vsel %vm2677, %v2678, %v2679
        %v2681 = vrot.slane %v2589, 2
        %v2682 = vrot.slane %v1871, 2
        %v2683 = vsel %vm2677, %v2681, %v2682
        %v2684 = vrot.slane %v2590, 2
        %v2685 = vrot.slane %v1872, 2
        %v2686 = vsel %vm2677, %v2684, %v2685
        %v2687 = vrot.slane %v2591, 2
        %v2688 = vrot.slane %v1873, 2
        %v2689 = vsel %vm2677, %v2687, %v2688
        %v2690 = vrot.slane %v1874, 2
        %v2691 = vsel %vm2677, %v2679, %v2690
        %v2692 = vrot.slane %v1875, 2
        %v2693 = vsel %vm2677, %v2682, %v2692
        %v2694 = vrot.slane %v1876, 2
        %v2695 = vsel %vm2677, %v2685, %v2694
        %v2696 = vrot.slane %v1877, 2
        %v2697 = vsel %vm2677, %v2688, %v2696
        %v2698 = vrot.slane %v2592, 2
        %v2699 = vsel %vm2677, %v2690, %v2698
        %v2700 = vrot.slane %v2593, 2
        %v2701 = vsel %vm2677, %v2692, %v2700
        %v2702 = vrot.slane %v2594, 2
        %v2703 = vsel %vm2677, %v2694, %v2702
        %v2704 = vrot.slane %v2595, 2
        %v2705 = vsel %vm2677, %v2696, %v2704
        %v2786 = vunpack.c.l.b16 %v2597
        %v2787 = vunpack.c.h.b16 %v2597
        %v2788 = vunpack.c.l.b16 %v2598
        %v2789 = vunpack.c.h.b16 %v2598
        %v2790 = vunpack.c.l.b16 %v2599
        %v2791 = vunpack.c.h.b16 %v2599
        %v2792 = vunpack.c.l.b16 %v2600
        %v2793 = vunpack.c.h.b16 %v2600
        %v2794 = vunpack.c.l.b16 %v2601
        %v2795 = vunpack.c.h.b16 %v2601
        %v2796 = vunpack.c.l.b16 %v2602
        %v2797 = vunpack.c.h.b16 %v2602
        %v2798 = vunpack.c.l.b16 %v2603
        %v2799 = vunpack.c.h.b16 %v2603
        %v2800 = vunpack.c.l.b16 %v2604
        %v2801 = vunpack.c.h.b16 %v2604
        %v2802 = vunpack.c.l.b16 %v2605
        %v2803 = vunpack.c.h.b16 %v2605
        %v2804 = vunpack.c.l.b16 %v2606
        %v2805 = vunpack.c.h.b16 %v2606
        %v2806 = vunpack.c.l.b16 %v2607
        %v2807 = vunpack.c.h.b16 %v2607
        %v2808 = vunpack.c.l.b16 %v2608
        %v2809 = vunpack.c.h.b16 %v2608
        %v2810 = vunpack.c.l.b16 %v2609
        %v2811 = vunpack.c.h.b16 %v2609
        %v2812 = vunpack.c.l.b16 %v2610
        %v2813 = vunpack.c.h.b16 %v2610
        %v2814 = vunpack.c.l.b16 %v2611
        %v2815 = vunpack.c.h.b16 %v2611
        %v2816 = vunpack.c.l.b16 %v2612
        %v2817 = vunpack.c.h.b16 %v2612
        %v2818 = vunpack.c.l.b16 %v2613
        %v2819 = vunpack.c.h.b16 %v2613
        %v2820 = vunpack.c.l.b16 %v2614
        %v2821 = vunpack.c.h.b16 %v2614
        %v2822 = vunpack.c.l.b16 %v2615
        %v2823 = vunpack.c.h.b16 %v2615
        %v2824 = vunpack.c.l.b16 %v2616
        %v2825 = vunpack.c.h.b16 %v2616
        %v2826 = vunpack.c.l.b16 %v2617
        %v2827 = vunpack.c.h.b16 %v2617
        %v2828 = vunpack.c.l.b16 %v2618
        %v2829 = vunpack.c.h.b16 %v2618
        %v2830 = vunpack.c.l.b16 %v2619
        %v2831 = vunpack.c.h.b16 %v2619
        %v2832 = vunpack.c.l.b16 %v2620
        %v2833 = vunpack.c.h.b16 %v2620
        %v2834 = vunpack.c.l.b16 %v2621
        %v2835 = vunpack.c.h.b16 %v2621
        %v2836 = vunpack.c.l.b16 %v2622
        %v2837 = vunpack.c.h.b16 %v2622
        %v2838 = vunpack.c.l.b16 %v2623
        %v2839 = vunpack.c.h.b16 %v2623
        %v2840 = vunpack.c.l.b16 %v2624
        %v2841 = vunpack.c.h.b16 %v2624
        %v2842 = vunpack.c.l.b16 %v2625
        %v2843 = vunpack.c.h.b16 %v2625
        %v2844 = vunpack.c.l.b16 %v2626
        %v2845 = vunpack.c.h.b16 %v2626
        %v2846 = vunpack.c.l.b16 %v2627
        %v2847 = vunpack.c.h.b16 %v2627
        %v2848 = vunpack.c.l.b16 %v2628
        %v2849 = vunpack.c.h.b16 %v2628
        %v2850 = vunpack.c.l.b16 %v2629
        %v2851 = vunpack.c.h.b16 %v2629
        %v2852 = vunpack.c.l.b16 %v2630
        %v2853 = vunpack.c.h.b16 %v2630
        %v2854 = vunpack.c.l.b16 %v2631
        %v2855 = vunpack.c.h.b16 %v2631
        %v2856 = vunpack.c.l.b16 %v2632
        %v2857 = vunpack.c.h.b16 %v2632
        %v2858 = vunpack.c.l.b16 %v2633
        %v2859 = vunpack.c.h.b16 %v2633
        %v2860 = vunpack.c.l.b16 %v2634
        %v2861 = vunpack.c.h.b16 %v2634
        %v2862 = vunpack.c.l.b16 %v2635
        %v2863 = vunpack.c.h.b16 %v2635
        %v2864 = vunpack.c.l.b16 %v2636
        %v2865 = vunpack.c.h.b16 %v2636
        %v2866 = vunpack.c.l.b16 %v2637
        %v2867 = vunpack.c.h.b16 %v2637
        %v2868 = vunpack.c.l.b16 %v2638
        %v2869 = vunpack.c.h.b16 %v2638
        %v2870 = vunpack.c.l.b16 %v2639
        %v2871 = vunpack.c.h.b16 %v2639
        %v2872 = vunpack.c.l.b16 %v2640
        %v2873 = vunpack.c.h.b16 %v2640
        %v2874 = vunpack.c.l.b16 %v2641
        %v2875 = vunpack.c.h.b16 %v2641
        %v2876 = vunpack.c.l.b16 %v2642
        %v2877 = vunpack.c.h.b16 %v2642
        %v2878 = vunpack.c.l.b16 %v2643
        %v2879 = vunpack.c.h.b16 %v2643
        %v2880 = vunpack.c.l.b16 %v2644
        %v2881 = vunpack.c.h.b16 %v2644
        %v2882 = vunpack.c.l.b16 %v2645
        %v2883 = vunpack.c.h.b16 %v2645
        %v2884 = vunpack.c.l.b16 %v2646
        %v2885 = vunpack.c.h.b16 %v2646
        %v2886 = vunpack.c.l.b16 %v2647
        %v2887 = vunpack.c.h.b16 %v2647
        %v2888 = vunpack.c.l.b16 %v2648
        %v2889 = vunpack.c.h.b16 %v2648
        %v2890 = vunpack.c.l.b16 %v2649
        %v2891 = vunpack.c.h.b16 %v2649
        %v2892 = vunpack.c.l.b16 %v2650
        %v2893 = vunpack.c.h.b16 %v2650
        %v2894 = vunpack.c.l.b16 %v2651
        %v2895 = vunpack.c.h.b16 %v2651
        %v2896 = vunpack.c.l.b16 %v2652
        %v2897 = vunpack.c.h.b16 %v2652
        %v2898 = vunpack.c.l.b16 %v2653
        %v2899 = vunpack.c.h.b16 %v2653
        %v2900 = vunpack.c.l.b16 %v2654
        %v2901 = vunpack.c.h.b16 %v2654
        %v2902 = vunpack.c.l.b16 %v2655
        %v2903 = vunpack.c.h.b16 %v2655
        %v2904 = vunpack.c.l.b16 %v2656
        %v2905 = vunpack.c.h.b16 %v2656
        %v2906 = vunpack.c.l.b16 %v2657
        %v2907 = vunpack.c.h.b16 %v2657
        %v2908 = vunpack.c.l.b16 %v2658
        %v2909 = vunpack.c.h.b16 %v2658
        %v2910 = vunpack.c.l.b16 %v2659
        %v2911 = vunpack.c.h.b16 %v2659
        %v2912 = vunpack.c.l.b16 %v2660
        %v2913 = vunpack.c.h.b16 %v2660
        %v2914 = vpack.c.b16 %v2788, %v2786
        %v2915 = vpack.c.b16 %v2789, %v2787
        %v2916 = vpack.c.b16 %v2792, %v2790
        %v2917 = vpack.c.b16 %v2793, %v2791
        %v2918 = vpack.c.b16 %v2796, %v2794
        %v2919 = vpack.c.b16 %v2797, %v2795
        %v2920 = vpack.c.b16 %v2800, %v2798
        %v2921 = vpack.c.b16 %v2801, %v2799
        %v2922 = vpack.c.b16 %v2804, %v2802
        %v2923 = vpack.c.b16 %v2805, %v2803
        %v2924 = vpack.c.b16 %v2808, %v2806
        %v2925 = vpack.c.b16 %v2809, %v2807
        %v2926 = vpack.c.b16 %v2812, %v2810
        %v2927 = vpack.c.b16 %v2813, %v2811
        %v2928 = vpack.c.b16 %v2816, %v2814
        %v2929 = vpack.c.b16 %v2817, %v2815
        %v2930 = vpack.c.b16 %v2820, %v2818
        %v2931 = vpack.c.b16 %v2821, %v2819
        %v2932 = vpack.c.b16 %v2824, %v2822
        %v2933 = vpack.c.b16 %v2825, %v2823
        %v2934 = vpack.c.b16 %v2828, %v2826
        %v2935 = vpack.c.b16 %v2829, %v2827
        %v2936 = vpack.c.b16 %v2832, %v2830
        %v2937 = vpack.c.b16 %v2833, %v2831
        %v2938 = vpack.c.b16 %v2836, %v2834
        %v2939 = vpack.c.b16 %v2837, %v2835
        %v2940 = vpack.c.b16 %v2840, %v2838
        %v2941 = vpack.c.b16 %v2841, %v2839
        %v2942 = vpack.c.b16 %v2844, %v2842
        %v2943 = vpack.c.b16 %v2845, %v2843
        %v2944 = vpack.c.b16 %v2848, %v2846
        %v2945 = vpack.c.b16 %v2849, %v2847
        %v2946 = vpack.c.b16 %v2852, %v2850
        %v2947 = vpack.c.b16 %v2853, %v2851
        %v2948 = vpack.c.b16 %v2856, %v2854
        %v2949 = vpack.c.b16 %v2857, %v2855
        %v2950 = vpack.c.b16 %v2860, %v2858
        %v2951 = vpack.c.b16 %v2861, %v2859
        %v2952 = vpack.c.b16 %v2864, %v2862
        %v2953 = vpack.c.b16 %v2865, %v2863
        %v2954 = vpack.c.b16 %v2868, %v2866
        %v2955 = vpack.c.b16 %v2869, %v2867
        %v2956 = vpack.c.b16 %v2872, %v2870
        %v2957 = vpack.c.b16 %v2873, %v2871
        %v2958 = vpack.c.b16 %v2876, %v2874
        %v2959 = vpack.c.b16 %v2877, %v2875
        %v2960 = vpack.c.b16 %v2880, %v2878
        %v2961 = vpack.c.b16 %v2881, %v2879
        %v2962 = vpack.c.b16 %v2884, %v2882
        %v2963 = vpack.c.b16 %v2885, %v2883
        %v2964 = vpack.c.b16 %v2888, %v2886
        %v2965 = vpack.c.b16 %v2889, %v2887
        %v2966 = vpack.c.b16 %v2892, %v2890
        %v2967 = vpack.c.b16 %v2893, %v2891
        %v2968 = vpack.c.b16 %v2896, %v2894
        %v2969 = vpack.c.b16 %v2897, %v2895
        %v2970 = vpack.c.b16 %v2900, %v2898
        %v2971 = vpack.c.b16 %v2901, %v2899
        %v2972 = vpack.c.b16 %v2904, %v2902
        %v2973 = vpack.c.b16 %v2905, %v2903
        %v2974 = vpack.c.b16 %v2908, %v2906
        %v2975 = vpack.c.b16 %v2909, %v2907
        %v2976 = vpack.c.b16 %v2912, %v2910
        %v2977 = vpack.c.b16 %v2913, %v2911
        %3042 = vmatprep.subr.bf16.mxu0 %v2929
        %3043 = vmatpush1.bf16.msra.mxu0 %v2928
        %3044 = vmatprep.subr.bf16.mxu0 %v2927
        %3045 = vmatpush1.bf16.msra.mxu0 %v2926
        %3046 = vmatprep.subr.bf16.mxu0 %v2925
        %3047 = vmatpush1.bf16.msra.mxu0 %v2924
        %3048 = vmatprep.subr.bf16.mxu0 %v2923
        %3049 = vmatpush1.bf16.msra.mxu0 %v2922
        %3050 = vmatprep.subr.bf16.mxu0 %v2921
        %3051 = vmatpush1.bf16.msra.mxu0 %v2920
        %3052 = vmatprep.subr.bf16.mxu0 %v2919
        %3053 = vmatpush1.bf16.msra.mxu0 %v2918
        %3054 = vmatprep.subr.bf16.mxu0 %v2917
        %3055 = vmatpush1.bf16.msra.mxu0 %v2916
        %3056 = vmatprep.subr.bf16.mxu0 %v2915
        %3057 = vmatpush1.bf16.msra.mxu0 %v2914
        %3058 = vmatprep.subr.bf16.mxu0 %v2945
        %3059 = vmatpush2.bf16.msra.mxu0 %v2944
        %3060 = vmatprep.subr.bf16.mxu0 %v2943
        %3061 = vmatpush2.bf16.msra.mxu0 %v2942
        %3062 = vmatprep.subr.bf16.mxu0 %v2941
        %3063 = vmatpush2.bf16.msra.mxu0 %v2940
        %3064 = vmatprep.subr.bf16.mxu0 %v2939
        %3065 = vmatpush2.bf16.msra.mxu0 %v2938
        %3066 = vmatprep.subr.bf16.mxu0 %v2937
        %3067 = vmatpush2.bf16.msra.mxu0 %v2936
        %3068 = vmatprep.subr.bf16.mxu0 %v2935
        %3069 = vmatpush2.bf16.msra.mxu0 %v2934
        %3070 = vmatprep.subr.bf16.mxu0 %v2933
        %3071 = vmatpush2.bf16.msra.mxu0 %v2932
        %3072 = vmatprep.subr.bf16.mxu0 %v2931
        %3073 = vmatpush2.bf16.msra.mxu0 %v2930
        %3074 = vmatprep.mubr.bf16.mxu0 %v2683
        %3075 = vmatmul.mubr.bf16.gmra.mxu0 %v2680
        %v3076 = vpop.f32.mrf.mxu0
        %v3077 = vadd.f32 0.0, %v3076
        %v3078 = vpop.f32.mrf.mxu0
        %v3079 = vadd.f32 0.0, %v3078
        %v3080 = vpop.f32.mrf.mxu0
        %v3081 = vadd.f32 0.0, %v3080
        %v3082 = vpop.f32.mrf.mxu0
        %v3083 = vadd.f32 0.0, %v3082
        %3084 = vmatprep.mubr.bf16.mxu0 %v2693
        %3085 = vmatmul.mubr.bf16.gmra.mxu0 %v2691
        %v3086 = vpop.f32.mrf.mxu0
        %v3087 = vadd.f32 0.0, %v3086
        %v3088 = vpop.f32.mrf.mxu0
        %v3089 = vadd.f32 0.0, %v3088
        %v3090 = vpop.f32.mrf.mxu0
        %v3091 = vadd.f32 0.0, %v3090
        %v3092 = vpop.f32.mrf.mxu0
        %v3093 = vadd.f32 0.0, %v3092
        %3094 = vmatprep.mubr.bf16.mxu0 %v2701
        %3095 = vmatmul.mubr.bf16.gmra.mxu0 %v2699
        %v3096 = vpop.f32.mrf.mxu0
        %v3097 = vadd.f32 0.0, %v3096
        %v3098 = vpop.f32.mrf.mxu0
        %v3099 = vadd.f32 0.0, %v3098
        %v3100 = vpop.f32.mrf.mxu0
        %v3101 = vadd.f32 0.0, %v3100
        %v3102 = vpop.f32.mrf.mxu0
        %v3103 = vadd.f32 0.0, %v3102
        %3104 = vmatprep.mubr.bf16.mxu0 %v2700
        %3105 = vmatmul.mubr.bf16.gmra.mxu0 %v2698
        %v3106 = vpop.f32.mrf.mxu0
        %v3107 = vadd.f32 0.0, %v3106
        %v3108 = vpop.f32.mrf.mxu0
        %v3109 = vadd.f32 0.0, %v3108
        %v3110 = vpop.f32.mrf.mxu0
        %v3111 = vpop.f32.mrf.mxu0
        %3112 = vdwg.mxu0
        %3113 = vmatprep.subr.bf16.mxu0 %v2961
        %3114 = vmatpush1.bf16.msra.mxu0 %v2960
        %3115 = vmatprep.subr.bf16.mxu0 %v2959
        %3116 = vmatpush1.bf16.msra.mxu0 %v2958
        %3117 = vmatprep.subr.bf16.mxu0 %v2957
        %3118 = vmatpush1.bf16.msra.mxu0 %v2956
        %3119 = vmatprep.subr.bf16.mxu0 %v2955
        %3120 = vmatpush1.bf16.msra.mxu0 %v2954
        %3121 = vmatprep.subr.bf16.mxu0 %v2953
        %3122 = vmatpush1.bf16.msra.mxu0 %v2952
        %3123 = vmatprep.subr.bf16.mxu0 %v2951
        %3124 = vmatpush1.bf16.msra.mxu0 %v2950
        %3125 = vmatprep.subr.bf16.mxu0 %v2949
        %3126 = vmatpush1.bf16.msra.mxu0 %v2948
        %3127 = vmatprep.subr.bf16.mxu0 %v2947
        %3128 = vmatpush1.bf16.msra.mxu0 %v2946
        %3129 = vmatprep.subr.bf16.mxu0 %v2977
        %3130 = vmatpush2.bf16.msra.mxu0 %v2976
        %3131 = vmatprep.subr.bf16.mxu0 %v2975
        %3132 = vmatpush2.bf16.msra.mxu0 %v2974
        %3133 = vmatprep.subr.bf16.mxu0 %v2973
        %3134 = vmatpush2.bf16.msra.mxu0 %v2972
        %3135 = vmatprep.subr.bf16.mxu0 %v2971
        %3136 = vmatpush2.bf16.msra.mxu0 %v2970
        %3137 = vmatprep.subr.bf16.mxu0 %v2969
        %3138 = vmatpush2.bf16.msra.mxu0 %v2968
        %3139 = vmatprep.subr.bf16.mxu0 %v2967
        %3140 = vmatpush2.bf16.msra.mxu0 %v2966
        %3141 = vmatprep.subr.bf16.mxu0 %v2965
        %3142 = vmatpush2.bf16.msra.mxu0 %v2964
        %3143 = vmatprep.subr.bf16.mxu0 %v2963
        %3144 = vmatpush2.bf16.msra.mxu0 %v2962
        %3145 = vmatprep.mubr.bf16.mxu0 %v2689
        %3146 = vmatmul.mubr.bf16.gmra.mxu0 %v2686
        %v3147 = vpop.f32.mrf.mxu0
        %v3148 = vadd.f32 %v3077, %v3147
        %v3149 = vpop.f32.mrf.mxu0
        %v3150 = vadd.f32 %v3079, %v3149
        %v3151 = vpop.f32.mrf.mxu0
        %v3152 = vadd.f32 %v3081, %v3151
        %v3153 = vpop.f32.mrf.mxu0
        %v3154 = vadd.f32 %v3083, %v3153
        %3155 = vmatprep.mubr.bf16.mxu0 %v2697
        %3156 = vmatmul.mubr.bf16.gmra.mxu0 %v2695
        %v3157 = vpop.f32.mrf.mxu0
        %v3158 = vadd.f32 %v3087, %v3157
        %v3159 = vpop.f32.mrf.mxu0
        %v3160 = vadd.f32 %v3089, %v3159
        %v3161 = vpop.f32.mrf.mxu0
        %v3162 = vadd.f32 %v3091, %v3161
        %v3163 = vpop.f32.mrf.mxu0
        %v3164 = vadd.f32 %v3093, %v3163
        %3165 = vmatprep.mubr.bf16.mxu0 %v2705
        %3166 = vmatmul.mubr.bf16.gmra.mxu0 %v2703
        %v3167 = vpop.f32.mrf.mxu0
        %v3168 = vadd.f32 %v3097, %v3167
        %v3169 = vpop.f32.mrf.mxu0
        %v3170 = vadd.f32 %v3099, %v3169
        %v3171 = vpop.f32.mrf.mxu0
        %v3172 = vadd.f32 %v3101, %v3171
        %v3173 = vpop.f32.mrf.mxu0
        %v3174 = vadd.f32 %v3103, %v3173
        %3175 = vmatprep.mubr.bf16.mxu0 %v2704
        %3176 = vmatmul.mubr.bf16.gmra.mxu0 %v2702
        %v3177 = vpop.f32.mrf.mxu0
        %v3178 = vadd.f32 %v3107, %v3177
        %v3179 = vpop.f32.mrf.mxu0
        %v3180 = vadd.f32 %v3109, %v3179
        %v3181 = vpop.f32.mrf.mxu0
        %v3182 = vpop.f32.mrf.mxu0
        %3183 = vdwg.mxu0
        %v3184 = vadd.f32 %v2566, %v3148
        %v3185 = vadd.f32 %v2567, %v3150
        %v3186 = vadd.f32 %v2568, %v3152
        %v3187 = vadd.f32 %v2569, %v3154
        %v3188 = vadd.f32 %v2570, %v3158
        %v3189 = vadd.f32 %v2571, %v3160
        %v3190 = vadd.f32 %v2572, %v3162
        %v3191 = vadd.f32 %v2573, %v3164
        %v3192 = vadd.f32 %v2574, %v3168
        %v3193 = vadd.f32 %v2575, %v3170
        %v3194 = vadd.f32 %v2576, %v3172
        %v3195 = vadd.f32 %v2577, %v3174
        %v3196 = vadd.f32 %v2578, %v3178
        %v3197 = vadd.f32 %v2579, %v3180
        %v3198 = vld [vmem:[%s2] sm:$0x3]
        %v3200 = vlaneseq
        %v3201 = vshrl.u32 %v3200, 7
        %v3202 = vsub.s32 0, %v3201
        %v3203 = vrot.slane %v3198, %v3202
        %v3204 = vlaneseq
        %v3205 = vshrl.u32 %v3204, 7
        %v3206 = vsub.s32 1, %v3205
        %v3207 = vrot.slane %v3198, %v3206
        %v3210 = vadd.f32 %v3184, %v3203
        %v3211 = vadd.f32 %v3185, %v3207
        %v3212 = vadd.f32 %v3186, %v3203
        %v3213 = vadd.f32 %v3187, %v3207
        %v3214 = vadd.f32 %v3188, %v3203
        %v3215 = vadd.f32 %v3189, %v3207
        %v3216 = vadd.f32 %v3190, %v3203
        %v3217 = vadd.f32 %v3191, %v3207
        %v3218 = vadd.f32 %v3192, %v3203
        %v3219 = vadd.f32 %v3193, %v3207
        %v3220 = vadd.f32 %v3194, %v3203
        %v3221 = vadd.f32 %v3195, %v3207
        %v3222 = vadd.f32 %v3196, %v3203
        %v3223 = vadd.f32 %v3197, %v3207
        %v3224 = vmax.f32 %v3210, 0.0
        %v3225 = vmax.f32 %v3211, 0.0
        %v3226 = vmax.f32 %v3212, 0.0
        %v3227 = vmax.f32 %v3213, 0.0
        %v3228 = vmax.f32 %v3214, 0.0
        %v3229 = vmax.f32 %v3215, 0.0
        %v3230 = vmax.f32 %v3216, 0.0
        %v3231 = vmax.f32 %v3217, 0.0
        %v3232 = vmax.f32 %v3218, 0.0
        %v3233 = vmax.f32 %v3219, 0.0
        %v3234 = vmax.f32 %v3220, 0.0
        %v3235 = vmax.f32 %v3221, 0.0
        %v3236 = vmax.f32 %v3222, 0.0
        %v3237 = vmax.f32 %v3223, 0.0
        %v3238 = vmul.f32 %v3224, %v573
        %v3239 = vmul.f32 %v3225, %v573
        %v3240 = vmul.f32 %v3226, %v574
        %v3241 = vmul.f32 %v3227, %v574
        %v3242 = vmul.f32 %v3228, %v575
        %v3243 = vmul.f32 %v3229, %v575
        %v3244 = vmul.f32 %v3230, %v576
        %v3245 = vmul.f32 %v3231, %v576
        %v3246 = vmul.f32 %v3232, %v577
        %v3247 = vmul.f32 %v3233, %v577
        %v3248 = vmul.f32 %v3234, %v578
        %v3249 = vmul.f32 %v3235, %v578
        %v3250 = vmul.f32 %v3236, %v579
        %v3251 = vmul.f32 %v3237, %v579
        %3252 = vst [vmem:[#allocation2] sm:$0xff] 0.0
        %3253 = vst [vmem:[#allocation2 + $0x8] sm:$0xff] 0.0
        %3254 = vst [vmem:[#allocation2 + $0x10] sm:$0xff] 0.0
        %3255 = vst [vmem:[#allocation2 + $0x18] sm:$0xff] 0.0
        %3256 = vst [vmem:[#allocation2 + $0x20] sm:$0xff] 0.0
        %3257 = vst [vmem:[#allocation2 + $0x28] sm:$0xff] 0.0
        %3258 = vst [vmem:[#allocation2 + $0x30] sm:$0xff] 0.0
        %3259 = vst [vmem:[#allocation2 + $0x38] sm:$0xff] 0.0
        %3260 = vst [vmem:[#allocation2 + $0x40] sm:$0xff] 0.0
        %3261 = vst [vmem:[#allocation2 + $0x48] sm:$0xff] 0.0
        %3262 = vst [vmem:[#allocation2 + $0x50] sm:$0xff] 0.0
        %3263 = vst [vmem:[#allocation2 + $0x58] sm:$0xff] 0.0
        %3264 = vst [vmem:[#allocation2 + $0x60] sm:$0xff] 0.0
        %3265 = vst [vmem:[#allocation2 + $0x68] sm:$0xff] 0.0
        %3266 = vst [vmem:[#allocation2 + $0x70] sm:$0xff] 0.0
        %3267 = vst [vmem:[#allocation2 + $0x78] sm:$0xff] 0.0
        %3268 = vst [vmem:[#allocation2 + $0x80] sm:$0xff] 0.0
        %3269 = vst [vmem:[#allocation2 + $0x88] sm:$0xff] 0.0
        %vm3284 = vcmask 1043456
        %v3285 = vrot.slane %v3238, 4
        %v3286 = vrot.slane %v3239, 4
        %v3287 = vrot.slane %v3240, 4
        %v3288 = vsel %vm3284, %v3285, %v3287
        %v3289 = vrot.slane %v3241, 4
        %v3290 = vsel %vm3284, %v3286, %v3289
        %v3291 = vrot.slane %v3242, 4
        %v3292 = vsel %vm3284, %v3287, %v3291
        %v3293 = vrot.slane %v3243, 4
        %v3294 = vsel %vm3284, %v3289, %v3293
        %v3295 = vrot.slane %v3244, 4
        %v3296 = vsel %vm3284, %v3291, %v3295
        %v3297 = vrot.slane %v3245, 4
        %v3298 = vsel %vm3284, %v3293, %v3297
        %v3299 = vrot.slane %v3246, 4
        %v3300 = vsel %vm3284, %v3295, %v3299
        %v3301 = vrot.slane %v3247, 4
        %v3302 = vsel %vm3284, %v3297, %v3301
        %v3303 = vrot.slane %v3248, 4
        %v3304 = vsel %vm3284, %v3299, %v3303
        %v3305 = vrot.slane %v3249, 4
        %v3306 = vsel %vm3284, %v3301, %v3305
        %v3307 = vrot.slane %v3250, 4
        %v3308 = vsel %vm3284, %v3303, %v3307
        %v3309 = vrot.slane %v3251, 4
        %v3310 = vsel %vm3284, %v3305, %v3309
        %3327 = vst [vmem:[#allocation2 + $0x10] sm:$0xf0] %v3285
        %3328 = vst [vmem:[#allocation2 + $0x18] sm:$0xf0] %v3286
        %3329 = vst [vmem:[#allocation2 + $0x20] sm:$0xff] %v3288
        %3330 = vst [vmem:[#allocation2 + $0x28] sm:$0xff] %v3290
        %3331 = vst [vmem:[#allocation2 + $0x30] sm:$0xff] %v3292
        %3332 = vst [vmem:[#allocation2 + $0x38] sm:$0xff] %v3294
        %3333 = vst [vmem:[#allocation2 + $0x40] sm:$0xff] %v3296
        %3334 = vst [vmem:[#allocation2 + $0x48] sm:$0xff] %v3298
        %3335 = vst [vmem:[#allocation2 + $0x50] sm:$0xff] %v3300
        %3336 = vst [vmem:[#allocation2 + $0x58] sm:$0xff] %v3302
        %3337 = vst [vmem:[#allocation2 + $0x60] sm:$0xff] %v3304
        %3338 = vst [vmem:[#allocation2 + $0x68] sm:$0xff] %v3306
        %3339 = vst [vmem:[#allocation2 + $0x70] sm:$0xff] %v3308
        %3340 = vst [vmem:[#allocation2 + $0x78] sm:$0xff] %v3310
        %3341 = vst [vmem:[#allocation2 + $0x80] sm:$0x7] %v3307
        %3342 = vst [vmem:[#allocation2 + $0x88] sm:$0x7] %v3309
        %v3343 = vld [vmem:[#allocation2] sm:$0xff]
        %v3344 = vld [vmem:[#allocation2 + $0x8] sm:$0xff]
        %v3345 = vld [vmem:[#allocation2 + $0x10] sm:$0xff]
        %v3346 = vld [vmem:[#allocation2 + $0x18] sm:$0xff]
        %v3347 = vld [vmem:[#allocation2 + $0x20] sm:$0xff]
        %v3348 = vld [vmem:[#allocation2 + $0x28] sm:$0xff]
        %v3349 = vld [vmem:[#allocation2 + $0x30] sm:$0xff]
        %v3350 = vld [vmem:[#allocation2 + $0x38] sm:$0xff]
        %v3351 = vld [vmem:[#allocation2 + $0x40] sm:$0xff]
        %v3352 = vld [vmem:[#allocation2 + $0x48] sm:$0xff]
        %v3353 = vld [vmem:[#allocation2 + $0x50] sm:$0xff]
        %v3354 = vld [vmem:[#allocation2 + $0x58] sm:$0xff]
        %v3355 = vld [vmem:[#allocation2 + $0x60] sm:$0x7f]
        %v3356 = vld [vmem:[#allocation2 + $0x68] sm:$0x7f]
        %v3357 = vpack.c.bf16 %v3345, %v3343
        %v3358 = vpack.c.bf16 %v3346, %v3344
        %v3359 = vpack.c.bf16 %v3349, %v3347
        %v3360 = vpack.c.bf16 %v3350, %v3348
        %v3361 = vpack.c.bf16 %v3353, %v3351
        %v3362 = vpack.c.bf16 %v3354, %v3352
        %v3363 = vpack.c.bf16 %v3355, %v3355
        %v3364 = vpack.c.bf16 %v3356, %v3356
        %v3365 = vld [vmem:[%s3] sm:$0xf]
        %v3366 = vld [vmem:[%s3 + $0x4] sm:$0xf]
        %v3367 = vld [vmem:[%s3 + $0x8] sm:$0xf]
        %v3368 = vld [vmem:[%s3 + $0xc] sm:$0xf]
        %v3369 = vld [vmem:[%s3 + $0x10] sm:$0xf]
        %v3370 = vld [vmem:[%s3 + $0x14] sm:$0xf]
        %v3371 = vld [vmem:[%s3 + $0x18] sm:$0xf]
        %v3372 = vld [vmem:[%s3 + $0x1c] sm:$0xf]
        %v3373 = vld [vmem:[%s3 + $0x20] sm:$0xf]
        %v3374 = vld [vmem:[%s3 + $0x24] sm:$0xf]
        %v3375 = vld [vmem:[%s3 + $0x28] sm:$0xf]
        %v3376 = vld [vmem:[%s3 + $0x2c] sm:$0xf]
        %v3377 = vld [vmem:[%s3 + $0x30] sm:$0xf]
        %v3378 = vld [vmem:[%s3 + $0x34] sm:$0xf]
        %v3379 = vld [vmem:[%s3 + $0x38] sm:$0xf]
        %v3380 = vld [vmem:[%s3 + $0x3c] sm:$0xf]
        %v3381 = vld [vmem:[%s3 + $0x40] sm:$0xf]
        %v3382 = vld [vmem:[%s3 + $0x44] sm:$0xf]
        %v3383 = vld [vmem:[%s3 + $0x48] sm:$0xf]
        %v3384 = vld [vmem:[%s3 + $0x4c] sm:$0xf]
        %v3385 = vld [vmem:[%s3 + $0x50] sm:$0xf]
        %v3386 = vld [vmem:[%s3 + $0x54] sm:$0xf]
        %v3387 = vld [vmem:[%s3 + $0x58] sm:$0xf]
        %v3388 = vld [vmem:[%s3 + $0x5c] sm:$0xf]
        %v3389 = vld [vmem:[%s3 + $0x60] sm:$0xf]
        %v3390 = vld [vmem:[%s3 + $0x64] sm:$0xf]
        %v3391 = vld [vmem:[%s3 + $0x68] sm:$0xf]
        %v3392 = vld [vmem:[%s3 + $0x6c] sm:$0xf]
        %v3393 = vld [vmem:[%s3 + $0x70] sm:$0xf]
        %v3394 = vld [vmem:[%s3 + $0x74] sm:$0xf]
        %v3395 = vld [vmem:[%s3 + $0x78] sm:$0xf]
        %v3396 = vld [vmem:[%s3 + $0x7c] sm:$0xf]
        %v3397 = vld [vmem:[#allocation2] sm:$0xfe]
        %v3398 = vld [vmem:[#allocation2 + $0x8] sm:$0xfe]
        %v3399 = vld [vmem:[#allocation2 + $0x60] sm:$0xff]
        %v3400 = vld [vmem:[#allocation2 + $0x68] sm:$0xff]
        %v3401 = vpack.c.bf16 %v3345, %v3397
        %v3402 = vpack.c.bf16 %v3346, %v3398
        %v3403 = vpack.c.bf16 %v3399, %v3399
        %v3404 = vpack.c.bf16 %v3400, %v3400
        %s3405 = scalar_lea.vmem %s3, 128
        %v3406 = vld [vmem:[%s3405] sm:$0xf]
        %v3407 = vld [vmem:[%s3405 + $0x4] sm:$0xf]
        %v3408 = vld [vmem:[%s3405 + $0x8] sm:$0xf]
        %v3409 = vld [vmem:[%s3405 + $0xc] sm:$0xf]
        %v3410 = vld [vmem:[%s3405 + $0x10] sm:$0xf]
        %v3411 = vld [vmem:[%s3405 + $0x14] sm:$0xf]
        %v3412 = vld [vmem:[%s3405 + $0x18] sm:$0xf]
        %v3413 = vld [vmem:[%s3405 + $0x1c] sm:$0xf]
        %v3414 = vld [vmem:[%s3405 + $0x20] sm:$0xf]
        %v3415 = vld [vmem:[%s3405 + $0x24] sm:$0xf]
        %v3416 = vld [vmem:[%s3405 + $0x28] sm:$0xf]
        %v3417 = vld [vmem:[%s3405 + $0x2c] sm:$0xf]
        %v3418 = vld [vmem:[%s3405 + $0x30] sm:$0xf]
        %v3419 = vld [vmem:[%s3405 + $0x34] sm:$0xf]
        %v3420 = vld [vmem:[%s3405 + $0x38] sm:$0xf]
        %v3421 = vld [vmem:[%s3405 + $0x3c] sm:$0xf]
        %v3422 = vld [vmem:[%s3405 + $0x40] sm:$0xf]
        %v3423 = vld [vmem:[%s3405 + $0x44] sm:$0xf]
        %v3424 = vld [vmem:[%s3405 + $0x48] sm:$0xf]
        %v3425 = vld [vmem:[%s3405 + $0x4c] sm:$0xf]
        %v3426 = vld [vmem:[%s3405 + $0x50] sm:$0xf]
        %v3427 = vld [vmem:[%s3405 + $0x54] sm:$0xf]
        %v3428 = vld [vmem:[%s3405 + $0x58] sm:$0xf]
        %v3429 = vld [vmem:[%s3405 + $0x5c] sm:$0xf]
        %v3430 = vld [vmem:[%s3405 + $0x60] sm:$0xf]
        %v3431 = vld [vmem:[%s3405 + $0x64] sm:$0xf]
        %v3432 = vld [vmem:[%s3405 + $0x68] sm:$0xf]
        %v3433 = vld [vmem:[%s3405 + $0x6c] sm:$0xf]
        %v3434 = vld [vmem:[%s3405 + $0x70] sm:$0xf]
        %v3435 = vld [vmem:[%s3405 + $0x74] sm:$0xf]
        %v3436 = vld [vmem:[%s3405 + $0x78] sm:$0xf]
        %v3437 = vld [vmem:[%s3405 + $0x7c] sm:$0xf]
        %v3439 = vshrl.u32 %v3401, 16
        %v3441 = vshll.u32 %v3401, 16
        %v3443 = vrot.slane %v3441, 1
        %v3444 = vor.u32 %v3439, %v3443
        %v3446 = vshll.u32 %v3359, 16
        %v3448 = vrot.slane %v3446, 1
        %v3449 = vsel %vm769, %v3444, %v3448
        %v3451 = vshrl.u32 %v3402, 16
        %v3453 = vshll.u32 %v3402, 16
        %v3455 = vrot.slane %v3453, 1
        %v3456 = vor.u32 %v3451, %v3455
        %v3458 = vshll.u32 %v3360, 16
        %v3460 = vrot.slane %v3458, 1
        %v3461 = vsel %vm769, %v3456, %v3460
        %v3462 = vshrl.u32 %v3359, 16
        %v3464 = vor.u32 %v3462, %v3448
        %v3466 = vshll.u32 %v3361, 16
        %v3468 = vrot.slane %v3466, 1
        %v3469 = vsel %vm769, %v3464, %v3468
        %v3470 = vshrl.u32 %v3360, 16
        %v3472 = vor.u32 %v3470, %v3460
        %v3474 = vshll.u32 %v3362, 16
        %v3476 = vrot.slane %v3474, 1
        %v3477 = vsel %vm769, %v3472, %v3476
        %v3478 = vshrl.u32 %v3361, 16
        %v3480 = vor.u32 %v3478, %v3468
        %v3482 = vshll.u32 %v3403, 16
        %v3484 = vrot.slane %v3482, 1
        %v3485 = vsel %vm769, %v3480, %v3484
        %v3486 = vshrl.u32 %v3362, 16
        %v3488 = vor.u32 %v3486, %v3476
        %v3490 = vshll.u32 %v3404, 16
        %v3492 = vrot.slane %v3490, 1
        %v3493 = vsel %vm769, %v3488, %v3492
        %v3494 = vshrl.u32 %v3403, 16
        %v3496 = vor.u32 %v3494, %v3484
        %v3497 = vshrl.u32 %v3404, 16
        %v3499 = vor.u32 %v3497, %v3492
        %v3540 = vunpack.c.l.b16 %v3406
        %v3541 = vunpack.c.l.b16 %v3407
        %v3542 = vunpack.c.l.b16 %v3408
        %v3543 = vunpack.c.l.b16 %v3409
        %v3544 = vunpack.c.l.b16 %v3410
        %v3545 = vunpack.c.l.b16 %v3411
        %v3546 = vunpack.c.l.b16 %v3412
        %v3547 = vunpack.c.l.b16 %v3413
        %v3548 = vunpack.c.l.b16 %v3414
        %v3549 = vunpack.c.l.b16 %v3415
        %v3550 = vunpack.c.l.b16 %v3416
        %v3551 = vunpack.c.l.b16 %v3417
        %v3552 = vunpack.c.l.b16 %v3418
        %v3553 = vunpack.c.l.b16 %v3419
        %v3554 = vunpack.c.l.b16 %v3420
        %v3555 = vunpack.c.l.b16 %v3421
        %v3556 = vunpack.c.l.b16 %v3422
        %v3557 = vunpack.c.l.b16 %v3423
        %v3558 = vunpack.c.l.b16 %v3424
        %v3559 = vunpack.c.l.b16 %v3425
        %v3560 = vunpack.c.l.b16 %v3426
        %v3561 = vunpack.c.l.b16 %v3427
        %v3562 = vunpack.c.l.b16 %v3428
        %v3563 = vunpack.c.l.b16 %v3429
        %v3564 = vunpack.c.l.b16 %v3430
        %v3565 = vunpack.c.l.b16 %v3431
        %v3566 = vunpack.c.l.b16 %v3432
        %v3567 = vunpack.c.l.b16 %v3433
        %v3568 = vunpack.c.l.b16 %v3434
        %v3569 = vunpack.c.l.b16 %v3435
        %v3570 = vunpack.c.l.b16 %v3436
        %v3571 = vunpack.c.l.b16 %v3437
        %v3572 = vpack.c.b16 %v3541, %v3540
        %v3573 = vpack.c.b16 %v3543, %v3542
        %v3574 = vpack.c.b16 %v3545, %v3544
        %v3575 = vpack.c.b16 %v3547, %v3546
        %v3576 = vpack.c.b16 %v3549, %v3548
        %v3577 = vpack.c.b16 %v3551, %v3550
        %v3578 = vpack.c.b16 %v3553, %v3552
        %v3579 = vpack.c.b16 %v3555, %v3554
        %v3580 = vpack.c.b16 %v3557, %v3556
        %v3581 = vpack.c.b16 %v3559, %v3558
        %v3582 = vpack.c.b16 %v3561, %v3560
        %v3583 = vpack.c.b16 %v3563, %v3562
        %v3584 = vpack.c.b16 %v3565, %v3564
        %v3585 = vpack.c.b16 %v3567, %v3566
        %v3586 = vpack.c.b16 %v3569, %v3568
        %v3587 = vpack.c.b16 %v3571, %v3570
        %3604 = vmatprep.subr.bf16.mxu0 0
        %3605 = vmatpush1.bf16.msra.mxu0 %v3579
        %3606 = vmatprep.subr.bf16.mxu0 0
        %3607 = vmatpush1.bf16.msra.mxu0 %v3578
        %3608 = vmatprep.subr.bf16.mxu0 0
        %3609 = vmatpush1.bf16.msra.mxu0 %v3577
        %3610 = vmatprep.subr.bf16.mxu0 0
        %3611 = vmatpush1.bf16.msra.mxu0 %v3576
        %3612 = vmatprep.subr.bf16.mxu0 0
        %3613 = vmatpush1.bf16.msra.mxu0 %v3575
        %3614 = vmatprep.subr.bf16.mxu0 0
        %3615 = vmatpush1.bf16.msra.mxu0 %v3574
        %3616 = vmatprep.subr.bf16.mxu0 0
        %3617 = vmatpush1.bf16.msra.mxu0 %v3573
        %3618 = vmatprep.subr.bf16.mxu0 0
        %3619 = vmatpush1.bf16.msra.mxu0 %v3572
        %3620 = vmatprep.subr.bf16.mxu0 0
        %3621 = vmatpush2.bf16.msra.mxu0 %v3587
        %3622 = vmatprep.subr.bf16.mxu0 0
        %3623 = vmatpush2.bf16.msra.mxu0 %v3586
        %3624 = vmatprep.subr.bf16.mxu0 0
        %3625 = vmatpush2.bf16.msra.mxu0 %v3585
        %3626 = vmatprep.subr.bf16.mxu0 0
        %3627 = vmatpush2.bf16.msra.mxu0 %v3584
        %3628 = vmatprep.subr.bf16.mxu0 0
        %3629 = vmatpush2.bf16.msra.mxu0 %v3583
        %3630 = vmatprep.subr.bf16.mxu0 0
        %3631 = vmatpush2.bf16.msra.mxu0 %v3582
        %3632 = vmatprep.subr.bf16.mxu0 0
        %3633 = vmatpush2.bf16.msra.mxu0 %v3581
        %3634 = vmatprep.subr.bf16.mxu0 0
        %3635 = vmatpush2.bf16.msra.mxu0 %v3580
        %3636 = vmatprep.mubr.bf16.mxu0 %v3461
        %3637 = vmatmul.mubr.bf16.gmra.mxu0 %v3449
        %v3638 = vpop.f32.mrf.mxu0
        %v3639 = vadd.f32 0.0, %v3638
        %v3640 = vpop.f32.mrf.mxu0
        %v3641 = vpop.f32.mrf.mxu0
        %v3642 = vadd.f32 0.0, %v3641
        %v3643 = vpop.f32.mrf.mxu0
        %3644 = vmatprep.mubr.bf16.mxu0 %v3477
        %3645 = vmatmul.mubr.bf16.gmra.mxu0 %v3469
        %v3646 = vpop.f32.mrf.mxu0
        %v3647 = vadd.f32 0.0, %v3646
        %v3648 = vpop.f32.mrf.mxu0
        %v3649 = vpop.f32.mrf.mxu0
        %v3650 = vadd.f32 0.0, %v3649
        %v3651 = vpop.f32.mrf.mxu0
        %3652 = vmatprep.mubr.bf16.mxu0 %v3493
        %3653 = vmatmul.mubr.bf16.gmra.mxu0 %v3485
        %v3654 = vpop.f32.mrf.mxu0
        %v3655 = vadd.f32 0.0, %v3654
        %v3656 = vpop.f32.mrf.mxu0
        %v3657 = vpop.f32.mrf.mxu0
        %v3658 = vadd.f32 0.0, %v3657
        %v3659 = vpop.f32.mrf.mxu0
        %3660 = vmatprep.mubr.bf16.mxu0 %v3499
        %3661 = vmatmul.mubr.bf16.gmra.mxu0 %v3496
        %v3662 = vpop.f32.mrf.mxu0
        %v3663 = vadd.f32 0.0, %v3662
        %v3664 = vpop.f32.mrf.mxu0
        %v3665 = vpop.f32.mrf.mxu0
        %v3666 = vpop.f32.mrf.mxu0
        %3667 = vdwg.mxu0
        %v3700 = vunpack.c.l.b16 %v3365
        %v3701 = vunpack.c.l.b16 %v3366
        %v3702 = vunpack.c.l.b16 %v3367
        %v3703 = vunpack.c.l.b16 %v3368
        %v3704 = vunpack.c.l.b16 %v3369
        %v3705 = vunpack.c.l.b16 %v3370
        %v3706 = vunpack.c.l.b16 %v3371
        %v3707 = vunpack.c.l.b16 %v3372
        %v3708 = vunpack.c.l.b16 %v3373
        %v3709 = vunpack.c.l.b16 %v3374
        %v3710 = vunpack.c.l.b16 %v3375
        %v3711 = vunpack.c.l.b16 %v3376
        %v3712 = vunpack.c.l.b16 %v3377
        %v3713 = vunpack.c.l.b16 %v3378
        %v3714 = vunpack.c.l.b16 %v3379
        %v3715 = vunpack.c.l.b16 %v3380
        %v3716 = vunpack.c.l.b16 %v3381
        %v3717 = vunpack.c.l.b16 %v3382
        %v3718 = vunpack.c.l.b16 %v3383
        %v3719 = vunpack.c.l.b16 %v3384
        %v3720 = vunpack.c.l.b16 %v3385
        %v3721 = vunpack.c.l.b16 %v3386
        %v3722 = vunpack.c.l.b16 %v3387
        %v3723 = vunpack.c.l.b16 %v3388
        %v3724 = vunpack.c.l.b16 %v3389
        %v3725 = vunpack.c.l.b16 %v3390
        %v3726 = vunpack.c.l.b16 %v3391
        %v3727 = vunpack.c.l.b16 %v3392
        %v3728 = vunpack.c.l.b16 %v3393
        %v3729 = vunpack.c.l.b16 %v3394
        %v3730 = vunpack.c.l.b16 %v3395
        %v3731 = vunpack.c.l.b16 %v3396
        %v3732 = vpack.c.b16 %v3701, %v3700
        %v3733 = vpack.c.b16 %v3703, %v3702
        %v3734 = vpack.c.b16 %v3705, %v3704
        %v3735 = vpack.c.b16 %v3707, %v3706
        %v3736 = vpack.c.b16 %v3709, %v3708
        %v3737 = vpack.c.b16 %v3711, %v3710
        %v3738 = vpack.c.b16 %v3713, %v3712
        %v3739 = vpack.c.b16 %v3715, %v3714
        %v3740 = vpack.c.b16 %v3717, %v3716
        %v3741 = vpack.c.b16 %v3719, %v3718
        %v3742 = vpack.c.b16 %v3721, %v3720
        %v3743 = vpack.c.b16 %v3723, %v3722
        %v3744 = vpack.c.b16 %v3725, %v3724
        %v3745 = vpack.c.b16 %v3727, %v3726
        %v3746 = vpack.c.b16 %v3729, %v3728
        %v3747 = vpack.c.b16 %v3731, %v3730
        %3764 = vmatprep.subr.bf16.mxu0 0
        %3765 = vmatpush1.bf16.msra.mxu0 %v3739
        %3766 = vmatprep.subr.bf16.mxu0 0
        %3767 = vmatpush1.bf16.msra.mxu0 %v3738
        %3768 = vmatprep.subr.bf16.mxu0 0
        %3769 = vmatpush1.bf16.msra.mxu0 %v3737
        %3770 = vmatprep.subr.bf16.mxu0 0
        %3771 = vmatpush1.bf16.msra.mxu0 %v3736
        %3772 = vmatprep.subr.bf16.mxu0 0
        %3773 = vmatpush1.bf16.msra.mxu0 %v3735
        %3774 = vmatprep.subr.bf16.mxu0 0
        %3775 = vmatpush1.bf16.msra.mxu0 %v3734
        %3776 = vmatprep.subr.bf16.mxu0 0
        %3777 = vmatpush1.bf16.msra.mxu0 %v3733
        %3778 = vmatprep.subr.bf16.mxu0 0
        %3779 = vmatpush1.bf16.msra.mxu0 %v3732
        %3780 = vmatprep.subr.bf16.mxu0 0
        %3781 = vmatpush2.bf16.msra.mxu0 %v3747
        %3782 = vmatprep.subr.bf16.mxu0 0
        %3783 = vmatpush2.bf16.msra.mxu0 %v3746
        %3784 = vmatprep.subr.bf16.mxu0 0
        %3785 = vmatpush2.bf16.msra.mxu0 %v3745
        %3786 = vmatprep.subr.bf16.mxu0 0
        %3787 = vmatpush2.bf16.msra.mxu0 %v3744
        %3788 = vmatprep.subr.bf16.mxu0 0
        %3789 = vmatpush2.bf16.msra.mxu0 %v3743
        %3790 = vmatprep.subr.bf16.mxu0 0
        %3791 = vmatpush2.bf16.msra.mxu0 %v3742
        %3792 = vmatprep.subr.bf16.mxu0 0
        %3793 = vmatpush2.bf16.msra.mxu0 %v3741
        %3794 = vmatprep.subr.bf16.mxu0 0
        %3795 = vmatpush2.bf16.msra.mxu0 %v3740
        %3796 = vmatprep.mubr.bf16.mxu0 %v3358
        %3797 = vmatmul.mubr.bf16.gmra.mxu0 %v3357
        %v3798 = vpop.f32.mrf.mxu0
        %v3799 = vadd.f32 %v3639, %v3798
        %v3800 = vpop.f32.mrf.mxu0
        %v3801 = vpop.f32.mrf.mxu0
        %v3802 = vadd.f32 %v3642, %v3801
        %v3803 = vpop.f32.mrf.mxu0
        %3804 = vmatprep.mubr.bf16.mxu0 %v3360
        %3805 = vmatmul.mubr.bf16.gmra.mxu0 %v3359
        %v3806 = vpop.f32.mrf.mxu0
        %v3807 = vadd.f32 %v3647, %v3806
        %v3808 = vpop.f32.mrf.mxu0
        %v3809 = vpop.f32.mrf.mxu0
        %v3810 = vadd.f32 %v3650, %v3809
        %v3811 = vpop.f32.mrf.mxu0
        %3812 = vmatprep.mubr.bf16.mxu0 %v3362
        %3813 = vmatmul.mubr.bf16.gmra.mxu0 %v3361
        %v3814 = vpop.f32.mrf.mxu0
        %v3815 = vadd.f32 %v3655, %v3814
        %v3816 = vpop.f32.mrf.mxu0
        %v3817 = vpop.f32.mrf.mxu0
        %v3818 = vadd.f32 %v3658, %v3817
        %v3819 = vpop.f32.mrf.mxu0
        %3820 = vmatprep.mubr.bf16.mxu0 %v3364
        %3821 = vmatmul.mubr.bf16.gmra.mxu0 %v3363
        %v3822 = vpop.f32.mrf.mxu0
        %v3823 = vadd.f32 %v3663, %v3822
        %v3824 = vpop.f32.mrf.mxu0
        %v3825 = vpop.f32.mrf.mxu0
        %v3826 = vpop.f32.mrf.mxu0
        %3827 = vdwg.mxu0
        %v3828 = vld [vmem:[#allocation2 + $0x10] sm:$0xf8]
        %v3829 = vld [vmem:[#allocation2 + $0x18] sm:$0xf8]
        %v3830 = vld [vmem:[#allocation2 + $0x20] sm:$0xff]
        %v3831 = vld [vmem:[#allocation2 + $0x28] sm:$0xff]
        %v3832 = vld [vmem:[#allocation2 + $0x30] sm:$0xff]
        %v3833 = vld [vmem:[#allocation2 + $0x38] sm:$0xff]
        %v3834 = vld [vmem:[#allocation2 + $0x40] sm:$0xff]
        %v3835 = vld [vmem:[#allocation2 + $0x48] sm:$0xff]
        %v3836 = vld [vmem:[#allocation2 + $0x50] sm:$0xff]
        %v3837 = vld [vmem:[#allocation2 + $0x58] sm:$0xff]
        %v3838 = vld [vmem:[#allocation2 + $0x60] sm:$0xff]
        %v3839 = vld [vmem:[#allocation2 + $0x68] sm:$0xff]
        %v3840 = vld [vmem:[#allocation2 + $0x70] sm:$0xff]
        %v3841 = vld [vmem:[#allocation2 + $0x78] sm:$0xff]
        %v3842 = vld [vmem:[#allocation2 + $0x80] sm:$0x3]
        %v3843 = vld [vmem:[#allocation2 + $0x88] sm:$0x3]
        %v3844 = vpack.c.bf16 %v3830, %v3828
        %v3845 = vpack.c.bf16 %v3831, %v3829
        %v3846 = vpack.c.bf16 %v3834, %v3832
        %v3847 = vpack.c.bf16 %v3835, %v3833
        %v3848 = vpack.c.bf16 %v3838, %v3836
        %v3849 = vpack.c.bf16 %v3839, %v3837
        %v3850 = vpack.c.bf16 %v3842, %v3840
        %v3851 = vpack.c.bf16 %v3843, %v3841
        %s3852 = scalar_lea.vmem %s3, 256
        %v3853 = vld [vmem:[%s3852] sm:$0xf]
        %v3854 = vld [vmem:[%s3852 + $0x4] sm:$0xf]
        %v3855 = vld [vmem:[%s3852 + $0x8] sm:$0xf]
        %v3856 = vld [vmem:[%s3852 + $0xc] sm:$0xf]
        %v3857 = vld [vmem:[%s3852 + $0x10] sm:$0xf]
        %v3858 = vld [vmem:[%s3852 + $0x14] sm:$0xf]
        %v3859 = vld [vmem:[%s3852 + $0x18] sm:$0xf]
        %v3860 = vld [vmem:[%s3852 + $0x1c] sm:$0xf]
        %v3861 = vld [vmem:[%s3852 + $0x20] sm:$0xf]
        %v3862 = vld [vmem:[%s3852 + $0x24] sm:$0xf]
        %v3863 = vld [vmem:[%s3852 + $0x28] sm:$0xf]
        %v3864 = vld [vmem:[%s3852 + $0x2c] sm:$0xf]
        %v3865 = vld [vmem:[%s3852 + $0x30] sm:$0xf]
        %v3866 = vld [vmem:[%s3852 + $0x34] sm:$0xf]
        %v3867 = vld [vmem:[%s3852 + $0x38] sm:$0xf]
        %v3868 = vld [vmem:[%s3852 + $0x3c] sm:$0xf]
        %v3869 = vld [vmem:[%s3852 + $0x40] sm:$0xf]
        %v3870 = vld [vmem:[%s3852 + $0x44] sm:$0xf]
        %v3871 = vld [vmem:[%s3852 + $0x48] sm:$0xf]
        %v3872 = vld [vmem:[%s3852 + $0x4c] sm:$0xf]
        %v3873 = vld [vmem:[%s3852 + $0x50] sm:$0xf]
        %v3874 = vld [vmem:[%s3852 + $0x54] sm:$0xf]
        %v3875 = vld [vmem:[%s3852 + $0x58] sm:$0xf]
        %v3876 = vld [vmem:[%s3852 + $0x5c] sm:$0xf]
        %v3877 = vld [vmem:[%s3852 + $0x60] sm:$0xf]
        %v3878 = vld [vmem:[%s3852 + $0x64] sm:$0xf]
        %v3879 = vld [vmem:[%s3852 + $0x68] sm:$0xf]
        %v3880 = vld [vmem:[%s3852 + $0x6c] sm:$0xf]
        %v3881 = vld [vmem:[%s3852 + $0x70] sm:$0xf]
        %v3882 = vld [vmem:[%s3852 + $0x74] sm:$0xf]
        %v3883 = vld [vmem:[%s3852 + $0x78] sm:$0xf]
        %v3884 = vld [vmem:[%s3852 + $0x7c] sm:$0xf]
        %v3886 = vshrl.u32 %v3844, 16
        %v3888 = vrot.slane %v3886, 1
        %v3889 = vshll.u32 %v3844, 16
        %v3891 = vrot.slane %v3889, 2
        %v3892 = vor.u32 %v3888, %v3891
        %v3894 = vshrl.u32 %v3846, 16
        %v3896 = vrot.slane %v3894, 1
        %v3897 = vshll.u32 %v3846, 16
        %v3899 = vrot.slane %v3897, 2
        %v3900 = vor.u32 %v3896, %v3899
        %v3901 = vsel %vm1947, %v3892, %v3900
        %v3903 = vshrl.u32 %v3845, 16
        %v3905 = vrot.slane %v3903, 1
        %v3906 = vshll.u32 %v3845, 16
        %v3908 = vrot.slane %v3906, 2
        %v3909 = vor.u32 %v3905, %v3908
        %v3911 = vshrl.u32 %v3847, 16
        %v3913 = vrot.slane %v3911, 1
        %v3914 = vshll.u32 %v3847, 16
        %v3916 = vrot.slane %v3914, 2
        %v3917 = vor.u32 %v3913, %v3916
        %v3918 = vsel %vm1947, %v3909, %v3917
        %v3920 = vshrl.u32 %v3848, 16
        %v3922 = vrot.slane %v3920, 1
        %v3923 = vshll.u32 %v3848, 16
        %v3925 = vrot.slane %v3923, 2
        %v3926 = vor.u32 %v3922, %v3925
        %v3927 = vsel %vm1947, %v3900, %v3926
        %v3929 = vshrl.u32 %v3849, 16
        %v3931 = vrot.slane %v3929, 1
        %v3932 = vshll.u32 %v3849, 16
        %v3934 = vrot.slane %v3932, 2
        %v3935 = vor.u32 %v3931, %v3934
        %v3936 = vsel %vm1947, %v3917, %v3935
        %v3938 = vshrl.u32 %v3850, 16
        %v3940 = vrot.slane %v3938, 1
        %v3941 = vshll.u32 %v3850, 16
        %v3943 = vrot.slane %v3941, 2
        %v3944 = vor.u32 %v3940, %v3943
        %v3945 = vsel %vm1947, %v3926, %v3944
        %v3947 = vshrl.u32 %v3851, 16
        %v3949 = vrot.slane %v3947, 1
        %v3950 = vshll.u32 %v3851, 16
        %v3952 = vrot.slane %v3950, 2
        %v3953 = vor.u32 %v3949, %v3952
        %v3954 = vsel %vm1947, %v3935, %v3953
        %v3995 = vunpack.c.l.b16 %v3853
        %v3996 = vunpack.c.l.b16 %v3854
        %v3997 = vunpack.c.l.b16 %v3855
        %v3998 = vunpack.c.l.b16 %v3856
        %v3999 = vunpack.c.l.b16 %v3857
        %v4000 = vunpack.c.l.b16 %v3858
        %v4001 = vunpack.c.l.b16 %v3859
        %v4002 = vunpack.c.l.b16 %v3860
        %v4003 = vunpack.c.l.b16 %v3861
        %v4004 = vunpack.c.l.b16 %v3862
        %v4005 = vunpack.c.l.b16 %v3863
        %v4006 = vunpack.c.l.b16 %v3864
        %v4007 = vunpack.c.l.b16 %v3865
        %v4008 = vunpack.c.l.b16 %v3866
        %v4009 = vunpack.c.l.b16 %v3867
        %v4010 = vunpack.c.l.b16 %v3868
        %v4011 = vunpack.c.l.b16 %v3869
        %v4012 = vunpack.c.l.b16 %v3870
        %v4013 = vunpack.c.l.b16 %v3871
        %v4014 = vunpack.c.l.b16 %v3872
        %v4015 = vunpack.c.l.b16 %v3873
        %v4016 = vunpack.c.l.b16 %v3874
        %v4017 = vunpack.c.l.b16 %v3875
        %v4018 = vunpack.c.l.b16 %v3876
        %v4019 = vunpack.c.l.b16 %v3877
        %v4020 = vunpack.c.l.b16 %v3878
        %v4021 = vunpack.c.l.b16 %v3879
        %v4022 = vunpack.c.l.b16 %v3880
        %v4023 = vunpack.c.l.b16 %v3881
        %v4024 = vunpack.c.l.b16 %v3882
        %v4025 = vunpack.c.l.b16 %v3883
        %v4026 = vunpack.c.l.b16 %v3884
        %v4027 = vpack.c.b16 %v3996, %v3995
        %v4028 = vpack.c.b16 %v3998, %v3997
        %v4029 = vpack.c.b16 %v4000, %v3999
        %v4030 = vpack.c.b16 %v4002, %v4001
        %v4031 = vpack.c.b16 %v4004, %v4003
        %v4032 = vpack.c.b16 %v4006, %v4005
        %v4033 = vpack.c.b16 %v4008, %v4007
        %v4034 = vpack.c.b16 %v4010, %v4009
        %v4035 = vpack.c.b16 %v4012, %v4011
        %v4036 = vpack.c.b16 %v4014, %v4013
        %v4037 = vpack.c.b16 %v4016, %v4015
        %v4038 = vpack.c.b16 %v4018, %v4017
        %v4039 = vpack.c.b16 %v4020, %v4019
        %v4040 = vpack.c.b16 %v4022, %v4021
        %v4041 = vpack.c.b16 %v4024, %v4023
        %v4042 = vpack.c.b16 %v4026, %v4025
        %4059 = vmatprep.subr.bf16.mxu0 0
        %4060 = vmatpush1.bf16.msra.mxu0 %v4034
        %4061 = vmatprep.subr.bf16.mxu0 0
        %4062 = vmatpush1.bf16.msra.mxu0 %v4033
        %4063 = vmatprep.subr.bf16.mxu0 0
        %4064 = vmatpush1.bf16.msra.mxu0 %v4032
        %4065 = vmatprep.subr.bf16.mxu0 0
        %4066 = vmatpush1.bf16.msra.mxu0 %v4031
        %4067 = vmatprep.subr.bf16.mxu0 0
        %4068 = vmatpush1.bf16.msra.mxu0 %v4030
        %4069 = vmatprep.subr.bf16.mxu0 0
        %4070 = vmatpush1.bf16.msra.mxu0 %v4029
        %4071 = vmatprep.subr.bf16.mxu0 0
        %4072 = vmatpush1.bf16.msra.mxu0 %v4028
        %4073 = vmatprep.subr.bf16.mxu0 0
        %4074 = vmatpush1.bf16.msra.mxu0 %v4027
        %4075 = vmatprep.subr.bf16.mxu0 0
        %4076 = vmatpush2.bf16.msra.mxu0 %v4042
        %4077 = vmatprep.subr.bf16.mxu0 0
        %4078 = vmatpush2.bf16.msra.mxu0 %v4041
        %4079 = vmatprep.subr.bf16.mxu0 0
        %4080 = vmatpush2.bf16.msra.mxu0 %v4040
        %4081 = vmatprep.subr.bf16.mxu0 0
        %4082 = vmatpush2.bf16.msra.mxu0 %v4039
        %4083 = vmatprep.subr.bf16.mxu0 0
        %4084 = vmatpush2.bf16.msra.mxu0 %v4038
        %4085 = vmatprep.subr.bf16.mxu0 0
        %4086 = vmatpush2.bf16.msra.mxu0 %v4037
        %4087 = vmatprep.subr.bf16.mxu0 0
        %4088 = vmatpush2.bf16.msra.mxu0 %v4036
        %4089 = vmatprep.subr.bf16.mxu0 0
        %4090 = vmatpush2.bf16.msra.mxu0 %v4035
        %4091 = vmatprep.mubr.bf16.mxu0 %v3918
        %4092 = vmatmul.mubr.bf16.gmra.mxu0 %v3901
        %v4093 = vpop.f32.mrf.mxu0
        %v4094 = vadd.f32 0.0, %v4093
        %v4095 = vpop.f32.mrf.mxu0
        %v4096 = vpop.f32.mrf.mxu0
        %v4097 = vadd.f32 0.0, %v4096
        %v4098 = vpop.f32.mrf.mxu0
        %4099 = vmatprep.mubr.bf16.mxu0 %v3936
        %4100 = vmatmul.mubr.bf16.gmra.mxu0 %v3927
        %v4101 = vpop.f32.mrf.mxu0
        %v4102 = vadd.f32 0.0, %v4101
        %v4103 = vpop.f32.mrf.mxu0
        %v4104 = vpop.f32.mrf.mxu0
        %v4105 = vadd.f32 0.0, %v4104
        %v4106 = vpop.f32.mrf.mxu0
        %4107 = vmatprep.mubr.bf16.mxu0 %v3954
        %4108 = vmatmul.mubr.bf16.gmra.mxu0 %v3945
        %v4109 = vpop.f32.mrf.mxu0
        %v4110 = vadd.f32 0.0, %v4109
        %v4111 = vpop.f32.mrf.mxu0
        %v4112 = vpop.f32.mrf.mxu0
        %v4113 = vadd.f32 0.0, %v4112
        %v4114 = vpop.f32.mrf.mxu0
        %4115 = vmatprep.mubr.bf16.mxu0 %v3953
        %4116 = vmatmul.mubr.bf16.gmra.mxu0 %v3944
        %v4117 = vpop.f32.mrf.mxu0
        %v4118 = vadd.f32 0.0, %v4117
        %v4119 = vpop.f32.mrf.mxu0
        %v4120 = vpop.f32.mrf.mxu0
        %v4121 = vpop.f32.mrf.mxu0
        %4122 = vdwg.mxu0
        %v4123 = vadd.f32 %v3799, %v4094
        %v4124 = vadd.f32 %v3802, %v4097
        %v4125 = vadd.f32 %v3807, %v4102
        %v4126 = vadd.f32 %v3810, %v4105
        %v4127 = vadd.f32 %v3815, %v4110
        %v4128 = vadd.f32 %v3818, %v4113
        %v4129 = vadd.f32 %v3823, %v4118
        %v4130 = vld [vmem:[#allocation2 + $0x10] sm:$0xf0]
        %v4131 = vld [vmem:[#allocation2 + $0x18] sm:$0xf0]
        %v4132 = vld [vmem:[#allocation2 + $0x80] sm:$0x7]
        %v4133 = vld [vmem:[#allocation2 + $0x88] sm:$0x7]
        %v4134 = vpack.c.bf16 %v3830, %v4130
        %v4135 = vpack.c.bf16 %v3831, %v4131
        %v4136 = vpack.c.bf16 %v4132, %v3840
        %v4137 = vpack.c.bf16 %v4133, %v3841
        %s4138 = scalar_lea.vmem %s3, 384
        %v4139 = vld [vmem:[%s4138] sm:$0xf]
        %v4140 = vld [vmem:[%s4138 + $0x4] sm:$0xf]
        %v4141 = vld [vmem:[%s4138 + $0x8] sm:$0xf]
        %v4142 = vld [vmem:[%s4138 + $0xc] sm:$0xf]
        %v4143 = vld [vmem:[%s4138 + $0x10] sm:$0xf]
        %v4144 = vld [vmem:[%s4138 + $0x14] sm:$0xf]
        %v4145 = vld [vmem:[%s4138 + $0x18] sm:$0xf]
        %v4146 = vld [vmem:[%s4138 + $0x1c] sm:$0xf]
        %v4147 = vld [vmem:[%s4138 + $0x20] sm:$0xf]
        %v4148 = vld [vmem:[%s4138 + $0x24] sm:$0xf]
        %v4149 = vld [vmem:[%s4138 + $0x28] sm:$0xf]
        %v4150 = vld [vmem:[%s4138 + $0x2c] sm:$0xf]
        %v4151 = vld [vmem:[%s4138 + $0x30] sm:$0xf]
        %v4152 = vld [vmem:[%s4138 + $0x34] sm:$0xf]
        %v4153 = vld [vmem:[%s4138 + $0x38] sm:$0xf]
        %v4154 = vld [vmem:[%s4138 + $0x3c] sm:$0xf]
        %v4155 = vld [vmem:[%s4138 + $0x40] sm:$0xf]
        %v4156 = vld [vmem:[%s4138 + $0x44] sm:$0xf]
        %v4157 = vld [vmem:[%s4138 + $0x48] sm:$0xf]
        %v4158 = vld [vmem:[%s4138 + $0x4c] sm:$0xf]
        %v4159 = vld [vmem:[%s4138 + $0x50] sm:$0xf]
        %v4160 = vld [vmem:[%s4138 + $0x54] sm:$0xf]
        %v4161 = vld [vmem:[%s4138 + $0x58] sm:$0xf]
        %v4162 = vld [vmem:[%s4138 + $0x5c] sm:$0xf]
        %v4163 = vld [vmem:[%s4138 + $0x60] sm:$0xf]
        %v4164 = vld [vmem:[%s4138 + $0x64] sm:$0xf]
        %v4165 = vld [vmem:[%s4138 + $0x68] sm:$0xf]
        %v4166 = vld [vmem:[%s4138 + $0x6c] sm:$0xf]
        %v4167 = vld [vmem:[%s4138 + $0x70] sm:$0xf]
        %v4168 = vld [vmem:[%s4138 + $0x74] sm:$0xf]
        %v4169 = vld [vmem:[%s4138 + $0x78] sm:$0xf]
        %v4170 = vld [vmem:[%s4138 + $0x7c] sm:$0xf]
        %v4179 = vrot.slane %v4134, 2
        %v4180 = vrot.slane %v3846, 2
        %v4181 = vsel %vm2677, %v4179, %v4180
        %v4182 = vrot.slane %v4135, 2
        %v4183 = vrot.slane %v3847, 2
        %v4184 = vsel %vm2677, %v4182, %v4183
        %v4185 = vrot.slane %v3848, 2
        %v4186 = vsel %vm2677, %v4180, %v4185
        %v4187 = vrot.slane %v3849, 2
        %v4188 = vsel %vm2677, %v4183, %v4187
        %v4189 = vrot.slane %v4136, 2
        %v4190 = vsel %vm2677, %v4185, %v4189
        %v4191 = vrot.slane %v4137, 2
        %v4192 = vsel %vm2677, %v4187, %v4191
        %v4233 = vunpack.c.l.b16 %v4139
        %v4234 = vunpack.c.l.b16 %v4140
        %v4235 = vunpack.c.l.b16 %v4141
        %v4236 = vunpack.c.l.b16 %v4142
        %v4237 = vunpack.c.l.b16 %v4143
        %v4238 = vunpack.c.l.b16 %v4144
        %v4239 = vunpack.c.l.b16 %v4145
        %v4240 = vunpack.c.l.b16 %v4146
        %v4241 = vunpack.c.l.b16 %v4147
        %v4242 = vunpack.c.l.b16 %v4148
        %v4243 = vunpack.c.l.b16 %v4149
        %v4244 = vunpack.c.l.b16 %v4150
        %v4245 = vunpack.c.l.b16 %v4151
        %v4246 = vunpack.c.l.b16 %v4152
        %v4247 = vunpack.c.l.b16 %v4153
        %v4248 = vunpack.c.l.b16 %v4154
        %v4249 = vunpack.c.l.b16 %v4155
        %v4250 = vunpack.c.l.b16 %v4156
        %v4251 = vunpack.c.l.b16 %v4157
        %v4252 = vunpack.c.l.b16 %v4158
        %v4253 = vunpack.c.l.b16 %v4159
        %v4254 = vunpack.c.l.b16 %v4160
        %v4255 = vunpack.c.l.b16 %v4161
        %v4256 = vunpack.c.l.b16 %v4162
        %v4257 = vunpack.c.l.b16 %v4163
        %v4258 = vunpack.c.l.b16 %v4164
        %v4259 = vunpack.c.l.b16 %v4165
        %v4260 = vunpack.c.l.b16 %v4166
        %v4261 = vunpack.c.l.b16 %v4167
        %v4262 = vunpack.c.l.b16 %v4168
        %v4263 = vunpack.c.l.b16 %v4169
        %v4264 = vunpack.c.l.b16 %v4170
        %v4265 = vpack.c.b16 %v4234, %v4233
        %v4266 = vpack.c.b16 %v4236, %v4235
        %v4267 = vpack.c.b16 %v4238, %v4237
        %v4268 = vpack.c.b16 %v4240, %v4239
        %v4269 = vpack.c.b16 %v4242, %v4241
        %v4270 = vpack.c.b16 %v4244, %v4243
        %v4271 = vpack.c.b16 %v4246, %v4245
        %v4272 = vpack.c.b16 %v4248, %v4247
        %v4273 = vpack.c.b16 %v4250, %v4249
        %v4274 = vpack.c.b16 %v4252, %v4251
        %v4275 = vpack.c.b16 %v4254, %v4253
        %v4276 = vpack.c.b16 %v4256, %v4255
        %v4277 = vpack.c.b16 %v4258, %v4257
        %v4278 = vpack.c.b16 %v4260, %v4259
        %v4279 = vpack.c.b16 %v4262, %v4261
        %v4280 = vpack.c.b16 %v4264, %v4263
        %4297 = vmatprep.subr.bf16.mxu0 0
        %4298 = vmatpush1.bf16.msra.mxu0 %v4272
        %4299 = vmatprep.subr.bf16.mxu0 0
        %4300 = vmatpush1.bf16.msra.mxu0 %v4271
        %4301 = vmatprep.subr.bf16.mxu0 0
        %4302 = vmatpush1.bf16.msra.mxu0 %v4270
        %4303 = vmatprep.subr.bf16.mxu0 0
        %4304 = vmatpush1.bf16.msra.mxu0 %v4269
        %4305 = vmatprep.subr.bf16.mxu0 0
        %4306 = vmatpush1.bf16.msra.mxu0 %v4268
        %4307 = vmatprep.subr.bf16.mxu0 0
        %4308 = vmatpush1.bf16.msra.mxu0 %v4267
        %4309 = vmatprep.subr.bf16.mxu0 0
        %4310 = vmatpush1.bf16.msra.mxu0 %v4266
        %4311 = vmatprep.subr.bf16.mxu0 0
        %4312 = vmatpush1.bf16.msra.mxu0 %v4265
        %4313 = vmatprep.subr.bf16.mxu0 0
        %4314 = vmatpush2.bf16.msra.mxu0 %v4280
        %4315 = vmatprep.subr.bf16.mxu0 0
        %4316 = vmatpush2.bf16.msra.mxu0 %v4279
        %4317 = vmatprep.subr.bf16.mxu0 0
        %4318 = vmatpush2.bf16.msra.mxu0 %v4278
        %4319 = vmatprep.subr.bf16.mxu0 0
        %4320 = vmatpush2.bf16.msra.mxu0 %v4277
        %4321 = vmatprep.subr.bf16.mxu0 0
        %4322 = vmatpush2.bf16.msra.mxu0 %v4276
        %4323 = vmatprep.subr.bf16.mxu0 0
        %4324 = vmatpush2.bf16.msra.mxu0 %v4275
        %4325 = vmatprep.subr.bf16.mxu0 0
        %4326 = vmatpush2.bf16.msra.mxu0 %v4274
        %4327 = vmatprep.subr.bf16.mxu0 0
        %4328 = vmatpush2.bf16.msra.mxu0 %v4273
        %4329 = vmatprep.mubr.bf16.mxu0 %v4184
        %4330 = vmatmul.mubr.bf16.gmra.mxu0 %v4181
        %v4331 = vpop.f32.mrf.mxu0
        %v4332 = vadd.f32 0.0, %v4331
        %v4333 = vpop.f32.mrf.mxu0
        %v4334 = vpop.f32.mrf.mxu0
        %v4335 = vadd.f32 0.0, %v4334
        %v4336 = vpop.f32.mrf.mxu0
        %4337 = vmatprep.mubr.bf16.mxu0 %v4188
        %4338 = vmatmul.mubr.bf16.gmra.mxu0 %v4186
        %v4339 = vpop.f32.mrf.mxu0
        %v4340 = vadd.f32 0.0, %v4339
        %v4341 = vpop.f32.mrf.mxu0
        %v4342 = vpop.f32.mrf.mxu0
        %v4343 = vadd.f32 0.0, %v4342
        %v4344 = vpop.f32.mrf.mxu0
        %4345 = vmatprep.mubr.bf16.mxu0 %v4192
        %4346 = vmatmul.mubr.bf16.gmra.mxu0 %v4190
        %v4347 = vpop.f32.mrf.mxu0
        %v4348 = vadd.f32 0.0, %v4347
        %v4349 = vpop.f32.mrf.mxu0
        %v4350 = vpop.f32.mrf.mxu0
        %v4351 = vadd.f32 0.0, %v4350
        %v4352 = vpop.f32.mrf.mxu0
        %4353 = vmatprep.mubr.bf16.mxu0 %v4191
        %4354 = vmatmul.mubr.bf16.gmra.mxu0 %v4189
        %v4355 = vpop.f32.mrf.mxu0
        %v4356 = vadd.f32 0.0, %v4355
        %v4357 = vpop.f32.mrf.mxu0
        %v4358 = vpop.f32.mrf.mxu0
        %v4359 = vpop.f32.mrf.mxu0
        %4360 = vdwg.mxu0
        %v4361 = vadd.f32 %v4123, %v4332
        %v4362 = vadd.f32 %v4124, %v4335
        %v4363 = vadd.f32 %v4125, %v4340
        %v4364 = vadd.f32 %v4126, %v4343
        %v4365 = vadd.f32 %v4127, %v4348
        %v4366 = vadd.f32 %v4128, %v4351
        %v4367 = vadd.f32 %v4129, %v4356
        %v4368 = vld [vmem:[%s4] sm:$0x1]
        %v4370 = vlaneseq
        %v4371 = vshrl.u32 %v4370, 7
        %v4372 = vsub.s32 0, %v4371
        %v4373 = vrot.slane %v4368, %v4372
        %v4375 = vadd.f32 %v4361, %v4373
        %v4376 = vadd.f32 %v4362, %v4373
        %v4377 = vadd.f32 %v4363, %v4373
        %v4378 = vadd.f32 %v4364, %v4373
        %v4379 = vadd.f32 %v4365, %v4373
        %v4380 = vadd.f32 %v4366, %v4373
        %v4381 = vadd.f32 %v4367, %v4373
        %v4382 = vmax.f32 %v4375, 0.0
        %v4383 = vmax.f32 %v4376, 0.0
        %v4384 = vmax.f32 %v4377, 0.0
        %v4385 = vmax.f32 %v4378, 0.0
        %v4386 = vmax.f32 %v4379, 0.0
        %v4387 = vmax.f32 %v4380, 0.0
        %v4388 = vmax.f32 %v4381, 0.0
        %v4389 = vmul.f32 %v4382, %v573
        %v4390 = vmul.f32 %v4383, %v574
        %v4391 = vmul.f32 %v4384, %v575
        %v4392 = vmul.f32 %v4385, %v576
        %v4393 = vmul.f32 %v4386, %v577
        %v4394 = vmul.f32 %v4387, %v578
        %v4395 = vmul.f32 %v4388, %v579
        %4396 = vst [vmem:[#allocation3] sm:$0xff] 0.0
        %4397 = vst [vmem:[#allocation3 + $0x8] sm:$0xff] 0.0
        %4398 = vst [vmem:[#allocation3 + $0x10] sm:$0xff] 0.0
        %4399 = vst [vmem:[#allocation3 + $0x18] sm:$0xff] 0.0
        %4400 = vst [vmem:[#allocation3 + $0x20] sm:$0xff] 0.0
        %4401 = vst [vmem:[#allocation3 + $0x28] sm:$0xff] 0.0
        %4402 = vst [vmem:[#allocation3 + $0x30] sm:$0xff] 0.0
        %4403 = vst [vmem:[#allocation3 + $0x38] sm:$0xff] 0.0
        %4404 = vst [vmem:[#allocation3 + $0x40] sm:$0xff] 0.0
        %4405 = vst [vmem:[#allocation3 + $0xc] sm:$0xff] %v4389
        %4406 = vst [vmem:[#allocation3 + $0x14] sm:$0xff] %v4390
        %4407 = vst [vmem:[#allocation3 + $0x1c] sm:$0xff] %v4391
        %4408 = vst [vmem:[#allocation3 + $0x24] sm:$0xff] %v4392
        %4409 = vst [vmem:[#allocation3 + $0x2c] sm:$0xff] %v4393
        %4410 = vst [vmem:[#allocation3 + $0x34] sm:$0xff] %v4394
        %4411 = vst [vmem:[#allocation3 + $0x3c] sm:$0x7f] %v4395
        %v4412 = vld [vmem:[#allocation3] sm:$0xff]
        %v4413 = vld [vmem:[#allocation3 + $0x8] sm:$0xff]
        %v4414 = vld [vmem:[#allocation3 + $0x10] sm:$0xff]
        %v4415 = vld [vmem:[#allocation3 + $0x18] sm:$0xff]
        %v4416 = vld [vmem:[#allocation3 + $0x20] sm:$0xff]
        %v4417 = vld [vmem:[#allocation3 + $0x28] sm:$0xff]
        %v4418 = vld [vmem:[#allocation3 + $0x30] sm:$0x7f]
        %v4419 = vpack.c.bf16 %v4413, %v4412
        %v4420 = vpack.c.bf16 %v4415, %v4414
        %v4421 = vpack.c.bf16 %v4417, %v4416
        %v4422 = vpack.c.bf16 %v4418, %v4418
        %v4423 = vld [vmem:[%s5] sm:$0xf]
        %v4424 = vld [vmem:[%s5 + $0x4] sm:$0xf]
        %v4425 = vld [vmem:[%s5 + $0x8] sm:$0xf]
        %v4426 = vld [vmem:[%s5 + $0xc] sm:$0xf]
        %v4427 = vld [vmem:[%s5 + $0x10] sm:$0xf]
        %v4428 = vld [vmem:[%s5 + $0x14] sm:$0xf]
        %v4429 = vld [vmem:[%s5 + $0x18] sm:$0xf]
        %v4430 = vld [vmem:[%s5 + $0x1c] sm:$0xf]
        %v4431 = vld [vmem:[%s5 + $0x20] sm:$0xf]
        %v4432 = vld [vmem:[%s5 + $0x24] sm:$0xf]
        %v4433 = vld [vmem:[%s5 + $0x28] sm:$0xf]
        %v4434 = vld [vmem:[%s5 + $0x2c] sm:$0xf]
        %v4435 = vld [vmem:[%s5 + $0x30] sm:$0xf]
        %v4436 = vld [vmem:[%s5 + $0x34] sm:$0xf]
        %v4437 = vld [vmem:[%s5 + $0x38] sm:$0xf]
        %v4438 = vld [vmem:[%s5 + $0x3c] sm:$0xf]
        %v4439 = vld [vmem:[#allocation3 + $0x1] sm:$0xff]
        %v4440 = vld [vmem:[#allocation3 + $0x9] sm:$0xff]
        %v4441 = vld [vmem:[#allocation3 + $0x11] sm:$0xff]
        %v4442 = vld [vmem:[#allocation3 + $0x19] sm:$0xff]
        %v4443 = vld [vmem:[#allocation3 + $0x21] sm:$0xff]
        %v4444 = vld [vmem:[#allocation3 + $0x29] sm:$0xff]
        %v4445 = vld [vmem:[#allocation3 + $0x31] sm:$0x7f]
        %v4446 = vpack.c.bf16 %v4440, %v4439
        %v4447 = vpack.c.bf16 %v4442, %v4441
        %v4448 = vpack.c.bf16 %v4444, %v4443
        %v4449 = vpack.c.bf16 %v4445, %v4445
        %s4450 = scalar_lea.vmem %s5, 64
        %v4451 = vld [vmem:[%s4450] sm:$0xf]
        %v4452 = vld [vmem:[%s4450 + $0x4] sm:$0xf]
        %v4453 = vld [vmem:[%s4450 + $0x8] sm:$0xf]
        %v4454 = vld [vmem:[%s4450 + $0xc] sm:$0xf]
        %v4455 = vld [vmem:[%s4450 + $0x10] sm:$0xf]
        %v4456 = vld [vmem:[%s4450 + $0x14] sm:$0xf]
        %v4457 = vld [vmem:[%s4450 + $0x18] sm:$0xf]
        %v4458 = vld [vmem:[%s4450 + $0x1c] sm:$0xf]
        %v4459 = vld [vmem:[%s4450 + $0x20] sm:$0xf]
        %v4460 = vld [vmem:[%s4450 + $0x24] sm:$0xf]
        %v4461 = vld [vmem:[%s4450 + $0x28] sm:$0xf]
        %v4462 = vld [vmem:[%s4450 + $0x2c] sm:$0xf]
        %v4463 = vld [vmem:[%s4450 + $0x30] sm:$0xf]
        %v4464 = vld [vmem:[%s4450 + $0x34] sm:$0xf]
        %v4465 = vld [vmem:[%s4450 + $0x38] sm:$0xf]
        %v4466 = vld [vmem:[%s4450 + $0x3c] sm:$0xf]
        %v4483 = vunpack.c.l.b16 %v4451
        %v4484 = vunpack.c.l.b16 %v4452
        %v4485 = vunpack.c.l.b16 %v4453
        %v4486 = vunpack.c.l.b16 %v4454
        %v4487 = vunpack.c.l.b16 %v4455
        %v4488 = vunpack.c.l.b16 %v4456
        %v4489 = vunpack.c.l.b16 %v4457
        %v4490 = vunpack.c.l.b16 %v4458
        %v4491 = vunpack.c.l.b16 %v4459
        %v4492 = vunpack.c.l.b16 %v4460
        %v4493 = vunpack.c.l.b16 %v4461
        %v4494 = vunpack.c.l.b16 %v4462
        %v4495 = vunpack.c.l.b16 %v4463
        %v4496 = vunpack.c.l.b16 %v4464
        %v4497 = vunpack.c.l.b16 %v4465
        %v4498 = vunpack.c.l.b16 %v4466
        %v4499 = vpack.c.b16 %v4484, %v4483
        %v4500 = vpack.c.b16 %v4486, %v4485
        %v4501 = vpack.c.b16 %v4488, %v4487
        %v4502 = vpack.c.b16 %v4490, %v4489
        %v4503 = vpack.c.b16 %v4492, %v4491
        %v4504 = vpack.c.b16 %v4494, %v4493
        %v4505 = vpack.c.b16 %v4496, %v4495
        %v4506 = vpack.c.b16 %v4498, %v4497
        %4515 = vmatprep.subr.bf16.mxu0 0
        %4516 = vmatpush1.bf16.msra.mxu0 %v4506
        %4517 = vmatprep.subr.bf16.mxu0 0
        %4518 = vmatpush1.bf16.msra.mxu0 %v4505
        %4519 = vmatprep.subr.bf16.mxu0 0
        %4520 = vmatpush1.bf16.msra.mxu0 %v4504
        %4521 = vmatprep.subr.bf16.mxu0 0
        %4522 = vmatpush1.bf16.msra.mxu0 %v4503
        %4523 = vmatprep.subr.bf16.mxu0 0
        %4524 = vmatpush1.bf16.msra.mxu0 %v4502
        %4525 = vmatprep.subr.bf16.mxu0 0
        %4526 = vmatpush1.bf16.msra.mxu0 %v4501
        %4527 = vmatprep.subr.bf16.mxu0 0
        %4528 = vmatpush1.bf16.msra.mxu0 %v4500
        %4529 = vmatprep.subr.bf16.mxu0 0
        %4530 = vmatpush1.bf16.msra.mxu0 %v4499
        %4531 = vmatprep.subr.bf16.mxu0 0
        %4532 = vmatpush2.bf16.msra.mxu0 0
        %4533 = vmatprep.subr.bf16.mxu0 0
        %4534 = vmatpush2.bf16.msra.mxu0 0
        %4535 = vmatprep.subr.bf16.mxu0 0
        %4536 = vmatpush2.bf16.msra.mxu0 0
        %4537 = vmatprep.subr.bf16.mxu0 0
        %4538 = vmatpush2.bf16.msra.mxu0 0
        %4539 = vmatprep.subr.bf16.mxu0 0
        %4540 = vmatpush2.bf16.msra.mxu0 0
        %4541 = vmatprep.subr.bf16.mxu0 0
        %4542 = vmatpush2.bf16.msra.mxu0 0
        %4543 = vmatprep.subr.bf16.mxu0 0
        %4544 = vmatpush2.bf16.msra.mxu0 0
        %4545 = vmatprep.subr.bf16.mxu0 0
        %4546 = vmatpush2.bf16.msra.mxu0 0
        %4547 = vmatprep.mubr.bf16.mxu0 0
        %4548 = vmatmul.mubr.bf16.gmra.mxu0 %v4446
        %v4549 = vpop.f32.mrf.mxu0
        %v4550 = vadd.f32 0.0, %v4549
        %v4551 = vpop.f32.mrf.mxu0
        %v4552 = vpop.f32.mrf.mxu0
        %v4553 = vadd.f32 0.0, %v4552
        %v4554 = vpop.f32.mrf.mxu0
        %4555 = vmatprep.mubr.bf16.mxu0 0
        %4556 = vmatmul.mubr.bf16.gmra.mxu0 %v4447
        %v4557 = vpop.f32.mrf.mxu0
        %v4558 = vadd.f32 0.0, %v4557
        %v4559 = vpop.f32.mrf.mxu0
        %v4560 = vpop.f32.mrf.mxu0
        %v4561 = vadd.f32 0.0, %v4560
        %v4562 = vpop.f32.mrf.mxu0
        %4563 = vmatprep.mubr.bf16.mxu0 0
        %4564 = vmatmul.mubr.bf16.gmra.mxu0 %v4448
        %v4565 = vpop.f32.mrf.mxu0
        %v4566 = vadd.f32 0.0, %v4565
        %v4567 = vpop.f32.mrf.mxu0
        %v4568 = vpop.f32.mrf.mxu0
        %v4569 = vadd.f32 0.0, %v4568
        %v4570 = vpop.f32.mrf.mxu0
        %4571 = vmatprep.mubr.bf16.mxu0 0
        %4572 = vmatmul.mubr.bf16.gmra.mxu0 %v4449
        %v4573 = vpop.f32.mrf.mxu0
        %v4574 = vadd.f32 0.0, %v4573
        %v4575 = vpop.f32.mrf.mxu0
        %v4576 = vpop.f32.mrf.mxu0
        %v4577 = vpop.f32.mrf.mxu0
        %4578 = vdwg.mxu0
        %v4595 = vunpack.c.l.b16 %v4423
        %v4596 = vunpack.c.l.b16 %v4424
        %v4597 = vunpack.c.l.b16 %v4425
        %v4598 = vunpack.c.l.b16 %v4426
        %v4599 = vunpack.c.l.b16 %v4427
        %v4600 = vunpack.c.l.b16 %v4428
        %v4601 = vunpack.c.l.b16 %v4429
        %v4602 = vunpack.c.l.b16 %v4430
        %v4603 = vunpack.c.l.b16 %v4431
        %v4604 = vunpack.c.l.b16 %v4432
        %v4605 = vunpack.c.l.b16 %v4433
        %v4606 = vunpack.c.l.b16 %v4434
        %v4607 = vunpack.c.l.b16 %v4435
        %v4608 = vunpack.c.l.b16 %v4436
        %v4609 = vunpack.c.l.b16 %v4437
        %v4610 = vunpack.c.l.b16 %v4438
        %v4611 = vpack.c.b16 %v4596, %v4595
        %v4612 = vpack.c.b16 %v4598, %v4597
        %v4613 = vpack.c.b16 %v4600, %v4599
        %v4614 = vpack.c.b16 %v4602, %v4601
        %v4615 = vpack.c.b16 %v4604, %v4603
        %v4616 = vpack.c.b16 %v4606, %v4605
        %v4617 = vpack.c.b16 %v4608, %v4607
        %v4618 = vpack.c.b16 %v4610, %v4609
        %4627 = vmatprep.subr.bf16.mxu0 0
        %4628 = vmatpush1.bf16.msra.mxu0 %v4618
        %4629 = vmatprep.subr.bf16.mxu0 0
        %4630 = vmatpush1.bf16.msra.mxu0 %v4617
        %4631 = vmatprep.subr.bf16.mxu0 0
        %4632 = vmatpush1.bf16.msra.mxu0 %v4616
        %4633 = vmatprep.subr.bf16.mxu0 0
        %4634 = vmatpush1.bf16.msra.mxu0 %v4615
        %4635 = vmatprep.subr.bf16.mxu0 0
        %4636 = vmatpush1.bf16.msra.mxu0 %v4614
        %4637 = vmatprep.subr.bf16.mxu0 0
        %4638 = vmatpush1.bf16.msra.mxu0 %v4613
        %4639 = vmatprep.subr.bf16.mxu0 0
        %4640 = vmatpush1.bf16.msra.mxu0 %v4612
        %4641 = vmatprep.subr.bf16.mxu0 0
        %4642 = vmatpush1.bf16.msra.mxu0 %v4611
        %4643 = vmatprep.subr.bf16.mxu0 0
        %4644 = vmatpush2.bf16.msra.mxu0 0
        %4645 = vmatprep.subr.bf16.mxu0 0
        %4646 = vmatpush2.bf16.msra.mxu0 0
        %4647 = vmatprep.subr.bf16.mxu0 0
        %4648 = vmatpush2.bf16.msra.mxu0 0
        %4649 = vmatprep.subr.bf16.mxu0 0
        %4650 = vmatpush2.bf16.msra.mxu0 0
        %4651 = vmatprep.subr.bf16.mxu0 0
        %4652 = vmatpush2.bf16.msra.mxu0 0
        %4653 = vmatprep.subr.bf16.mxu0 0
        %4654 = vmatpush2.bf16.msra.mxu0 0
        %4655 = vmatprep.subr.bf16.mxu0 0
        %4656 = vmatpush2.bf16.msra.mxu0 0
        %4657 = vmatprep.subr.bf16.mxu0 0
        %4658 = vmatpush2.bf16.msra.mxu0 0
        %4659 = vmatprep.mubr.bf16.mxu0 0
        %4660 = vmatmul.mubr.bf16.gmra.mxu0 %v4419
        %v4661 = vpop.f32.mrf.mxu0
        %v4662 = vadd.f32 %v4550, %v4661
        %v4663 = vpop.f32.mrf.mxu0
        %v4664 = vpop.f32.mrf.mxu0
        %v4665 = vadd.f32 %v4553, %v4664
        %v4666 = vpop.f32.mrf.mxu0
        %4667 = vmatprep.mubr.bf16.mxu0 0
        %4668 = vmatmul.mubr.bf16.gmra.mxu0 %v4420
        %v4669 = vpop.f32.mrf.mxu0
        %v4670 = vadd.f32 %v4558, %v4669
        %v4671 = vpop.f32.mrf.mxu0
        %v4672 = vpop.f32.mrf.mxu0
        %v4673 = vadd.f32 %v4561, %v4672
        %v4674 = vpop.f32.mrf.mxu0
        %4675 = vmatprep.mubr.bf16.mxu0 0
        %4676 = vmatmul.mubr.bf16.gmra.mxu0 %v4421
        %v4677 = vpop.f32.mrf.mxu0
        %v4678 = vadd.f32 %v4566, %v4677
        %v4679 = vpop.f32.mrf.mxu0
        %v4680 = vpop.f32.mrf.mxu0
        %v4681 = vadd.f32 %v4569, %v4680
        %v4682 = vpop.f32.mrf.mxu0
        %4683 = vmatprep.mubr.bf16.mxu0 0
        %4684 = vmatmul.mubr.bf16.gmra.mxu0 %v4422
        %v4685 = vpop.f32.mrf.mxu0
        %v4686 = vadd.f32 %v4574, %v4685
        %v4687 = vpop.f32.mrf.mxu0
        %v4688 = vpop.f32.mrf.mxu0
        %v4689 = vpop.f32.mrf.mxu0
        %4690 = vdwg.mxu0
        %v4691 = vld [vmem:[#allocation3 + $0xb] sm:$0xff]
        %v4692 = vld [vmem:[#allocation3 + $0x13] sm:$0xff]
        %v4693 = vld [vmem:[#allocation3 + $0x1b] sm:$0xff]
        %v4694 = vld [vmem:[#allocation3 + $0x23] sm:$0xff]
        %v4695 = vld [vmem:[#allocation3 + $0x2b] sm:$0xff]
        %v4696 = vld [vmem:[#allocation3 + $0x33] sm:$0xff]
        %v4697 = vld [vmem:[#allocation3 + $0x3b] sm:$0x7f]
        %v4698 = vpack.c.bf16 %v4692, %v4691
        %v4699 = vpack.c.bf16 %v4694, %v4693
        %v4700 = vpack.c.bf16 %v4696, %v4695
        %v4701 = vpack.c.bf16 %v4697, %v4697
        %s4702 = scalar_lea.vmem %s5, 128
        %v4703 = vld [vmem:[%s4702] sm:$0xf]
        %v4704 = vld [vmem:[%s4702 + $0x4] sm:$0xf]
        %v4705 = vld [vmem:[%s4702 + $0x8] sm:$0xf]
        %v4706 = vld [vmem:[%s4702 + $0xc] sm:$0xf]
        %v4707 = vld [vmem:[%s4702 + $0x10] sm:$0xf]
        %v4708 = vld [vmem:[%s4702 + $0x14] sm:$0xf]
        %v4709 = vld [vmem:[%s4702 + $0x18] sm:$0xf]
        %v4710 = vld [vmem:[%s4702 + $0x1c] sm:$0xf]
        %v4711 = vld [vmem:[%s4702 + $0x20] sm:$0xf]
        %v4712 = vld [vmem:[%s4702 + $0x24] sm:$0xf]
        %v4713 = vld [vmem:[%s4702 + $0x28] sm:$0xf]
        %v4714 = vld [vmem:[%s4702 + $0x2c] sm:$0xf]
        %v4715 = vld [vmem:[%s4702 + $0x30] sm:$0xf]
        %v4716 = vld [vmem:[%s4702 + $0x34] sm:$0xf]
        %v4717 = vld [vmem:[%s4702 + $0x38] sm:$0xf]
        %v4718 = vld [vmem:[%s4702 + $0x3c] sm:$0xf]
        %v4735 = vunpack.c.l.b16 %v4703
        %v4736 = vunpack.c.l.b16 %v4704
        %v4737 = vunpack.c.l.b16 %v4705
        %v4738 = vunpack.c.l.b16 %v4706
        %v4739 = vunpack.c.l.b16 %v4707
        %v4740 = vunpack.c.l.b16 %v4708
        %v4741 = vunpack.c.l.b16 %v4709
        %v4742 = vunpack.c.l.b16 %v4710
        %v4743 = vunpack.c.l.b16 %v4711
        %v4744 = vunpack.c.l.b16 %v4712
        %v4745 = vunpack.c.l.b16 %v4713
        %v4746 = vunpack.c.l.b16 %v4714
        %v4747 = vunpack.c.l.b16 %v4715
        %v4748 = vunpack.c.l.b16 %v4716
        %v4749 = vunpack.c.l.b16 %v4717
        %v4750 = vunpack.c.l.b16 %v4718
        %v4751 = vpack.c.b16 %v4736, %v4735
        %v4752 = vpack.c.b16 %v4738, %v4737
        %v4753 = vpack.c.b16 %v4740, %v4739
        %v4754 = vpack.c.b16 %v4742, %v4741
        %v4755 = vpack.c.b16 %v4744, %v4743
        %v4756 = vpack.c.b16 %v4746, %v4745
        %v4757 = vpack.c.b16 %v4748, %v4747
        %v4758 = vpack.c.b16 %v4750, %v4749
        %4767 = vmatprep.subr.bf16.mxu0 0
        %4768 = vmatpush1.bf16.msra.mxu0 %v4758
        %4769 = vmatprep.subr.bf16.mxu0 0
        %4770 = vmatpush1.bf16.msra.mxu0 %v4757
        %4771 = vmatprep.subr.bf16.mxu0 0
        %4772 = vmatpush1.bf16.msra.mxu0 %v4756
        %4773 = vmatprep.subr.bf16.mxu0 0
        %4774 = vmatpush1.bf16.msra.mxu0 %v4755
        %4775 = vmatprep.subr.bf16.mxu0 0
        %4776 = vmatpush1.bf16.msra.mxu0 %v4754
        %4777 = vmatprep.subr.bf16.mxu0 0
        %4778 = vmatpush1.bf16.msra.mxu0 %v4753
        %4779 = vmatprep.subr.bf16.mxu0 0
        %4780 = vmatpush1.bf16.msra.mxu0 %v4752
        %4781 = vmatprep.subr.bf16.mxu0 0
        %4782 = vmatpush1.bf16.msra.mxu0 %v4751
        %4783 = vmatprep.subr.bf16.mxu0 0
        %4784 = vmatpush2.bf16.msra.mxu0 0
        %4785 = vmatprep.subr.bf16.mxu0 0
        %4786 = vmatpush2.bf16.msra.mxu0 0
        %4787 = vmatprep.subr.bf16.mxu0 0
        %4788 = vmatpush2.bf16.msra.mxu0 0
        %4789 = vmatprep.subr.bf16.mxu0 0
        %4790 = vmatpush2.bf16.msra.mxu0 0
        %4791 = vmatprep.subr.bf16.mxu0 0
        %4792 = vmatpush2.bf16.msra.mxu0 0
        %4793 = vmatprep.subr.bf16.mxu0 0
        %4794 = vmatpush2.bf16.msra.mxu0 0
        %4795 = vmatprep.subr.bf16.mxu0 0
        %4796 = vmatpush2.bf16.msra.mxu0 0
        %4797 = vmatprep.subr.bf16.mxu0 0
        %4798 = vmatpush2.bf16.msra.mxu0 0
        %4799 = vmatprep.mubr.bf16.mxu0 0
        %4800 = vmatmul.mubr.bf16.gmra.mxu0 %v4698
        %v4801 = vpop.f32.mrf.mxu0
        %v4802 = vadd.f32 0.0, %v4801
        %v4803 = vpop.f32.mrf.mxu0
        %v4804 = vpop.f32.mrf.mxu0
        %v4805 = vadd.f32 0.0, %v4804
        %v4806 = vpop.f32.mrf.mxu0
        %4807 = vmatprep.mubr.bf16.mxu0 0
        %4808 = vmatmul.mubr.bf16.gmra.mxu0 %v4699
        %v4809 = vpop.f32.mrf.mxu0
        %v4810 = vadd.f32 0.0, %v4809
        %v4811 = vpop.f32.mrf.mxu0
        %v4812 = vpop.f32.mrf.mxu0
        %v4813 = vadd.f32 0.0, %v4812
        %v4814 = vpop.f32.mrf.mxu0
        %4815 = vmatprep.mubr.bf16.mxu0 0
        %4816 = vmatmul.mubr.bf16.gmra.mxu0 %v4700
        %v4817 = vpop.f32.mrf.mxu0
        %v4818 = vadd.f32 0.0, %v4817
        %v4819 = vpop.f32.mrf.mxu0
        %v4820 = vpop.f32.mrf.mxu0
        %v4821 = vadd.f32 0.0, %v4820
        %v4822 = vpop.f32.mrf.mxu0
        %4823 = vmatprep.mubr.bf16.mxu0 0
        %4824 = vmatmul.mubr.bf16.gmra.mxu0 %v4701
        %v4825 = vpop.f32.mrf.mxu0
        %v4826 = vadd.f32 0.0, %v4825
        %v4827 = vpop.f32.mrf.mxu0
        %v4828 = vpop.f32.mrf.mxu0
        %v4829 = vpop.f32.mrf.mxu0
        %4830 = vdwg.mxu0
        %v4831 = vadd.f32 %v4662, %v4802
        %v4832 = vadd.f32 %v4665, %v4805
        %v4833 = vadd.f32 %v4670, %v4810
        %v4834 = vadd.f32 %v4673, %v4813
        %v4835 = vadd.f32 %v4678, %v4818
        %v4836 = vadd.f32 %v4681, %v4821
        %v4837 = vadd.f32 %v4686, %v4826
        %v4838 = vld [vmem:[#allocation3 + $0xc] sm:$0xff]
        %v4839 = vld [vmem:[#allocation3 + $0x14] sm:$0xff]
        %v4840 = vld [vmem:[#allocation3 + $0x1c] sm:$0xff]
        %v4841 = vld [vmem:[#allocation3 + $0x24] sm:$0xff]
        %v4842 = vld [vmem:[#allocation3 + $0x2c] sm:$0xff]
        %v4843 = vld [vmem:[#allocation3 + $0x34] sm:$0xff]
        %v4844 = vld [vmem:[#allocation3 + $0x3c] sm:$0x7f]
        %v4845 = vpack.c.bf16 %v4839, %v4838
        %v4846 = vpack.c.bf16 %v4841, %v4840
        %v4847 = vpack.c.bf16 %v4843, %v4842
        %v4848 = vpack.c.bf16 %v4844, %v4844
        %s4849 = scalar_lea.vmem %s5, 192
        %v4850 = vld [vmem:[%s4849] sm:$0xf]
        %v4851 = vld [vmem:[%s4849 + $0x4] sm:$0xf]
        %v4852 = vld [vmem:[%s4849 + $0x8] sm:$0xf]
        %v4853 = vld [vmem:[%s4849 + $0xc] sm:$0xf]
        %v4854 = vld [vmem:[%s4849 + $0x10] sm:$0xf]
        %v4855 = vld [vmem:[%s4849 + $0x14] sm:$0xf]
        %v4856 = vld [vmem:[%s4849 + $0x18] sm:$0xf]
        %v4857 = vld [vmem:[%s4849 + $0x1c] sm:$0xf]
        %v4858 = vld [vmem:[%s4849 + $0x20] sm:$0xf]
        %v4859 = vld [vmem:[%s4849 + $0x24] sm:$0xf]
        %v4860 = vld [vmem:[%s4849 + $0x28] sm:$0xf]
        %v4861 = vld [vmem:[%s4849 + $0x2c] sm:$0xf]
        %v4862 = vld [vmem:[%s4849 + $0x30] sm:$0xf]
        %v4863 = vld [vmem:[%s4849 + $0x34] sm:$0xf]
        %v4864 = vld [vmem:[%s4849 + $0x38] sm:$0xf]
        %v4865 = vld [vmem:[%s4849 + $0x3c] sm:$0xf]
        %v4882 = vunpack.c.l.b16 %v4850
        %v4883 = vunpack.c.l.b16 %v4851
        %v4884 = vunpack.c.l.b16 %v4852
        %v4885 = vunpack.c.l.b16 %v4853
        %v4886 = vunpack.c.l.b16 %v4854
        %v4887 = vunpack.c.l.b16 %v4855
        %v4888 = vunpack.c.l.b16 %v4856
        %v4889 = vunpack.c.l.b16 %v4857
        %v4890 = vunpack.c.l.b16 %v4858
        %v4891 = vunpack.c.l.b16 %v4859
        %v4892 = vunpack.c.l.b16 %v4860
        %v4893 = vunpack.c.l.b16 %v4861
        %v4894 = vunpack.c.l.b16 %v4862
        %v4895 = vunpack.c.l.b16 %v4863
        %v4896 = vunpack.c.l.b16 %v4864
        %v4897 = vunpack.c.l.b16 %v4865
        %v4898 = vpack.c.b16 %v4883, %v4882
        %v4899 = vpack.c.b16 %v4885, %v4884
        %v4900 = vpack.c.b16 %v4887, %v4886
        %v4901 = vpack.c.b16 %v4889, %v4888
        %v4902 = vpack.c.b16 %v4891, %v4890
        %v4903 = vpack.c.b16 %v4893, %v4892
        %v4904 = vpack.c.b16 %v4895, %v4894
        %v4905 = vpack.c.b16 %v4897, %v4896
        %4914 = vmatprep.subr.bf16.mxu0 0
        %4915 = vmatpush1.bf16.msra.mxu0 %v4905
        %4916 = vmatprep.subr.bf16.mxu0 0
        %4917 = vmatpush1.bf16.msra.mxu0 %v4904
        %4918 = vmatprep.subr.bf16.mxu0 0
        %4919 = vmatpush1.bf16.msra.mxu0 %v4903
        %4920 = vmatprep.subr.bf16.mxu0 0
        %4921 = vmatpush1.bf16.msra.mxu0 %v4902
        %4922 = vmatprep.subr.bf16.mxu0 0
        %4923 = vmatpush1.bf16.msra.mxu0 %v4901
        %4924 = vmatprep.subr.bf16.mxu0 0
        %4925 = vmatpush1.bf16.msra.mxu0 %v4900
        %4926 = vmatprep.subr.bf16.mxu0 0
        %4927 = vmatpush1.bf16.msra.mxu0 %v4899
        %4928 = vmatprep.subr.bf16.mxu0 0
        %4929 = vmatpush1.bf16.msra.mxu0 %v4898
        %4930 = vmatprep.subr.bf16.mxu0 0
        %4931 = vmatpush2.bf16.msra.mxu0 0
        %4932 = vmatprep.subr.bf16.mxu0 0
        %4933 = vmatpush2.bf16.msra.mxu0 0
        %4934 = vmatprep.subr.bf16.mxu0 0
        %4935 = vmatpush2.bf16.msra.mxu0 0
        %4936 = vmatprep.subr.bf16.mxu0 0
        %4937 = vmatpush2.bf16.msra.mxu0 0
        %4938 = vmatprep.subr.bf16.mxu0 0
        %4939 = vmatpush2.bf16.msra.mxu0 0
        %4940 = vmatprep.subr.bf16.mxu0 0
        %4941 = vmatpush2.bf16.msra.mxu0 0
        %4942 = vmatprep.subr.bf16.mxu0 0
        %4943 = vmatpush2.bf16.msra.mxu0 0
        %4944 = vmatprep.subr.bf16.mxu0 0
        %4945 = vmatpush2.bf16.msra.mxu0 0
        %4946 = vmatprep.mubr.bf16.mxu0 0
        %4947 = vmatmul.mubr.bf16.gmra.mxu0 %v4845
        %v4948 = vpop.f32.mrf.mxu0
        %v4949 = vadd.f32 0.0, %v4948
        %v4950 = vpop.f32.mrf.mxu0
        %v4951 = vpop.f32.mrf.mxu0
        %v4952 = vadd.f32 0.0, %v4951
        %v4953 = vpop.f32.mrf.mxu0
        %4954 = vmatprep.mubr.bf16.mxu0 0
        %4955 = vmatmul.mubr.bf16.gmra.mxu0 %v4846
        %v4956 = vpop.f32.mrf.mxu0
        %v4957 = vadd.f32 0.0, %v4956
        %v4958 = vpop.f32.mrf.mxu0
        %v4959 = vpop.f32.mrf.mxu0
        %v4960 = vadd.f32 0.0, %v4959
        %v4961 = vpop.f32.mrf.mxu0
        %4962 = vmatprep.mubr.bf16.mxu0 0
        %4963 = vmatmul.mubr.bf16.gmra.mxu0 %v4847
        %v4964 = vpop.f32.mrf.mxu0
        %v4965 = vadd.f32 0.0, %v4964
        %v4966 = vpop.f32.mrf.mxu0
        %v4967 = vpop.f32.mrf.mxu0
        %v4968 = vadd.f32 0.0, %v4967
        %v4969 = vpop.f32.mrf.mxu0
        %4970 = vmatprep.mubr.bf16.mxu0 0
        %4971 = vmatmul.mubr.bf16.gmra.mxu0 %v4848
        %v4972 = vpop.f32.mrf.mxu0
        %v4973 = vadd.f32 0.0, %v4972
        %v4974 = vpop.f32.mrf.mxu0
        %v4975 = vpop.f32.mrf.mxu0
        %v4976 = vpop.f32.mrf.mxu0
        %4977 = vdwg.mxu0
        %v4978 = vadd.f32 %v4831, %v4949
        %v4979 = vadd.f32 %v4832, %v4952
        %v4980 = vadd.f32 %v4833, %v4957
        %v4981 = vadd.f32 %v4834, %v4960
        %v4982 = vadd.f32 %v4835, %v4965
        %v4983 = vadd.f32 %v4836, %v4968
        %v4984 = vadd.f32 %v4837, %v4973
        %v4985 = vld [vmem:[%s6] sm:$0x1]
        %v4987 = vlaneseq
        %v4988 = vshrl.u32 %v4987, 7
        %v4989 = vsub.s32 0, %v4988
        %v4990 = vrot.slane %v4985, %v4989
        %v4992 = vadd.f32 %v4978, %v4990
        %v4993 = vadd.f32 %v4979, %v4990
        %v4994 = vadd.f32 %v4980, %v4990
        %v4995 = vadd.f32 %v4981, %v4990
        %v4996 = vadd.f32 %v4982, %v4990
        %v4997 = vadd.f32 %v4983, %v4990
        %v4998 = vadd.f32 %v4984, %v4990
        %v4999 = vmax.f32 %v4992, 0.0
        %v5000 = vmax.f32 %v4993, 0.0
        %v5001 = vmax.f32 %v4994, 0.0
        %v5002 = vmax.f32 %v4995, 0.0
        %v5003 = vmax.f32 %v4996, 0.0
        %v5004 = vmax.f32 %v4997, 0.0
        %v5005 = vmax.f32 %v4998, 0.0
        %v5006 = vmul.f32 %v4999, %v573
        %v5007 = vmul.f32 %v5000, %v574
        %v5008 = vmul.f32 %v5001, %v575
        %v5009 = vmul.f32 %v5002, %v576
        %v5010 = vmul.f32 %v5003, %v577
        %v5011 = vmul.f32 %v5004, %v578
        %v5012 = vmul.f32 %v5005, %v579
        %v5013 = vld [vmem:[%s7] sm:$0xff]
        %v5014 = vld [vmem:[%s7 + $0x8] sm:$0xff]
        %v5015 = vld [vmem:[%s7 + $0x10] sm:$0xff]
        %v5016 = vld [vmem:[%s7 + $0x18] sm:$0xff]
        %v5017 = vld [vmem:[%s7 + $0x20] sm:$0xff]
        %v5018 = vld [vmem:[%s7 + $0x28] sm:$0xff]
        %v5019 = vld [vmem:[%s7 + $0x30] sm:$0x7f]
        %5021 = vset.pattern.permute.xlu0 0
        %5022 = vperm.xlu0 %5021, %v5006
        %v5023 = vpop.permute.xlu0 %5022
        %5026 = vset.pattern.permute.xlu0 0
        %5027 = vperm.xlu0 %5026, %v5007
        %v5028 = vpop.permute.xlu0 %5027
        %5031 = vset.pattern.permute.xlu0 0
        %5032 = vperm.xlu0 %5031, %v5008
        %v5033 = vpop.permute.xlu0 %5032
        %5036 = vset.pattern.permute.xlu0 0
        %5037 = vperm.xlu0 %5036, %v5009
        %v5038 = vpop.permute.xlu0 %5037
        %5041 = vset.pattern.permute.xlu0 0
        %5042 = vperm.xlu0 %5041, %v5010
        %v5043 = vpop.permute.xlu0 %5042
        %5046 = vset.pattern.permute.xlu0 0
        %5047 = vperm.xlu0 %5046, %v5011
        %v5048 = vpop.permute.xlu0 %5047
        %5051 = vset.pattern.permute.xlu0 0
        %5052 = vperm.xlu0 %5051, %v5012
        %v5053 = vpop.permute.xlu0 %5052
        %v5055 = vmul.f32 %v5023, %v5013
        %v5056 = vmul.f32 %v5028, %v5014
        %v5057 = vmul.f32 %v5033, %v5015
        %v5058 = vmul.f32 %v5038, %v5016
        %v5059 = vmul.f32 %v5043, %v5017
        %v5060 = vmul.f32 %v5048, %v5018
        %v5061 = vmul.f32 %v5053, %v5019
        %v5062 = vadd.f32 %v5055, 0.0
        %v5063 = vadd.f32 %v5056, 0.0
        %v5064 = vadd.f32 %v5057, 0.0
        %v5065 = vadd.f32 %v5058, 0.0
        %v5066 = vadd.f32 %v5059, 0.0
        %v5067 = vadd.f32 %v5060, 0.0
        %v5068 = vadd.f32 %v5061, 0.0
        %s5069 = scalar_lea.vmem %s7, 56
        %v5070 = vld [vmem:[%s5069] sm:$0xff]
        %v5071 = vld [vmem:[%s5069 + $0x8] sm:$0xff]
        %v5072 = vld [vmem:[%s5069 + $0x10] sm:$0xff]
        %v5073 = vld [vmem:[%s5069 + $0x18] sm:$0xff]
        %v5074 = vld [vmem:[%s5069 + $0x20] sm:$0xff]
        %v5075 = vld [vmem:[%s5069 + $0x28] sm:$0xff]
        %v5076 = vld [vmem:[%s5069 + $0x30] sm:$0x7f]
        %5077 = vset.pattern.permute.xlu0 1
        %5078 = vperm.xlu0 %5077, %v5006
        %v5079 = vpop.permute.xlu0 %5078
        %5081 = vset.pattern.permute.xlu0 1
        %5082 = vperm.xlu0 %5081, %v5007
        %v5083 = vpop.permute.xlu0 %5082
        %5085 = vset.pattern.permute.xlu0 1
        %5086 = vperm.xlu0 %5085, %v5008
        %v5087 = vpop.permute.xlu0 %5086
        %5089 = vset.pattern.permute.xlu0 1
        %5090 = vperm.xlu0 %5089, %v5009
        %v5091 = vpop.permute.xlu0 %5090
        %5093 = vset.pattern.permute.xlu0 1
        %5094 = vperm.xlu0 %5093, %v5010
        %v5095 = vpop.permute.xlu0 %5094
        %5097 = vset.pattern.permute.xlu0 1
        %5098 = vperm.xlu0 %5097, %v5011
        %v5099 = vpop.permute.xlu0 %5098
        %5101 = vset.pattern.permute.xlu0 1
        %5102 = vperm.xlu0 %5101, %v5012
        %v5103 = vpop.permute.xlu0 %5102
        %v5105 = vmul.f32 %v5079, %v5070
        %v5106 = vmul.f32 %v5083, %v5071
        %v5107 = vmul.f32 %v5087, %v5072
        %v5108 = vmul.f32 %v5091, %v5073
        %v5109 = vmul.f32 %v5095, %v5074
        %v5110 = vmul.f32 %v5099, %v5075
        %v5111 = vmul.f32 %v5103, %v5076
        %v5112 = vadd.f32 %v5062, %v5105
        %v5113 = vadd.f32 %v5063, %v5106
        %v5114 = vadd.f32 %v5064, %v5107
        %v5115 = vadd.f32 %v5065, %v5108
        %v5116 = vadd.f32 %v5066, %v5109
        %v5117 = vadd.f32 %v5067, %v5110
        %v5118 = vadd.f32 %v5068, %v5111
        %s5119 = scalar_lea.vmem %s7, 112
        %v5120 = vld [vmem:[%s5119] sm:$0xff]
        %v5121 = vld [vmem:[%s5119 + $0x8] sm:$0xff]
        %v5122 = vld [vmem:[%s5119 + $0x10] sm:$0xff]
        %v5123 = vld [vmem:[%s5119 + $0x18] sm:$0xff]
        %v5124 = vld [vmem:[%s5119 + $0x20] sm:$0xff]
        %v5125 = vld [vmem:[%s5119 + $0x28] sm:$0xff]
        %v5126 = vld [vmem:[%s5119 + $0x30] sm:$0x7f]
        %5127 = vset.pattern.permute.xlu0 2
        %5128 = vperm.xlu0 %5127, %v5006
        %v5129 = vpop.permute.xlu0 %5128
        %5131 = vset.pattern.permute.xlu0 2
        %5132 = vperm.xlu0 %5131, %v5007
        %v5133 = vpop.permute.xlu0 %5132
        %5135 = vset.pattern.permute.xlu0 2
        %5136 = vperm.xlu0 %5135, %v5008
        %v5137 = vpop.permute.xlu0 %5136
        %5139 = vset.pattern.permute.xlu0 2
        %5140 = vperm.xlu0 %5139, %v5009
        %v5141 = vpop.permute.xlu0 %5140
        %5143 = vset.pattern.permute.xlu0 2
        %5144 = vperm.xlu0 %5143, %v5010
        %v5145 = vpop.permute.xlu0 %5144
        %5147 = vset.pattern.permute.xlu0 2
        %5148 = vperm.xlu0 %5147, %v5011
        %v5149 = vpop.permute.xlu0 %5148
        %5151 = vset.pattern.permute.xlu0 2
        %5152 = vperm.xlu0 %5151, %v5012
        %v5153 = vpop.permute.xlu0 %5152
        %v5155 = vmul.f32 %v5129, %v5120
        %v5156 = vmul.f32 %v5133, %v5121
        %v5157 = vmul.f32 %v5137, %v5122
        %v5158 = vmul.f32 %v5141, %v5123
        %v5159 = vmul.f32 %v5145, %v5124
        %v5160 = vmul.f32 %v5149, %v5125
        %v5161 = vmul.f32 %v5153, %v5126
        %v5162 = vadd.f32 %v5112, %v5155
        %v5163 = vadd.f32 %v5113, %v5156
        %v5164 = vadd.f32 %v5114, %v5157
        %v5165 = vadd.f32 %v5115, %v5158
        %v5166 = vadd.f32 %v5116, %v5159
        %v5167 = vadd.f32 %v5117, %v5160
        %v5168 = vadd.f32 %v5118, %v5161
        %s5169 = scalar_lea.vmem %s7, 168
        %v5170 = vld [vmem:[%s5169] sm:$0xff]
        %v5171 = vld [vmem:[%s5169 + $0x8] sm:$0xff]
        %v5172 = vld [vmem:[%s5169 + $0x10] sm:$0xff]
        %v5173 = vld [vmem:[%s5169 + $0x18] sm:$0xff]
        %v5174 = vld [vmem:[%s5169 + $0x20] sm:$0xff]
        %v5175 = vld [vmem:[%s5169 + $0x28] sm:$0xff]
        %v5176 = vld [vmem:[%s5169 + $0x30] sm:$0x7f]
        %5177 = vset.pattern.permute.xlu0 3
        %5178 = vperm.xlu0 %5177, %v5006
        %v5179 = vpop.permute.xlu0 %5178
        %5181 = vset.pattern.permute.xlu0 3
        %5182 = vperm.xlu0 %5181, %v5007
        %v5183 = vpop.permute.xlu0 %5182
        %5185 = vset.pattern.permute.xlu0 3
        %5186 = vperm.xlu0 %5185, %v5008
        %v5187 = vpop.permute.xlu0 %5186
        %5189 = vset.pattern.permute.xlu0 3
        %5190 = vperm.xlu0 %5189, %v5009
        %v5191 = vpop.permute.xlu0 %5190
        %5193 = vset.pattern.permute.xlu0 3
        %5194 = vperm.xlu0 %5193, %v5010
        %v5195 = vpop.permute.xlu0 %5194
        %5197 = vset.pattern.permute.xlu0 3
        %5198 = vperm.xlu0 %5197, %v5011
        %v5199 = vpop.permute.xlu0 %5198
        %5201 = vset.pattern.permute.xlu0 3
        %5202 = vperm.xlu0 %5201, %v5012
        %v5203 = vpop.permute.xlu0 %5202
        %v5205 = vmul.f32 %v5179, %v5170
        %v5206 = vmul.f32 %v5183, %v5171
        %v5207 = vmul.f32 %v5187, %v5172
        %v5208 = vmul.f32 %v5191, %v5173
        %v5209 = vmul.f32 %v5195, %v5174
        %v5210 = vmul.f32 %v5199, %v5175
        %v5211 = vmul.f32 %v5203, %v5176
        %v5212 = vadd.f32 %v5162, %v5205
        %v5213 = vadd.f32 %v5163, %v5206
        %v5214 = vadd.f32 %v5164, %v5207
        %v5215 = vadd.f32 %v5165, %v5208
        %v5216 = vadd.f32 %v5166, %v5209
        %v5217 = vadd.f32 %v5167, %v5210
        %v5218 = vadd.f32 %v5168, %v5211
        %s5219 = scalar_lea.vmem %s7, 224
        %v5220 = vld [vmem:[%s5219] sm:$0xff]
        %v5221 = vld [vmem:[%s5219 + $0x8] sm:$0xff]
        %v5222 = vld [vmem:[%s5219 + $0x10] sm:$0xff]
        %v5223 = vld [vmem:[%s5219 + $0x18] sm:$0xff]
        %v5224 = vld [vmem:[%s5219 + $0x20] sm:$0xff]
        %v5225 = vld [vmem:[%s5219 + $0x28] sm:$0xff]
        %v5226 = vld [vmem:[%s5219 + $0x30] sm:$0x7f]
        %5227 = vset.pattern.permute.xlu0 4
        %5228 = vperm.xlu0 %5227, %v5006
        %v5229 = vpop.permute.xlu0 %5228
        %5231 = vset.pattern.permute.xlu0 4
        %5232 = vperm.xlu0 %5231, %v5007
        %v5233 = vpop.permute.xlu0 %5232
        %5235 = vset.pattern.permute.xlu0 4
        %5236 = vperm.xlu0 %5235, %v5008
        %v5237 = vpop.permute.xlu0 %5236
        %5239 = vset.pattern.permute.xlu0 4
        %5240 = vperm.xlu0 %5239, %v5009
        %v5241 = vpop.permute.xlu0 %5240
        %5243 = vset.pattern.permute.xlu0 4
        %5244 = vperm.xlu0 %5243, %v5010
        %v5245 = vpop.permute.xlu0 %5244
        %5247 = vset.pattern.permute.xlu0 4
        %5248 = vperm.xlu0 %5247, %v5011
        %v5249 = vpop.permute.xlu0 %5248
        %5251 = vset.pattern.permute.xlu0 4
        %5252 = vperm.xlu0 %5251, %v5012
        %v5253 = vpop.permute.xlu0 %5252
        %v5255 = vmul.f32 %v5229, %v5220
        %v5256 = vmul.f32 %v5233, %v5221
        %v5257 = vmul.f32 %v5237, %v5222
        %v5258 = vmul.f32 %v5241, %v5223
        %v5259 = vmul.f32 %v5245, %v5224
        %v5260 = vmul.f32 %v5249, %v5225
        %v5261 = vmul.f32 %v5253, %v5226
        %v5262 = vadd.f32 %v5212, %v5255
        %v5263 = vadd.f32 %v5213, %v5256
        %v5264 = vadd.f32 %v5214, %v5257
        %v5265 = vadd.f32 %v5215, %v5258
        %v5266 = vadd.f32 %v5216, %v5259
        %v5267 = vadd.f32 %v5217, %v5260
        %v5268 = vadd.f32 %v5218, %v5261
        %s5269 = scalar_lea.vmem %s7, 280
        %v5270 = vld [vmem:[%s5269] sm:$0xff]
        %v5271 = vld [vmem:[%s5269 + $0x8] sm:$0xff]
        %v5272 = vld [vmem:[%s5269 + $0x10] sm:$0xff]
        %v5273 = vld [vmem:[%s5269 + $0x18] sm:$0xff]
        %v5274 = vld [vmem:[%s5269 + $0x20] sm:$0xff]
        %v5275 = vld [vmem:[%s5269 + $0x28] sm:$0xff]
        %v5276 = vld [vmem:[%s5269 + $0x30] sm:$0x7f]
        %5277 = vset.pattern.permute.xlu0 5
        %5278 = vperm.xlu0 %5277, %v5006
        %v5279 = vpop.permute.xlu0 %5278
        %5281 = vset.pattern.permute.xlu0 5
        %5282 = vperm.xlu0 %5281, %v5007
        %v5283 = vpop.permute.xlu0 %5282
        %5285 = vset.pattern.permute.xlu0 5
        %5286 = vperm.xlu0 %5285, %v5008
        %v5287 = vpop.permute.xlu0 %5286
        %5289 = vset.pattern.permute.xlu0 5
        %5290 = vperm.xlu0 %5289, %v5009
        %v5291 = vpop.permute.xlu0 %5290
        %5293 = vset.pattern.permute.xlu0 5
        %5294 = vperm.xlu0 %5293, %v5010
        %v5295 = vpop.permute.xlu0 %5294
        %5297 = vset.pattern.permute.xlu0 5
        %5298 = vperm.xlu0 %5297, %v5011
        %v5299 = vpop.permute.xlu0 %5298
        %5301 = vset.pattern.permute.xlu0 5
        %5302 = vperm.xlu0 %5301, %v5012
        %v5303 = vpop.permute.xlu0 %5302
        %v5305 = vmul.f32 %v5279, %v5270
        %v5306 = vmul.f32 %v5283, %v5271
        %v5307 = vmul.f32 %v5287, %v5272
        %v5308 = vmul.f32 %v5291, %v5273
        %v5309 = vmul.f32 %v5295, %v5274
        %v5310 = vmul.f32 %v5299, %v5275
        %v5311 = vmul.f32 %v5303, %v5276
        %v5312 = vadd.f32 %v5262, %v5305
        %v5313 = vadd.f32 %v5263, %v5306
        %v5314 = vadd.f32 %v5264, %v5307
        %v5315 = vadd.f32 %v5265, %v5308
        %v5316 = vadd.f32 %v5266, %v5309
        %v5317 = vadd.f32 %v5267, %v5310
        %v5318 = vadd.f32 %v5268, %v5311
        %s5319 = scalar_lea.vmem %s7, 336
        %v5320 = vld [vmem:[%s5319] sm:$0xff]
        %v5321 = vld [vmem:[%s5319 + $0x8] sm:$0xff]
        %v5322 = vld [vmem:[%s5319 + $0x10] sm:$0xff]
        %v5323 = vld [vmem:[%s5319 + $0x18] sm:$0xff]
        %v5324 = vld [vmem:[%s5319 + $0x20] sm:$0xff]
        %v5325 = vld [vmem:[%s5319 + $0x28] sm:$0xff]
        %v5326 = vld [vmem:[%s5319 + $0x30] sm:$0x7f]
        %5327 = vset.pattern.permute.xlu0 6
        %5328 = vperm.xlu0 %5327, %v5006
        %v5329 = vpop.permute.xlu0 %5328
        %5331 = vset.pattern.permute.xlu0 6
        %5332 = vperm.xlu0 %5331, %v5007
        %v5333 = vpop.permute.xlu0 %5332
        %5335 = vset.pattern.permute.xlu0 6
        %5336 = vperm.xlu0 %5335, %v5008
        %v5337 = vpop.permute.xlu0 %5336
        %5339 = vset.pattern.permute.xlu0 6
        %5340 = vperm.xlu0 %5339, %v5009
        %v5341 = vpop.permute.xlu0 %5340
        %5343 = vset.pattern.permute.xlu0 6
        %5344 = vperm.xlu0 %5343, %v5010
        %v5345 = vpop.permute.xlu0 %5344
        %5347 = vset.pattern.permute.xlu0 6
        %5348 = vperm.xlu0 %5347, %v5011
        %v5349 = vpop.permute.xlu0 %5348
        %5351 = vset.pattern.permute.xlu0 6
        %5352 = vperm.xlu0 %5351, %v5012
        %v5353 = vpop.permute.xlu0 %5352
        %v5355 = vmul.f32 %v5329, %v5320
        %v5356 = vmul.f32 %v5333, %v5321
        %v5357 = vmul.f32 %v5337, %v5322
        %v5358 = vmul.f32 %v5341, %v5323
        %v5359 = vmul.f32 %v5345, %v5324
        %v5360 = vmul.f32 %v5349, %v5325
        %v5361 = vmul.f32 %v5353, %v5326
        %v5362 = vadd.f32 %v5312, %v5355
        %v5363 = vadd.f32 %v5313, %v5356
        %v5364 = vadd.f32 %v5314, %v5357
        %v5365 = vadd.f32 %v5315, %v5358
        %v5366 = vadd.f32 %v5316, %v5359
        %v5367 = vadd.f32 %v5317, %v5360
        %v5368 = vadd.f32 %v5318, %v5361
        %s5369 = scalar_lea.vmem %s7, 392
        %v5370 = vld [vmem:[%s5369] sm:$0xff]
        %v5371 = vld [vmem:[%s5369 + $0x8] sm:$0xff]
        %v5372 = vld [vmem:[%s5369 + $0x10] sm:$0xff]
        %v5373 = vld [vmem:[%s5369 + $0x18] sm:$0xff]
        %v5374 = vld [vmem:[%s5369 + $0x20] sm:$0xff]
        %v5375 = vld [vmem:[%s5369 + $0x28] sm:$0xff]
        %v5376 = vld [vmem:[%s5369 + $0x30] sm:$0x7f]
        %5377 = vset.pattern.permute.xlu0 7
        %5378 = vperm.xlu0 %5377, %v5006
        %v5379 = vpop.permute.xlu0 %5378
        %5381 = vset.pattern.permute.xlu0 7
        %5382 = vperm.xlu0 %5381, %v5007
        %v5383 = vpop.permute.xlu0 %5382
        %5385 = vset.pattern.permute.xlu0 7
        %5386 = vperm.xlu0 %5385, %v5008
        %v5387 = vpop.permute.xlu0 %5386
        %5389 = vset.pattern.permute.xlu0 7
        %5390 = vperm.xlu0 %5389, %v5009
        %v5391 = vpop.permute.xlu0 %5390
        %5393 = vset.pattern.permute.xlu0 7
        %5394 = vperm.xlu0 %5393, %v5010
        %v5395 = vpop.permute.xlu0 %5394
        %5397 = vset.pattern.permute.xlu0 7
        %5398 = vperm.xlu0 %5397, %v5011
        %v5399 = vpop.permute.xlu0 %5398
        %5401 = vset.pattern.permute.xlu0 7
        %5402 = vperm.xlu0 %5401, %v5012
        %v5403 = vpop.permute.xlu0 %5402
        %v5405 = vmul.f32 %v5379, %v5370
        %v5406 = vmul.f32 %v5383, %v5371
        %v5407 = vmul.f32 %v5387, %v5372
        %v5408 = vmul.f32 %v5391, %v5373
        %v5409 = vmul.f32 %v5395, %v5374
        %v5410 = vmul.f32 %v5399, %v5375
        %v5411 = vmul.f32 %v5403, %v5376
        %v5412 = vadd.f32 %v5362, %v5405
        %v5413 = vadd.f32 %v5363, %v5406
        %v5414 = vadd.f32 %v5364, %v5407
        %v5415 = vadd.f32 %v5365, %v5408
        %v5416 = vadd.f32 %v5366, %v5409
        %v5417 = vadd.f32 %v5367, %v5410
        %v5418 = vadd.f32 %v5368, %v5411
        %s5419 = scalar_lea.vmem %s7, 448
        %v5420 = vld [vmem:[%s5419] sm:$0xff]
        %v5421 = vld [vmem:[%s5419 + $0x8] sm:$0xff]
        %v5422 = vld [vmem:[%s5419 + $0x10] sm:$0xff]
        %v5423 = vld [vmem:[%s5419 + $0x18] sm:$0xff]
        %v5424 = vld [vmem:[%s5419 + $0x20] sm:$0xff]
        %v5425 = vld [vmem:[%s5419 + $0x28] sm:$0xff]
        %v5426 = vld [vmem:[%s5419 + $0x30] sm:$0x7f]
        %5427 = vset.pattern.permute.xlu0 8
        %5428 = vperm.xlu0 %5427, %v5006
        %v5429 = vpop.permute.xlu0 %5428
        %5431 = vset.pattern.permute.xlu0 8
        %5432 = vperm.xlu0 %5431, %v5007
        %v5433 = vpop.permute.xlu0 %5432
        %5435 = vset.pattern.permute.xlu0 8
        %5436 = vperm.xlu0 %5435, %v5008
        %v5437 = vpop.permute.xlu0 %5436
        %5439 = vset.pattern.permute.xlu0 8
        %5440 = vperm.xlu0 %5439, %v5009
        %v5441 = vpop.permute.xlu0 %5440
        %5443 = vset.pattern.permute.xlu0 8
        %5444 = vperm.xlu0 %5443, %v5010
        %v5445 = vpop.permute.xlu0 %5444
        %5447 = vset.pattern.permute.xlu0 8
        %5448 = vperm.xlu0 %5447, %v5011
        %v5449 = vpop.permute.xlu0 %5448
        %5451 = vset.pattern.permute.xlu0 8
        %5452 = vperm.xlu0 %5451, %v5012
        %v5453 = vpop.permute.xlu0 %5452
        %v5455 = vmul.f32 %v5429, %v5420
        %v5456 = vmul.f32 %v5433, %v5421
        %v5457 = vmul.f32 %v5437, %v5422
        %v5458 = vmul.f32 %v5441, %v5423
        %v5459 = vmul.f32 %v5445, %v5424
        %v5460 = vmul.f32 %v5449, %v5425
        %v5461 = vmul.f32 %v5453, %v5426
        %v5462 = vadd.f32 %v5412, %v5455
        %v5463 = vadd.f32 %v5413, %v5456
        %v5464 = vadd.f32 %v5414, %v5457
        %v5465 = vadd.f32 %v5415, %v5458
        %v5466 = vadd.f32 %v5416, %v5459
        %v5467 = vadd.f32 %v5417, %v5460
        %v5468 = vadd.f32 %v5418, %v5461
        %s5469 = scalar_lea.vmem %s7, 504
        %v5470 = vld [vmem:[%s5469] sm:$0xff]
        %v5471 = vld [vmem:[%s5469 + $0x8] sm:$0xff]
        %v5472 = vld [vmem:[%s5469 + $0x10] sm:$0xff]
        %v5473 = vld [vmem:[%s5469 + $0x18] sm:$0xff]
        %v5474 = vld [vmem:[%s5469 + $0x20] sm:$0xff]
        %v5475 = vld [vmem:[%s5469 + $0x28] sm:$0xff]
        %v5476 = vld [vmem:[%s5469 + $0x30] sm:$0x7f]
        %5477 = vset.pattern.permute.xlu0 9
        %5478 = vperm.xlu0 %5477, %v5006
        %v5479 = vpop.permute.xlu0 %5478
        %5481 = vset.pattern.permute.xlu0 9
        %5482 = vperm.xlu0 %5481, %v5007
        %v5483 = vpop.permute.xlu0 %5482
        %5485 = vset.pattern.permute.xlu0 9
        %5486 = vperm.xlu0 %5485, %v5008
        %v5487 = vpop.permute.xlu0 %5486
        %5489 = vset.pattern.permute.xlu0 9
        %5490 = vperm.xlu0 %5489, %v5009
        %v5491 = vpop.permute.xlu0 %5490
        %5493 = vset.pattern.permute.xlu0 9
        %5494 = vperm.xlu0 %5493, %v5010
        %v5495 = vpop.permute.xlu0 %5494
        %5497 = vset.pattern.permute.xlu0 9
        %5498 = vperm.xlu0 %5497, %v5011
        %v5499 = vpop.permute.xlu0 %5498
        %5501 = vset.pattern.permute.xlu0 9
        %5502 = vperm.xlu0 %5501, %v5012
        %v5503 = vpop.permute.xlu0 %5502
        %v5505 = vmul.f32 %v5479, %v5470
        %v5506 = vmul.f32 %v5483, %v5471
        %v5507 = vmul.f32 %v5487, %v5472
        %v5508 = vmul.f32 %v5491, %v5473
        %v5509 = vmul.f32 %v5495, %v5474
        %v5510 = vmul.f32 %v5499, %v5475
        %v5511 = vmul.f32 %v5503, %v5476
        %v5512 = vadd.f32 %v5462, %v5505
        %v5513 = vadd.f32 %v5463, %v5506
        %v5514 = vadd.f32 %v5464, %v5507
        %v5515 = vadd.f32 %v5465, %v5508
        %v5516 = vadd.f32 %v5466, %v5509
        %v5517 = vadd.f32 %v5467, %v5510
        %v5518 = vadd.f32 %v5468, %v5511
        %s5519 = scalar_lea.vmem %s7, 560
        %v5520 = vld [vmem:[%s5519] sm:$0xff]
        %v5521 = vld [vmem:[%s5519 + $0x8] sm:$0xff]
        %v5522 = vld [vmem:[%s5519 + $0x10] sm:$0xff]
        %v5523 = vld [vmem:[%s5519 + $0x18] sm:$0xff]
        %v5524 = vld [vmem:[%s5519 + $0x20] sm:$0xff]
        %v5525 = vld [vmem:[%s5519 + $0x28] sm:$0xff]
        %v5526 = vld [vmem:[%s5519 + $0x30] sm:$0x7f]
        %5527 = vset.pattern.permute.xlu0 10
        %5528 = vperm.xlu0 %5527, %v5006
        %v5529 = vpop.permute.xlu0 %5528
        %5531 = vset.pattern.permute.xlu0 10
        %5532 = vperm.xlu0 %5531, %v5007
        %v5533 = vpop.permute.xlu0 %5532
        %5535 = vset.pattern.permute.xlu0 10
        %5536 = vperm.xlu0 %5535, %v5008
        %v5537 = vpop.permute.xlu0 %5536
        %5539 = vset.pattern.permute.xlu0 10
        %5540 = vperm.xlu0 %5539, %v5009
        %v5541 = vpop.permute.xlu0 %5540
        %5543 = vset.pattern.permute.xlu0 10
        %5544 = vperm.xlu0 %5543, %v5010
        %v5545 = vpop.permute.xlu0 %5544
        %5547 = vset.pattern.permute.xlu0 10
        %5548 = vperm.xlu0 %5547, %v5011
        %v5549 = vpop.permute.xlu0 %5548
        %5551 = vset.pattern.permute.xlu0 10
        %5552 = vperm.xlu0 %5551, %v5012
        %v5553 = vpop.permute.xlu0 %5552
        %v5555 = vmul.f32 %v5529, %v5520
        %v5556 = vmul.f32 %v5533, %v5521
        %v5557 = vmul.f32 %v5537, %v5522
        %v5558 = vmul.f32 %v5541, %v5523
        %v5559 = vmul.f32 %v5545, %v5524
        %v5560 = vmul.f32 %v5549, %v5525
        %v5561 = vmul.f32 %v5553, %v5526
        %v5562 = vadd.f32 %v5512, %v5555
        %v5563 = vadd.f32 %v5513, %v5556
        %v5564 = vadd.f32 %v5514, %v5557
        %v5565 = vadd.f32 %v5515, %v5558
        %v5566 = vadd.f32 %v5516, %v5559
        %v5567 = vadd.f32 %v5517, %v5560
        %v5568 = vadd.f32 %v5518, %v5561
        %s5569 = scalar_lea.vmem %s7, 616
        %v5570 = vld [vmem:[%s5569] sm:$0xff]
        %v5571 = vld [vmem:[%s5569 + $0x8] sm:$0xff]
        %v5572 = vld [vmem:[%s5569 + $0x10] sm:$0xff]
        %v5573 = vld [vmem:[%s5569 + $0x18] sm:$0xff]
        %v5574 = vld [vmem:[%s5569 + $0x20] sm:$0xff]
        %v5575 = vld [vmem:[%s5569 + $0x28] sm:$0xff]
        %v5576 = vld [vmem:[%s5569 + $0x30] sm:$0x7f]
        %5577 = vset.pattern.permute.xlu0 11
        %5578 = vperm.xlu0 %5577, %v5006
        %v5579 = vpop.permute.xlu0 %5578
        %5581 = vset.pattern.permute.xlu0 11
        %5582 = vperm.xlu0 %5581, %v5007
        %v5583 = vpop.permute.xlu0 %5582
        %5585 = vset.pattern.permute.xlu0 11
        %5586 = vperm.xlu0 %5585, %v5008
        %v5587 = vpop.permute.xlu0 %5586
        %5589 = vset.pattern.permute.xlu0 11
        %5590 = vperm.xlu0 %5589, %v5009
        %v5591 = vpop.permute.xlu0 %5590
        %5593 = vset.pattern.permute.xlu0 11
        %5594 = vperm.xlu0 %5593, %v5010
        %v5595 = vpop.permute.xlu0 %5594
        %5597 = vset.pattern.permute.xlu0 11
        %5598 = vperm.xlu0 %5597, %v5011
        %v5599 = vpop.permute.xlu0 %5598
        %5601 = vset.pattern.permute.xlu0 11
        %5602 = vperm.xlu0 %5601, %v5012
        %v5603 = vpop.permute.xlu0 %5602
        %v5605 = vmul.f32 %v5579, %v5570
        %v5606 = vmul.f32 %v5583, %v5571
        %v5607 = vmul.f32 %v5587, %v5572
        %v5608 = vmul.f32 %v5591, %v5573
        %v5609 = vmul.f32 %v5595, %v5574
        %v5610 = vmul.f32 %v5599, %v5575
        %v5611 = vmul.f32 %v5603, %v5576
        %v5612 = vadd.f32 %v5562, %v5605
        %v5613 = vadd.f32 %v5563, %v5606
        %v5614 = vadd.f32 %v5564, %v5607
        %v5615 = vadd.f32 %v5565, %v5608
        %v5616 = vadd.f32 %v5566, %v5609
        %v5617 = vadd.f32 %v5567, %v5610
        %v5618 = vadd.f32 %v5568, %v5611
        %s5619 = scalar_lea.vmem %s7, 672
        %v5620 = vld [vmem:[%s5619] sm:$0xff]
        %v5621 = vld [vmem:[%s5619 + $0x8] sm:$0xff]
        %v5622 = vld [vmem:[%s5619 + $0x10] sm:$0xff]
        %v5623 = vld [vmem:[%s5619 + $0x18] sm:$0xff]
        %v5624 = vld [vmem:[%s5619 + $0x20] sm:$0xff]
        %v5625 = vld [vmem:[%s5619 + $0x28] sm:$0xff]
        %v5626 = vld [vmem:[%s5619 + $0x30] sm:$0x7f]
        %5627 = vset.pattern.permute.xlu0 12
        %5628 = vperm.xlu0 %5627, %v5006
        %v5629 = vpop.permute.xlu0 %5628
        %5631 = vset.pattern.permute.xlu0 12
        %5632 = vperm.xlu0 %5631, %v5007
        %v5633 = vpop.permute.xlu0 %5632
        %5635 = vset.pattern.permute.xlu0 12
        %5636 = vperm.xlu0 %5635, %v5008
        %v5637 = vpop.permute.xlu0 %5636
        %5639 = vset.pattern.permute.xlu0 12
        %5640 = vperm.xlu0 %5639, %v5009
        %v5641 = vpop.permute.xlu0 %5640
        %5643 = vset.pattern.permute.xlu0 12
        %5644 = vperm.xlu0 %5643, %v5010
        %v5645 = vpop.permute.xlu0 %5644
        %5647 = vset.pattern.permute.xlu0 12
        %5648 = vperm.xlu0 %5647, %v5011
        %v5649 = vpop.permute.xlu0 %5648
        %5651 = vset.pattern.permute.xlu0 12
        %5652 = vperm.xlu0 %5651, %v5012
        %v5653 = vpop.permute.xlu0 %5652
        %v5655 = vmul.f32 %v5629, %v5620
        %v5656 = vmul.f32 %v5633, %v5621
        %v5657 = vmul.f32 %v5637, %v5622
        %v5658 = vmul.f32 %v5641, %v5623
        %v5659 = vmul.f32 %v5645, %v5624
        %v5660 = vmul.f32 %v5649, %v5625
        %v5661 = vmul.f32 %v5653, %v5626
        %v5662 = vadd.f32 %v5612, %v5655
        %v5663 = vadd.f32 %v5613, %v5656
        %v5664 = vadd.f32 %v5614, %v5657
        %v5665 = vadd.f32 %v5615, %v5658
        %v5666 = vadd.f32 %v5616, %v5659
        %v5667 = vadd.f32 %v5617, %v5660
        %v5668 = vadd.f32 %v5618, %v5661
        %s5669 = scalar_lea.vmem %s7, 728
        %v5670 = vld [vmem:[%s5669] sm:$0xff]
        %v5671 = vld [vmem:[%s5669 + $0x8] sm:$0xff]
        %v5672 = vld [vmem:[%s5669 + $0x10] sm:$0xff]
        %v5673 = vld [vmem:[%s5669 + $0x18] sm:$0xff]
        %v5674 = vld [vmem:[%s5669 + $0x20] sm:$0xff]
        %v5675 = vld [vmem:[%s5669 + $0x28] sm:$0xff]
        %v5676 = vld [vmem:[%s5669 + $0x30] sm:$0x7f]
        %5677 = vset.pattern.permute.xlu0 13
        %5678 = vperm.xlu0 %5677, %v5006
        %v5679 = vpop.permute.xlu0 %5678
        %5681 = vset.pattern.permute.xlu0 13
        %5682 = vperm.xlu0 %5681, %v5007
        %v5683 = vpop.permute.xlu0 %5682
        %5685 = vset.pattern.permute.xlu0 13
        %5686 = vperm.xlu0 %5685, %v5008
        %v5687 = vpop.permute.xlu0 %5686
        %5689 = vset.pattern.permute.xlu0 13
        %5690 = vperm.xlu0 %5689, %v5009
        %v5691 = vpop.permute.xlu0 %5690
        %5693 = vset.pattern.permute.xlu0 13
        %5694 = vperm.xlu0 %5693, %v5010
        %v5695 = vpop.permute.xlu0 %5694
        %5697 = vset.pattern.permute.xlu0 13
        %5698 = vperm.xlu0 %5697, %v5011
        %v5699 = vpop.permute.xlu0 %5698
        %5701 = vset.pattern.permute.xlu0 13
        %5702 = vperm.xlu0 %5701, %v5012
        %v5703 = vpop.permute.xlu0 %5702
        %v5705 = vmul.f32 %v5679, %v5670
        %v5706 = vmul.f32 %v5683, %v5671
        %v5707 = vmul.f32 %v5687, %v5672
        %v5708 = vmul.f32 %v5691, %v5673
        %v5709 = vmul.f32 %v5695, %v5674
        %v5710 = vmul.f32 %v5699, %v5675
        %v5711 = vmul.f32 %v5703, %v5676
        %v5712 = vadd.f32 %v5662, %v5705
        %v5713 = vadd.f32 %v5663, %v5706
        %v5714 = vadd.f32 %v5664, %v5707
        %v5715 = vadd.f32 %v5665, %v5708
        %v5716 = vadd.f32 %v5666, %v5709
        %v5717 = vadd.f32 %v5667, %v5710
        %v5718 = vadd.f32 %v5668, %v5711
        %s5719 = scalar_lea.vmem %s7, 784
        %v5720 = vld [vmem:[%s5719] sm:$0xff]
        %v5721 = vld [vmem:[%s5719 + $0x8] sm:$0xff]
        %v5722 = vld [vmem:[%s5719 + $0x10] sm:$0xff]
        %v5723 = vld [vmem:[%s5719 + $0x18] sm:$0xff]
        %v5724 = vld [vmem:[%s5719 + $0x20] sm:$0xff]
        %v5725 = vld [vmem:[%s5719 + $0x28] sm:$0xff]
        %v5726 = vld [vmem:[%s5719 + $0x30] sm:$0x7f]
        %5727 = vset.pattern.permute.xlu0 14
        %5728 = vperm.xlu0 %5727, %v5006
        %v5729 = vpop.permute.xlu0 %5728
        %5731 = vset.pattern.permute.xlu0 14
        %5732 = vperm.xlu0 %5731, %v5007
        %v5733 = vpop.permute.xlu0 %5732
        %5735 = vset.pattern.permute.xlu0 14
        %5736 = vperm.xlu0 %5735, %v5008
        %v5737 = vpop.permute.xlu0 %5736
        %5739 = vset.pattern.permute.xlu0 14
        %5740 = vperm.xlu0 %5739, %v5009
        %v5741 = vpop.permute.xlu0 %5740
        %5743 = vset.pattern.permute.xlu0 14
        %5744 = vperm.xlu0 %5743, %v5010
        %v5745 = vpop.permute.xlu0 %5744
        %5747 = vset.pattern.permute.xlu0 14
        %5748 = vperm.xlu0 %5747, %v5011
        %v5749 = vpop.permute.xlu0 %5748
        %5751 = vset.pattern.permute.xlu0 14
        %5752 = vperm.xlu0 %5751, %v5012
        %v5753 = vpop.permute.xlu0 %5752
        %v5755 = vmul.f32 %v5729, %v5720
        %v5756 = vmul.f32 %v5733, %v5721
        %v5757 = vmul.f32 %v5737, %v5722
        %v5758 = vmul.f32 %v5741, %v5723
        %v5759 = vmul.f32 %v5745, %v5724
        %v5760 = vmul.f32 %v5749, %v5725
        %v5761 = vmul.f32 %v5753, %v5726
        %v5762 = vadd.f32 %v5712, %v5755
        %v5763 = vadd.f32 %v5713, %v5756
        %v5764 = vadd.f32 %v5714, %v5757
        %v5765 = vadd.f32 %v5715, %v5758
        %v5766 = vadd.f32 %v5716, %v5759
        %v5767 = vadd.f32 %v5717, %v5760
        %v5768 = vadd.f32 %v5718, %v5761
        %s5769 = scalar_lea.vmem %s7, 840
        %v5770 = vld [vmem:[%s5769] sm:$0xff]
        %v5771 = vld [vmem:[%s5769 + $0x8] sm:$0xff]
        %v5772 = vld [vmem:[%s5769 + $0x10] sm:$0xff]
        %v5773 = vld [vmem:[%s5769 + $0x18] sm:$0xff]
        %v5774 = vld [vmem:[%s5769 + $0x20] sm:$0xff]
        %v5775 = vld [vmem:[%s5769 + $0x28] sm:$0xff]
        %v5776 = vld [vmem:[%s5769 + $0x30] sm:$0x7f]
        %5777 = vset.pattern.permute.xlu0 15
        %5778 = vperm.xlu0 %5777, %v5006
        %v5779 = vpop.permute.xlu0 %5778
        %5781 = vset.pattern.permute.xlu0 15
        %5782 = vperm.xlu0 %5781, %v5007
        %v5783 = vpop.permute.xlu0 %5782
        %5785 = vset.pattern.permute.xlu0 15
        %5786 = vperm.xlu0 %5785, %v5008
        %v5787 = vpop.permute.xlu0 %5786
        %5789 = vset.pattern.permute.xlu0 15
        %5790 = vperm.xlu0 %5789, %v5009
        %v5791 = vpop.permute.xlu0 %5790
        %5793 = vset.pattern.permute.xlu0 15
        %5794 = vperm.xlu0 %5793, %v5010
        %v5795 = vpop.permute.xlu0 %5794
        %5797 = vset.pattern.permute.xlu0 15
        %5798 = vperm.xlu0 %5797, %v5011
        %v5799 = vpop.permute.xlu0 %5798
        %5801 = vset.pattern.permute.xlu0 15
        %5802 = vperm.xlu0 %5801, %v5012
        %v5803 = vpop.permute.xlu0 %5802
        %v5805 = vmul.f32 %v5779, %v5770
        %v5806 = vmul.f32 %v5783, %v5771
        %v5807 = vmul.f32 %v5787, %v5772
        %v5808 = vmul.f32 %v5791, %v5773
        %v5809 = vmul.f32 %v5795, %v5774
        %v5810 = vmul.f32 %v5799, %v5775
        %v5811 = vmul.f32 %v5803, %v5776
        %v5812 = vadd.f32 %v5762, %v5805
        %v5813 = vadd.f32 %v5763, %v5806
        %v5814 = vadd.f32 %v5764, %v5807
        %v5815 = vadd.f32 %v5765, %v5808
        %v5816 = vadd.f32 %v5766, %v5809
        %v5817 = vadd.f32 %v5767, %v5810
        %v5818 = vadd.f32 %v5768, %v5811
        %s5819 = scalar_lea.vmem %s7, 896
        %v5820 = vld [vmem:[%s5819] sm:$0xff]
        %v5821 = vld [vmem:[%s5819 + $0x8] sm:$0xff]
        %v5822 = vld [vmem:[%s5819 + $0x10] sm:$0xff]
        %v5823 = vld [vmem:[%s5819 + $0x18] sm:$0xff]
        %v5824 = vld [vmem:[%s5819 + $0x20] sm:$0xff]
        %v5825 = vld [vmem:[%s5819 + $0x28] sm:$0xff]
        %v5826 = vld [vmem:[%s5819 + $0x30] sm:$0x7f]
        %5827 = vset.pattern.permute.xlu0 16
        %5828 = vperm.xlu0 %5827, %v5006
        %v5829 = vpop.permute.xlu0 %5828
        %5831 = vset.pattern.permute.xlu0 16
        %5832 = vperm.xlu0 %5831, %v5007
        %v5833 = vpop.permute.xlu0 %5832
        %5835 = vset.pattern.permute.xlu0 16
        %5836 = vperm.xlu0 %5835, %v5008
        %v5837 = vpop.permute.xlu0 %5836
        %5839 = vset.pattern.permute.xlu0 16
        %5840 = vperm.xlu0 %5839, %v5009
        %v5841 = vpop.permute.xlu0 %5840
        %5843 = vset.pattern.permute.xlu0 16
        %5844 = vperm.xlu0 %5843, %v5010
        %v5845 = vpop.permute.xlu0 %5844
        %5847 = vset.pattern.permute.xlu0 16
        %5848 = vperm.xlu0 %5847, %v5011
        %v5849 = vpop.permute.xlu0 %5848
        %5851 = vset.pattern.permute.xlu0 16
        %5852 = vperm.xlu0 %5851, %v5012
        %v5853 = vpop.permute.xlu0 %5852
        %v5855 = vmul.f32 %v5829, %v5820
        %v5856 = vmul.f32 %v5833, %v5821
        %v5857 = vmul.f32 %v5837, %v5822
        %v5858 = vmul.f32 %v5841, %v5823
        %v5859 = vmul.f32 %v5845, %v5824
        %v5860 = vmul.f32 %v5849, %v5825
        %v5861 = vmul.f32 %v5853, %v5826
        %v5862 = vadd.f32 %v5812, %v5855
        %v5863 = vadd.f32 %v5813, %v5856
        %v5864 = vadd.f32 %v5814, %v5857
        %v5865 = vadd.f32 %v5815, %v5858
        %v5866 = vadd.f32 %v5816, %v5859
        %v5867 = vadd.f32 %v5817, %v5860
        %v5868 = vadd.f32 %v5818, %v5861
        %s5869 = scalar_lea.vmem %s7, 952
        %v5870 = vld [vmem:[%s5869] sm:$0xff]
        %v5871 = vld [vmem:[%s5869 + $0x8] sm:$0xff]
        %v5872 = vld [vmem:[%s5869 + $0x10] sm:$0xff]
        %v5873 = vld [vmem:[%s5869 + $0x18] sm:$0xff]
        %v5874 = vld [vmem:[%s5869 + $0x20] sm:$0xff]
        %v5875 = vld [vmem:[%s5869 + $0x28] sm:$0xff]
        %v5876 = vld [vmem:[%s5869 + $0x30] sm:$0x7f]
        %5877 = vset.pattern.permute.xlu0 17
        %5878 = vperm.xlu0 %5877, %v5006
        %v5879 = vpop.permute.xlu0 %5878
        %5881 = vset.pattern.permute.xlu0 17
        %5882 = vperm.xlu0 %5881, %v5007
        %v5883 = vpop.permute.xlu0 %5882
        %5885 = vset.pattern.permute.xlu0 17
        %5886 = vperm.xlu0 %5885, %v5008
        %v5887 = vpop.permute.xlu0 %5886
        %5889 = vset.pattern.permute.xlu0 17
        %5890 = vperm.xlu0 %5889, %v5009
        %v5891 = vpop.permute.xlu0 %5890
        %5893 = vset.pattern.permute.xlu0 17
        %5894 = vperm.xlu0 %5893, %v5010
        %v5895 = vpop.permute.xlu0 %5894
        %5897 = vset.pattern.permute.xlu0 17
        %5898 = vperm.xlu0 %5897, %v5011
        %v5899 = vpop.permute.xlu0 %5898
        %5901 = vset.pattern.permute.xlu0 17
        %5902 = vperm.xlu0 %5901, %v5012
        %v5903 = vpop.permute.xlu0 %5902
        %v5905 = vmul.f32 %v5879, %v5870
        %v5906 = vmul.f32 %v5883, %v5871
        %v5907 = vmul.f32 %v5887, %v5872
        %v5908 = vmul.f32 %v5891, %v5873
        %v5909 = vmul.f32 %v5895, %v5874
        %v5910 = vmul.f32 %v5899, %v5875
        %v5911 = vmul.f32 %v5903, %v5876
        %v5912 = vadd.f32 %v5862, %v5905
        %v5913 = vadd.f32 %v5863, %v5906
        %v5914 = vadd.f32 %v5864, %v5907
        %v5915 = vadd.f32 %v5865, %v5908
        %v5916 = vadd.f32 %v5866, %v5909
        %v5917 = vadd.f32 %v5867, %v5910
        %v5918 = vadd.f32 %v5868, %v5911
        %s5919 = scalar_lea.vmem %s7, 1008
        %v5920 = vld [vmem:[%s5919] sm:$0xff]
        %v5921 = vld [vmem:[%s5919 + $0x8] sm:$0xff]
        %v5922 = vld [vmem:[%s5919 + $0x10] sm:$0xff]
        %v5923 = vld [vmem:[%s5919 + $0x18] sm:$0xff]
        %v5924 = vld [vmem:[%s5919 + $0x20] sm:$0xff]
        %v5925 = vld [vmem:[%s5919 + $0x28] sm:$0xff]
        %v5926 = vld [vmem:[%s5919 + $0x30] sm:$0x7f]
        %5927 = vset.pattern.permute.xlu0 18
        %5928 = vperm.xlu0 %5927, %v5006
        %v5929 = vpop.permute.xlu0 %5928
        %5931 = vset.pattern.permute.xlu0 18
        %5932 = vperm.xlu0 %5931, %v5007
        %v5933 = vpop.permute.xlu0 %5932
        %5935 = vset.pattern.permute.xlu0 18
        %5936 = vperm.xlu0 %5935, %v5008
        %v5937 = vpop.permute.xlu0 %5936
        %5939 = vset.pattern.permute.xlu0 18
        %5940 = vperm.xlu0 %5939, %v5009
        %v5941 = vpop.permute.xlu0 %5940
        %5943 = vset.pattern.permute.xlu0 18
        %5944 = vperm.xlu0 %5943, %v5010
        %v5945 = vpop.permute.xlu0 %5944
        %5947 = vset.pattern.permute.xlu0 18
        %5948 = vperm.xlu0 %5947, %v5011
        %v5949 = vpop.permute.xlu0 %5948
        %5951 = vset.pattern.permute.xlu0 18
        %5952 = vperm.xlu0 %5951, %v5012
        %v5953 = vpop.permute.xlu0 %5952
        %v5955 = vmul.f32 %v5929, %v5920
        %v5956 = vmul.f32 %v5933, %v5921
        %v5957 = vmul.f32 %v5937, %v5922
        %v5958 = vmul.f32 %v5941, %v5923
        %v5959 = vmul.f32 %v5945, %v5924
        %v5960 = vmul.f32 %v5949, %v5925
        %v5961 = vmul.f32 %v5953, %v5926
        %v5962 = vadd.f32 %v5912, %v5955
        %v5963 = vadd.f32 %v5913, %v5956
        %v5964 = vadd.f32 %v5914, %v5957
        %v5965 = vadd.f32 %v5915, %v5958
        %v5966 = vadd.f32 %v5916, %v5959
        %v5967 = vadd.f32 %v5917, %v5960
        %v5968 = vadd.f32 %v5918, %v5961
        %s5969 = scalar_lea.vmem %s7, 1064
        %v5970 = vld [vmem:[%s5969] sm:$0xff]
        %v5971 = vld [vmem:[%s5969 + $0x8] sm:$0xff]
        %v5972 = vld [vmem:[%s5969 + $0x10] sm:$0xff]
        %v5973 = vld [vmem:[%s5969 + $0x18] sm:$0xff]
        %v5974 = vld [vmem:[%s5969 + $0x20] sm:$0xff]
        %v5975 = vld [vmem:[%s5969 + $0x28] sm:$0xff]
        %v5976 = vld [vmem:[%s5969 + $0x30] sm:$0x7f]
        %5977 = vset.pattern.permute.xlu0 19
        %5978 = vperm.xlu0 %5977, %v5006
        %v5979 = vpop.permute.xlu0 %5978
        %5981 = vset.pattern.permute.xlu0 19
        %5982 = vperm.xlu0 %5981, %v5007
        %v5983 = vpop.permute.xlu0 %5982
        %5985 = vset.pattern.permute.xlu0 19
        %5986 = vperm.xlu0 %5985, %v5008
        %v5987 = vpop.permute.xlu0 %5986
        %5989 = vset.pattern.permute.xlu0 19
        %5990 = vperm.xlu0 %5989, %v5009
        %v5991 = vpop.permute.xlu0 %5990
        %5993 = vset.pattern.permute.xlu0 19
        %5994 = vperm.xlu0 %5993, %v5010
        %v5995 = vpop.permute.xlu0 %5994
        %5997 = vset.pattern.permute.xlu0 19
        %5998 = vperm.xlu0 %5997, %v5011
        %v5999 = vpop.permute.xlu0 %5998
        %6001 = vset.pattern.permute.xlu0 19
        %6002 = vperm.xlu0 %6001, %v5012
        %v6003 = vpop.permute.xlu0 %6002
        %v6005 = vmul.f32 %v5979, %v5970
        %v6006 = vmul.f32 %v5983, %v5971
        %v6007 = vmul.f32 %v5987, %v5972
        %v6008 = vmul.f32 %v5991, %v5973
        %v6009 = vmul.f32 %v5995, %v5974
        %v6010 = vmul.f32 %v5999, %v5975
        %v6011 = vmul.f32 %v6003, %v5976
        %v6012 = vadd.f32 %v5962, %v6005
        %v6013 = vadd.f32 %v5963, %v6006
        %v6014 = vadd.f32 %v5964, %v6007
        %v6015 = vadd.f32 %v5965, %v6008
        %v6016 = vadd.f32 %v5966, %v6009
        %v6017 = vadd.f32 %v5967, %v6010
        %v6018 = vadd.f32 %v5968, %v6011
        %s6019 = scalar_lea.vmem %s7, 1120
        %v6020 = vld [vmem:[%s6019] sm:$0xff]
        %v6021 = vld [vmem:[%s6019 + $0x8] sm:$0xff]
        %v6022 = vld [vmem:[%s6019 + $0x10] sm:$0xff]
        %v6023 = vld [vmem:[%s6019 + $0x18] sm:$0xff]
        %v6024 = vld [vmem:[%s6019 + $0x20] sm:$0xff]
        %v6025 = vld [vmem:[%s6019 + $0x28] sm:$0xff]
        %v6026 = vld [vmem:[%s6019 + $0x30] sm:$0x7f]
        %6027 = vset.pattern.permute.xlu0 20
        %6028 = vperm.xlu0 %6027, %v5006
        %v6029 = vpop.permute.xlu0 %6028
        %6031 = vset.pattern.permute.xlu0 20
        %6032 = vperm.xlu0 %6031, %v5007
        %v6033 = vpop.permute.xlu0 %6032
        %6035 = vset.pattern.permute.xlu0 20
        %6036 = vperm.xlu0 %6035, %v5008
        %v6037 = vpop.permute.xlu0 %6036
        %6039 = vset.pattern.permute.xlu0 20
        %6040 = vperm.xlu0 %6039, %v5009
        %v6041 = vpop.permute.xlu0 %6040
        %6043 = vset.pattern.permute.xlu0 20
        %6044 = vperm.xlu0 %6043, %v5010
        %v6045 = vpop.permute.xlu0 %6044
        %6047 = vset.pattern.permute.xlu0 20
        %6048 = vperm.xlu0 %6047, %v5011
        %v6049 = vpop.permute.xlu0 %6048
        %6051 = vset.pattern.permute.xlu0 20
        %6052 = vperm.xlu0 %6051, %v5012
        %v6053 = vpop.permute.xlu0 %6052
        %v6055 = vmul.f32 %v6029, %v6020
        %v6056 = vmul.f32 %v6033, %v6021
        %v6057 = vmul.f32 %v6037, %v6022
        %v6058 = vmul.f32 %v6041, %v6023
        %v6059 = vmul.f32 %v6045, %v6024
        %v6060 = vmul.f32 %v6049, %v6025
        %v6061 = vmul.f32 %v6053, %v6026
        %v6062 = vadd.f32 %v6012, %v6055
        %v6063 = vadd.f32 %v6013, %v6056
        %v6064 = vadd.f32 %v6014, %v6057
        %v6065 = vadd.f32 %v6015, %v6058
        %v6066 = vadd.f32 %v6016, %v6059
        %v6067 = vadd.f32 %v6017, %v6060
        %v6068 = vadd.f32 %v6018, %v6061
        %s6069 = scalar_lea.vmem %s7, 1176
        %v6070 = vld [vmem:[%s6069] sm:$0xff]
        %v6071 = vld [vmem:[%s6069 + $0x8] sm:$0xff]
        %v6072 = vld [vmem:[%s6069 + $0x10] sm:$0xff]
        %v6073 = vld [vmem:[%s6069 + $0x18] sm:$0xff]
        %v6074 = vld [vmem:[%s6069 + $0x20] sm:$0xff]
        %v6075 = vld [vmem:[%s6069 + $0x28] sm:$0xff]
        %v6076 = vld [vmem:[%s6069 + $0x30] sm:$0x7f]
        %6077 = vset.pattern.permute.xlu0 21
        %6078 = vperm.xlu0 %6077, %v5006
        %v6079 = vpop.permute.xlu0 %6078
        %6081 = vset.pattern.permute.xlu0 21
        %6082 = vperm.xlu0 %6081, %v5007
        %v6083 = vpop.permute.xlu0 %6082
        %6085 = vset.pattern.permute.xlu0 21
        %6086 = vperm.xlu0 %6085, %v5008
        %v6087 = vpop.permute.xlu0 %6086
        %6089 = vset.pattern.permute.xlu0 21
        %6090 = vperm.xlu0 %6089, %v5009
        %v6091 = vpop.permute.xlu0 %6090
        %6093 = vset.pattern.permute.xlu0 21
        %6094 = vperm.xlu0 %6093, %v5010
        %v6095 = vpop.permute.xlu0 %6094
        %6097 = vset.pattern.permute.xlu0 21
        %6098 = vperm.xlu0 %6097, %v5011
        %v6099 = vpop.permute.xlu0 %6098
        %6101 = vset.pattern.permute.xlu0 21
        %6102 = vperm.xlu0 %6101, %v5012
        %v6103 = vpop.permute.xlu0 %6102
        %v6105 = vmul.f32 %v6079, %v6070
        %v6106 = vmul.f32 %v6083, %v6071
        %v6107 = vmul.f32 %v6087, %v6072
        %v6108 = vmul.f32 %v6091, %v6073
        %v6109 = vmul.f32 %v6095, %v6074
        %v6110 = vmul.f32 %v6099, %v6075
        %v6111 = vmul.f32 %v6103, %v6076
        %v6112 = vadd.f32 %v6062, %v6105
        %v6113 = vadd.f32 %v6063, %v6106
        %v6114 = vadd.f32 %v6064, %v6107
        %v6115 = vadd.f32 %v6065, %v6108
        %v6116 = vadd.f32 %v6066, %v6109
        %v6117 = vadd.f32 %v6067, %v6110
        %v6118 = vadd.f32 %v6068, %v6111
        %s6119 = scalar_lea.vmem %s7, 1232
        %v6120 = vld [vmem:[%s6119] sm:$0xff]
        %v6121 = vld [vmem:[%s6119 + $0x8] sm:$0xff]
        %v6122 = vld [vmem:[%s6119 + $0x10] sm:$0xff]
        %v6123 = vld [vmem:[%s6119 + $0x18] sm:$0xff]
        %v6124 = vld [vmem:[%s6119 + $0x20] sm:$0xff]
        %v6125 = vld [vmem:[%s6119 + $0x28] sm:$0xff]
        %v6126 = vld [vmem:[%s6119 + $0x30] sm:$0x7f]
        %6127 = vset.pattern.permute.xlu0 22
        %6128 = vperm.xlu0 %6127, %v5006
        %v6129 = vpop.permute.xlu0 %6128
        %6131 = vset.pattern.permute.xlu0 22
        %6132 = vperm.xlu0 %6131, %v5007
        %v6133 = vpop.permute.xlu0 %6132
        %6135 = vset.pattern.permute.xlu0 22
        %6136 = vperm.xlu0 %6135, %v5008
        %v6137 = vpop.permute.xlu0 %6136
        %6139 = vset.pattern.permute.xlu0 22
        %6140 = vperm.xlu0 %6139, %v5009
        %v6141 = vpop.permute.xlu0 %6140
        %6143 = vset.pattern.permute.xlu0 22
        %6144 = vperm.xlu0 %6143, %v5010
        %v6145 = vpop.permute.xlu0 %6144
        %6147 = vset.pattern.permute.xlu0 22
        %6148 = vperm.xlu0 %6147, %v5011
        %v6149 = vpop.permute.xlu0 %6148
        %6151 = vset.pattern.permute.xlu0 22
        %6152 = vperm.xlu0 %6151, %v5012
        %v6153 = vpop.permute.xlu0 %6152
        %v6155 = vmul.f32 %v6129, %v6120
        %v6156 = vmul.f32 %v6133, %v6121
        %v6157 = vmul.f32 %v6137, %v6122
        %v6158 = vmul.f32 %v6141, %v6123
        %v6159 = vmul.f32 %v6145, %v6124
        %v6160 = vmul.f32 %v6149, %v6125
        %v6161 = vmul.f32 %v6153, %v6126
        %v6162 = vadd.f32 %v6112, %v6155
        %v6163 = vadd.f32 %v6113, %v6156
        %v6164 = vadd.f32 %v6114, %v6157
        %v6165 = vadd.f32 %v6115, %v6158
        %v6166 = vadd.f32 %v6116, %v6159
        %v6167 = vadd.f32 %v6117, %v6160
        %v6168 = vadd.f32 %v6118, %v6161
        %s6169 = scalar_lea.vmem %s7, 1288
        %v6170 = vld [vmem:[%s6169] sm:$0xff]
        %v6171 = vld [vmem:[%s6169 + $0x8] sm:$0xff]
        %v6172 = vld [vmem:[%s6169 + $0x10] sm:$0xff]
        %v6173 = vld [vmem:[%s6169 + $0x18] sm:$0xff]
        %v6174 = vld [vmem:[%s6169 + $0x20] sm:$0xff]
        %v6175 = vld [vmem:[%s6169 + $0x28] sm:$0xff]
        %v6176 = vld [vmem:[%s6169 + $0x30] sm:$0x7f]
        %6177 = vset.pattern.permute.xlu0 23
        %6178 = vperm.xlu0 %6177, %v5006
        %v6179 = vpop.permute.xlu0 %6178
        %6181 = vset.pattern.permute.xlu0 23
        %6182 = vperm.xlu0 %6181, %v5007
        %v6183 = vpop.permute.xlu0 %6182
        %6185 = vset.pattern.permute.xlu0 23
        %6186 = vperm.xlu0 %6185, %v5008
        %v6187 = vpop.permute.xlu0 %6186
        %6189 = vset.pattern.permute.xlu0 23
        %6190 = vperm.xlu0 %6189, %v5009
        %v6191 = vpop.permute.xlu0 %6190
        %6193 = vset.pattern.permute.xlu0 23
        %6194 = vperm.xlu0 %6193, %v5010
        %v6195 = vpop.permute.xlu0 %6194
        %6197 = vset.pattern.permute.xlu0 23
        %6198 = vperm.xlu0 %6197, %v5011
        %v6199 = vpop.permute.xlu0 %6198
        %6201 = vset.pattern.permute.xlu0 23
        %6202 = vperm.xlu0 %6201, %v5012
        %v6203 = vpop.permute.xlu0 %6202
        %v6205 = vmul.f32 %v6179, %v6170
        %v6206 = vmul.f32 %v6183, %v6171
        %v6207 = vmul.f32 %v6187, %v6172
        %v6208 = vmul.f32 %v6191, %v6173
        %v6209 = vmul.f32 %v6195, %v6174
        %v6210 = vmul.f32 %v6199, %v6175
        %v6211 = vmul.f32 %v6203, %v6176
        %v6212 = vadd.f32 %v6162, %v6205
        %v6213 = vadd.f32 %v6163, %v6206
        %v6214 = vadd.f32 %v6164, %v6207
        %v6215 = vadd.f32 %v6165, %v6208
        %v6216 = vadd.f32 %v6166, %v6209
        %v6217 = vadd.f32 %v6167, %v6210
        %v6218 = vadd.f32 %v6168, %v6211
        %s6219 = scalar_lea.vmem %s7, 1344
        %v6220 = vld [vmem:[%s6219] sm:$0xff]
        %v6221 = vld [vmem:[%s6219 + $0x8] sm:$0xff]
        %v6222 = vld [vmem:[%s6219 + $0x10] sm:$0xff]
        %v6223 = vld [vmem:[%s6219 + $0x18] sm:$0xff]
        %v6224 = vld [vmem:[%s6219 + $0x20] sm:$0xff]
        %v6225 = vld [vmem:[%s6219 + $0x28] sm:$0xff]
        %v6226 = vld [vmem:[%s6219 + $0x30] sm:$0x7f]
        %6227 = vset.pattern.permute.xlu0 24
        %6228 = vperm.xlu0 %6227, %v5006
        %v6229 = vpop.permute.xlu0 %6228
        %6231 = vset.pattern.permute.xlu0 24
        %6232 = vperm.xlu0 %6231, %v5007
        %v6233 = vpop.permute.xlu0 %6232
        %6235 = vset.pattern.permute.xlu0 24
        %6236 = vperm.xlu0 %6235, %v5008
        %v6237 = vpop.permute.xlu0 %6236
        %6239 = vset.pattern.permute.xlu0 24
        %6240 = vperm.xlu0 %6239, %v5009
        %v6241 = vpop.permute.xlu0 %6240
        %6243 = vset.pattern.permute.xlu0 24
        %6244 = vperm.xlu0 %6243, %v5010
        %v6245 = vpop.permute.xlu0 %6244
        %6247 = vset.pattern.permute.xlu0 24
        %6248 = vperm.xlu0 %6247, %v5011
        %v6249 = vpop.permute.xlu0 %6248
        %6251 = vset.pattern.permute.xlu0 24
        %6252 = vperm.xlu0 %6251, %v5012
        %v6253 = vpop.permute.xlu0 %6252
        %v6255 = vmul.f32 %v6229, %v6220
        %v6256 = vmul.f32 %v6233, %v6221
        %v6257 = vmul.f32 %v6237, %v6222
        %v6258 = vmul.f32 %v6241, %v6223
        %v6259 = vmul.f32 %v6245, %v6224
        %v6260 = vmul.f32 %v6249, %v6225
        %v6261 = vmul.f32 %v6253, %v6226
        %v6262 = vadd.f32 %v6212, %v6255
        %v6263 = vadd.f32 %v6213, %v6256
        %v6264 = vadd.f32 %v6214, %v6257
        %v6265 = vadd.f32 %v6215, %v6258
        %v6266 = vadd.f32 %v6216, %v6259
        %v6267 = vadd.f32 %v6217, %v6260
        %v6268 = vadd.f32 %v6218, %v6261
        %s6269 = scalar_lea.vmem %s7, 1400
        %v6270 = vld [vmem:[%s6269] sm:$0xff]
        %v6271 = vld [vmem:[%s6269 + $0x8] sm:$0xff]
        %v6272 = vld [vmem:[%s6269 + $0x10] sm:$0xff]
        %v6273 = vld [vmem:[%s6269 + $0x18] sm:$0xff]
        %v6274 = vld [vmem:[%s6269 + $0x20] sm:$0xff]
        %v6275 = vld [vmem:[%s6269 + $0x28] sm:$0xff]
        %v6276 = vld [vmem:[%s6269 + $0x30] sm:$0x7f]
        %6277 = vset.pattern.permute.xlu0 25
        %6278 = vperm.xlu0 %6277, %v5006
        %v6279 = vpop.permute.xlu0 %6278
        %6281 = vset.pattern.permute.xlu0 25
        %6282 = vperm.xlu0 %6281, %v5007
        %v6283 = vpop.permute.xlu0 %6282
        %6285 = vset.pattern.permute.xlu0 25
        %6286 = vperm.xlu0 %6285, %v5008
        %v6287 = vpop.permute.xlu0 %6286
        %6289 = vset.pattern.permute.xlu0 25
        %6290 = vperm.xlu0 %6289, %v5009
        %v6291 = vpop.permute.xlu0 %6290
        %6293 = vset.pattern.permute.xlu0 25
        %6294 = vperm.xlu0 %6293, %v5010
        %v6295 = vpop.permute.xlu0 %6294
        %6297 = vset.pattern.permute.xlu0 25
        %6298 = vperm.xlu0 %6297, %v5011
        %v6299 = vpop.permute.xlu0 %6298
        %6301 = vset.pattern.permute.xlu0 25
        %6302 = vperm.xlu0 %6301, %v5012
        %v6303 = vpop.permute.xlu0 %6302
        %v6305 = vmul.f32 %v6279, %v6270
        %v6306 = vmul.f32 %v6283, %v6271
        %v6307 = vmul.f32 %v6287, %v6272
        %v6308 = vmul.f32 %v6291, %v6273
        %v6309 = vmul.f32 %v6295, %v6274
        %v6310 = vmul.f32 %v6299, %v6275
        %v6311 = vmul.f32 %v6303, %v6276
        %v6312 = vadd.f32 %v6262, %v6305
        %v6313 = vadd.f32 %v6263, %v6306
        %v6314 = vadd.f32 %v6264, %v6307
        %v6315 = vadd.f32 %v6265, %v6308
        %v6316 = vadd.f32 %v6266, %v6309
        %v6317 = vadd.f32 %v6267, %v6310
        %v6318 = vadd.f32 %v6268, %v6311
        %s6319 = scalar_lea.vmem %s7, 1456
        %v6320 = vld [vmem:[%s6319] sm:$0xff]
        %v6321 = vld [vmem:[%s6319 + $0x8] sm:$0xff]
        %v6322 = vld [vmem:[%s6319 + $0x10] sm:$0xff]
        %v6323 = vld [vmem:[%s6319 + $0x18] sm:$0xff]
        %v6324 = vld [vmem:[%s6319 + $0x20] sm:$0xff]
        %v6325 = vld [vmem:[%s6319 + $0x28] sm:$0xff]
        %v6326 = vld [vmem:[%s6319 + $0x30] sm:$0x7f]
        %6327 = vset.pattern.permute.xlu0 26
        %6328 = vperm.xlu0 %6327, %v5006
        %v6329 = vpop.permute.xlu0 %6328
        %6331 = vset.pattern.permute.xlu0 26
        %6332 = vperm.xlu0 %6331, %v5007
        %v6333 = vpop.permute.xlu0 %6332
        %6335 = vset.pattern.permute.xlu0 26
        %6336 = vperm.xlu0 %6335, %v5008
        %v6337 = vpop.permute.xlu0 %6336
        %6339 = vset.pattern.permute.xlu0 26
        %6340 = vperm.xlu0 %6339, %v5009
        %v6341 = vpop.permute.xlu0 %6340
        %6343 = vset.pattern.permute.xlu0 26
        %6344 = vperm.xlu0 %6343, %v5010
        %v6345 = vpop.permute.xlu0 %6344
        %6347 = vset.pattern.permute.xlu0 26
        %6348 = vperm.xlu0 %6347, %v5011
        %v6349 = vpop.permute.xlu0 %6348
        %6351 = vset.pattern.permute.xlu0 26
        %6352 = vperm.xlu0 %6351, %v5012
        %v6353 = vpop.permute.xlu0 %6352
        %v6355 = vmul.f32 %v6329, %v6320
        %v6356 = vmul.f32 %v6333, %v6321
        %v6357 = vmul.f32 %v6337, %v6322
        %v6358 = vmul.f32 %v6341, %v6323
        %v6359 = vmul.f32 %v6345, %v6324
        %v6360 = vmul.f32 %v6349, %v6325
        %v6361 = vmul.f32 %v6353, %v6326
        %v6362 = vadd.f32 %v6312, %v6355
        %v6363 = vadd.f32 %v6313, %v6356
        %v6364 = vadd.f32 %v6314, %v6357
        %v6365 = vadd.f32 %v6315, %v6358
        %v6366 = vadd.f32 %v6316, %v6359
        %v6367 = vadd.f32 %v6317, %v6360
        %v6368 = vadd.f32 %v6318, %v6361
        %s6369 = scalar_lea.vmem %s7, 1512
        %v6370 = vld [vmem:[%s6369] sm:$0xff]
        %v6371 = vld [vmem:[%s6369 + $0x8] sm:$0xff]
        %v6372 = vld [vmem:[%s6369 + $0x10] sm:$0xff]
        %v6373 = vld [vmem:[%s6369 + $0x18] sm:$0xff]
        %v6374 = vld [vmem:[%s6369 + $0x20] sm:$0xff]
        %v6375 = vld [vmem:[%s6369 + $0x28] sm:$0xff]
        %v6376 = vld [vmem:[%s6369 + $0x30] sm:$0x7f]
        %6377 = vset.pattern.permute.xlu0 27
        %6378 = vperm.xlu0 %6377, %v5006
        %v6379 = vpop.permute.xlu0 %6378
        %6381 = vset.pattern.permute.xlu0 27
        %6382 = vperm.xlu0 %6381, %v5007
        %v6383 = vpop.permute.xlu0 %6382
        %6385 = vset.pattern.permute.xlu0 27
        %6386 = vperm.xlu0 %6385, %v5008
        %v6387 = vpop.permute.xlu0 %6386
        %6389 = vset.pattern.permute.xlu0 27
        %6390 = vperm.xlu0 %6389, %v5009
        %v6391 = vpop.permute.xlu0 %6390
        %6393 = vset.pattern.permute.xlu0 27
        %6394 = vperm.xlu0 %6393, %v5010
        %v6395 = vpop.permute.xlu0 %6394
        %6397 = vset.pattern.permute.xlu0 27
        %6398 = vperm.xlu0 %6397, %v5011
        %v6399 = vpop.permute.xlu0 %6398
        %6401 = vset.pattern.permute.xlu0 27
        %6402 = vperm.xlu0 %6401, %v5012
        %v6403 = vpop.permute.xlu0 %6402
        %v6405 = vmul.f32 %v6379, %v6370
        %v6406 = vmul.f32 %v6383, %v6371
        %v6407 = vmul.f32 %v6387, %v6372
        %v6408 = vmul.f32 %v6391, %v6373
        %v6409 = vmul.f32 %v6395, %v6374
        %v6410 = vmul.f32 %v6399, %v6375
        %v6411 = vmul.f32 %v6403, %v6376
        %v6412 = vadd.f32 %v6362, %v6405
        %v6413 = vadd.f32 %v6363, %v6406
        %v6414 = vadd.f32 %v6364, %v6407
        %v6415 = vadd.f32 %v6365, %v6408
        %v6416 = vadd.f32 %v6366, %v6409
        %v6417 = vadd.f32 %v6367, %v6410
        %v6418 = vadd.f32 %v6368, %v6411
        %s6419 = scalar_lea.vmem %s7, 1568
        %v6420 = vld [vmem:[%s6419] sm:$0xff]
        %v6421 = vld [vmem:[%s6419 + $0x8] sm:$0xff]
        %v6422 = vld [vmem:[%s6419 + $0x10] sm:$0xff]
        %v6423 = vld [vmem:[%s6419 + $0x18] sm:$0xff]
        %v6424 = vld [vmem:[%s6419 + $0x20] sm:$0xff]
        %v6425 = vld [vmem:[%s6419 + $0x28] sm:$0xff]
        %v6426 = vld [vmem:[%s6419 + $0x30] sm:$0x7f]
        %6427 = vset.pattern.permute.xlu0 28
        %6428 = vperm.xlu0 %6427, %v5006
        %v6429 = vpop.permute.xlu0 %6428
        %6431 = vset.pattern.permute.xlu0 28
        %6432 = vperm.xlu0 %6431, %v5007
        %v6433 = vpop.permute.xlu0 %6432
        %6435 = vset.pattern.permute.xlu0 28
        %6436 = vperm.xlu0 %6435, %v5008
        %v6437 = vpop.permute.xlu0 %6436
        %6439 = vset.pattern.permute.xlu0 28
        %6440 = vperm.xlu0 %6439, %v5009
        %v6441 = vpop.permute.xlu0 %6440
        %6443 = vset.pattern.permute.xlu0 28
        %6444 = vperm.xlu0 %6443, %v5010
        %v6445 = vpop.permute.xlu0 %6444
        %6447 = vset.pattern.permute.xlu0 28
        %6448 = vperm.xlu0 %6447, %v5011
        %v6449 = vpop.permute.xlu0 %6448
        %6451 = vset.pattern.permute.xlu0 28
        %6452 = vperm.xlu0 %6451, %v5012
        %v6453 = vpop.permute.xlu0 %6452
        %v6455 = vmul.f32 %v6429, %v6420
        %v6456 = vmul.f32 %v6433, %v6421
        %v6457 = vmul.f32 %v6437, %v6422
        %v6458 = vmul.f32 %v6441, %v6423
        %v6459 = vmul.f32 %v6445, %v6424
        %v6460 = vmul.f32 %v6449, %v6425
        %v6461 = vmul.f32 %v6453, %v6426
        %v6462 = vadd.f32 %v6412, %v6455
        %v6463 = vadd.f32 %v6413, %v6456
        %v6464 = vadd.f32 %v6414, %v6457
        %v6465 = vadd.f32 %v6415, %v6458
        %v6466 = vadd.f32 %v6416, %v6459
        %v6467 = vadd.f32 %v6417, %v6460
        %v6468 = vadd.f32 %v6418, %v6461
        %s6469 = scalar_lea.vmem %s7, 1624
        %v6470 = vld [vmem:[%s6469] sm:$0xff]
        %v6471 = vld [vmem:[%s6469 + $0x8] sm:$0xff]
        %v6472 = vld [vmem:[%s6469 + $0x10] sm:$0xff]
        %v6473 = vld [vmem:[%s6469 + $0x18] sm:$0xff]
        %v6474 = vld [vmem:[%s6469 + $0x20] sm:$0xff]
        %v6475 = vld [vmem:[%s6469 + $0x28] sm:$0xff]
        %v6476 = vld [vmem:[%s6469 + $0x30] sm:$0x7f]
        %6477 = vset.pattern.permute.xlu0 29
        %6478 = vperm.xlu0 %6477, %v5006
        %v6479 = vpop.permute.xlu0 %6478
        %6481 = vset.pattern.permute.xlu0 29
        %6482 = vperm.xlu0 %6481, %v5007
        %v6483 = vpop.permute.xlu0 %6482
        %6485 = vset.pattern.permute.xlu0 29
        %6486 = vperm.xlu0 %6485, %v5008
        %v6487 = vpop.permute.xlu0 %6486
        %6489 = vset.pattern.permute.xlu0 29
        %6490 = vperm.xlu0 %6489, %v5009
        %v6491 = vpop.permute.xlu0 %6490
        %6493 = vset.pattern.permute.xlu0 29
        %6494 = vperm.xlu0 %6493, %v5010
        %v6495 = vpop.permute.xlu0 %6494
        %6497 = vset.pattern.permute.xlu0 29
        %6498 = vperm.xlu0 %6497, %v5011
        %v6499 = vpop.permute.xlu0 %6498
        %6501 = vset.pattern.permute.xlu0 29
        %6502 = vperm.xlu0 %6501, %v5012
        %v6503 = vpop.permute.xlu0 %6502
        %v6505 = vmul.f32 %v6479, %v6470
        %v6506 = vmul.f32 %v6483, %v6471
        %v6507 = vmul.f32 %v6487, %v6472
        %v6508 = vmul.f32 %v6491, %v6473
        %v6509 = vmul.f32 %v6495, %v6474
        %v6510 = vmul.f32 %v6499, %v6475
        %v6511 = vmul.f32 %v6503, %v6476
        %v6512 = vadd.f32 %v6462, %v6505
        %v6513 = vadd.f32 %v6463, %v6506
        %v6514 = vadd.f32 %v6464, %v6507
        %v6515 = vadd.f32 %v6465, %v6508
        %v6516 = vadd.f32 %v6466, %v6509
        %v6517 = vadd.f32 %v6467, %v6510
        %v6518 = vadd.f32 %v6468, %v6511
        %s6519 = scalar_lea.vmem %s7, 1680
        %v6520 = vld [vmem:[%s6519] sm:$0xff]
        %v6521 = vld [vmem:[%s6519 + $0x8] sm:$0xff]
        %v6522 = vld [vmem:[%s6519 + $0x10] sm:$0xff]
        %v6523 = vld [vmem:[%s6519 + $0x18] sm:$0xff]
        %v6524 = vld [vmem:[%s6519 + $0x20] sm:$0xff]
        %v6525 = vld [vmem:[%s6519 + $0x28] sm:$0xff]
        %v6526 = vld [vmem:[%s6519 + $0x30] sm:$0x7f]
        %6527 = vset.pattern.permute.xlu0 30
        %6528 = vperm.xlu0 %6527, %v5006
        %v6529 = vpop.permute.xlu0 %6528
        %6531 = vset.pattern.permute.xlu0 30
        %6532 = vperm.xlu0 %6531, %v5007
        %v6533 = vpop.permute.xlu0 %6532
        %6535 = vset.pattern.permute.xlu0 30
        %6536 = vperm.xlu0 %6535, %v5008
        %v6537 = vpop.permute.xlu0 %6536
        %6539 = vset.pattern.permute.xlu0 30
        %6540 = vperm.xlu0 %6539, %v5009
        %v6541 = vpop.permute.xlu0 %6540
        %6543 = vset.pattern.permute.xlu0 30
        %6544 = vperm.xlu0 %6543, %v5010
        %v6545 = vpop.permute.xlu0 %6544
        %6547 = vset.pattern.permute.xlu0 30
        %6548 = vperm.xlu0 %6547, %v5011
        %v6549 = vpop.permute.xlu0 %6548
        %6551 = vset.pattern.permute.xlu0 30
        %6552 = vperm.xlu0 %6551, %v5012
        %v6553 = vpop.permute.xlu0 %6552
        %v6555 = vmul.f32 %v6529, %v6520
        %v6556 = vmul.f32 %v6533, %v6521
        %v6557 = vmul.f32 %v6537, %v6522
        %v6558 = vmul.f32 %v6541, %v6523
        %v6559 = vmul.f32 %v6545, %v6524
        %v6560 = vmul.f32 %v6549, %v6525
        %v6561 = vmul.f32 %v6553, %v6526
        %v6562 = vadd.f32 %v6512, %v6555
        %v6563 = vadd.f32 %v6513, %v6556
        %v6564 = vadd.f32 %v6514, %v6557
        %v6565 = vadd.f32 %v6515, %v6558
        %v6566 = vadd.f32 %v6516, %v6559
        %v6567 = vadd.f32 %v6517, %v6560
        %v6568 = vadd.f32 %v6518, %v6561
        %s6569 = scalar_lea.vmem %s7, 1736
        %v6570 = vld [vmem:[%s6569] sm:$0xff]
        %v6571 = vld [vmem:[%s6569 + $0x8] sm:$0xff]
        %v6572 = vld [vmem:[%s6569 + $0x10] sm:$0xff]
        %v6573 = vld [vmem:[%s6569 + $0x18] sm:$0xff]
        %v6574 = vld [vmem:[%s6569 + $0x20] sm:$0xff]
        %v6575 = vld [vmem:[%s6569 + $0x28] sm:$0xff]
        %v6576 = vld [vmem:[%s6569 + $0x30] sm:$0x7f]
        %6577 = vset.pattern.permute.xlu0 31
        %6578 = vperm.xlu0 %6577, %v5006
        %v6579 = vpop.permute.xlu0 %6578
        %6581 = vset.pattern.permute.xlu0 31
        %6582 = vperm.xlu0 %6581, %v5007
        %v6583 = vpop.permute.xlu0 %6582
        %6585 = vset.pattern.permute.xlu0 31
        %6586 = vperm.xlu0 %6585, %v5008
        %v6587 = vpop.permute.xlu0 %6586
        %6589 = vset.pattern.permute.xlu0 31
        %6590 = vperm.xlu0 %6589, %v5009
        %v6591 = vpop.permute.xlu0 %6590
        %6593 = vset.pattern.permute.xlu0 31
        %6594 = vperm.xlu0 %6593, %v5010
        %v6595 = vpop.permute.xlu0 %6594
        %6597 = vset.pattern.permute.xlu0 31
        %6598 = vperm.xlu0 %6597, %v5011
        %v6599 = vpop.permute.xlu0 %6598
        %6601 = vset.pattern.permute.xlu0 31
        %6602 = vperm.xlu0 %6601, %v5012
        %v6603 = vpop.permute.xlu0 %6602
        %v6605 = vmul.f32 %v6579, %v6570
        %v6606 = vmul.f32 %v6583, %v6571
        %v6607 = vmul.f32 %v6587, %v6572
        %v6608 = vmul.f32 %v6591, %v6573
        %v6609 = vmul.f32 %v6595, %v6574
        %v6610 = vmul.f32 %v6599, %v6575
        %v6611 = vmul.f32 %v6603, %v6576
        %v6612 = vadd.f32 %v6562, %v6605
        %v6613 = vadd.f32 %v6563, %v6606
        %v6614 = vadd.f32 %v6564, %v6607
        %v6615 = vadd.f32 %v6565, %v6608
        %v6616 = vadd.f32 %v6566, %v6609
        %v6617 = vadd.f32 %v6567, %v6610
        %v6618 = vadd.f32 %v6568, %v6611
        %s6619 = scalar_lea.vmem %s7, 1792
        %v6620 = vld [vmem:[%s6619] sm:$0xff]
        %v6621 = vld [vmem:[%s6619 + $0x8] sm:$0xff]
        %v6622 = vld [vmem:[%s6619 + $0x10] sm:$0xff]
        %v6623 = vld [vmem:[%s6619 + $0x18] sm:$0xff]
        %v6624 = vld [vmem:[%s6619 + $0x20] sm:$0xff]
        %v6625 = vld [vmem:[%s6619 + $0x28] sm:$0xff]
        %v6626 = vld [vmem:[%s6619 + $0x30] sm:$0x7f]
        %6627 = vset.pattern.permute.xlu0 32
        %6628 = vperm.xlu0 %6627, %v5006
        %v6629 = vpop.permute.xlu0 %6628
        %6631 = vset.pattern.permute.xlu0 32
        %6632 = vperm.xlu0 %6631, %v5007
        %v6633 = vpop.permute.xlu0 %6632
        %6635 = vset.pattern.permute.xlu0 32
        %6636 = vperm.xlu0 %6635, %v5008
        %v6637 = vpop.permute.xlu0 %6636
        %6639 = vset.pattern.permute.xlu0 32
        %6640 = vperm.xlu0 %6639, %v5009
        %v6641 = vpop.permute.xlu0 %6640
        %6643 = vset.pattern.permute.xlu0 32
        %6644 = vperm.xlu0 %6643, %v5010
        %v6645 = vpop.permute.xlu0 %6644
        %6647 = vset.pattern.permute.xlu0 32
        %6648 = vperm.xlu0 %6647, %v5011
        %v6649 = vpop.permute.xlu0 %6648
        %6651 = vset.pattern.permute.xlu0 32
        %6652 = vperm.xlu0 %6651, %v5012
        %v6653 = vpop.permute.xlu0 %6652
        %v6655 = vmul.f32 %v6629, %v6620
        %v6656 = vmul.f32 %v6633, %v6621
        %v6657 = vmul.f32 %v6637, %v6622
        %v6658 = vmul.f32 %v6641, %v6623
        %v6659 = vmul.f32 %v6645, %v6624
        %v6660 = vmul.f32 %v6649, %v6625
        %v6661 = vmul.f32 %v6653, %v6626
        %v6662 = vadd.f32 %v6612, %v6655
        %v6663 = vadd.f32 %v6613, %v6656
        %v6664 = vadd.f32 %v6614, %v6657
        %v6665 = vadd.f32 %v6615, %v6658
        %v6666 = vadd.f32 %v6616, %v6659
        %v6667 = vadd.f32 %v6617, %v6660
        %v6668 = vadd.f32 %v6618, %v6661
        %s6669 = scalar_lea.vmem %s7, 1848
        %v6670 = vld [vmem:[%s6669] sm:$0xff]
        %v6671 = vld [vmem:[%s6669 + $0x8] sm:$0xff]
        %v6672 = vld [vmem:[%s6669 + $0x10] sm:$0xff]
        %v6673 = vld [vmem:[%s6669 + $0x18] sm:$0xff]
        %v6674 = vld [vmem:[%s6669 + $0x20] sm:$0xff]
        %v6675 = vld [vmem:[%s6669 + $0x28] sm:$0xff]
        %v6676 = vld [vmem:[%s6669 + $0x30] sm:$0x7f]
        %6677 = vset.pattern.permute.xlu0 33
        %6678 = vperm.xlu0 %6677, %v5006
        %v6679 = vpop.permute.xlu0 %6678
        %6681 = vset.pattern.permute.xlu0 33
        %6682 = vperm.xlu0 %6681, %v5007
        %v6683 = vpop.permute.xlu0 %6682
        %6685 = vset.pattern.permute.xlu0 33
        %6686 = vperm.xlu0 %6685, %v5008
        %v6687 = vpop.permute.xlu0 %6686
        %6689 = vset.pattern.permute.xlu0 33
        %6690 = vperm.xlu0 %6689, %v5009
        %v6691 = vpop.permute.xlu0 %6690
        %6693 = vset.pattern.permute.xlu0 33
        %6694 = vperm.xlu0 %6693, %v5010
        %v6695 = vpop.permute.xlu0 %6694
        %6697 = vset.pattern.permute.xlu0 33
        %6698 = vperm.xlu0 %6697, %v5011
        %v6699 = vpop.permute.xlu0 %6698
        %6701 = vset.pattern.permute.xlu0 33
        %6702 = vperm.xlu0 %6701, %v5012
        %v6703 = vpop.permute.xlu0 %6702
        %v6705 = vmul.f32 %v6679, %v6670
        %v6706 = vmul.f32 %v6683, %v6671
        %v6707 = vmul.f32 %v6687, %v6672
        %v6708 = vmul.f32 %v6691, %v6673
        %v6709 = vmul.f32 %v6695, %v6674
        %v6710 = vmul.f32 %v6699, %v6675
        %v6711 = vmul.f32 %v6703, %v6676
        %v6712 = vadd.f32 %v6662, %v6705
        %v6713 = vadd.f32 %v6663, %v6706
        %v6714 = vadd.f32 %v6664, %v6707
        %v6715 = vadd.f32 %v6665, %v6708
        %v6716 = vadd.f32 %v6666, %v6709
        %v6717 = vadd.f32 %v6667, %v6710
        %v6718 = vadd.f32 %v6668, %v6711
        %s6719 = scalar_lea.vmem %s7, 1904
        %v6720 = vld [vmem:[%s6719] sm:$0xff]
        %v6721 = vld [vmem:[%s6719 + $0x8] sm:$0xff]
        %v6722 = vld [vmem:[%s6719 + $0x10] sm:$0xff]
        %v6723 = vld [vmem:[%s6719 + $0x18] sm:$0xff]
        %v6724 = vld [vmem:[%s6719 + $0x20] sm:$0xff]
        %v6725 = vld [vmem:[%s6719 + $0x28] sm:$0xff]
        %v6726 = vld [vmem:[%s6719 + $0x30] sm:$0x7f]
        %6727 = vset.pattern.permute.xlu0 34
        %6728 = vperm.xlu0 %6727, %v5006
        %v6729 = vpop.permute.xlu0 %6728
        %6731 = vset.pattern.permute.xlu0 34
        %6732 = vperm.xlu0 %6731, %v5007
        %v6733 = vpop.permute.xlu0 %6732
        %6735 = vset.pattern.permute.xlu0 34
        %6736 = vperm.xlu0 %6735, %v5008
        %v6737 = vpop.permute.xlu0 %6736
        %6739 = vset.pattern.permute.xlu0 34
        %6740 = vperm.xlu0 %6739, %v5009
        %v6741 = vpop.permute.xlu0 %6740
        %6743 = vset.pattern.permute.xlu0 34
        %6744 = vperm.xlu0 %6743, %v5010
        %v6745 = vpop.permute.xlu0 %6744
        %6747 = vset.pattern.permute.xlu0 34
        %6748 = vperm.xlu0 %6747, %v5011
        %v6749 = vpop.permute.xlu0 %6748
        %6751 = vset.pattern.permute.xlu0 34
        %6752 = vperm.xlu0 %6751, %v5012
        %v6753 = vpop.permute.xlu0 %6752
        %v6755 = vmul.f32 %v6729, %v6720
        %v6756 = vmul.f32 %v6733, %v6721
        %v6757 = vmul.f32 %v6737, %v6722
        %v6758 = vmul.f32 %v6741, %v6723
        %v6759 = vmul.f32 %v6745, %v6724
        %v6760 = vmul.f32 %v6749, %v6725
        %v6761 = vmul.f32 %v6753, %v6726
        %v6762 = vadd.f32 %v6712, %v6755
        %v6763 = vadd.f32 %v6713, %v6756
        %v6764 = vadd.f32 %v6714, %v6757
        %v6765 = vadd.f32 %v6715, %v6758
        %v6766 = vadd.f32 %v6716, %v6759
        %v6767 = vadd.f32 %v6717, %v6760
        %v6768 = vadd.f32 %v6718, %v6761
        %s6769 = scalar_lea.vmem %s7, 1960
        %v6770 = vld [vmem:[%s6769] sm:$0xff]
        %v6771 = vld [vmem:[%s6769 + $0x8] sm:$0xff]
        %v6772 = vld [vmem:[%s6769 + $0x10] sm:$0xff]
        %v6773 = vld [vmem:[%s6769 + $0x18] sm:$0xff]
        %v6774 = vld [vmem:[%s6769 + $0x20] sm:$0xff]
        %v6775 = vld [vmem:[%s6769 + $0x28] sm:$0xff]
        %v6776 = vld [vmem:[%s6769 + $0x30] sm:$0x7f]
        %6777 = vset.pattern.permute.xlu0 35
        %6778 = vperm.xlu0 %6777, %v5006
        %v6779 = vpop.permute.xlu0 %6778
        %6781 = vset.pattern.permute.xlu0 35
        %6782 = vperm.xlu0 %6781, %v5007
        %v6783 = vpop.permute.xlu0 %6782
        %6785 = vset.pattern.permute.xlu0 35
        %6786 = vperm.xlu0 %6785, %v5008
        %v6787 = vpop.permute.xlu0 %6786
        %6789 = vset.pattern.permute.xlu0 35
        %6790 = vperm.xlu0 %6789, %v5009
        %v6791 = vpop.permute.xlu0 %6790
        %6793 = vset.pattern.permute.xlu0 35
        %6794 = vperm.xlu0 %6793, %v5010
        %v6795 = vpop.permute.xlu0 %6794
        %6797 = vset.pattern.permute.xlu0 35
        %6798 = vperm.xlu0 %6797, %v5011
        %v6799 = vpop.permute.xlu0 %6798
        %6801 = vset.pattern.permute.xlu0 35
        %6802 = vperm.xlu0 %6801, %v5012
        %v6803 = vpop.permute.xlu0 %6802
        %v6805 = vmul.f32 %v6779, %v6770
        %v6806 = vmul.f32 %v6783, %v6771
        %v6807 = vmul.f32 %v6787, %v6772
        %v6808 = vmul.f32 %v6791, %v6773
        %v6809 = vmul.f32 %v6795, %v6774
        %v6810 = vmul.f32 %v6799, %v6775
        %v6811 = vmul.f32 %v6803, %v6776
        %v6812 = vadd.f32 %v6762, %v6805
        %v6813 = vadd.f32 %v6763, %v6806
        %v6814 = vadd.f32 %v6764, %v6807
        %v6815 = vadd.f32 %v6765, %v6808
        %v6816 = vadd.f32 %v6766, %v6809
        %v6817 = vadd.f32 %v6767, %v6810
        %v6818 = vadd.f32 %v6768, %v6811
        %s6819 = scalar_lea.vmem %s7, 2016
        %v6820 = vld [vmem:[%s6819] sm:$0xff]
        %v6821 = vld [vmem:[%s6819 + $0x8] sm:$0xff]
        %v6822 = vld [vmem:[%s6819 + $0x10] sm:$0xff]
        %v6823 = vld [vmem:[%s6819 + $0x18] sm:$0xff]
        %v6824 = vld [vmem:[%s6819 + $0x20] sm:$0xff]
        %v6825 = vld [vmem:[%s6819 + $0x28] sm:$0xff]
        %v6826 = vld [vmem:[%s6819 + $0x30] sm:$0x7f]
        %6827 = vset.pattern.permute.xlu0 36
        %6828 = vperm.xlu0 %6827, %v5006
        %v6829 = vpop.permute.xlu0 %6828
        %6831 = vset.pattern.permute.xlu0 36
        %6832 = vperm.xlu0 %6831, %v5007
        %v6833 = vpop.permute.xlu0 %6832
        %6835 = vset.pattern.permute.xlu0 36
        %6836 = vperm.xlu0 %6835, %v5008
        %v6837 = vpop.permute.xlu0 %6836
        %6839 = vset.pattern.permute.xlu0 36
        %6840 = vperm.xlu0 %6839, %v5009
        %v6841 = vpop.permute.xlu0 %6840
        %6843 = vset.pattern.permute.xlu0 36
        %6844 = vperm.xlu0 %6843, %v5010
        %v6845 = vpop.permute.xlu0 %6844
        %6847 = vset.pattern.permute.xlu0 36
        %6848 = vperm.xlu0 %6847, %v5011
        %v6849 = vpop.permute.xlu0 %6848
        %6851 = vset.pattern.permute.xlu0 36
        %6852 = vperm.xlu0 %6851, %v5012
        %v6853 = vpop.permute.xlu0 %6852
        %v6855 = vmul.f32 %v6829, %v6820
        %v6856 = vmul.f32 %v6833, %v6821
        %v6857 = vmul.f32 %v6837, %v6822
        %v6858 = vmul.f32 %v6841, %v6823
        %v6859 = vmul.f32 %v6845, %v6824
        %v6860 = vmul.f32 %v6849, %v6825
        %v6861 = vmul.f32 %v6853, %v6826
        %v6862 = vadd.f32 %v6812, %v6855
        %v6863 = vadd.f32 %v6813, %v6856
        %v6864 = vadd.f32 %v6814, %v6857
        %v6865 = vadd.f32 %v6815, %v6858
        %v6866 = vadd.f32 %v6816, %v6859
        %v6867 = vadd.f32 %v6817, %v6860
        %v6868 = vadd.f32 %v6818, %v6861
        %s6869 = scalar_lea.vmem %s7, 2072
        %v6870 = vld [vmem:[%s6869] sm:$0xff]
        %v6871 = vld [vmem:[%s6869 + $0x8] sm:$0xff]
        %v6872 = vld [vmem:[%s6869 + $0x10] sm:$0xff]
        %v6873 = vld [vmem:[%s6869 + $0x18] sm:$0xff]
        %v6874 = vld [vmem:[%s6869 + $0x20] sm:$0xff]
        %v6875 = vld [vmem:[%s6869 + $0x28] sm:$0xff]
        %v6876 = vld [vmem:[%s6869 + $0x30] sm:$0x7f]
        %6877 = vset.pattern.permute.xlu0 37
        %6878 = vperm.xlu0 %6877, %v5006
        %v6879 = vpop.permute.xlu0 %6878
        %6881 = vset.pattern.permute.xlu0 37
        %6882 = vperm.xlu0 %6881, %v5007
        %v6883 = vpop.permute.xlu0 %6882
        %6885 = vset.pattern.permute.xlu0 37
        %6886 = vperm.xlu0 %6885, %v5008
        %v6887 = vpop.permute.xlu0 %6886
        %6889 = vset.pattern.permute.xlu0 37
        %6890 = vperm.xlu0 %6889, %v5009
        %v6891 = vpop.permute.xlu0 %6890
        %6893 = vset.pattern.permute.xlu0 37
        %6894 = vperm.xlu0 %6893, %v5010
        %v6895 = vpop.permute.xlu0 %6894
        %6897 = vset.pattern.permute.xlu0 37
        %6898 = vperm.xlu0 %6897, %v5011
        %v6899 = vpop.permute.xlu0 %6898
        %6901 = vset.pattern.permute.xlu0 37
        %6902 = vperm.xlu0 %6901, %v5012
        %v6903 = vpop.permute.xlu0 %6902
        %v6905 = vmul.f32 %v6879, %v6870
        %v6906 = vmul.f32 %v6883, %v6871
        %v6907 = vmul.f32 %v6887, %v6872
        %v6908 = vmul.f32 %v6891, %v6873
        %v6909 = vmul.f32 %v6895, %v6874
        %v6910 = vmul.f32 %v6899, %v6875
        %v6911 = vmul.f32 %v6903, %v6876
        %v6912 = vadd.f32 %v6862, %v6905
        %v6913 = vadd.f32 %v6863, %v6906
        %v6914 = vadd.f32 %v6864, %v6907
        %v6915 = vadd.f32 %v6865, %v6908
        %v6916 = vadd.f32 %v6866, %v6909
        %v6917 = vadd.f32 %v6867, %v6910
        %v6918 = vadd.f32 %v6868, %v6911
        %s6919 = scalar_lea.vmem %s7, 2128
        %v6920 = vld [vmem:[%s6919] sm:$0xff]
        %v6921 = vld [vmem:[%s6919 + $0x8] sm:$0xff]
        %v6922 = vld [vmem:[%s6919 + $0x10] sm:$0xff]
        %v6923 = vld [vmem:[%s6919 + $0x18] sm:$0xff]
        %v6924 = vld [vmem:[%s6919 + $0x20] sm:$0xff]
        %v6925 = vld [vmem:[%s6919 + $0x28] sm:$0xff]
        %v6926 = vld [vmem:[%s6919 + $0x30] sm:$0x7f]
        %6927 = vset.pattern.permute.xlu0 38
        %6928 = vperm.xlu0 %6927, %v5006
        %v6929 = vpop.permute.xlu0 %6928
        %6931 = vset.pattern.permute.xlu0 38
        %6932 = vperm.xlu0 %6931, %v5007
        %v6933 = vpop.permute.xlu0 %6932
        %6935 = vset.pattern.permute.xlu0 38
        %6936 = vperm.xlu0 %6935, %v5008
        %v6937 = vpop.permute.xlu0 %6936
        %6939 = vset.pattern.permute.xlu0 38
        %6940 = vperm.xlu0 %6939, %v5009
        %v6941 = vpop.permute.xlu0 %6940
        %6943 = vset.pattern.permute.xlu0 38
        %6944 = vperm.xlu0 %6943, %v5010
        %v6945 = vpop.permute.xlu0 %6944
        %6947 = vset.pattern.permute.xlu0 38
        %6948 = vperm.xlu0 %6947, %v5011
        %v6949 = vpop.permute.xlu0 %6948
        %6951 = vset.pattern.permute.xlu0 38
        %6952 = vperm.xlu0 %6951, %v5012
        %v6953 = vpop.permute.xlu0 %6952
        %v6955 = vmul.f32 %v6929, %v6920
        %v6956 = vmul.f32 %v6933, %v6921
        %v6957 = vmul.f32 %v6937, %v6922
        %v6958 = vmul.f32 %v6941, %v6923
        %v6959 = vmul.f32 %v6945, %v6924
        %v6960 = vmul.f32 %v6949, %v6925
        %v6961 = vmul.f32 %v6953, %v6926
        %v6962 = vadd.f32 %v6912, %v6955
        %v6963 = vadd.f32 %v6913, %v6956
        %v6964 = vadd.f32 %v6914, %v6957
        %v6965 = vadd.f32 %v6915, %v6958
        %v6966 = vadd.f32 %v6916, %v6959
        %v6967 = vadd.f32 %v6917, %v6960
        %v6968 = vadd.f32 %v6918, %v6961
        %s6969 = scalar_lea.vmem %s7, 2184
        %v6970 = vld [vmem:[%s6969] sm:$0xff]
        %v6971 = vld [vmem:[%s6969 + $0x8] sm:$0xff]
        %v6972 = vld [vmem:[%s6969 + $0x10] sm:$0xff]
        %v6973 = vld [vmem:[%s6969 + $0x18] sm:$0xff]
        %v6974 = vld [vmem:[%s6969 + $0x20] sm:$0xff]
        %v6975 = vld [vmem:[%s6969 + $0x28] sm:$0xff]
        %v6976 = vld [vmem:[%s6969 + $0x30] sm:$0x7f]
        %6977 = vset.pattern.permute.xlu0 39
        %6978 = vperm.xlu0 %6977, %v5006
        %v6979 = vpop.permute.xlu0 %6978
        %6981 = vset.pattern.permute.xlu0 39
        %6982 = vperm.xlu0 %6981, %v5007
        %v6983 = vpop.permute.xlu0 %6982
        %6985 = vset.pattern.permute.xlu0 39
        %6986 = vperm.xlu0 %6985, %v5008
        %v6987 = vpop.permute.xlu0 %6986
        %6989 = vset.pattern.permute.xlu0 39
        %6990 = vperm.xlu0 %6989, %v5009
        %v6991 = vpop.permute.xlu0 %6990
        %6993 = vset.pattern.permute.xlu0 39
        %6994 = vperm.xlu0 %6993, %v5010
        %v6995 = vpop.permute.xlu0 %6994
        %6997 = vset.pattern.permute.xlu0 39
        %6998 = vperm.xlu0 %6997, %v5011
        %v6999 = vpop.permute.xlu0 %6998
        %7001 = vset.pattern.permute.xlu0 39
        %7002 = vperm.xlu0 %7001, %v5012
        %v7003 = vpop.permute.xlu0 %7002
        %v7005 = vmul.f32 %v6979, %v6970
        %v7006 = vmul.f32 %v6983, %v6971
        %v7007 = vmul.f32 %v6987, %v6972
        %v7008 = vmul.f32 %v6991, %v6973
        %v7009 = vmul.f32 %v6995, %v6974
        %v7010 = vmul.f32 %v6999, %v6975
        %v7011 = vmul.f32 %v7003, %v6976
        %v7012 = vadd.f32 %v6962, %v7005
        %v7013 = vadd.f32 %v6963, %v7006
        %v7014 = vadd.f32 %v6964, %v7007
        %v7015 = vadd.f32 %v6965, %v7008
        %v7016 = vadd.f32 %v6966, %v7009
        %v7017 = vadd.f32 %v6967, %v7010
        %v7018 = vadd.f32 %v6968, %v7011
        %s7019 = scalar_lea.vmem %s7, 2240
        %v7020 = vld [vmem:[%s7019] sm:$0xff]
        %v7021 = vld [vmem:[%s7019 + $0x8] sm:$0xff]
        %v7022 = vld [vmem:[%s7019 + $0x10] sm:$0xff]
        %v7023 = vld [vmem:[%s7019 + $0x18] sm:$0xff]
        %v7024 = vld [vmem:[%s7019 + $0x20] sm:$0xff]
        %v7025 = vld [vmem:[%s7019 + $0x28] sm:$0xff]
        %v7026 = vld [vmem:[%s7019 + $0x30] sm:$0x7f]
        %7027 = vset.pattern.permute.xlu0 40
        %7028 = vperm.xlu0 %7027, %v5006
        %v7029 = vpop.permute.xlu0 %7028
        %7031 = vset.pattern.permute.xlu0 40
        %7032 = vperm.xlu0 %7031, %v5007
        %v7033 = vpop.permute.xlu0 %7032
        %7035 = vset.pattern.permute.xlu0 40
        %7036 = vperm.xlu0 %7035, %v5008
        %v7037 = vpop.permute.xlu0 %7036
        %7039 = vset.pattern.permute.xlu0 40
        %7040 = vperm.xlu0 %7039, %v5009
        %v7041 = vpop.permute.xlu0 %7040
        %7043 = vset.pattern.permute.xlu0 40
        %7044 = vperm.xlu0 %7043, %v5010
        %v7045 = vpop.permute.xlu0 %7044
        %7047 = vset.pattern.permute.xlu0 40
        %7048 = vperm.xlu0 %7047, %v5011
        %v7049 = vpop.permute.xlu0 %7048
        %7051 = vset.pattern.permute.xlu0 40
        %7052 = vperm.xlu0 %7051, %v5012
        %v7053 = vpop.permute.xlu0 %7052
        %v7055 = vmul.f32 %v7029, %v7020
        %v7056 = vmul.f32 %v7033, %v7021
        %v7057 = vmul.f32 %v7037, %v7022
        %v7058 = vmul.f32 %v7041, %v7023
        %v7059 = vmul.f32 %v7045, %v7024
        %v7060 = vmul.f32 %v7049, %v7025
        %v7061 = vmul.f32 %v7053, %v7026
        %v7062 = vadd.f32 %v7012, %v7055
        %v7063 = vadd.f32 %v7013, %v7056
        %v7064 = vadd.f32 %v7014, %v7057
        %v7065 = vadd.f32 %v7015, %v7058
        %v7066 = vadd.f32 %v7016, %v7059
        %v7067 = vadd.f32 %v7017, %v7060
        %v7068 = vadd.f32 %v7018, %v7061
        %s7069 = scalar_lea.vmem %s7, 2296
        %v7070 = vld [vmem:[%s7069] sm:$0xff]
        %v7071 = vld [vmem:[%s7069 + $0x8] sm:$0xff]
        %v7072 = vld [vmem:[%s7069 + $0x10] sm:$0xff]
        %v7073 = vld [vmem:[%s7069 + $0x18] sm:$0xff]
        %v7074 = vld [vmem:[%s7069 + $0x20] sm:$0xff]
        %v7075 = vld [vmem:[%s7069 + $0x28] sm:$0xff]
        %v7076 = vld [vmem:[%s7069 + $0x30] sm:$0x7f]
        %7077 = vset.pattern.permute.xlu0 41
        %7078 = vperm.xlu0 %7077, %v5006
        %v7079 = vpop.permute.xlu0 %7078
        %7081 = vset.pattern.permute.xlu0 41
        %7082 = vperm.xlu0 %7081, %v5007
        %v7083 = vpop.permute.xlu0 %7082
        %7085 = vset.pattern.permute.xlu0 41
        %7086 = vperm.xlu0 %7085, %v5008
        %v7087 = vpop.permute.xlu0 %7086
        %7089 = vset.pattern.permute.xlu0 41
        %7090 = vperm.xlu0 %7089, %v5009
        %v7091 = vpop.permute.xlu0 %7090
        %7093 = vset.pattern.permute.xlu0 41
        %7094 = vperm.xlu0 %7093, %v5010
        %v7095 = vpop.permute.xlu0 %7094
        %7097 = vset.pattern.permute.xlu0 41
        %7098 = vperm.xlu0 %7097, %v5011
        %v7099 = vpop.permute.xlu0 %7098
        %7101 = vset.pattern.permute.xlu0 41
        %7102 = vperm.xlu0 %7101, %v5012
        %v7103 = vpop.permute.xlu0 %7102
        %v7105 = vmul.f32 %v7079, %v7070
        %v7106 = vmul.f32 %v7083, %v7071
        %v7107 = vmul.f32 %v7087, %v7072
        %v7108 = vmul.f32 %v7091, %v7073
        %v7109 = vmul.f32 %v7095, %v7074
        %v7110 = vmul.f32 %v7099, %v7075
        %v7111 = vmul.f32 %v7103, %v7076
        %v7112 = vadd.f32 %v7062, %v7105
        %v7113 = vadd.f32 %v7063, %v7106
        %v7114 = vadd.f32 %v7064, %v7107
        %v7115 = vadd.f32 %v7065, %v7108
        %v7116 = vadd.f32 %v7066, %v7109
        %v7117 = vadd.f32 %v7067, %v7110
        %v7118 = vadd.f32 %v7068, %v7111
        %s7119 = scalar_lea.vmem %s7, 2352
        %v7120 = vld [vmem:[%s7119] sm:$0xff]
        %v7121 = vld [vmem:[%s7119 + $0x8] sm:$0xff]
        %v7122 = vld [vmem:[%s7119 + $0x10] sm:$0xff]
        %v7123 = vld [vmem:[%s7119 + $0x18] sm:$0xff]
        %v7124 = vld [vmem:[%s7119 + $0x20] sm:$0xff]
        %v7125 = vld [vmem:[%s7119 + $0x28] sm:$0xff]
        %v7126 = vld [vmem:[%s7119 + $0x30] sm:$0x7f]
        %7127 = vset.pattern.permute.xlu0 42
        %7128 = vperm.xlu0 %7127, %v5006
        %v7129 = vpop.permute.xlu0 %7128
        %7131 = vset.pattern.permute.xlu0 42
        %7132 = vperm.xlu0 %7131, %v5007
        %v7133 = vpop.permute.xlu0 %7132
        %7135 = vset.pattern.permute.xlu0 42
        %7136 = vperm.xlu0 %7135, %v5008
        %v7137 = vpop.permute.xlu0 %7136
        %7139 = vset.pattern.permute.xlu0 42
        %7140 = vperm.xlu0 %7139, %v5009
        %v7141 = vpop.permute.xlu0 %7140
        %7143 = vset.pattern.permute.xlu0 42
        %7144 = vperm.xlu0 %7143, %v5010
        %v7145 = vpop.permute.xlu0 %7144
        %7147 = vset.pattern.permute.xlu0 42
        %7148 = vperm.xlu0 %7147, %v5011
        %v7149 = vpop.permute.xlu0 %7148
        %7151 = vset.pattern.permute.xlu0 42
        %7152 = vperm.xlu0 %7151, %v5012
        %v7153 = vpop.permute.xlu0 %7152
        %v7155 = vmul.f32 %v7129, %v7120
        %v7156 = vmul.f32 %v7133, %v7121
        %v7157 = vmul.f32 %v7137, %v7122
        %v7158 = vmul.f32 %v7141, %v7123
        %v7159 = vmul.f32 %v7145, %v7124
        %v7160 = vmul.f32 %v7149, %v7125
        %v7161 = vmul.f32 %v7153, %v7126
        %v7162 = vadd.f32 %v7112, %v7155
        %v7163 = vadd.f32 %v7113, %v7156
        %v7164 = vadd.f32 %v7114, %v7157
        %v7165 = vadd.f32 %v7115, %v7158
        %v7166 = vadd.f32 %v7116, %v7159
        %v7167 = vadd.f32 %v7117, %v7160
        %v7168 = vadd.f32 %v7118, %v7161
        %s7169 = scalar_lea.vmem %s7, 2408
        %v7170 = vld [vmem:[%s7169] sm:$0xff]
        %v7171 = vld [vmem:[%s7169 + $0x8] sm:$0xff]
        %v7172 = vld [vmem:[%s7169 + $0x10] sm:$0xff]
        %v7173 = vld [vmem:[%s7169 + $0x18] sm:$0xff]
        %v7174 = vld [vmem:[%s7169 + $0x20] sm:$0xff]
        %v7175 = vld [vmem:[%s7169 + $0x28] sm:$0xff]
        %v7176 = vld [vmem:[%s7169 + $0x30] sm:$0x7f]
        %7177 = vset.pattern.permute.xlu0 43
        %7178 = vperm.xlu0 %7177, %v5006
        %v7179 = vpop.permute.xlu0 %7178
        %7181 = vset.pattern.permute.xlu0 43
        %7182 = vperm.xlu0 %7181, %v5007
        %v7183 = vpop.permute.xlu0 %7182
        %7185 = vset.pattern.permute.xlu0 43
        %7186 = vperm.xlu0 %7185, %v5008
        %v7187 = vpop.permute.xlu0 %7186
        %7189 = vset.pattern.permute.xlu0 43
        %7190 = vperm.xlu0 %7189, %v5009
        %v7191 = vpop.permute.xlu0 %7190
        %7193 = vset.pattern.permute.xlu0 43
        %7194 = vperm.xlu0 %7193, %v5010
        %v7195 = vpop.permute.xlu0 %7194
        %7197 = vset.pattern.permute.xlu0 43
        %7198 = vperm.xlu0 %7197, %v5011
        %v7199 = vpop.permute.xlu0 %7198
        %7201 = vset.pattern.permute.xlu0 43
        %7202 = vperm.xlu0 %7201, %v5012
        %v7203 = vpop.permute.xlu0 %7202
        %v7205 = vmul.f32 %v7179, %v7170
        %v7206 = vmul.f32 %v7183, %v7171
        %v7207 = vmul.f32 %v7187, %v7172
        %v7208 = vmul.f32 %v7191, %v7173
        %v7209 = vmul.f32 %v7195, %v7174
        %v7210 = vmul.f32 %v7199, %v7175
        %v7211 = vmul.f32 %v7203, %v7176
        %v7212 = vadd.f32 %v7162, %v7205
        %v7213 = vadd.f32 %v7163, %v7206
        %v7214 = vadd.f32 %v7164, %v7207
        %v7215 = vadd.f32 %v7165, %v7208
        %v7216 = vadd.f32 %v7166, %v7209
        %v7217 = vadd.f32 %v7167, %v7210
        %v7218 = vadd.f32 %v7168, %v7211
        %s7219 = scalar_lea.vmem %s7, 2464
        %v7220 = vld [vmem:[%s7219] sm:$0xff]
        %v7221 = vld [vmem:[%s7219 + $0x8] sm:$0xff]
        %v7222 = vld [vmem:[%s7219 + $0x10] sm:$0xff]
        %v7223 = vld [vmem:[%s7219 + $0x18] sm:$0xff]
        %v7224 = vld [vmem:[%s7219 + $0x20] sm:$0xff]
        %v7225 = vld [vmem:[%s7219 + $0x28] sm:$0xff]
        %v7226 = vld [vmem:[%s7219 + $0x30] sm:$0x7f]
        %7227 = vset.pattern.permute.xlu0 44
        %7228 = vperm.xlu0 %7227, %v5006
        %v7229 = vpop.permute.xlu0 %7228
        %7231 = vset.pattern.permute.xlu0 44
        %7232 = vperm.xlu0 %7231, %v5007
        %v7233 = vpop.permute.xlu0 %7232
        %7235 = vset.pattern.permute.xlu0 44
        %7236 = vperm.xlu0 %7235, %v5008
        %v7237 = vpop.permute.xlu0 %7236
        %7239 = vset.pattern.permute.xlu0 44
        %7240 = vperm.xlu0 %7239, %v5009
        %v7241 = vpop.permute.xlu0 %7240
        %7243 = vset.pattern.permute.xlu0 44
        %7244 = vperm.xlu0 %7243, %v5010
        %v7245 = vpop.permute.xlu0 %7244
        %7247 = vset.pattern.permute.xlu0 44
        %7248 = vperm.xlu0 %7247, %v5011
        %v7249 = vpop.permute.xlu0 %7248
        %7251 = vset.pattern.permute.xlu0 44
        %7252 = vperm.xlu0 %7251, %v5012
        %v7253 = vpop.permute.xlu0 %7252
        %v7255 = vmul.f32 %v7229, %v7220
        %v7256 = vmul.f32 %v7233, %v7221
        %v7257 = vmul.f32 %v7237, %v7222
        %v7258 = vmul.f32 %v7241, %v7223
        %v7259 = vmul.f32 %v7245, %v7224
        %v7260 = vmul.f32 %v7249, %v7225
        %v7261 = vmul.f32 %v7253, %v7226
        %v7262 = vadd.f32 %v7212, %v7255
        %v7263 = vadd.f32 %v7213, %v7256
        %v7264 = vadd.f32 %v7214, %v7257
        %v7265 = vadd.f32 %v7215, %v7258
        %v7266 = vadd.f32 %v7216, %v7259
        %v7267 = vadd.f32 %v7217, %v7260
        %v7268 = vadd.f32 %v7218, %v7261
        %s7269 = scalar_lea.vmem %s7, 2520
        %v7270 = vld [vmem:[%s7269] sm:$0xff]
        %v7271 = vld [vmem:[%s7269 + $0x8] sm:$0xff]
        %v7272 = vld [vmem:[%s7269 + $0x10] sm:$0xff]
        %v7273 = vld [vmem:[%s7269 + $0x18] sm:$0xff]
        %v7274 = vld [vmem:[%s7269 + $0x20] sm:$0xff]
        %v7275 = vld [vmem:[%s7269 + $0x28] sm:$0xff]
        %v7276 = vld [vmem:[%s7269 + $0x30] sm:$0x7f]
        %7277 = vset.pattern.permute.xlu0 45
        %7278 = vperm.xlu0 %7277, %v5006
        %v7279 = vpop.permute.xlu0 %7278
        %7281 = vset.pattern.permute.xlu0 45
        %7282 = vperm.xlu0 %7281, %v5007
        %v7283 = vpop.permute.xlu0 %7282
        %7285 = vset.pattern.permute.xlu0 45
        %7286 = vperm.xlu0 %7285, %v5008
        %v7287 = vpop.permute.xlu0 %7286
        %7289 = vset.pattern.permute.xlu0 45
        %7290 = vperm.xlu0 %7289, %v5009
        %v7291 = vpop.permute.xlu0 %7290
        %7293 = vset.pattern.permute.xlu0 45
        %7294 = vperm.xlu0 %7293, %v5010
        %v7295 = vpop.permute.xlu0 %7294
        %7297 = vset.pattern.permute.xlu0 45
        %7298 = vperm.xlu0 %7297, %v5011
        %v7299 = vpop.permute.xlu0 %7298
        %7301 = vset.pattern.permute.xlu0 45
        %7302 = vperm.xlu0 %7301, %v5012
        %v7303 = vpop.permute.xlu0 %7302
        %v7305 = vmul.f32 %v7279, %v7270
        %v7306 = vmul.f32 %v7283, %v7271
        %v7307 = vmul.f32 %v7287, %v7272
        %v7308 = vmul.f32 %v7291, %v7273
        %v7309 = vmul.f32 %v7295, %v7274
        %v7310 = vmul.f32 %v7299, %v7275
        %v7311 = vmul.f32 %v7303, %v7276
        %v7312 = vadd.f32 %v7262, %v7305
        %v7313 = vadd.f32 %v7263, %v7306
        %v7314 = vadd.f32 %v7264, %v7307
        %v7315 = vadd.f32 %v7265, %v7308
        %v7316 = vadd.f32 %v7266, %v7309
        %v7317 = vadd.f32 %v7267, %v7310
        %v7318 = vadd.f32 %v7268, %v7311
        %s7319 = scalar_lea.vmem %s7, 2576
        %v7320 = vld [vmem:[%s7319] sm:$0xff]
        %v7321 = vld [vmem:[%s7319 + $0x8] sm:$0xff]
        %v7322 = vld [vmem:[%s7319 + $0x10] sm:$0xff]
        %v7323 = vld [vmem:[%s7319 + $0x18] sm:$0xff]
        %v7324 = vld [vmem:[%s7319 + $0x20] sm:$0xff]
        %v7325 = vld [vmem:[%s7319 + $0x28] sm:$0xff]
        %v7326 = vld [vmem:[%s7319 + $0x30] sm:$0x7f]
        %7327 = vset.pattern.permute.xlu0 46
        %7328 = vperm.xlu0 %7327, %v5006
        %v7329 = vpop.permute.xlu0 %7328
        %7331 = vset.pattern.permute.xlu0 46
        %7332 = vperm.xlu0 %7331, %v5007
        %v7333 = vpop.permute.xlu0 %7332
        %7335 = vset.pattern.permute.xlu0 46
        %7336 = vperm.xlu0 %7335, %v5008
        %v7337 = vpop.permute.xlu0 %7336
        %7339 = vset.pattern.permute.xlu0 46
        %7340 = vperm.xlu0 %7339, %v5009
        %v7341 = vpop.permute.xlu0 %7340
        %7343 = vset.pattern.permute.xlu0 46
        %7344 = vperm.xlu0 %7343, %v5010
        %v7345 = vpop.permute.xlu0 %7344
        %7347 = vset.pattern.permute.xlu0 46
        %7348 = vperm.xlu0 %7347, %v5011
        %v7349 = vpop.permute.xlu0 %7348
        %7351 = vset.pattern.permute.xlu0 46
        %7352 = vperm.xlu0 %7351, %v5012
        %v7353 = vpop.permute.xlu0 %7352
        %v7355 = vmul.f32 %v7329, %v7320
        %v7356 = vmul.f32 %v7333, %v7321
        %v7357 = vmul.f32 %v7337, %v7322
        %v7358 = vmul.f32 %v7341, %v7323
        %v7359 = vmul.f32 %v7345, %v7324
        %v7360 = vmul.f32 %v7349, %v7325
        %v7361 = vmul.f32 %v7353, %v7326
        %v7362 = vadd.f32 %v7312, %v7355
        %v7363 = vadd.f32 %v7313, %v7356
        %v7364 = vadd.f32 %v7314, %v7357
        %v7365 = vadd.f32 %v7315, %v7358
        %v7366 = vadd.f32 %v7316, %v7359
        %v7367 = vadd.f32 %v7317, %v7360
        %v7368 = vadd.f32 %v7318, %v7361
        %s7369 = scalar_lea.vmem %s7, 2632
        %v7370 = vld [vmem:[%s7369] sm:$0xff]
        %v7371 = vld [vmem:[%s7369 + $0x8] sm:$0xff]
        %v7372 = vld [vmem:[%s7369 + $0x10] sm:$0xff]
        %v7373 = vld [vmem:[%s7369 + $0x18] sm:$0xff]
        %v7374 = vld [vmem:[%s7369 + $0x20] sm:$0xff]
        %v7375 = vld [vmem:[%s7369 + $0x28] sm:$0xff]
        %v7376 = vld [vmem:[%s7369 + $0x30] sm:$0x7f]
        %7377 = vset.pattern.permute.xlu0 47
        %7378 = vperm.xlu0 %7377, %v5006
        %v7379 = vpop.permute.xlu0 %7378
        %7381 = vset.pattern.permute.xlu0 47
        %7382 = vperm.xlu0 %7381, %v5007
        %v7383 = vpop.permute.xlu0 %7382
        %7385 = vset.pattern.permute.xlu0 47
        %7386 = vperm.xlu0 %7385, %v5008
        %v7387 = vpop.permute.xlu0 %7386
        %7389 = vset.pattern.permute.xlu0 47
        %7390 = vperm.xlu0 %7389, %v5009
        %v7391 = vpop.permute.xlu0 %7390
        %7393 = vset.pattern.permute.xlu0 47
        %7394 = vperm.xlu0 %7393, %v5010
        %v7395 = vpop.permute.xlu0 %7394
        %7397 = vset.pattern.permute.xlu0 47
        %7398 = vperm.xlu0 %7397, %v5011
        %v7399 = vpop.permute.xlu0 %7398
        %7401 = vset.pattern.permute.xlu0 47
        %7402 = vperm.xlu0 %7401, %v5012
        %v7403 = vpop.permute.xlu0 %7402
        %v7405 = vmul.f32 %v7379, %v7370
        %v7406 = vmul.f32 %v7383, %v7371
        %v7407 = vmul.f32 %v7387, %v7372
        %v7408 = vmul.f32 %v7391, %v7373
        %v7409 = vmul.f32 %v7395, %v7374
        %v7410 = vmul.f32 %v7399, %v7375
        %v7411 = vmul.f32 %v7403, %v7376
        %v7412 = vadd.f32 %v7362, %v7405
        %v7413 = vadd.f32 %v7363, %v7406
        %v7414 = vadd.f32 %v7364, %v7407
        %v7415 = vadd.f32 %v7365, %v7408
        %v7416 = vadd.f32 %v7366, %v7409
        %v7417 = vadd.f32 %v7367, %v7410
        %v7418 = vadd.f32 %v7368, %v7411
        %s7419 = scalar_lea.vmem %s7, 2688
        %v7420 = vld [vmem:[%s7419] sm:$0xff]
        %v7421 = vld [vmem:[%s7419 + $0x8] sm:$0xff]
        %v7422 = vld [vmem:[%s7419 + $0x10] sm:$0xff]
        %v7423 = vld [vmem:[%s7419 + $0x18] sm:$0xff]
        %v7424 = vld [vmem:[%s7419 + $0x20] sm:$0xff]
        %v7425 = vld [vmem:[%s7419 + $0x28] sm:$0xff]
        %v7426 = vld [vmem:[%s7419 + $0x30] sm:$0x7f]
        %7427 = vset.pattern.permute.xlu0 48
        %7428 = vperm.xlu0 %7427, %v5006
        %v7429 = vpop.permute.xlu0 %7428
        %7431 = vset.pattern.permute.xlu0 48
        %7432 = vperm.xlu0 %7431, %v5007
        %v7433 = vpop.permute.xlu0 %7432
        %7435 = vset.pattern.permute.xlu0 48
        %7436 = vperm.xlu0 %7435, %v5008
        %v7437 = vpop.permute.xlu0 %7436
        %7439 = vset.pattern.permute.xlu0 48
        %7440 = vperm.xlu0 %7439, %v5009
        %v7441 = vpop.permute.xlu0 %7440
        %7443 = vset.pattern.permute.xlu0 48
        %7444 = vperm.xlu0 %7443, %v5010
        %v7445 = vpop.permute.xlu0 %7444
        %7447 = vset.pattern.permute.xlu0 48
        %7448 = vperm.xlu0 %7447, %v5011
        %v7449 = vpop.permute.xlu0 %7448
        %7451 = vset.pattern.permute.xlu0 48
        %7452 = vperm.xlu0 %7451, %v5012
        %v7453 = vpop.permute.xlu0 %7452
        %v7455 = vmul.f32 %v7429, %v7420
        %v7456 = vmul.f32 %v7433, %v7421
        %v7457 = vmul.f32 %v7437, %v7422
        %v7458 = vmul.f32 %v7441, %v7423
        %v7459 = vmul.f32 %v7445, %v7424
        %v7460 = vmul.f32 %v7449, %v7425
        %v7461 = vmul.f32 %v7453, %v7426
        %v7462 = vadd.f32 %v7412, %v7455
        %v7463 = vadd.f32 %v7413, %v7456
        %v7464 = vadd.f32 %v7414, %v7457
        %v7465 = vadd.f32 %v7415, %v7458
        %v7466 = vadd.f32 %v7416, %v7459
        %v7467 = vadd.f32 %v7417, %v7460
        %v7468 = vadd.f32 %v7418, %v7461
        %s7469 = scalar_lea.vmem %s7, 2744
        %v7470 = vld [vmem:[%s7469] sm:$0xff]
        %v7471 = vld [vmem:[%s7469 + $0x8] sm:$0xff]
        %v7472 = vld [vmem:[%s7469 + $0x10] sm:$0xff]
        %v7473 = vld [vmem:[%s7469 + $0x18] sm:$0xff]
        %v7474 = vld [vmem:[%s7469 + $0x20] sm:$0xff]
        %v7475 = vld [vmem:[%s7469 + $0x28] sm:$0xff]
        %v7476 = vld [vmem:[%s7469 + $0x30] sm:$0x7f]
        %7477 = vset.pattern.permute.xlu0 49
        %7478 = vperm.xlu0 %7477, %v5006
        %v7479 = vpop.permute.xlu0 %7478
        %7481 = vset.pattern.permute.xlu0 49
        %7482 = vperm.xlu0 %7481, %v5007
        %v7483 = vpop.permute.xlu0 %7482
        %7485 = vset.pattern.permute.xlu0 49
        %7486 = vperm.xlu0 %7485, %v5008
        %v7487 = vpop.permute.xlu0 %7486
        %7489 = vset.pattern.permute.xlu0 49
        %7490 = vperm.xlu0 %7489, %v5009
        %v7491 = vpop.permute.xlu0 %7490
        %7493 = vset.pattern.permute.xlu0 49
        %7494 = vperm.xlu0 %7493, %v5010
        %v7495 = vpop.permute.xlu0 %7494
        %7497 = vset.pattern.permute.xlu0 49
        %7498 = vperm.xlu0 %7497, %v5011
        %v7499 = vpop.permute.xlu0 %7498
        %7501 = vset.pattern.permute.xlu0 49
        %7502 = vperm.xlu0 %7501, %v5012
        %v7503 = vpop.permute.xlu0 %7502
        %v7505 = vmul.f32 %v7479, %v7470
        %v7506 = vmul.f32 %v7483, %v7471
        %v7507 = vmul.f32 %v7487, %v7472
        %v7508 = vmul.f32 %v7491, %v7473
        %v7509 = vmul.f32 %v7495, %v7474
        %v7510 = vmul.f32 %v7499, %v7475
        %v7511 = vmul.f32 %v7503, %v7476
        %v7512 = vadd.f32 %v7462, %v7505
        %v7513 = vadd.f32 %v7463, %v7506
        %v7514 = vadd.f32 %v7464, %v7507
        %v7515 = vadd.f32 %v7465, %v7508
        %v7516 = vadd.f32 %v7466, %v7509
        %v7517 = vadd.f32 %v7467, %v7510
        %v7518 = vadd.f32 %v7468, %v7511
        %s7519 = scalar_lea.vmem %s7, 2800
        %v7520 = vld [vmem:[%s7519] sm:$0xff]
        %v7521 = vld [vmem:[%s7519 + $0x8] sm:$0xff]
        %v7522 = vld [vmem:[%s7519 + $0x10] sm:$0xff]
        %v7523 = vld [vmem:[%s7519 + $0x18] sm:$0xff]
        %v7524 = vld [vmem:[%s7519 + $0x20] sm:$0xff]
        %v7525 = vld [vmem:[%s7519 + $0x28] sm:$0xff]
        %v7526 = vld [vmem:[%s7519 + $0x30] sm:$0x7f]
        %7527 = vset.pattern.permute.xlu0 50
        %7528 = vperm.xlu0 %7527, %v5006
        %v7529 = vpop.permute.xlu0 %7528
        %7531 = vset.pattern.permute.xlu0 50
        %7532 = vperm.xlu0 %7531, %v5007
        %v7533 = vpop.permute.xlu0 %7532
        %7535 = vset.pattern.permute.xlu0 50
        %7536 = vperm.xlu0 %7535, %v5008
        %v7537 = vpop.permute.xlu0 %7536
        %7539 = vset.pattern.permute.xlu0 50
        %7540 = vperm.xlu0 %7539, %v5009
        %v7541 = vpop.permute.xlu0 %7540
        %7543 = vset.pattern.permute.xlu0 50
        %7544 = vperm.xlu0 %7543, %v5010
        %v7545 = vpop.permute.xlu0 %7544
        %7547 = vset.pattern.permute.xlu0 50
        %7548 = vperm.xlu0 %7547, %v5011
        %v7549 = vpop.permute.xlu0 %7548
        %7551 = vset.pattern.permute.xlu0 50
        %7552 = vperm.xlu0 %7551, %v5012
        %v7553 = vpop.permute.xlu0 %7552
        %v7555 = vmul.f32 %v7529, %v7520
        %v7556 = vmul.f32 %v7533, %v7521
        %v7557 = vmul.f32 %v7537, %v7522
        %v7558 = vmul.f32 %v7541, %v7523
        %v7559 = vmul.f32 %v7545, %v7524
        %v7560 = vmul.f32 %v7549, %v7525
        %v7561 = vmul.f32 %v7553, %v7526
        %v7562 = vadd.f32 %v7512, %v7555
        %v7563 = vadd.f32 %v7513, %v7556
        %v7564 = vadd.f32 %v7514, %v7557
        %v7565 = vadd.f32 %v7515, %v7558
        %v7566 = vadd.f32 %v7516, %v7559
        %v7567 = vadd.f32 %v7517, %v7560
        %v7568 = vadd.f32 %v7518, %v7561
        %s7569 = scalar_lea.vmem %s7, 2856
        %v7570 = vld [vmem:[%s7569] sm:$0xff]
        %v7571 = vld [vmem:[%s7569 + $0x8] sm:$0xff]
        %v7572 = vld [vmem:[%s7569 + $0x10] sm:$0xff]
        %v7573 = vld [vmem:[%s7569 + $0x18] sm:$0xff]
        %v7574 = vld [vmem:[%s7569 + $0x20] sm:$0xff]
        %v7575 = vld [vmem:[%s7569 + $0x28] sm:$0xff]
        %v7576 = vld [vmem:[%s7569 + $0x30] sm:$0x7f]
        %7577 = vset.pattern.permute.xlu0 51
        %7578 = vperm.xlu0 %7577, %v5006
        %v7579 = vpop.permute.xlu0 %7578
        %7581 = vset.pattern.permute.xlu0 51
        %7582 = vperm.xlu0 %7581, %v5007
        %v7583 = vpop.permute.xlu0 %7582
        %7585 = vset.pattern.permute.xlu0 51
        %7586 = vperm.xlu0 %7585, %v5008
        %v7587 = vpop.permute.xlu0 %7586
        %7589 = vset.pattern.permute.xlu0 51
        %7590 = vperm.xlu0 %7589, %v5009
        %v7591 = vpop.permute.xlu0 %7590
        %7593 = vset.pattern.permute.xlu0 51
        %7594 = vperm.xlu0 %7593, %v5010
        %v7595 = vpop.permute.xlu0 %7594
        %7597 = vset.pattern.permute.xlu0 51
        %7598 = vperm.xlu0 %7597, %v5011
        %v7599 = vpop.permute.xlu0 %7598
        %7601 = vset.pattern.permute.xlu0 51
        %7602 = vperm.xlu0 %7601, %v5012
        %v7603 = vpop.permute.xlu0 %7602
        %v7605 = vmul.f32 %v7579, %v7570
        %v7606 = vmul.f32 %v7583, %v7571
        %v7607 = vmul.f32 %v7587, %v7572
        %v7608 = vmul.f32 %v7591, %v7573
        %v7609 = vmul.f32 %v7595, %v7574
        %v7610 = vmul.f32 %v7599, %v7575
        %v7611 = vmul.f32 %v7603, %v7576
        %v7612 = vadd.f32 %v7562, %v7605
        %v7613 = vadd.f32 %v7563, %v7606
        %v7614 = vadd.f32 %v7564, %v7607
        %v7615 = vadd.f32 %v7565, %v7608
        %v7616 = vadd.f32 %v7566, %v7609
        %v7617 = vadd.f32 %v7567, %v7610
        %v7618 = vadd.f32 %v7568, %v7611
        %s7619 = scalar_lea.vmem %s7, 2912
        %v7620 = vld [vmem:[%s7619] sm:$0xff]
        %v7621 = vld [vmem:[%s7619 + $0x8] sm:$0xff]
        %v7622 = vld [vmem:[%s7619 + $0x10] sm:$0xff]
        %v7623 = vld [vmem:[%s7619 + $0x18] sm:$0xff]
        %v7624 = vld [vmem:[%s7619 + $0x20] sm:$0xff]
        %v7625 = vld [vmem:[%s7619 + $0x28] sm:$0xff]
        %v7626 = vld [vmem:[%s7619 + $0x30] sm:$0x7f]
        %7627 = vset.pattern.permute.xlu0 52
        %7628 = vperm.xlu0 %7627, %v5006
        %v7629 = vpop.permute.xlu0 %7628
        %7631 = vset.pattern.permute.xlu0 52
        %7632 = vperm.xlu0 %7631, %v5007
        %v7633 = vpop.permute.xlu0 %7632
        %7635 = vset.pattern.permute.xlu0 52
        %7636 = vperm.xlu0 %7635, %v5008
        %v7637 = vpop.permute.xlu0 %7636
        %7639 = vset.pattern.permute.xlu0 52
        %7640 = vperm.xlu0 %7639, %v5009
        %v7641 = vpop.permute.xlu0 %7640
        %7643 = vset.pattern.permute.xlu0 52
        %7644 = vperm.xlu0 %7643, %v5010
        %v7645 = vpop.permute.xlu0 %7644
        %7647 = vset.pattern.permute.xlu0 52
        %7648 = vperm.xlu0 %7647, %v5011
        %v7649 = vpop.permute.xlu0 %7648
        %7651 = vset.pattern.permute.xlu0 52
        %7652 = vperm.xlu0 %7651, %v5012
        %v7653 = vpop.permute.xlu0 %7652
        %v7655 = vmul.f32 %v7629, %v7620
        %v7656 = vmul.f32 %v7633, %v7621
        %v7657 = vmul.f32 %v7637, %v7622
        %v7658 = vmul.f32 %v7641, %v7623
        %v7659 = vmul.f32 %v7645, %v7624
        %v7660 = vmul.f32 %v7649, %v7625
        %v7661 = vmul.f32 %v7653, %v7626
        %v7662 = vadd.f32 %v7612, %v7655
        %v7663 = vadd.f32 %v7613, %v7656
        %v7664 = vadd.f32 %v7614, %v7657
        %v7665 = vadd.f32 %v7615, %v7658
        %v7666 = vadd.f32 %v7616, %v7659
        %v7667 = vadd.f32 %v7617, %v7660
        %v7668 = vadd.f32 %v7618, %v7661
        %s7669 = scalar_lea.vmem %s7, 2968
        %v7670 = vld [vmem:[%s7669] sm:$0xff]
        %v7671 = vld [vmem:[%s7669 + $0x8] sm:$0xff]
        %v7672 = vld [vmem:[%s7669 + $0x10] sm:$0xff]
        %v7673 = vld [vmem:[%s7669 + $0x18] sm:$0xff]
        %v7674 = vld [vmem:[%s7669 + $0x20] sm:$0xff]
        %v7675 = vld [vmem:[%s7669 + $0x28] sm:$0xff]
        %v7676 = vld [vmem:[%s7669 + $0x30] sm:$0x7f]
        %7677 = vset.pattern.permute.xlu0 53
        %7678 = vperm.xlu0 %7677, %v5006
        %v7679 = vpop.permute.xlu0 %7678
        %7681 = vset.pattern.permute.xlu0 53
        %7682 = vperm.xlu0 %7681, %v5007
        %v7683 = vpop.permute.xlu0 %7682
        %7685 = vset.pattern.permute.xlu0 53
        %7686 = vperm.xlu0 %7685, %v5008
        %v7687 = vpop.permute.xlu0 %7686
        %7689 = vset.pattern.permute.xlu0 53
        %7690 = vperm.xlu0 %7689, %v5009
        %v7691 = vpop.permute.xlu0 %7690
        %7693 = vset.pattern.permute.xlu0 53
        %7694 = vperm.xlu0 %7693, %v5010
        %v7695 = vpop.permute.xlu0 %7694
        %7697 = vset.pattern.permute.xlu0 53
        %7698 = vperm.xlu0 %7697, %v5011
        %v7699 = vpop.permute.xlu0 %7698
        %7701 = vset.pattern.permute.xlu0 53
        %7702 = vperm.xlu0 %7701, %v5012
        %v7703 = vpop.permute.xlu0 %7702
        %v7705 = vmul.f32 %v7679, %v7670
        %v7706 = vmul.f32 %v7683, %v7671
        %v7707 = vmul.f32 %v7687, %v7672
        %v7708 = vmul.f32 %v7691, %v7673
        %v7709 = vmul.f32 %v7695, %v7674
        %v7710 = vmul.f32 %v7699, %v7675
        %v7711 = vmul.f32 %v7703, %v7676
        %v7712 = vadd.f32 %v7662, %v7705
        %v7713 = vadd.f32 %v7663, %v7706
        %v7714 = vadd.f32 %v7664, %v7707
        %v7715 = vadd.f32 %v7665, %v7708
        %v7716 = vadd.f32 %v7666, %v7709
        %v7717 = vadd.f32 %v7667, %v7710
        %v7718 = vadd.f32 %v7668, %v7711
        %s7719 = scalar_lea.vmem %s7, 3024
        %v7720 = vld [vmem:[%s7719] sm:$0xff]
        %v7721 = vld [vmem:[%s7719 + $0x8] sm:$0xff]
        %v7722 = vld [vmem:[%s7719 + $0x10] sm:$0xff]
        %v7723 = vld [vmem:[%s7719 + $0x18] sm:$0xff]
        %v7724 = vld [vmem:[%s7719 + $0x20] sm:$0xff]
        %v7725 = vld [vmem:[%s7719 + $0x28] sm:$0xff]
        %v7726 = vld [vmem:[%s7719 + $0x30] sm:$0x7f]
        %7727 = vset.pattern.permute.xlu0 54
        %7728 = vperm.xlu0 %7727, %v5006
        %v7729 = vpop.permute.xlu0 %7728
        %7731 = vset.pattern.permute.xlu0 54
        %7732 = vperm.xlu0 %7731, %v5007
        %v7733 = vpop.permute.xlu0 %7732
        %7735 = vset.pattern.permute.xlu0 54
        %7736 = vperm.xlu0 %7735, %v5008
        %v7737 = vpop.permute.xlu0 %7736
        %7739 = vset.pattern.permute.xlu0 54
        %7740 = vperm.xlu0 %7739, %v5009
        %v7741 = vpop.permute.xlu0 %7740
        %7743 = vset.pattern.permute.xlu0 54
        %7744 = vperm.xlu0 %7743, %v5010
        %v7745 = vpop.permute.xlu0 %7744
        %7747 = vset.pattern.permute.xlu0 54
        %7748 = vperm.xlu0 %7747, %v5011
        %v7749 = vpop.permute.xlu0 %7748
        %7751 = vset.pattern.permute.xlu0 54
        %7752 = vperm.xlu0 %7751, %v5012
        %v7753 = vpop.permute.xlu0 %7752
        %v7755 = vmul.f32 %v7729, %v7720
        %v7756 = vmul.f32 %v7733, %v7721
        %v7757 = vmul.f32 %v7737, %v7722
        %v7758 = vmul.f32 %v7741, %v7723
        %v7759 = vmul.f32 %v7745, %v7724
        %v7760 = vmul.f32 %v7749, %v7725
        %v7761 = vmul.f32 %v7753, %v7726
        %v7762 = vadd.f32 %v7712, %v7755
        %v7763 = vadd.f32 %v7713, %v7756
        %v7764 = vadd.f32 %v7714, %v7757
        %v7765 = vadd.f32 %v7715, %v7758
        %v7766 = vadd.f32 %v7716, %v7759
        %v7767 = vadd.f32 %v7717, %v7760
        %v7768 = vadd.f32 %v7718, %v7761
        %s7769 = scalar_lea.vmem %s7, 3080
        %v7770 = vld [vmem:[%s7769] sm:$0xff]
        %v7771 = vld [vmem:[%s7769 + $0x8] sm:$0xff]
        %v7772 = vld [vmem:[%s7769 + $0x10] sm:$0xff]
        %v7773 = vld [vmem:[%s7769 + $0x18] sm:$0xff]
        %v7774 = vld [vmem:[%s7769 + $0x20] sm:$0xff]
        %v7775 = vld [vmem:[%s7769 + $0x28] sm:$0xff]
        %v7776 = vld [vmem:[%s7769 + $0x30] sm:$0x7f]
        %7777 = vset.pattern.permute.xlu0 55
        %7778 = vperm.xlu0 %7777, %v5006
        %v7779 = vpop.permute.xlu0 %7778
        %7781 = vset.pattern.permute.xlu0 55
        %7782 = vperm.xlu0 %7781, %v5007
        %v7783 = vpop.permute.xlu0 %7782
        %7785 = vset.pattern.permute.xlu0 55
        %7786 = vperm.xlu0 %7785, %v5008
        %v7787 = vpop.permute.xlu0 %7786
        %7789 = vset.pattern.permute.xlu0 55
        %7790 = vperm.xlu0 %7789, %v5009
        %v7791 = vpop.permute.xlu0 %7790
        %7793 = vset.pattern.permute.xlu0 55
        %7794 = vperm.xlu0 %7793, %v5010
        %v7795 = vpop.permute.xlu0 %7794
        %7797 = vset.pattern.permute.xlu0 55
        %7798 = vperm.xlu0 %7797, %v5011
        %v7799 = vpop.permute.xlu0 %7798
        %7801 = vset.pattern.permute.xlu0 55
        %7802 = vperm.xlu0 %7801, %v5012
        %v7803 = vpop.permute.xlu0 %7802
        %v7805 = vmul.f32 %v7779, %v7770
        %v7806 = vmul.f32 %v7783, %v7771
        %v7807 = vmul.f32 %v7787, %v7772
        %v7808 = vmul.f32 %v7791, %v7773
        %v7809 = vmul.f32 %v7795, %v7774
        %v7810 = vmul.f32 %v7799, %v7775
        %v7811 = vmul.f32 %v7803, %v7776
        %v7812 = vadd.f32 %v7762, %v7805
        %v7813 = vadd.f32 %v7763, %v7806
        %v7814 = vadd.f32 %v7764, %v7807
        %v7815 = vadd.f32 %v7765, %v7808
        %v7816 = vadd.f32 %v7766, %v7809
        %v7817 = vadd.f32 %v7767, %v7810
        %v7818 = vadd.f32 %v7768, %v7811
        %s7819 = scalar_lea.vmem %s7, 3136
        %v7820 = vld [vmem:[%s7819] sm:$0xff]
        %v7821 = vld [vmem:[%s7819 + $0x8] sm:$0xff]
        %v7822 = vld [vmem:[%s7819 + $0x10] sm:$0xff]
        %v7823 = vld [vmem:[%s7819 + $0x18] sm:$0xff]
        %v7824 = vld [vmem:[%s7819 + $0x20] sm:$0xff]
        %v7825 = vld [vmem:[%s7819 + $0x28] sm:$0xff]
        %v7826 = vld [vmem:[%s7819 + $0x30] sm:$0x7f]
        %7827 = vset.pattern.permute.xlu0 56
        %7828 = vperm.xlu0 %7827, %v5006
        %v7829 = vpop.permute.xlu0 %7828
        %7831 = vset.pattern.permute.xlu0 56
        %7832 = vperm.xlu0 %7831, %v5007
        %v7833 = vpop.permute.xlu0 %7832
        %7835 = vset.pattern.permute.xlu0 56
        %7836 = vperm.xlu0 %7835, %v5008
        %v7837 = vpop.permute.xlu0 %7836
        %7839 = vset.pattern.permute.xlu0 56
        %7840 = vperm.xlu0 %7839, %v5009
        %v7841 = vpop.permute.xlu0 %7840
        %7843 = vset.pattern.permute.xlu0 56
        %7844 = vperm.xlu0 %7843, %v5010
        %v7845 = vpop.permute.xlu0 %7844
        %7847 = vset.pattern.permute.xlu0 56
        %7848 = vperm.xlu0 %7847, %v5011
        %v7849 = vpop.permute.xlu0 %7848
        %7851 = vset.pattern.permute.xlu0 56
        %7852 = vperm.xlu0 %7851, %v5012
        %v7853 = vpop.permute.xlu0 %7852
        %v7855 = vmul.f32 %v7829, %v7820
        %v7856 = vmul.f32 %v7833, %v7821
        %v7857 = vmul.f32 %v7837, %v7822
        %v7858 = vmul.f32 %v7841, %v7823
        %v7859 = vmul.f32 %v7845, %v7824
        %v7860 = vmul.f32 %v7849, %v7825
        %v7861 = vmul.f32 %v7853, %v7826
        %v7862 = vadd.f32 %v7812, %v7855
        %v7863 = vadd.f32 %v7813, %v7856
        %v7864 = vadd.f32 %v7814, %v7857
        %v7865 = vadd.f32 %v7815, %v7858
        %v7866 = vadd.f32 %v7816, %v7859
        %v7867 = vadd.f32 %v7817, %v7860
        %v7868 = vadd.f32 %v7818, %v7861
        %s7869 = scalar_lea.vmem %s7, 3192
        %v7870 = vld [vmem:[%s7869] sm:$0xff]
        %v7871 = vld [vmem:[%s7869 + $0x8] sm:$0xff]
        %v7872 = vld [vmem:[%s7869 + $0x10] sm:$0xff]
        %v7873 = vld [vmem:[%s7869 + $0x18] sm:$0xff]
        %v7874 = vld [vmem:[%s7869 + $0x20] sm:$0xff]
        %v7875 = vld [vmem:[%s7869 + $0x28] sm:$0xff]
        %v7876 = vld [vmem:[%s7869 + $0x30] sm:$0x7f]
        %7877 = vset.pattern.permute.xlu0 57
        %7878 = vperm.xlu0 %7877, %v5006
        %v7879 = vpop.permute.xlu0 %7878
        %7881 = vset.pattern.permute.xlu0 57
        %7882 = vperm.xlu0 %7881, %v5007
        %v7883 = vpop.permute.xlu0 %7882
        %7885 = vset.pattern.permute.xlu0 57
        %7886 = vperm.xlu0 %7885, %v5008
        %v7887 = vpop.permute.xlu0 %7886
        %7889 = vset.pattern.permute.xlu0 57
        %7890 = vperm.xlu0 %7889, %v5009
        %v7891 = vpop.permute.xlu0 %7890
        %7893 = vset.pattern.permute.xlu0 57
        %7894 = vperm.xlu0 %7893, %v5010
        %v7895 = vpop.permute.xlu0 %7894
        %7897 = vset.pattern.permute.xlu0 57
        %7898 = vperm.xlu0 %7897, %v5011
        %v7899 = vpop.permute.xlu0 %7898
        %7901 = vset.pattern.permute.xlu0 57
        %7902 = vperm.xlu0 %7901, %v5012
        %v7903 = vpop.permute.xlu0 %7902
        %v7905 = vmul.f32 %v7879, %v7870
        %v7906 = vmul.f32 %v7883, %v7871
        %v7907 = vmul.f32 %v7887, %v7872
        %v7908 = vmul.f32 %v7891, %v7873
        %v7909 = vmul.f32 %v7895, %v7874
        %v7910 = vmul.f32 %v7899, %v7875
        %v7911 = vmul.f32 %v7903, %v7876
        %v7912 = vadd.f32 %v7862, %v7905
        %v7913 = vadd.f32 %v7863, %v7906
        %v7914 = vadd.f32 %v7864, %v7907
        %v7915 = vadd.f32 %v7865, %v7908
        %v7916 = vadd.f32 %v7866, %v7909
        %v7917 = vadd.f32 %v7867, %v7910
        %v7918 = vadd.f32 %v7868, %v7911
        %s7919 = scalar_lea.vmem %s7, 3248
        %v7920 = vld [vmem:[%s7919] sm:$0xff]
        %v7921 = vld [vmem:[%s7919 + $0x8] sm:$0xff]
        %v7922 = vld [vmem:[%s7919 + $0x10] sm:$0xff]
        %v7923 = vld [vmem:[%s7919 + $0x18] sm:$0xff]
        %v7924 = vld [vmem:[%s7919 + $0x20] sm:$0xff]
        %v7925 = vld [vmem:[%s7919 + $0x28] sm:$0xff]
        %v7926 = vld [vmem:[%s7919 + $0x30] sm:$0x7f]
        %7927 = vset.pattern.permute.xlu0 58
        %7928 = vperm.xlu0 %7927, %v5006
        %v7929 = vpop.permute.xlu0 %7928
        %7931 = vset.pattern.permute.xlu0 58
        %7932 = vperm.xlu0 %7931, %v5007
        %v7933 = vpop.permute.xlu0 %7932
        %7935 = vset.pattern.permute.xlu0 58
        %7936 = vperm.xlu0 %7935, %v5008
        %v7937 = vpop.permute.xlu0 %7936
        %7939 = vset.pattern.permute.xlu0 58
        %7940 = vperm.xlu0 %7939, %v5009
        %v7941 = vpop.permute.xlu0 %7940
        %7943 = vset.pattern.permute.xlu0 58
        %7944 = vperm.xlu0 %7943, %v5010
        %v7945 = vpop.permute.xlu0 %7944
        %7947 = vset.pattern.permute.xlu0 58
        %7948 = vperm.xlu0 %7947, %v5011
        %v7949 = vpop.permute.xlu0 %7948
        %7951 = vset.pattern.permute.xlu0 58
        %7952 = vperm.xlu0 %7951, %v5012
        %v7953 = vpop.permute.xlu0 %7952
        %v7955 = vmul.f32 %v7929, %v7920
        %v7956 = vmul.f32 %v7933, %v7921
        %v7957 = vmul.f32 %v7937, %v7922
        %v7958 = vmul.f32 %v7941, %v7923
        %v7959 = vmul.f32 %v7945, %v7924
        %v7960 = vmul.f32 %v7949, %v7925
        %v7961 = vmul.f32 %v7953, %v7926
        %v7962 = vadd.f32 %v7912, %v7955
        %v7963 = vadd.f32 %v7913, %v7956
        %v7964 = vadd.f32 %v7914, %v7957
        %v7965 = vadd.f32 %v7915, %v7958
        %v7966 = vadd.f32 %v7916, %v7959
        %v7967 = vadd.f32 %v7917, %v7960
        %v7968 = vadd.f32 %v7918, %v7961
        %s7969 = scalar_lea.vmem %s7, 3304
        %v7970 = vld [vmem:[%s7969] sm:$0xff]
        %v7971 = vld [vmem:[%s7969 + $0x8] sm:$0xff]
        %v7972 = vld [vmem:[%s7969 + $0x10] sm:$0xff]
        %v7973 = vld [vmem:[%s7969 + $0x18] sm:$0xff]
        %v7974 = vld [vmem:[%s7969 + $0x20] sm:$0xff]
        %v7975 = vld [vmem:[%s7969 + $0x28] sm:$0xff]
        %v7976 = vld [vmem:[%s7969 + $0x30] sm:$0x7f]
        %7977 = vset.pattern.permute.xlu0 59
        %7978 = vperm.xlu0 %7977, %v5006
        %v7979 = vpop.permute.xlu0 %7978
        %7981 = vset.pattern.permute.xlu0 59
        %7982 = vperm.xlu0 %7981, %v5007
        %v7983 = vpop.permute.xlu0 %7982
        %7985 = vset.pattern.permute.xlu0 59
        %7986 = vperm.xlu0 %7985, %v5008
        %v7987 = vpop.permute.xlu0 %7986
        %7989 = vset.pattern.permute.xlu0 59
        %7990 = vperm.xlu0 %7989, %v5009
        %v7991 = vpop.permute.xlu0 %7990
        %7993 = vset.pattern.permute.xlu0 59
        %7994 = vperm.xlu0 %7993, %v5010
        %v7995 = vpop.permute.xlu0 %7994
        %7997 = vset.pattern.permute.xlu0 59
        %7998 = vperm.xlu0 %7997, %v5011
        %v7999 = vpop.permute.xlu0 %7998
        %8001 = vset.pattern.permute.xlu0 59
        %8002 = vperm.xlu0 %8001, %v5012
        %v8003 = vpop.permute.xlu0 %8002
        %v8005 = vmul.f32 %v7979, %v7970
        %v8006 = vmul.f32 %v7983, %v7971
        %v8007 = vmul.f32 %v7987, %v7972
        %v8008 = vmul.f32 %v7991, %v7973
        %v8009 = vmul.f32 %v7995, %v7974
        %v8010 = vmul.f32 %v7999, %v7975
        %v8011 = vmul.f32 %v8003, %v7976
        %v8012 = vadd.f32 %v7962, %v8005
        %v8013 = vadd.f32 %v7963, %v8006
        %v8014 = vadd.f32 %v7964, %v8007
        %v8015 = vadd.f32 %v7965, %v8008
        %v8016 = vadd.f32 %v7966, %v8009
        %v8017 = vadd.f32 %v7967, %v8010
        %v8018 = vadd.f32 %v7968, %v8011
        %s8019 = scalar_lea.vmem %s7, 3360
        %v8020 = vld [vmem:[%s8019] sm:$0xff]
        %v8021 = vld [vmem:[%s8019 + $0x8] sm:$0xff]
        %v8022 = vld [vmem:[%s8019 + $0x10] sm:$0xff]
        %v8023 = vld [vmem:[%s8019 + $0x18] sm:$0xff]
        %v8024 = vld [vmem:[%s8019 + $0x20] sm:$0xff]
        %v8025 = vld [vmem:[%s8019 + $0x28] sm:$0xff]
        %v8026 = vld [vmem:[%s8019 + $0x30] sm:$0x7f]
        %8027 = vset.pattern.permute.xlu0 60
        %8028 = vperm.xlu0 %8027, %v5006
        %v8029 = vpop.permute.xlu0 %8028
        %8031 = vset.pattern.permute.xlu0 60
        %8032 = vperm.xlu0 %8031, %v5007
        %v8033 = vpop.permute.xlu0 %8032
        %8035 = vset.pattern.permute.xlu0 60
        %8036 = vperm.xlu0 %8035, %v5008
        %v8037 = vpop.permute.xlu0 %8036
        %8039 = vset.pattern.permute.xlu0 60
        %8040 = vperm.xlu0 %8039, %v5009
        %v8041 = vpop.permute.xlu0 %8040
        %8043 = vset.pattern.permute.xlu0 60
        %8044 = vperm.xlu0 %8043, %v5010
        %v8045 = vpop.permute.xlu0 %8044
        %8047 = vset.pattern.permute.xlu0 60
        %8048 = vperm.xlu0 %8047, %v5011
        %v8049 = vpop.permute.xlu0 %8048
        %8051 = vset.pattern.permute.xlu0 60
        %8052 = vperm.xlu0 %8051, %v5012
        %v8053 = vpop.permute.xlu0 %8052
        %v8055 = vmul.f32 %v8029, %v8020
        %v8056 = vmul.f32 %v8033, %v8021
        %v8057 = vmul.f32 %v8037, %v8022
        %v8058 = vmul.f32 %v8041, %v8023
        %v8059 = vmul.f32 %v8045, %v8024
        %v8060 = vmul.f32 %v8049, %v8025
        %v8061 = vmul.f32 %v8053, %v8026
        %v8062 = vadd.f32 %v8012, %v8055
        %v8063 = vadd.f32 %v8013, %v8056
        %v8064 = vadd.f32 %v8014, %v8057
        %v8065 = vadd.f32 %v8015, %v8058
        %v8066 = vadd.f32 %v8016, %v8059
        %v8067 = vadd.f32 %v8017, %v8060
        %v8068 = vadd.f32 %v8018, %v8061
        %s8069 = scalar_lea.vmem %s7, 3416
        %v8070 = vld [vmem:[%s8069] sm:$0xff]
        %v8071 = vld [vmem:[%s8069 + $0x8] sm:$0xff]
        %v8072 = vld [vmem:[%s8069 + $0x10] sm:$0xff]
        %v8073 = vld [vmem:[%s8069 + $0x18] sm:$0xff]
        %v8074 = vld [vmem:[%s8069 + $0x20] sm:$0xff]
        %v8075 = vld [vmem:[%s8069 + $0x28] sm:$0xff]
        %v8076 = vld [vmem:[%s8069 + $0x30] sm:$0x7f]
        %8077 = vset.pattern.permute.xlu0 61
        %8078 = vperm.xlu0 %8077, %v5006
        %v8079 = vpop.permute.xlu0 %8078
        %8081 = vset.pattern.permute.xlu0 61
        %8082 = vperm.xlu0 %8081, %v5007
        %v8083 = vpop.permute.xlu0 %8082
        %8085 = vset.pattern.permute.xlu0 61
        %8086 = vperm.xlu0 %8085, %v5008
        %v8087 = vpop.permute.xlu0 %8086
        %8089 = vset.pattern.permute.xlu0 61
        %8090 = vperm.xlu0 %8089, %v5009
        %v8091 = vpop.permute.xlu0 %8090
        %8093 = vset.pattern.permute.xlu0 61
        %8094 = vperm.xlu0 %8093, %v5010
        %v8095 = vpop.permute.xlu0 %8094
        %8097 = vset.pattern.permute.xlu0 61
        %8098 = vperm.xlu0 %8097, %v5011
        %v8099 = vpop.permute.xlu0 %8098
        %8101 = vset.pattern.permute.xlu0 61
        %8102 = vperm.xlu0 %8101, %v5012
        %v8103 = vpop.permute.xlu0 %8102
        %v8105 = vmul.f32 %v8079, %v8070
        %v8106 = vmul.f32 %v8083, %v8071
        %v8107 = vmul.f32 %v8087, %v8072
        %v8108 = vmul.f32 %v8091, %v8073
        %v8109 = vmul.f32 %v8095, %v8074
        %v8110 = vmul.f32 %v8099, %v8075
        %v8111 = vmul.f32 %v8103, %v8076
        %v8112 = vadd.f32 %v8062, %v8105
        %v8113 = vadd.f32 %v8063, %v8106
        %v8114 = vadd.f32 %v8064, %v8107
        %v8115 = vadd.f32 %v8065, %v8108
        %v8116 = vadd.f32 %v8066, %v8109
        %v8117 = vadd.f32 %v8067, %v8110
        %v8118 = vadd.f32 %v8068, %v8111
        %s8119 = scalar_lea.vmem %s7, 3472
        %v8120 = vld [vmem:[%s8119] sm:$0xff]
        %v8121 = vld [vmem:[%s8119 + $0x8] sm:$0xff]
        %v8122 = vld [vmem:[%s8119 + $0x10] sm:$0xff]
        %v8123 = vld [vmem:[%s8119 + $0x18] sm:$0xff]
        %v8124 = vld [vmem:[%s8119 + $0x20] sm:$0xff]
        %v8125 = vld [vmem:[%s8119 + $0x28] sm:$0xff]
        %v8126 = vld [vmem:[%s8119 + $0x30] sm:$0x7f]
        %8127 = vset.pattern.permute.xlu0 62
        %8128 = vperm.xlu0 %8127, %v5006
        %v8129 = vpop.permute.xlu0 %8128
        %8131 = vset.pattern.permute.xlu0 62
        %8132 = vperm.xlu0 %8131, %v5007
        %v8133 = vpop.permute.xlu0 %8132
        %8135 = vset.pattern.permute.xlu0 62
        %8136 = vperm.xlu0 %8135, %v5008
        %v8137 = vpop.permute.xlu0 %8136
        %8139 = vset.pattern.permute.xlu0 62
        %8140 = vperm.xlu0 %8139, %v5009
        %v8141 = vpop.permute.xlu0 %8140
        %8143 = vset.pattern.permute.xlu0 62
        %8144 = vperm.xlu0 %8143, %v5010
        %v8145 = vpop.permute.xlu0 %8144
        %8147 = vset.pattern.permute.xlu0 62
        %8148 = vperm.xlu0 %8147, %v5011
        %v8149 = vpop.permute.xlu0 %8148
        %8151 = vset.pattern.permute.xlu0 62
        %8152 = vperm.xlu0 %8151, %v5012
        %v8153 = vpop.permute.xlu0 %8152
        %v8155 = vmul.f32 %v8129, %v8120
        %v8156 = vmul.f32 %v8133, %v8121
        %v8157 = vmul.f32 %v8137, %v8122
        %v8158 = vmul.f32 %v8141, %v8123
        %v8159 = vmul.f32 %v8145, %v8124
        %v8160 = vmul.f32 %v8149, %v8125
        %v8161 = vmul.f32 %v8153, %v8126
        %v8162 = vadd.f32 %v8112, %v8155
        %v8163 = vadd.f32 %v8113, %v8156
        %v8164 = vadd.f32 %v8114, %v8157
        %v8165 = vadd.f32 %v8115, %v8158
        %v8166 = vadd.f32 %v8116, %v8159
        %v8167 = vadd.f32 %v8117, %v8160
        %v8168 = vadd.f32 %v8118, %v8161
        %s8169 = scalar_lea.vmem %s7, 3528
        %v8170 = vld [vmem:[%s8169] sm:$0xff]
        %v8171 = vld [vmem:[%s8169 + $0x8] sm:$0xff]
        %v8172 = vld [vmem:[%s8169 + $0x10] sm:$0xff]
        %v8173 = vld [vmem:[%s8169 + $0x18] sm:$0xff]
        %v8174 = vld [vmem:[%s8169 + $0x20] sm:$0xff]
        %v8175 = vld [vmem:[%s8169 + $0x28] sm:$0xff]
        %v8176 = vld [vmem:[%s8169 + $0x30] sm:$0x7f]
        %8177 = vset.pattern.permute.xlu0 63
        %8178 = vperm.xlu0 %8177, %v5006
        %v8179 = vpop.permute.xlu0 %8178
        %8181 = vset.pattern.permute.xlu0 63
        %8182 = vperm.xlu0 %8181, %v5007
        %v8183 = vpop.permute.xlu0 %8182
        %8185 = vset.pattern.permute.xlu0 63
        %8186 = vperm.xlu0 %8185, %v5008
        %v8187 = vpop.permute.xlu0 %8186
        %8189 = vset.pattern.permute.xlu0 63
        %8190 = vperm.xlu0 %8189, %v5009
        %v8191 = vpop.permute.xlu0 %8190
        %8193 = vset.pattern.permute.xlu0 63
        %8194 = vperm.xlu0 %8193, %v5010
        %v8195 = vpop.permute.xlu0 %8194
        %8197 = vset.pattern.permute.xlu0 63
        %8198 = vperm.xlu0 %8197, %v5011
        %v8199 = vpop.permute.xlu0 %8198
        %8201 = vset.pattern.permute.xlu0 63
        %8202 = vperm.xlu0 %8201, %v5012
        %v8203 = vpop.permute.xlu0 %8202
        %v8205 = vmul.f32 %v8179, %v8170
        %v8206 = vmul.f32 %v8183, %v8171
        %v8207 = vmul.f32 %v8187, %v8172
        %v8208 = vmul.f32 %v8191, %v8173
        %v8209 = vmul.f32 %v8195, %v8174
        %v8210 = vmul.f32 %v8199, %v8175
        %v8211 = vmul.f32 %v8203, %v8176
        %v8212 = vadd.f32 %v8162, %v8205
        %v8213 = vadd.f32 %v8163, %v8206
        %v8214 = vadd.f32 %v8164, %v8207
        %v8215 = vadd.f32 %v8165, %v8208
        %v8216 = vadd.f32 %v8166, %v8209
        %v8217 = vadd.f32 %v8167, %v8210
        %v8218 = vadd.f32 %v8168, %v8211
        %v8219 = vld [vmem:[%s8] sm:$0x1]
        %vm8220 = vcmask 449536
        %v8222 = vsel %vm8220, 1.0, 0
        %vm8224 = vcmask 1046528
        %v8226 = vsel %vm8224, %v8218, 0
        %8228 = vmatprep.subr.mxu0 0.0
        %8229 = vmatpush1.msra.mxu0 0.0
        %8230 = vmatprep.subr.mxu0 0.0
        %8231 = vmatpush1.msra.mxu0 0.0
        %8232 = vmatprep.subr.mxu0 0.0
        %8233 = vmatpush1.msra.mxu0 0.0
        %8234 = vmatprep.subr.mxu0 0.0
        %8235 = vmatpush1.msra.mxu0 0.0
        %8236 = vmatprep.subr.mxu0 0.0
        %8237 = vmatpush1.msra.mxu0 0.0
        %8238 = vmatprep.subr.mxu0 0.0
        %8239 = vmatpush1.msra.mxu0 0.0
        %8240 = vmatprep.subr.mxu0 0.0
        %8241 = vmatpush1.msra.mxu0 0.0
        %8242 = vmatprep.subr.mxu0 0.0
        %8243 = vmatpush1.msra.mxu0 0.0
        %8244 = vmatprep.subr.mxu0 0.0
        %8245 = vmatpush1.msra.mxu0 0.0
        %8246 = vmatprep.subr.mxu0 0.0
        %8247 = vmatpush1.msra.mxu0 %v8226
        %8248 = vmatprep.subr.mxu0 0.0
        %8249 = vmatpush1.msra.mxu0 %v8217
        %8250 = vmatprep.subr.mxu0 0.0
        %8251 = vmatpush1.msra.mxu0 %v8216
        %8252 = vmatprep.subr.mxu0 0.0
        %8253 = vmatpush1.msra.mxu0 %v8215
        %8254 = vmatprep.subr.mxu0 0.0
        %8255 = vmatpush1.msra.mxu0 %v8214
        %8256 = vmatprep.subr.mxu0 0.0
        %8257 = vmatpush1.msra.mxu0 %v8213
        %8258 = vmatprep.subr.mxu0 0.0
        %8259 = vmatpush1.msra.mxu0 %v8212
        %8260 = vmatprep.subr.mxu0 0.0
        %8261 = vmatpush2.msra.mxu0 0.0
        %8262 = vmatprep.subr.mxu0 0.0
        %8263 = vmatpush2.msra.mxu0 0.0
        %8264 = vmatprep.subr.mxu0 0.0
        %8265 = vmatpush2.msra.mxu0 0.0
        %8266 = vmatprep.subr.mxu0 0.0
        %8267 = vmatpush2.msra.mxu0 0.0
        %8268 = vmatprep.subr.mxu0 0.0
        %8269 = vmatpush2.msra.mxu0 0.0
        %8270 = vmatprep.subr.mxu0 0.0
        %8271 = vmatpush2.msra.mxu0 0.0
        %8272 = vmatprep.subr.mxu0 0.0
        %8273 = vmatpush2.msra.mxu0 0.0
        %8274 = vmatprep.subr.mxu0 0.0
        %8275 = vmatpush2.msra.mxu0 0.0
        %8276 = vmatprep.subr.mxu0 0.0
        %8277 = vmatpush2.msra.mxu0 0.0
        %8278 = vmatprep.subr.mxu0 0.0
        %8279 = vmatpush2.msra.mxu0 0.0
        %8280 = vmatprep.subr.mxu0 0.0
        %8281 = vmatpush2.msra.mxu0 0.0
        %8282 = vmatprep.subr.mxu0 0.0
        %8283 = vmatpush2.msra.mxu0 0.0
        %8284 = vmatprep.subr.mxu0 0.0
        %8285 = vmatpush2.msra.mxu0 0.0
        %8286 = vmatprep.subr.mxu0 0.0
        %8287 = vmatpush2.msra.mxu0 0.0
        %8288 = vmatprep.subr.mxu0 0.0
        %8289 = vmatpush2.msra.mxu0 0.0
        %8290 = vmatprep.subr.mxu0 0.0
        %8291 = vmatpush2.msra.mxu0 0.0
        %8292 = vmatprep.mubr.f32.mxu0 0.0
        %8293 = vmatmul.mubr.f32.gmra.mxu0 %v8222
        %v8294 = vpop.f32.mrf.mxu0
        %v8295 = vadd.f32 %v8219, %v8294
        %v8296 = vpop.f32.mrf.mxu0
        %8297 = vdwg.mxu0
        %v8298 = vmax.f32 %v8295, 0.0
        %v8299 = vld [vmem:[%s9] sm:$0xff]
        %v8300 = vld [vmem:[%s9 + $0x8] sm:$0xff]
        %v8301 = vld [vmem:[%s9 + $0x10] sm:$0xff]
        %v8302 = vld [vmem:[%s9 + $0x18] sm:$0xff]
        %v8303 = vld [vmem:[%s10] sm:$0x1]
        %vm8304 = vcmask 261120
        %v8306 = vsel %vm8304, %v8298, 0
        %8308 = vmatprep.subr.mxu0 0.0
        %8309 = vmatpush1.msra.mxu0 0.0
        %8310 = vmatprep.subr.mxu0 0.0
        %8311 = vmatpush1.msra.mxu0 0.0
        %8312 = vmatprep.subr.mxu0 0.0
        %8313 = vmatpush1.msra.mxu0 0.0
        %8314 = vmatprep.subr.mxu0 0.0
        %8315 = vmatpush1.msra.mxu0 0.0
        %8316 = vmatprep.subr.mxu0 0.0
        %8317 = vmatpush1.msra.mxu0 0.0
        %8318 = vmatprep.subr.mxu0 0.0
        %8319 = vmatpush1.msra.mxu0 0.0
        %8320 = vmatprep.subr.mxu0 0.0
        %8321 = vmatpush1.msra.mxu0 0.0
        %8322 = vmatprep.subr.mxu0 0.0
        %8323 = vmatpush1.msra.mxu0 0.0
        %8324 = vmatprep.subr.mxu0 0.0
        %8325 = vmatpush1.msra.mxu0 0.0
        %8326 = vmatprep.subr.mxu0 0.0
        %8327 = vmatpush1.msra.mxu0 0.0
        %8328 = vmatprep.subr.mxu0 0.0
        %8329 = vmatpush1.msra.mxu0 0.0
        %8330 = vmatprep.subr.mxu0 0.0
        %8331 = vmatpush1.msra.mxu0 0.0
        %8332 = vmatprep.subr.mxu0 0.0
        %8333 = vmatpush1.msra.mxu0 %v8302
        %8334 = vmatprep.subr.mxu0 0.0
        %8335 = vmatpush1.msra.mxu0 %v8301
        %8336 = vmatprep.subr.mxu0 0.0
        %8337 = vmatpush1.msra.mxu0 %v8300
        %8338 = vmatprep.subr.mxu0 0.0
        %8339 = vmatpush1.msra.mxu0 %v8299
        %8340 = vmatprep.subr.mxu0 0.0
        %8341 = vmatpush2.msra.mxu0 0.0
        %8342 = vmatprep.subr.mxu0 0.0
        %8343 = vmatpush2.msra.mxu0 0.0
        %8344 = vmatprep.subr.mxu0 0.0
        %8345 = vmatpush2.msra.mxu0 0.0
        %8346 = vmatprep.subr.mxu0 0.0
        %8347 = vmatpush2.msra.mxu0 0.0
        %8348 = vmatprep.subr.mxu0 0.0
        %8349 = vmatpush2.msra.mxu0 0.0
        %8350 = vmatprep.subr.mxu0 0.0
        %8351 = vmatpush2.msra.mxu0 0.0
        %8352 = vmatprep.subr.mxu0 0.0
        %8353 = vmatpush2.msra.mxu0 0.0
        %8354 = vmatprep.subr.mxu0 0.0
        %8355 = vmatpush2.msra.mxu0 0.0
        %8356 = vmatprep.subr.mxu0 0.0
        %8357 = vmatpush2.msra.mxu0 0.0
        %8358 = vmatprep.subr.mxu0 0.0
        %8359 = vmatpush2.msra.mxu0 0.0
        %8360 = vmatprep.subr.mxu0 0.0
        %8361 = vmatpush2.msra.mxu0 0.0
        %8362 = vmatprep.subr.mxu0 0.0
        %8363 = vmatpush2.msra.mxu0 0.0
        %8364 = vmatprep.subr.mxu0 0.0
        %8365 = vmatpush2.msra.mxu0 0.0
        %8366 = vmatprep.subr.mxu0 0.0
        %8367 = vmatpush2.msra.mxu0 0.0
        %8368 = vmatprep.subr.mxu0 0.0
        %8369 = vmatpush2.msra.mxu0 0.0
        %8370 = vmatprep.subr.mxu0 0.0
        %8371 = vmatpush2.msra.mxu0 0.0
        %8372 = vmatprep.mubr.f32.mxu0 0.0
        %8373 = vmatmul.mubr.f32.gmra.mxu0 %v8306
        %v8374 = vpop.f32.mrf.mxu0
        %v8375 = vadd.f32 %v8303, %v8374
        %v8376 = vpop.f32.mrf.mxu0
        %8377 = vdwg.mxu0
        %v8378 = vmax.f32 %v8375, 0.0
        %v8379 = vld [vmem:[%s11] sm:$0xff]
        %v8380 = vld [vmem:[%s11 + $0x8] sm:$0xff]
        %v8381 = vld [vmem:[%s11 + $0x10] sm:$0xff]
        %v8382 = vld [vmem:[%s11 + $0x18] sm:$0xff]
        %v8383 = vld [vmem:[%s12] sm:$0x1]
        %v8385 = vsel %vm8304, %v8378, 0
        %8387 = vmatprep.subr.mxu0 0.0
        %8388 = vmatpush1.msra.mxu0 0.0
        %8389 = vmatprep.subr.mxu0 0.0
        %8390 = vmatpush1.msra.mxu0 0.0
        %8391 = vmatprep.subr.mxu0 0.0
        %8392 = vmatpush1.msra.mxu0 0.0
        %8393 = vmatprep.subr.mxu0 0.0
        %8394 = vmatpush1.msra.mxu0 0.0
        %8395 = vmatprep.subr.mxu0 0.0
        %8396 = vmatpush1.msra.mxu0 0.0
        %8397 = vmatprep.subr.mxu0 0.0
        %8398 = vmatpush1.msra.mxu0 0.0
        %8399 = vmatprep.subr.mxu0 0.0
        %8400 = vmatpush1.msra.mxu0 0.0
        %8401 = vmatprep.subr.mxu0 0.0
        %8402 = vmatpush1.msra.mxu0 0.0
        %8403 = vmatprep.subr.mxu0 0.0
        %8404 = vmatpush1.msra.mxu0 0.0
        %8405 = vmatprep.subr.mxu0 0.0
        %8406 = vmatpush1.msra.mxu0 0.0
        %8407 = vmatprep.subr.mxu0 0.0
        %8408 = vmatpush1.msra.mxu0 0.0
        %8409 = vmatprep.subr.mxu0 0.0
        %8410 = vmatpush1.msra.mxu0 0.0
        %8411 = vmatprep.subr.mxu0 0.0
        %8412 = vmatpush1.msra.mxu0 %v8382
        %8413 = vmatprep.subr.mxu0 0.0
        %8414 = vmatpush1.msra.mxu0 %v8381
        %8415 = vmatprep.subr.mxu0 0.0
        %8416 = vmatpush1.msra.mxu0 %v8380
        %8417 = vmatprep.subr.mxu0 0.0
        %8418 = vmatpush1.msra.mxu0 %v8379
        %8419 = vmatprep.subr.mxu0 0.0
        %8420 = vmatpush2.msra.mxu0 0.0
        %8421 = vmatprep.subr.mxu0 0.0
        %8422 = vmatpush2.msra.mxu0 0.0
        %8423 = vmatprep.subr.mxu0 0.0
        %8424 = vmatpush2.msra.mxu0 0.0
        %8425 = vmatprep.subr.mxu0 0.0
        %8426 = vmatpush2.msra.mxu0 0.0
        %8427 = vmatprep.subr.mxu0 0.0
        %8428 = vmatpush2.msra.mxu0 0.0
        %8429 = vmatprep.subr.mxu0 0.0
        %8430 = vmatpush2.msra.mxu0 0.0
        %8431 = vmatprep.subr.mxu0 0.0
        %8432 = vmatpush2.msra.mxu0 0.0
        %8433 = vmatprep.subr.mxu0 0.0
        %8434 = vmatpush2.msra.mxu0 0.0
        %8435 = vmatprep.subr.mxu0 0.0
        %8436 = vmatpush2.msra.mxu0 0.0
        %8437 = vmatprep.subr.mxu0 0.0
        %8438 = vmatpush2.msra.mxu0 0.0
        %8439 = vmatprep.subr.mxu0 0.0
        %8440 = vmatpush2.msra.mxu0 0.0
        %8441 = vmatprep.subr.mxu0 0.0
        %8442 = vmatpush2.msra.mxu0 0.0
        %8443 = vmatprep.subr.mxu0 0.0
        %8444 = vmatpush2.msra.mxu0 0.0
        %8445 = vmatprep.subr.mxu0 0.0
        %8446 = vmatpush2.msra.mxu0 0.0
        %8447 = vmatprep.subr.mxu0 0.0
        %8448 = vmatpush2.msra.mxu0 0.0
        %8449 = vmatprep.subr.mxu0 0.0
        %8450 = vmatpush2.msra.mxu0 0.0
        %8451 = vmatprep.mubr.f32.mxu0 0.0
        %8452 = vmatmul.mubr.f32.gmra.mxu0 %v8385
        %v8453 = vpop.f32.mrf.mxu0
        %v8454 = vadd.f32 %v8383, %v8453
        %v8455 = vpop.f32.mrf.mxu0
        %8456 = vdwg.mxu0
        %v8457 = vmax.f32 %v8454, 0.0
        %v8458 = vxor.u32 %v8457, 2147483648
        %v8459 = vmul.f32 %v8458, 1.442695
        %v8460 = vpow.pop %v8459
        %v8461 = vadd.f32 %v8460, 1.0
        %v8462 = vrcp.pop %v8461
        %v8463 = vmul.f32 1.0, %v8462
        %vm8464 = vcmask 24576
        %8465 = vst.msk [vmem:[%s432] sm:$0x1] %vm8464, %v8463
        %s8466 = sand.u32 %s313, 1
        %s8467 = scalar_lea.sflag [#allocation5], %s8466
        %s8468 = sand.u32 %s313, 1
        %s8469 = scalar_lea.vmem [#allocation4], %s8468
        // Predicated region
        $region73: #{actor_forward.1} parent=71 // pred_check
          %p8470 = pneg %p323
        $region74: #{actor_forward.1} parent=71 // pred_check_branch
          %8472 = sbr.rel (%p8470) target = $region76
        $region75: #{actor_forward.1} parent=71 // pred_region
          %s8474 = ssub.s32 16, 16
          %8475 = vsyncadd %s8467, %s8474
          %s8476 = smul.addr %s27, 16
          %s8477 = scalar_lea.hbm %s13, %s8476
          %s8479 = sshll.u32 %s8469, 4
          %s8480 = int_to_ptr.vmem [resolvable:$true] %s8479
          %8482 = dma.vmem_to_hbm [thread:$0]  %s8480, 16, %s8477, %s8467
        $region76: #{actor_forward.1} parent=71 // pred_fallthru
          _
      $region72: #{actor_forward.1} parent=5 // pred_fallthru
        _
      %p8483 = scmp.le.s32.totalorder 2, %s22
      // Predicated region
      $region77: #{actor_forward.1} parent=5 // pred_check
        %p8484 = pneg %p8483
      $region78: #{actor_forward.1} parent=5 // pred_check_branch
        %8486 = sbr.rel (%p8484) target = $region80
      $region79: #{actor_forward.1} parent=5 // pred_region
        %s8487 = ssub.s32 %s22, 2
        // Predicated region
        $region81: #{actor_forward.1} parent=79 // pred_check
          %p8488 = pneg %p329
        $region82: #{actor_forward.1} parent=79 // pred_check_branch
          %8490 = sbr.rel (%p8488) target = $region84
        $region83: #{actor_forward.1} parent=79 // pred_region
          %s8491 = sand.u32 %s314, 1
          %s8492 = scalar_lea.sflag [#allocation5], %s8491
          %s8493 = sand.u32 %s314, 1
          %s8494 = scalar_lea.vmem [#allocation4], %s8493
          %8495 = dma.done %s8492, 16
        $region84: #{actor_forward.1} parent=79 // pred_fallthru
          _
      $region80: #{actor_forward.1} parent=5 // pred_fallthru
        _
    $region6: #{actor_forward.1} parent=1 // loop_footer
      %s26 = sadd.s32 1, %s22
    $region7: #{actor_forward.1} parent=1 // loop_footer_branch
      %21 = sbr.rel target = $region3
    $region8: #{actor_forward.1} parent=1 // loop_exit
      _
    %8496 = vsyncpa [#allocation5], 1
    %s8497 = scalar_lea.sflag [#allocation5], 1
    %8498 = vsyncpa %s8497, 1

</llo_original>
